<compile_context>
chip_gen: v7x
topology: tpu7x:2x2x1
jax: 0.10.0
libtpu: 0.0.40
codegen_flags: <defaults>
</compile_context>

<pallas_src>
import functools

import jax
import jax.numpy as jnp
from jax import lax
from jax.experimental import pallas as pl
from jax.experimental.pallas import tpu as pltpu

# ------------------------- LRN constants (match nn.LocalResponseNorm) --------
LRN_SIZE, LRN_ALPHA, LRN_BETA, LRN_K = 5, 0.001, 0.5, 1.0
NPAD = 128   # lane-dense padded output-channel count for the conv kernels
ZPAD = 128   # lane-dense padded width for the final linear layer


# ------------------------------- hardware-aware tiling ------------------------
@functools.lru_cache(maxsize=None)
def _vmem_capacity_bytes():
    try:
        return int(pltpu.get_tpu_info().vmem_capacity_bytes)
    except Exception:
        return 64 << 20            # conservative fallback (v7x-sized VMEM)


@functools.lru_cache(maxsize=None)
def _tile_m_cap():
    # v7x: 64 MiB physical VMEM (2 TCs share pressure) -> cap 1024.
    # v5e/v6e: 128 MiB -> 2048 (tile>=512 already ~85% of HBM roofline).
    return 1024 if _vmem_capacity_bytes() <= (64 << 20) else 2048


@functools.lru_cache(maxsize=None)
def _vmem_limit_bytes():
    return int(min(3 * _vmem_capacity_bytes() // 4, 100 << 20))


def _round_up(x, m):
    return (x + m - 1) // m * m


# ------------------------------- Pallas kernels -------------------------------
def _make_conv_relu_lrn_kernel(n_paths):
    """o = LRN(relu(sum_i P_i @ W_i + bias)).

    P_i / W_i are bf16 (f32 MXU accumulation); the epilogue stays f32 (v5e has
    no bf16 VALU/EUP).  The LRN window sum over the 128-channel lane axis is 4
    XLU lane rotations (+-1, +-2 expressed as positive shifts); the circular
    wrap lands on the zero-padded channels, matching PyTorch's zero channel
    padding exactly (requires n_filter <= NPAD-4).  beta=0.5 -> one rsqrt.
    """
    def kernel(*refs):
        p_refs = refs[:n_paths]
        w_refs = refs[n_paths:2 * n_paths]
        b_ref = refs[2 * n_paths]
        o_ref = refs[2 * n_paths + 1]
        acc = jnp.dot(p_refs[0][...], w_refs[0][...],
                      preferred_element_type=jnp.float32)
        for i in range(1, n_paths):
            acc = acc + jnp.dot(p_refs[i][...], w_refs[i][...],
                                preferred_element_type=jnp.float32)
        acc = jnp.maximum(acc + b_ref[...], 0.0)
        sq = acc * acc
        s = sq
        for sh in (1, 2, NPAD - 1, NPAD - 2):      # +-1, +-2 lane rotations
            s = s + pltpu.roll(sq, shift=sh, axis=1)
        o_ref[...] = (acc * lax.rsqrt(LRN_K + (LRN_ALPHA / LRN_SIZE) * s)
                      ).astype(o_ref.dtype)
    return kernel


def _readout_kernel(x_ref, w1_ref, b1_ref, w2_ref, b2_ref, w3_ref, b3_ref, o_ref):
    """Fused Lin_1 -> relu -> Lin_2 -> relu -> Lin_3 (bf16 MXU, f32 accumulate)."""
    h = jnp.dot(x_ref[...], w1_ref[...],
                preferred_element_type=jnp.float32) + b1_ref[...]
    h = jnp.maximum(h, 0.0).astype(jnp.bfloat16)
    h = jnp.dot(h, w2_ref[...],
                preferred_element_type=jnp.float32) + b2_ref[...]
    h = jnp.maximum(h, 0.0).astype(jnp.bfloat16)
    o_ref[...] = jnp.dot(h, w3_ref[...],
                         preferred_element_type=jnp.float32) + b3_ref[...]


# ------------------------------- kernel wrappers ------------------------------
def conv_relu_lrn(patch_list, w_list, bias):
    """y = LRN(relu(sum_i patches_i @ w_i + bias)), M-tiled, lane-dense output."""
    M = int(patch_list[0].shape[0])
    ks = [int(p.shape[1]) for p in patch_list]
    n_paths = len(patch_list)

    cap = _tile_m_cap()
    if M <= 256:
        tm = M                                        # tiny: one full-extent block
    else:
        # >=2 blocks so v7x megacore can shard; capped for VMEM on all gens.
        tm = min(cap, _round_up((M + 1) // 2, 8))
    n_blocks = (M + tm - 1) // tm                     # ragged last block is masked

    in_specs = [pl.BlockSpec((tm, kk), lambda i: (i, 0)) for kk in ks]
    in_specs += [pl.BlockSpec((kk, NPAD), lambda i: (0, 0)) for kk in ks]
    in_specs += [pl.BlockSpec((1, NPAD), lambda i: (0, 0))]

    k_tot = sum(ks)
    cost = pl.CostEstimate(
        flops=2 * M * k_tot * NPAD + 10 * M * NPAD,
        transcendentals=M * NPAD,
        bytes_accessed=2 * M * k_tot + 2 * k_tot * NPAD + 2 * M * NPAD + 4 * NPAD)

    return pl.pallas_call(
        _make_conv_relu_lrn_kernel(n_paths),
        out_shape=jax.ShapeDtypeStruct((M, NPAD), jnp.bfloat16),
        grid=(n_blocks,),
        in_specs=in_specs,
        out_specs=pl.BlockSpec((tm, NPAD), lambda i: (i, 0)),
        compiler_params=pltpu.CompilerParams(
            dimension_semantics=("parallel",),
            vmem_limit_bytes=_vmem_limit_bytes()),
        cost_estimate=cost,
    )(*patch_list, *w_list, bias)


def readout(packed, a3, z_out, tile_n=512):
    """Fused 3-layer linear head on A3 = LRN(relu(Z3)); batch-tiled, bf16 MXU."""
    N = a3.shape[0]
    flat = a3.reshape(N, -1)                 # bf16 (N, 16*C) HWC order (folded into Lin_1)
    Kin = int(flat.shape[1])
    tn = N if N <= tile_n else tile_n
    n_blocks = (N + tn - 1) // tn
    cost = pl.CostEstimate(
        flops=2 * N * (Kin * 256 + 256 * 256 + 256 * ZPAD),
        transcendentals=0,
        bytes_accessed=(2 * N * Kin + 2 * (Kin * 256 + 256 * 256 + 256 * ZPAD)
                        + 4 * N * ZPAD + 4 * (256 + 256 + ZPAD)))
    out = pl.pallas_call(
        _readout_kernel,
        out_shape=jax.ShapeDtypeStruct((N, ZPAD), jnp.float32),
        grid=(n_blocks,),
        in_specs=[pl.BlockSpec((tn, Kin), lambda i: (i, 0)),
                  pl.BlockSpec((Kin, 256), lambda i: (0, 0)),
                  pl.BlockSpec((1, 256), lambda i: (0, 0)),
                  pl.BlockSpec((256, 256), lambda i: (0, 0)),
                  pl.BlockSpec((1, 256), lambda i: (0, 0)),
                  pl.BlockSpec((256, ZPAD), lambda i: (0, 0)),
                  pl.BlockSpec((1, ZPAD), lambda i: (0, 0))],
        out_specs=pl.BlockSpec((tn, ZPAD), lambda i: (i, 0)),
        compiler_params=pltpu.CompilerParams(
            dimension_semantics=("parallel",),
            vmem_limit_bytes=_vmem_limit_bytes()),
        cost_estimate=cost,
    )(flat, packed["lin1_w"], packed["lin1_b"],
      packed["lin2_w"], packed["lin2_b"],
      packed["lin3_w"], packed["lin3_b"])
    return out[:, :z_out]


# ------------------------------- im2col glue (XLA) ----------------------------
def _im2col(x, K, stride, padding):
    """NHWC -> (N*Ho*Wo, K*K*Cin) patches, flatten order (kh, kw, cin)."""
    N, H, W, Cin = x.shape
    Ho = (H + 2 * padding - K) // stride + 1
    Wo = (W + 2 * padding - K) // stride + 1
    xp = jnp.pad(x, ((0, 0), (padding, padding), (padding, padding), (0, 0)))
    cols = []
    for kh in range(K):
        for kw in range(K):
            cols.append(lax.slice(
                xp, (0, kh, kw, 0),
                (N, kh + (Ho - 1) * stride + 1, kw + (Wo - 1) * stride + 1, Cin),
                (1, stride, stride, 1)))
    patches = jnp.stack(cols, axis=3).reshape(N * Ho * Wo, K * K * Cin)
    return patches, Ho, Wo


def _im2col_transpose(x, K, stride, padding):
    """Patches for ConvTranspose2d(K, stride, padding, bias=False) via zero dilation."""
    # TODO(synk): sub-pixel (parity) decomposition would avoid 75% structural
    # zeros in these patches; kept as dilation to preserve one fused matmul.
    N, H, W, C = x.shape
    Hd, Wd = (H - 1) * stride + 1, (W - 1) * stride + 1
    xd = jnp.zeros((N, Hd, Wd, C), x.dtype).at[:, ::stride, ::stride, :].set(x)
    return _im2col(xd, K, 1, K - 1 - padding)


def _conv_block(patch_list, w_list, bias, N, Ho, Wo, n_filter):
    ps = [p.astype(jnp.bfloat16) for p in patch_list]
    y = conv_relu_lrn(ps, w_list, bias)
    return y[:, :n_filter].reshape(N, Ho, Wo, n_filter)


# ------------------------------- parameters -----------------------------------
def _kaiming(key, shape, fan_in):
    return jax.random.normal(key, shape, jnp.float32) * jnp.sqrt(2.0 / fan_in)


def init_params(key, encoder_type, z_dim_bern, z_dim_gauss, n_filter, nc, k):
    keys = jax.random.split(key, 16)
    z_out = z_dim_bern + 2 * z_dim_gauss
    p = {}
    p["W_b_1"] = _kaiming(keys[0], (n_filter, nc, k, k), nc * k * k)
    p["b_b_1"] = jnp.zeros((n_filter,), jnp.float32)
    p["W_b_2"] = _kaiming(keys[1], (n_filter, n_filter, k, k), n_filter * k * k)
    p["b_b_2"] = jnp.zeros((n_filter,), jnp.float32)
    p["W_b_3"] = _kaiming(keys[2], (n_filter, n_filter, k, k), n_filter * k * k)
    p["b_b_3"] = jnp.zeros((n_filter,), jnp.float32)
    if encoder_type in ("BL", "BLT"):
        p["W_l_1"] = _kaiming(keys[3], (n_filter, n_filter, 3, 3), n_filter * 9)
        p["W_l_2"] = _kaiming(keys[4], (n_filter, n_filter, 3, 3), n_filter * 9)
        p["W_l_3"] = _kaiming(keys[5], (n_filter, n_filter, 3, 3), n_filter * 9)
    if encoder_type in ("BT", "BLT"):
        p["W_t_1"] = _kaiming(keys[6], (n_filter, n_filter, 4, 4), n_filter * 16)
        p["W_t_2"] = _kaiming(keys[7], (n_filter, n_filter, 4, 4), n_filter * 16)
    p["Lin_1_w"] = _kaiming(keys[8], (256, n_filter * 4 * 4), n_filter * 16)
    p["Lin_1_b"] = jnp.zeros((256,), jnp.float32)
    p["Lin_2_w"] = _kaiming(keys[9], (256, 256), 256)
    p["Lin_2_b"] = jnp.zeros((256,), jnp.float32)
    p["Lin_3_w"] = _kaiming(keys[10], (z_out, 256), 256)
    p["Lin_3_b"] = jnp.zeros((z_out,), jnp.float32)
    return p


def pack_params(params, encoder_type, n_filter, z_out):
    """One-time packing: per-path im2col weight matrices (lane-padded to 128,
    bf16), and the linear head with the NCHW flatten folded into Lin_1."""
    assert n_filter <= NPAD - (LRN_SIZE - 1) and z_out <= ZPAD

    def conv_mat(w):            # Conv2d weight (Cout,Cin,K,K) -> (K*K*Cin, Cout)
        return jnp.transpose(w, (2, 3, 1, 0)).reshape(-1, w.shape[0])

    def tconv_mat(wt):          # ConvTranspose2d (Cin,Cout,K,K) -> equivalent conv mat
        wc = jnp.transpose(wt[:, :, ::-1, ::-1], (1, 0, 2, 3))
        return conv_mat(wc)

    def pad_cols(m):
        return jnp.pad(m, ((0, 0), (0, NPAD - m.shape[1]))).astype(jnp.bfloat16)

    packed = {}
    packed["bias"] = {
        i: jnp.pad(params[f"b_b_{i}"], (0, NPAD - n_filter)).reshape(1, NPAD)
              .astype(jnp.float32)
        for i in (1, 2, 3)}
    packed["wb"] = {i: pad_cols(conv_mat(params[f"W_b_{i}"])) for i in (1, 2, 3)}
    if encoder_type in ("BL", "BLT"):
        packed["wl"] = {i: pad_cols(conv_mat(params[f"W_l_{i}"])) for i in (1, 2, 3)}
    if encoder_type in ("BT", "BLT"):
        packed["wt"] = {i: pad_cols(tconv_mat(params[f"W_t_{i}"])) for i in (1, 2)}

    # Linear head: fold torch's NCHW .view() into Lin_1 rows (c,h,w)->(h,w,c),
    # pre-transpose all weights, store bf16, pad Lin_3 to a lane-dense 128.
    C = n_filter
    w1 = params["Lin_1_w"].T.reshape(C, 4, 4, 256)
    packed["lin1_w"] = jnp.transpose(w1, (1, 2, 0, 3)).reshape(C * 16, 256).astype(jnp.bfloat16)
    packed["lin1_b"] = params["Lin_1_b"].reshape(1, 256).astype(jnp.float32)
    packed["lin2_w"] = params["Lin_2_w"].T.astype(jnp.bfloat16)
    packed["lin2_b"] = params["Lin_2_b"].reshape(1, 256).astype(jnp.float32)
    packed["lin3_w"] = jnp.pad(params["Lin_3_w"].T, ((0, 0), (0, ZPAD - z_out))).astype(jnp.bfloat16)
    packed["lin3_b"] = jnp.pad(params["Lin_3_b"], (0, ZPAD - z_out)).reshape(1, ZPAD).astype(jnp.float32)
    return packed


# ------------------------------- forward --------------------------------------
def multi_encoder_forward(packed, x_nchw, encoder_type, n_rep, n_filter, k, pad, z_out):
    x = jnp.transpose(x_nchw, (0, 2, 3, 1)).astype(jnp.bfloat16)    # NCHW -> NHWC
    N = x.shape[0]
    bias, Wb = packed["bias"], packed["wb"]
    Wl = packed.get("wl")
    Wt = packed.get("wt")

    def block(plist, wlist, b, Ho, Wo):
        return _conv_block(plist, wlist, b, N, Ho, Wo, n_filter)

    # Loop-invariant bottom-up patches of the input (reused every timestep).
    Px, H1, W1 = _im2col(x, k, 2, pad)

    # ---- t = 0 feedforward pass (all encoder types) ----
    A1 = block([Px], [Wb[1]], bias[1], H1, W1)            # A_i = LRN(relu(Z_i))
    Pb2, H2, W2 = _im2col(A1, k, 2, pad)
    A2 = block([Pb2], [Wb[2]], bias[2], H2, W2)
    Pb3, H3, W3 = _im2col(A2, k, 2, pad)
    A3 = block([Pb3], [Wb[3]], bias[3], H3, W3)
    outs = [readout(packed, A3, z_out)]

    if encoder_type == "B":
        return outs

    for _ in range(1, n_rep):
        if encoder_type == "BL":
            Pl1, _, _ = _im2col(A1, 3, 1, 1)
            A1 = block([Px, Pl1], [Wb[1], Wl[1]], bias[1], H1, W1)
            Pb2, _, _ = _im2col(A1, k, 2, pad)
            Pl2, _, _ = _im2col(A2, 3, 1, 1)
            A2 = block([Pb2, Pl2], [Wb[2], Wl[2]], bias[2], H2, W2)
            Pb3, _, _ = _im2col(A2, k, 2, pad)
            Pl3, _, _ = _im2col(A3, 3, 1, 1)
            A3 = block([Pb3, Pl3], [Wb[3], Wl[3]], bias[3], H3, W3)
        elif encoder_type == "BT":
            Pt1, _, _ = _im2col_transpose(A2, 4, 2, 1)
            A1 = block([Px, Pt1], [Wb[1], Wt[1]], bias[1], H1, W1)
            Pb2, _, _ = _im2col(A1, k, 2, pad)
            Pt2, _, _ = _im2col_transpose(A3, 4, 2, 1)
            A2 = block([Pb2, Pt2], [Wb[2], Wt[2]], bias[2], H2, W2)
            Pb3, _, _ = _im2col(A2, k, 2, pad)
            A3 = block([Pb3], [Wb[3]], bias[3], H3, W3)
        else:  # BLT
            Pl1, _, _ = _im2col(A1, 3, 1, 1)
            Pt1, _, _ = _im2col_transpose(A2, 4, 2, 1)
            A1 = block([Px, Pl1, Pt1], [Wb[1], Wl[1], Wt[1]], bias[1], H1, W1)
            Pb2, _, _ = _im2col(A1, k, 2, pad)
            Pl2, _, _ = _im2col(A2, 3, 1, 1)
            Pt2, _, _ = _im2col_transpose(A3, 4, 2, 1)
            A2 = block([Pb2, Pl2, Pt2], [Wb[2], Wl[2], Wt[2]], bias[2], H2, W2)
            Pb3, _, _ = _im2col(A2, k, 2, pad)
            Pl3, _, _ = _im2col(A3, 3, 1, 1)
            A3 = block([Pb3, Pl3], [Wb[3], Wl[3]], bias[3], H3, W3)
        outs.append(readout(packed, A3, z_out))
    return outs


# --------------------------- pure-JAX f32 reference ----------------------------
def reference_forward(params, x, encoder_type, n_rep, n_filter, pad):
    """Straight NCHW/f32 port of the PyTorch forward, for tolerance checking."""
    dn = ("NCHW", "OIHW", "NCHW")

    def conv(inp, w, b, stride, p):
        y = lax.conv_general_dilated(inp, w, (stride, stride), [(p, p), (p, p)],
                                     dimension_numbers=dn)
        return y if b is None else y + b.reshape(1, -1, 1, 1)

    def tconv(inp, wt, kk, stride, p):
        w = jnp.transpose(wt, (1, 0, 2, 3))[:, :, ::-1, ::-1]
        q = kk - 1 - p
        return lax.conv_general_dilated(inp, w, (1, 1), [(q, q), (q, q)],
                                        lhs_dilation=(stride, stride),
                                        dimension_numbers=dn)

    def lrn(v):
        sq = v * v
        padded = jnp.pad(sq, ((0, 0), (2, 2), (0, 0), (0, 0)))
        s = sum(padded[:, i:i + v.shape[1]] for i in range(LRN_SIZE))
        return v * lax.rsqrt(LRN_K + (LRN_ALPHA / LRN_SIZE) * s)

    def head(z3):
        a = lrn(jax.nn.relu(z3)).reshape(z3.shape[0], -1)
        h = jax.nn.relu(a @ params["Lin_1_w"].T + params["Lin_1_b"])
        h = jax.nn.relu(h @ params["Lin_2_w"].T + params["Lin_2_b"])
        return h @ params["Lin_3_w"].T + params["Lin_3_b"]

    A = lambda z: lrn(jax.nn.relu(z))
    Cb = lambda i, inp: conv(inp, params[f"W_b_{i}"], params[f"b_b_{i}"], 2, pad)
    Cl = lambda i, inp: conv(inp, params[f"W_l_{i}"], None, 1, 1)
    Ct = lambda i, inp: tconv(inp, params[f"W_t_{i}"], 4, 2, 1)

    outs = []
    Z1 = Cb(1, x); Z2 = Cb(2, A(Z1)); Z3 = Cb(3, A(Z2)); outs.append(head(Z3))
    if encoder_type == "B":
        return outs
    for _ in range(1, n_rep):
        if encoder_type == "BL":
            Z1n = Cb(1, x) + Cl(1, A(Z1))
            Z2n = Cb(2, A(Z1n)) + Cl(2, A(Z2))
            Z3n = Cb(3, A(Z2n)) + Cl(3, A(Z3))
        elif encoder_type == "BT":
            Z1n = Cb(1, x) + Ct(1, A(Z2))
            Z2n = Cb(2, A(Z1n)) + Ct(2, A(Z3))
            Z3n = Cb(3, A(Z2n))
        else:  # BLT
            Z1n = Cb(1, x) + Cl(1, A(Z1)) + Ct(1, A(Z2))
            Z2n = Cb(2, A(Z1n)) + Cl(2, A(Z2)) + Ct(2, A(Z3))
            Z3n = Cb(3, A(Z2n)) + Cl(3, A(Z3))
        Z1, Z2, Z3 = Z1n, Z2n, Z3n
        outs.append(head(Z3))
    return outs


# ------------------------------- main ------------------------------------------
if __name__ == "__main__":
    encoder_type = "BLT"
    z_dim_bern, z_dim_gauss = 8, 12
    n_filter, nc, n_rep, k, pad = 32, 3, 2, 4, 1
    batch = 2
    z_out = z_dim_bern + 2 * z_dim_gauss

    key = jax.random.PRNGKey(0)
    k_param, k_x = jax.random.split(key)
    params = init_params(k_param, encoder_type, z_dim_bern, z_dim_gauss, n_filter, nc, k)
    packed = pack_params(params, encoder_type, n_filter, z_out)
    # Spatial size 32 so three stride-2 convs reach 4x4 (Lin_1 fan-in = n_filter*4*4).
    x = jax.random.normal(k_x, (batch, nc, 32, 32), jnp.float32)

    fwd = jax.jit(functools.partial(
        multi_encoder_forward,
        encoder_type=encoder_type, n_rep=n_rep, n_filter=n_filter,
        k=k, pad=pad, z_out=z_out))
    zs = jax.block_until_ready(fwd(packed, x))

    expected = (batch, z_out)
    assert len(zs) == n_rep and all(z.shape == expected for z in zs), \
        (len(zs), [z.shape for z in zs])
    assert all(bool(jnp.all(jnp.isfinite(z))) for z in zs)

    # Tolerance check vs. an f32 pure-JAX port of the PyTorch forward
    # (bf16 storage of patches/weights/carried activations causes small drift).
    refs = reference_forward(params, x, encoder_type, n_rep, n_filter, pad)
    for z, r in zip(zs, refs):
        rel = float(jnp.max(jnp.abs(z - r)) / (jnp.max(jnp.abs(r)) + 1e-6))
        assert rel < 0.1, rel

    print("KERNEL_OK")
</pallas_src>

<mosaic_0001>
module attributes {stable_mosaic.version = 11 : i64} {
  func.func @kernel(%arg0: i32, %arg1: memref<256x48xbf16, #tpu.memory_space<vmem>>, %arg2: memref<48x128xbf16, #tpu.memory_space<vmem>>, %arg3: memref<1x128xf32, #tpu.memory_space<vmem>>, %arg4: memref<256x128xbf16, #tpu.memory_space<vmem>>) attributes {dimension_semantics = [#tpu.dimension_semantics<parallel>], iteration_bounds = array<i64: 2>, scalar_prefetch = 0 : i64, scratch_operands = 0 : i64, tpu.core_type = #tpu.core_type<tc>, window_params = [{transform_indices = @transform_0, window_bounds = array<i64: 256, 48>}, {pipeline_mode = #tpu.pipeline_mode<synchronous>, transform_indices = @transform_1, window_bounds = array<i64: 48, 128>}, {pipeline_mode = #tpu.pipeline_mode<synchronous>, transform_indices = @transform_2, window_bounds = array<i64: 1, 128>}, {transform_indices = @transform_3, window_bounds = array<i64: 256, 128>}]} {
    %c0 = arith.constant 0 : index
    %c0_0 = arith.constant 0 : index
    %0 = vector.load %arg1[%c0, %c0_0] : memref<256x48xbf16, #tpu.memory_space<vmem>>, vector<256x48xbf16>
    %c0_1 = arith.constant 0 : index
    %c0_2 = arith.constant 0 : index
    %1 = vector.load %arg2[%c0_1, %c0_2] : memref<48x128xbf16, #tpu.memory_space<vmem>>, vector<48x128xbf16>
    %cst = arith.constant dense<0.000000e+00> : vector<256x128xf32>
    %2 = tpu.matmul %0, %1, %cst {dimension_numbers = #tpu.dot_dimension_numbers<[1], [0], [0], [1], [0, 0, 1, 1], [], []>} : vector<256x48xbf16>, vector<48x128xbf16>, vector<256x128xf32> -> vector<256x128xf32>
    %c0_3 = arith.constant 0 : index
    %c0_4 = arith.constant 0 : index
    %3 = vector.load %arg3[%c0_3, %c0_4] : memref<1x128xf32, #tpu.memory_space<vmem>>, vector<1x128xf32>
    %4 = vector.broadcast %3 : vector<1x128xf32> to vector<256x128xf32>
    %5 = arith.addf %2, %4 : vector<256x128xf32>
    %cst_5 = arith.constant 0.000000e+00 : f32
    %6 = vector.broadcast %cst_5 : f32 to vector<256x128xf32>
    %7 = arith.maximumf %5, %6 : vector<256x128xf32>
    %8 = arith.mulf %7, %7 : vector<256x128xf32>
    %c1_i32 = arith.constant 1 : i32
    %9 = tpu.dynamic_rotate %8 by %c1_i32 dim 1 : vector<256x128xf32>, i32 -> vector<256x128xf32>
    %10 = arith.addf %8, %9 : vector<256x128xf32>
    %c2_i32 = arith.constant 2 : i32
    %11 = tpu.dynamic_rotate %8 by %c2_i32 dim 1 : vector<256x128xf32>, i32 -> vector<256x128xf32>
    %12 = arith.addf %10, %11 : vector<256x128xf32>
    %c127_i32 = arith.constant 127 : i32
    %13 = tpu.dynamic_rotate %8 by %c127_i32 dim 1 : vector<256x128xf32>, i32 -> vector<256x128xf32>
    %14 = arith.addf %12, %13 : vector<256x128xf32>
    %c126_i32 = arith.constant 126 : i32
    %15 = tpu.dynamic_rotate %8 by %c126_i32 dim 1 : vector<256x128xf32>, i32 -> vector<256x128xf32>
    %16 = arith.addf %14, %15 : vector<256x128xf32>
    %cst_6 = arith.constant 2.000000e-04 : f32
    %17 = vector.broadcast %cst_6 : f32 to vector<256x128xf32>
    %18 = arith.mulf %17, %16 : vector<256x128xf32>
    %cst_7 = arith.constant 1.000000e+00 : f32
    %19 = vector.broadcast %cst_7 : f32 to vector<256x128xf32>
    %20 = arith.addf %19, %18 : vector<256x128xf32>
    %21 = math.rsqrt %20 : vector<256x128xf32>
    %22 = arith.mulf %7, %21 : vector<256x128xf32>
    %23 = arith.truncf %22 : vector<256x128xf32> to vector<256x128xbf16>
    %c0_8 = arith.constant 0 : index
    %c0_9 = arith.constant 0 : index
    %24 = vector.load %arg4[%c0_8, %c0_9] : memref<256x128xbf16, #tpu.memory_space<vmem>>, vector<256x128xbf16>
    tpu.vector_store %arg4[%c0_8, %c0_9], %23 {strides = array<i32>} : memref<256x128xbf16, #tpu.memory_space<vmem>>, vector<256x128xbf16>,
    return
  }
  func.func @transform_0(%arg0: i32) -> (i32, i32) {
    %c0_i32 = arith.constant 0 : i32
    %c0_i32_0 = arith.constant 0 : i32
    return %arg0, %c0_i32 : i32, i32
  }
  func.func @transform_1(%arg0: i32) -> (i32, i32) {
    %c0_i32 = arith.constant 0 : i32
    %c0_i32_0 = arith.constant 0 : i32
    %c0_i32_1 = arith.constant 0 : i32
    return %c0_i32, %c0_i32_0 : i32, i32
  }
  func.func @transform_2(%arg0: i32) -> (i32, i32) {
    %c0_i32 = arith.constant 0 : i32
    %c0_i32_0 = arith.constant 0 : i32
    %c0_i32_1 = arith.constant 0 : i32
    return %c0_i32, %c0_i32_0 : i32, i32
  }
  func.func @transform_3(%arg0: i32) -> (i32, i32) {
    %c0_i32 = arith.constant 0 : i32
    %c0_i32_0 = arith.constant 0 : i32
    return %arg0, %c0_i32 : i32, i32
  }
}

module attributes {stable_mosaic.version = 11 : i64} {
  func.func @kernel(%arg0: i32, %arg1: memref<128x512xbf16, #tpu.memory_space<vmem>>, %arg2: memref<512x128xbf16, #tpu.memory_space<vmem>>, %arg3: memref<1x128xf32, #tpu.memory_space<vmem>>, %arg4: memref<128x128xbf16, #tpu.memory_space<vmem>>) attributes {dimension_semantics = [#tpu.dimension_semantics<parallel>], iteration_bounds = array<i64: 1>, scalar_prefetch = 0 : i64, scratch_operands = 0 : i64, tpu.core_type = #tpu.core_type<tc>, window_params = [{transform_indices = @transform_0, window_bounds = array<i64: 128, 512>}, {pipeline_mode = #tpu.pipeline_mode<synchronous>, transform_indices = @transform_1, window_bounds = array<i64: 512, 128>}, {pipeline_mode = #tpu.pipeline_mode<synchronous>, transform_indices = @transform_2, window_bounds = array<i64: 1, 128>}, {transform_indices = @transform_3, window_bounds = array<i64: 128, 128>}]} {
    %c0 = arith.constant 0 : index
    %c0_0 = arith.constant 0 : index
    %0 = vector.load %arg1[%c0, %c0_0] : memref<128x512xbf16, #tpu.memory_space<vmem>>, vector<128x512xbf16>
    %c0_1 = arith.constant 0 : index
    %c0_2 = arith.constant 0 : index
    %1 = vector.load %arg2[%c0_1, %c0_2] : memref<512x128xbf16, #tpu.memory_space<vmem>>, vector<512x128xbf16>
    %cst = arith.constant dense<0.000000e+00> : vector<128x128xf32>
    %2 = tpu.matmul %0, %1, %cst {dimension_numbers = #tpu.dot_dimension_numbers<[1], [0], [0], [1], [0, 0, 1, 1], [], []>} : vector<128x512xbf16>, vector<512x128xbf16>, vector<128x128xf32> -> vector<128x128xf32>
    %c0_3 = arith.constant 0 : index
    %c0_4 = arith.constant 0 : index
    %3 = vector.load %arg3[%c0_3, %c0_4] : memref<1x128xf32, #tpu.memory_space<vmem>>, vector<1x128xf32>
    %4 = vector.broadcast %3 : vector<1x128xf32> to vector<128x128xf32>
    %5 = arith.addf %2, %4 : vector<128x128xf32>
    %cst_5 = arith.constant 0.000000e+00 : f32
    %6 = vector.broadcast %cst_5 : f32 to vector<128x128xf32>
    %7 = arith.maximumf %5, %6 : vector<128x128xf32>
    %8 = arith.mulf %7, %7 : vector<128x128xf32>
    %c1_i32 = arith.constant 1 : i32
    %9 = tpu.dynamic_rotate %8 by %c1_i32 dim 1 : vector<128x128xf32>, i32 -> vector<128x128xf32>
    %10 = arith.addf %8, %9 : vector<128x128xf32>
    %c2_i32 = arith.constant 2 : i32
    %11 = tpu.dynamic_rotate %8 by %c2_i32 dim 1 : vector<128x128xf32>, i32 -> vector<128x128xf32>
    %12 = arith.addf %10, %11 : vector<128x128xf32>
    %c127_i32 = arith.constant 127 : i32
    %13 = tpu.dynamic_rotate %8 by %c127_i32 dim 1 : vector<128x128xf32>, i32 -> vector<128x128xf32>
    %14 = arith.addf %12, %13 : vector<128x128xf32>
    %c126_i32 = arith.constant 126 : i32
    %15 = tpu.dynamic_rotate %8 by %c126_i32 dim 1 : vector<128x128xf32>, i32 -> vector<128x128xf32>
    %16 = arith.addf %14, %15 : vector<128x128xf32>
    %cst_6 = arith.constant 2.000000e-04 : f32
    %17 = vector.broadcast %cst_6 : f32 to vector<128x128xf32>
    %18 = arith.mulf %17, %16 : vector<128x128xf32>
    %cst_7 = arith.constant 1.000000e+00 : f32
    %19 = vector.broadcast %cst_7 : f32 to vector<128x128xf32>
    %20 = arith.addf %19, %18 : vector<128x128xf32>
    %21 = math.rsqrt %20 : vector<128x128xf32>
    %22 = arith.mulf %7, %21 : vector<128x128xf32>
    %23 = arith.truncf %22 : vector<128x128xf32> to vector<128x128xbf16>
    %c0_8 = arith.constant 0 : index
    %c0_9 = arith.constant 0 : index
    %24 = vector.load %arg4[%c0_8, %c0_9] : memref<128x128xbf16, #tpu.memory_space<vmem>>, vector<128x128xbf16>
    tpu.vector_store %arg4[%c0_8, %c0_9], %23 {strides = array<i32>} : memref<128x128xbf16, #tpu.memory_space<vmem>>, vector<128x128xbf16>,
    return
  }
  func.func @transform_0(%arg0: i32) -> (i32, i32) {
    %c0_i32 = arith.constant 0 : i32
    %c0_i32_0 = arith.constant 0 : i32
    return %arg0, %c0_i32 : i32, i32
  }
  func.func @transform_1(%arg0: i32) -> (i32, i32) {
    %c0_i32 = arith.constant 0 : i32
    %c0_i32_0 = arith.constant 0 : i32
    %c0_i32_1 = arith.constant 0 : i32
    return %c0_i32, %c0_i32_0 : i32, i32
  }
  func.func @transform_2(%arg0: i32) -> (i32, i32) {
    %c0_i32 = arith.constant 0 : i32
    %c0_i32_0 = arith.constant 0 : i32
    %c0_i32_1 = arith.constant 0 : i32
    return %c0_i32, %c0_i32_0 : i32, i32
  }
  func.func @transform_3(%arg0: i32) -> (i32, i32) {
    %c0_i32 = arith.constant 0 : i32
    %c0_i32_0 = arith.constant 0 : i32
    return %arg0, %c0_i32 : i32, i32
  }
}

module attributes {stable_mosaic.version = 11 : i64} {
  func.func @kernel(%arg0: i32, %arg1: memref<32x512xbf16, #tpu.memory_space<vmem>>, %arg2: memref<512x128xbf16, #tpu.memory_space<vmem>>, %arg3: memref<1x128xf32, #tpu.memory_space<vmem>>, %arg4: memref<32x128xbf16, #tpu.memory_space<vmem>>) attributes {dimension_semantics = [#tpu.dimension_semantics<parallel>], iteration_bounds = array<i64: 1>, scalar_prefetch = 0 : i64, scratch_operands = 0 : i64, tpu.core_type = #tpu.core_type<tc>, window_params = [{transform_indices = @transform_0, window_bounds = array<i64: 32, 512>}, {pipeline_mode = #tpu.pipeline_mode<synchronous>, transform_indices = @transform_1, window_bounds = array<i64: 512, 128>}, {pipeline_mode = #tpu.pipeline_mode<synchronous>, transform_indices = @transform_2, window_bounds = array<i64: 1, 128>}, {transform_indices = @transform_3, window_bounds = array<i64: 32, 128>}]} {
    %c0 = arith.constant 0 : index
    %c0_0 = arith.constant 0 : index
    %0 = vector.load %arg1[%c0, %c0_0] : memref<32x512xbf16, #tpu.memory_space<vmem>>, vector<32x512xbf16>
    %c0_1 = arith.constant 0 : index
    %c0_2 = arith.constant 0 : index
    %1 = vector.load %arg2[%c0_1, %c0_2] : memref<512x128xbf16, #tpu.memory_space<vmem>>, vector<512x128xbf16>
    %cst = arith.constant dense<0.000000e+00> : vector<32x128xf32>
    %2 = tpu.matmul %0, %1, %cst {dimension_numbers = #tpu.dot_dimension_numbers<[1], [0], [0], [1], [0, 0, 1, 1], [], []>} : vector<32x512xbf16>, vector<512x128xbf16>, vector<32x128xf32> -> vector<32x128xf32>
    %c0_3 = arith.constant 0 : index
    %c0_4 = arith.constant 0 : index
    %3 = vector.load %arg3[%c0_3, %c0_4] : memref<1x128xf32, #tpu.memory_space<vmem>>, vector<1x128xf32>
    %4 = vector.broadcast %3 : vector<1x128xf32> to vector<32x128xf32>
    %5 = arith.addf %2, %4 : vector<32x128xf32>
    %cst_5 = arith.constant 0.000000e+00 : f32
    %6 = vector.broadcast %cst_5 : f32 to vector<32x128xf32>
    %7 = arith.maximumf %5, %6 : vector<32x128xf32>
    %8 = arith.mulf %7, %7 : vector<32x128xf32>
    %c1_i32 = arith.constant 1 : i32
    %9 = tpu.dynamic_rotate %8 by %c1_i32 dim 1 : vector<32x128xf32>, i32 -> vector<32x128xf32>
    %10 = arith.addf %8, %9 : vector<32x128xf32>
    %c2_i32 = arith.constant 2 : i32
    %11 = tpu.dynamic_rotate %8 by %c2_i32 dim 1 : vector<32x128xf32>, i32 -> vector<32x128xf32>
    %12 = arith.addf %10, %11 : vector<32x128xf32>
    %c127_i32 = arith.constant 127 : i32
    %13 = tpu.dynamic_rotate %8 by %c127_i32 dim 1 : vector<32x128xf32>, i32 -> vector<32x128xf32>
    %14 = arith.addf %12, %13 : vector<32x128xf32>
    %c126_i32 = arith.constant 126 : i32
    %15 = tpu.dynamic_rotate %8 by %c126_i32 dim 1 : vector<32x128xf32>, i32 -> vector<32x128xf32>
    %16 = arith.addf %14, %15 : vector<32x128xf32>
    %cst_6 = arith.constant 2.000000e-04 : f32
    %17 = vector.broadcast %cst_6 : f32 to vector<32x128xf32>
    %18 = arith.mulf %17, %16 : vector<32x128xf32>
    %cst_7 = arith.constant 1.000000e+00 : f32
    %19 = vector.broadcast %cst_7 : f32 to vector<32x128xf32>
    %20 = arith.addf %19, %18 : vector<32x128xf32>
    %21 = math.rsqrt %20 : vector<32x128xf32>
    %22 = arith.mulf %7, %21 : vector<32x128xf32>
    %23 = arith.truncf %22 : vector<32x128xf32> to vector<32x128xbf16>
    %c0_8 = arith.constant 0 : index
    %c0_9 = arith.constant 0 : index
    %24 = vector.load %arg4[%c0_8, %c0_9] : memref<32x128xbf16, #tpu.memory_space<vmem>>, vector<32x128xbf16>
    tpu.vector_store %arg4[%c0_8, %c0_9], %23 {strides = array<i32>} : memref<32x128xbf16, #tpu.memory_space<vmem>>, vector<32x128xbf16>,
    return
  }
  func.func @transform_0(%arg0: i32) -> (i32, i32) {
    %c0_i32 = arith.constant 0 : i32
    %c0_i32_0 = arith.constant 0 : i32
    return %arg0, %c0_i32 : i32, i32
  }
  func.func @transform_1(%arg0: i32) -> (i32, i32) {
    %c0_i32 = arith.constant 0 : i32
    %c0_i32_0 = arith.constant 0 : i32
    %c0_i32_1 = arith.constant 0 : i32
    return %c0_i32, %c0_i32_0 : i32, i32
  }
  func.func @transform_2(%arg0: i32) -> (i32, i32) {
    %c0_i32 = arith.constant 0 : i32
    %c0_i32_0 = arith.constant 0 : i32
    %c0_i32_1 = arith.constant 0 : i32
    return %c0_i32, %c0_i32_0 : i32, i32
  }
  func.func @transform_3(%arg0: i32) -> (i32, i32) {
    %c0_i32 = arith.constant 0 : i32
    %c0_i32_0 = arith.constant 0 : i32
    return %arg0, %c0_i32 : i32, i32
  }
}

module attributes {stable_mosaic.version = 11 : i64} {
  func.func @kernel(%arg0: i32, %arg1: memref<256x48xbf16, #tpu.memory_space<vmem>>, %arg2: memref<256x288xbf16, #tpu.memory_space<vmem>>, %arg3: memref<256x512xbf16, #tpu.memory_space<vmem>>, %arg4: memref<48x128xbf16, #tpu.memory_space<vmem>>, %arg5: memref<288x128xbf16, #tpu.memory_space<vmem>>, %arg6: memref<512x128xbf16, #tpu.memory_space<vmem>>, %arg7: memref<1x128xf32, #tpu.memory_space<vmem>>, %arg8: memref<256x128xbf16, #tpu.memory_space<vmem>>) attributes {dimension_semantics = [#tpu.dimension_semantics<parallel>], iteration_bounds = array<i64: 2>, scalar_prefetch = 0 : i64, scratch_operands = 0 : i64, tpu.core_type = #tpu.core_type<tc>, window_params = [{transform_indices = @transform_0, window_bounds = array<i64: 256, 48>}, {transform_indices = @transform_1, window_bounds = array<i64: 256, 288>}, {transform_indices = @transform_2, window_bounds = array<i64: 256, 512>}, {pipeline_mode = #tpu.pipeline_mode<synchronous>, transform_indices = @transform_3, window_bounds = array<i64: 48, 128>}, {pipeline_mode = #tpu.pipeline_mode<synchronous>, transform_indices = @transform_4, window_bounds = array<i64: 288, 128>}, {pipeline_mode = #tpu.pipeline_mode<synchronous>, transform_indices = @transform_5, window_bounds = array<i64: 512, 128>}, {pipeline_mode = #tpu.pipeline_mode<synchronous>, transform_indices = @transform_6, window_bounds = array<i64: 1, 128>}, {transform_indices = @transform_7, window_bounds = array<i64: 256, 128>}]} {
    %c0 = arith.constant 0 : index
    %c0_0 = arith.constant 0 : index
    %0 = vector.load %arg1[%c0, %c0_0] : memref<256x48xbf16, #tpu.memory_space<vmem>>, vector<256x48xbf16>
    %c0_1 = arith.constant 0 : index
    %c0_2 = arith.constant 0 : index
    %1 = vector.load %arg4[%c0_1, %c0_2] : memref<48x128xbf16, #tpu.memory_space<vmem>>, vector<48x128xbf16>
    %cst = arith.constant dense<0.000000e+00> : vector<256x128xf32>
    %2 = tpu.matmul %0, %1, %cst {dimension_numbers = #tpu.dot_dimension_numbers<[1], [0], [0], [1], [0, 0, 1, 1], [], []>} : vector<256x48xbf16>, vector<48x128xbf16>, vector<256x128xf32> -> vector<256x128xf32>
    %c0_3 = arith.constant 0 : index
    %c0_4 = arith.constant 0 : index
    %3 = vector.load %arg2[%c0_3, %c0_4] : memref<256x288xbf16, #tpu.memory_space<vmem>>, vector<256x288xbf16>
    %c0_5 = arith.constant 0 : index
    %c0_6 = arith.constant 0 : index
    %4 = vector.load %arg5[%c0_5, %c0_6] : memref<288x128xbf16, #tpu.memory_space<vmem>>, vector<288x128xbf16>
    %cst_7 = arith.constant dense<0.000000e+00> : vector<256x128xf32>
    %5 = tpu.matmul %3, %4, %cst_7 {dimension_numbers = #tpu.dot_dimension_numbers<[1], [0], [0], [1], [0, 0, 1, 1], [], []>} : vector<256x288xbf16>, vector<288x128xbf16>, vector<256x128xf32> -> vector<256x128xf32>
    %6 = arith.addf %2, %5 : vector<256x128xf32>
    %c0_8 = arith.constant 0 : index
    %c0_9 = arith.constant 0 : index
    %7 = vector.load %arg3[%c0_8, %c0_9] : memref<256x512xbf16, #tpu.memory_space<vmem>>, vector<256x512xbf16>
    %c0_10 = arith.constant 0 : index
    %c0_11 = arith.constant 0 : index
    %8 = vector.load %arg6[%c0_10, %c0_11] : memref<512x128xbf16, #tpu.memory_space<vmem>>, vector<512x128xbf16>
    %cst_12 = arith.constant dense<0.000000e+00> : vector<256x128xf32>
    %9 = tpu.matmul %7, %8, %cst_12 {dimension_numbers = #tpu.dot_dimension_numbers<[1], [0], [0], [1], [0, 0, 1, 1], [], []>} : vector<256x512xbf16>, vector<512x128xbf16>, vector<256x128xf32> -> vector<256x128xf32>
    %10 = arith.addf %6, %9 : vector<256x128xf32>
    %c0_13 = arith.constant 0 : index
    %c0_14 = arith.constant 0 : index
    %11 = vector.load %arg7[%c0_13, %c0_14] : memref<1x128xf32, #tpu.memory_space<vmem>>, vector<1x128xf32>
    %12 = vector.broadcast %11 : vector<1x128xf32> to vector<256x128xf32>
    %13 = arith.addf %10, %12 : vector<256x128xf32>
    %cst_15 = arith.constant 0.000000e+00 : f32
    %14 = vector.broadcast %cst_15 : f32 to vector<256x128xf32>
    %15 = arith.maximumf %13, %14 : vector<256x128xf32>
    %16 = arith.mulf %15, %15 : vector<256x128xf32>
    %c1_i32 = arith.constant 1 : i32
    %17 = tpu.dynamic_rotate %16 by %c1_i32 dim 1 : vector<256x128xf32>, i32 -> vector<256x128xf32>
    %18 = arith.addf %16, %17 : vector<256x128xf32>
    %c2_i32 = arith.constant 2 : i32
    %19 = tpu.dynamic_rotate %16 by %c2_i32 dim 1 : vector<256x128xf32>, i32 -> vector<256x128xf32>
    %20 = arith.addf %18, %19 : vector<256x128xf32>
    %c127_i32 = arith.constant 127 : i32
    %21 = tpu.dynamic_rotate %16 by %c127_i32 dim 1 : vector<256x128xf32>, i32 -> vector<256x128xf32>
    %22 = arith.addf %20, %21 : vector<256x128xf32>
    %c126_i32 = arith.constant 126 : i32
    %23 = tpu.dynamic_rotate %16 by %c126_i32 dim 1 : vector<256x128xf32>, i32 -> vector<256x128xf32>
    %24 = arith.addf %22, %23 : vector<256x128xf32>
    %cst_16 = arith.constant 2.000000e-04 : f32
    %25 = vector.broadcast %cst_16 : f32 to vector<256x128xf32>
    %26 = arith.mulf %25, %24 : vector<256x128xf32>
    %cst_17 = arith.constant 1.000000e+00 : f32
    %27 = vector.broadcast %cst_17 : f32 to vector<256x128xf32>
    %28 = arith.addf %27, %26 : vector<256x128xf32>
    %29 = math.rsqrt %28 : vector<256x128xf32>
    %30 = arith.mulf %15, %29 : vector<256x128xf32>
    %31 = arith.truncf %30 : vector<256x128xf32> to vector<256x128xbf16>
    %c0_18 = arith.constant 0 : index
    %c0_19 = arith.constant 0 : index
    %32 = vector.load %arg8[%c0_18, %c0_19] : memref<256x128xbf16, #tpu.memory_space<vmem>>, vector<256x128xbf16>
    tpu.vector_store %arg8[%c0_18, %c0_19], %31 {strides = array<i32>} : memref<256x128xbf16, #tpu.memory_space<vmem>>, vector<256x128xbf16>,
    return
  }
  func.func @transform_0(%arg0: i32) -> (i32, i32) {
    %c0_i32 = arith.constant 0 : i32
    %c0_i32_0 = arith.constant 0 : i32
    return %arg0, %c0_i32 : i32, i32
  }
  func.func @transform_1(%arg0: i32) -> (i32, i32) {
    %c0_i32 = arith.constant 0 : i32
    %c0_i32_0 = arith.constant 0 : i32
    return %arg0, %c0_i32 : i32, i32
  }
  func.func @transform_2(%arg0: i32) -> (i32, i32) {
    %c0_i32 = arith.constant 0 : i32
    %c0_i32_0 = arith.constant 0 : i32
    return %arg0, %c0_i32 : i32, i32
  }
  func.func @transform_3(%arg0: i32) -> (i32, i32) {
    %c0_i32 = arith.constant 0 : i32
    %c0_i32_0 = arith.constant 0 : i32
    %c0_i32_1 = arith.constant 0 : i32
    return %c0_i32, %c0_i32_0 : i32, i32
  }
  func.func @transform_4(%arg0: i32) -> (i32, i32) {
    %c0_i32 = arith.constant 0 : i32
    %c0_i32_0 = arith.constant 0 : i32
    %c0_i32_1 = arith.constant 0 : i32
    return %c0_i32, %c0_i32_0 : i32, i32
  }
  func.func @transform_5(%arg0: i32) -> (i32, i32) {
    %c0_i32 = arith.constant 0 : i32
    %c0_i32_0 = arith.constant 0 : i32
    %c0_i32_1 = arith.constant 0 : i32
    return %c0_i32, %c0_i32_0 : i32, i32
  }
  func.func @transform_6(%arg0: i32) -> (i32, i32) {
    %c0_i32 = arith.constant 0 : i32
    %c0_i32_0 = arith.constant 0 : i32
    %c0_i32_1 = arith.constant 0 : i32
    return %c0_i32, %c0_i32_0 : i32, i32
  }
  func.func @transform_7(%arg0: i32) -> (i32, i32) {
    %c0_i32 = arith.constant 0 : i32
    %c0_i32_0 = arith.constant 0 : i32
    return %arg0, %c0_i32 : i32, i32
  }
}

module attributes {stable_mosaic.version = 11 : i64} {
  func.func @kernel(%arg0: i32, %arg1: memref<128x512xbf16, #tpu.memory_space<vmem>>, %arg2: memref<128x288xbf16, #tpu.memory_space<vmem>>, %arg3: memref<128x512xbf16, #tpu.memory_space<vmem>>, %arg4: memref<512x128xbf16, #tpu.memory_space<vmem>>, %arg5: memref<288x128xbf16, #tpu.memory_space<vmem>>, %arg6: memref<512x128xbf16, #tpu.memory_space<vmem>>, %arg7: memref<1x128xf32, #tpu.memory_space<vmem>>, %arg8: memref<128x128xbf16, #tpu.memory_space<vmem>>) attributes {dimension_semantics = [#tpu.dimension_semantics<parallel>], iteration_bounds = array<i64: 1>, scalar_prefetch = 0 : i64, scratch_operands = 0 : i64, tpu.core_type = #tpu.core_type<tc>, window_params = [{transform_indices = @transform_0, window_bounds = array<i64: 128, 512>}, {transform_indices = @transform_1, window_bounds = array<i64: 128, 288>}, {transform_indices = @transform_2, window_bounds = array<i64: 128, 512>}, {pipeline_mode = #tpu.pipeline_mode<synchronous>, transform_indices = @transform_3, window_bounds = array<i64: 512, 128>}, {pipeline_mode = #tpu.pipeline_mode<synchronous>, transform_indices = @transform_4, window_bounds = array<i64: 288, 128>}, {pipeline_mode = #tpu.pipeline_mode<synchronous>, transform_indices = @transform_5, window_bounds = array<i64: 512, 128>}, {pipeline_mode = #tpu.pipeline_mode<synchronous>, transform_indices = @transform_6, window_bounds = array<i64: 1, 128>}, {transform_indices = @transform_7, window_bounds = array<i64: 128, 128>}]} {
    %c0 = arith.constant 0 : index
    %c0_0 = arith.constant 0 : index
    %0 = vector.load %arg1[%c0, %c0_0] : memref<128x512xbf16, #tpu.memory_space<vmem>>, vector<128x512xbf16>
    %c0_1 = arith.constant 0 : index
    %c0_2 = arith.constant 0 : index
    %1 = vector.load %arg4[%c0_1, %c0_2] : memref<512x128xbf16, #tpu.memory_space<vmem>>, vector<512x128xbf16>
    %cst = arith.constant dense<0.000000e+00> : vector<128x128xf32>
    %2 = tpu.matmul %0, %1, %cst {dimension_numbers = #tpu.dot_dimension_numbers<[1], [0], [0], [1], [0, 0, 1, 1], [], []>} : vector<128x512xbf16>, vector<512x128xbf16>, vector<128x128xf32> -> vector<128x128xf32>
    %c0_3 = arith.constant 0 : index
    %c0_4 = arith.constant 0 : index
    %3 = vector.load %arg2[%c0_3, %c0_4] : memref<128x288xbf16, #tpu.memory_space<vmem>>, vector<128x288xbf16>
    %c0_5 = arith.constant 0 : index
    %c0_6 = arith.constant 0 : index
    %4 = vector.load %arg5[%c0_5, %c0_6] : memref<288x128xbf16, #tpu.memory_space<vmem>>, vector<288x128xbf16>
    %cst_7 = arith.constant dense<0.000000e+00> : vector<128x128xf32>
    %5 = tpu.matmul %3, %4, %cst_7 {dimension_numbers = #tpu.dot_dimension_numbers<[1], [0], [0], [1], [0, 0, 1, 1], [], []>} : vector<128x288xbf16>, vector<288x128xbf16>, vector<128x128xf32> -> vector<128x128xf32>
    %6 = arith.addf %2, %5 : vector<128x128xf32>
    %c0_8 = arith.constant 0 : index
    %c0_9 = arith.constant 0 : index
    %7 = vector.load %arg3[%c0_8, %c0_9] : memref<128x512xbf16, #tpu.memory_space<vmem>>, vector<128x512xbf16>
    %c0_10 = arith.constant 0 : index
    %c0_11 = arith.constant 0 : index
    %8 = vector.load %arg6[%c0_10, %c0_11] : memref<512x128xbf16, #tpu.memory_space<vmem>>, vector<512x128xbf16>
    %cst_12 = arith.constant dense<0.000000e+00> : vector<128x128xf32>
    %9 = tpu.matmul %7, %8, %cst_12 {dimension_numbers = #tpu.dot_dimension_numbers<[1], [0], [0], [1], [0, 0, 1, 1], [], []>} : vector<128x512xbf16>, vector<512x128xbf16>, vector<128x128xf32> -> vector<128x128xf32>
    %10 = arith.addf %6, %9 : vector<128x128xf32>
    %c0_13 = arith.constant 0 : index
    %c0_14 = arith.constant 0 : index
    %11 = vector.load %arg7[%c0_13, %c0_14] : memref<1x128xf32, #tpu.memory_space<vmem>>, vector<1x128xf32>
    %12 = vector.broadcast %11 : vector<1x128xf32> to vector<128x128xf32>
    %13 = arith.addf %10, %12 : vector<128x128xf32>
    %cst_15 = arith.constant 0.000000e+00 : f32
    %14 = vector.broadcast %cst_15 : f32 to vector<128x128xf32>
    %15 = arith.maximumf %13, %14 : vector<128x128xf32>
    %16 = arith.mulf %15, %15 : vector<128x128xf32>
    %c1_i32 = arith.constant 1 : i32
    %17 = tpu.dynamic_rotate %16 by %c1_i32 dim 1 : vector<128x128xf32>, i32 -> vector<128x128xf32>
    %18 = arith.addf %16, %17 : vector<128x128xf32>
    %c2_i32 = arith.constant 2 : i32
    %19 = tpu.dynamic_rotate %16 by %c2_i32 dim 1 : vector<128x128xf32>, i32 -> vector<128x128xf32>
    %20 = arith.addf %18, %19 : vector<128x128xf32>
    %c127_i32 = arith.constant 127 : i32
    %21 = tpu.dynamic_rotate %16 by %c127_i32 dim 1 : vector<128x128xf32>, i32 -> vector<128x128xf32>
    %22 = arith.addf %20, %21 : vector<128x128xf32>
    %c126_i32 = arith.constant 126 : i32
    %23 = tpu.dynamic_rotate %16 by %c126_i32 dim 1 : vector<128x128xf32>, i32 -> vector<128x128xf32>
    %24 = arith.addf %22, %23 : vector<128x128xf32>
    %cst_16 = arith.constant 2.000000e-04 : f32
    %25 = vector.broadcast %cst_16 : f32 to vector<128x128xf32>
    %26 = arith.mulf %25, %24 : vector<128x128xf32>
    %cst_17 = arith.constant 1.000000e+00 : f32
    %27 = vector.broadcast %cst_17 : f32 to vector<128x128xf32>
    %28 = arith.addf %27, %26 : vector<128x128xf32>
    %29 = math.rsqrt %28 : vector<128x128xf32>
    %30 = arith.mulf %15, %29 : vector<128x128xf32>
    %31 = arith.truncf %30 : vector<128x128xf32> to vector<128x128xbf16>
    %c0_18 = arith.constant 0 : index
    %c0_19 = arith.constant 0 : index
    %32 = vector.load %arg8[%c0_18, %c0_19] : memref<128x128xbf16, #tpu.memory_space<vmem>>, vector<128x128xbf16>
    tpu.vector_store %arg8[%c0_18, %c0_19], %31 {strides = array<i32>} : memref<128x128xbf16, #tpu.memory_space<vmem>>, vector<128x128xbf16>,
    return
  }
  func.func @transform_0(%arg0: i32) -> (i32, i32) {
    %c0_i32 = arith.constant 0 : i32
    %c0_i32_0 = arith.constant 0 : i32
    return %arg0, %c0_i32 : i32, i32
  }
  func.func @transform_1(%arg0: i32) -> (i32, i32) {
    %c0_i32 = arith.constant 0 : i32
    %c0_i32_0 = arith.constant 0 : i32
    return %arg0, %c0_i32 : i32, i32
  }
  func.func @transform_2(%arg0: i32) -> (i32, i32) {
    %c0_i32 = arith.constant 0 : i32
    %c0_i32_0 = arith.constant 0 : i32
    return %arg0, %c0_i32 : i32, i32
  }
  func.func @transform_3(%arg0: i32) -> (i32, i32) {
    %c0_i32 = arith.constant 0 : i32
    %c0_i32_0 = arith.constant 0 : i32
    %c0_i32_1 = arith.constant 0 : i32
    return %c0_i32, %c0_i32_0 : i32, i32
  }
  func.func @transform_4(%arg0: i32) -> (i32, i32) {
    %c0_i32 = arith.constant 0 : i32
    %c0_i32_0 = arith.constant 0 : i32
    %c0_i32_1 = arith.constant 0 : i32
    return %c0_i32, %c0_i32_0 : i32, i32
  }
  func.func @transform_5(%arg0: i32) -> (i32, i32) {
    %c0_i32 = arith.constant 0 : i32
    %c0_i32_0 = arith.constant 0 : i32
    %c0_i32_1 = arith.constant 0 : i32
    return %c0_i32, %c0_i32_0 : i32, i32
  }
  func.func @transform_6(%arg0: i32) -> (i32, i32) {
    %c0_i32 = arith.constant 0 : i32
    %c0_i32_0 = arith.constant 0 : i32
    %c0_i32_1 = arith.constant 0 : i32
    return %c0_i32, %c0_i32_0 : i32, i32
  }
  func.func @transform_7(%arg0: i32) -> (i32, i32) {
    %c0_i32 = arith.constant 0 : i32
    %c0_i32_0 = arith.constant 0 : i32
    return %arg0, %c0_i32 : i32, i32
  }
}

module attributes {stable_mosaic.version = 11 : i64} {
  func.func @kernel(%arg0: i32, %arg1: memref<32x512xbf16, #tpu.memory_space<vmem>>, %arg2: memref<32x288xbf16, #tpu.memory_space<vmem>>, %arg3: memref<512x128xbf16, #tpu.memory_space<vmem>>, %arg4: memref<288x128xbf16, #tpu.memory_space<vmem>>, %arg5: memref<1x128xf32, #tpu.memory_space<vmem>>, %arg6: memref<32x128xbf16, #tpu.memory_space<vmem>>) attributes {dimension_semantics = [#tpu.dimension_semantics<parallel>], iteration_bounds = array<i64: 1>, scalar_prefetch = 0 : i64, scratch_operands = 0 : i64, tpu.core_type = #tpu.core_type<tc>, window_params = [{transform_indices = @transform_0, window_bounds = array<i64: 32, 512>}, {transform_indices = @transform_1, window_bounds = array<i64: 32, 288>}, {pipeline_mode = #tpu.pipeline_mode<synchronous>, transform_indices = @transform_2, window_bounds = array<i64: 512, 128>}, {pipeline_mode = #tpu.pipeline_mode<synchronous>, transform_indices = @transform_3, window_bounds = array<i64: 288, 128>}, {pipeline_mode = #tpu.pipeline_mode<synchronous>, transform_indices = @transform_4, window_bounds = array<i64: 1, 128>}, {transform_indices = @transform_5, window_bounds = array<i64: 32, 128>}]} {
    %c0 = arith.constant 0 : index
    %c0_0 = arith.constant 0 : index
    %0 = vector.load %arg1[%c0, %c0_0] : memref<32x512xbf16, #tpu.memory_space<vmem>>, vector<32x512xbf16>
    %c0_1 = arith.constant 0 : index
    %c0_2 = arith.constant 0 : index
    %1 = vector.load %arg3[%c0_1, %c0_2] : memref<512x128xbf16, #tpu.memory_space<vmem>>, vector<512x128xbf16>
    %cst = arith.constant dense<0.000000e+00> : vector<32x128xf32>
    %2 = tpu.matmul %0, %1, %cst {dimension_numbers = #tpu.dot_dimension_numbers<[1], [0], [0], [1], [0, 0, 1, 1], [], []>} : vector<32x512xbf16>, vector<512x128xbf16>, vector<32x128xf32> -> vector<32x128xf32>
    %c0_3 = arith.constant 0 : index
    %c0_4 = arith.constant 0 : index
    %3 = vector.load %arg2[%c0_3, %c0_4] : memref<32x288xbf16, #tpu.memory_space<vmem>>, vector<32x288xbf16>
    %c0_5 = arith.constant 0 : index
    %c0_6 = arith.constant 0 : index
    %4 = vector.load %arg4[%c0_5, %c0_6] : memref<288x128xbf16, #tpu.memory_space<vmem>>, vector<288x128xbf16>
    %cst_7 = arith.constant dense<0.000000e+00> : vector<32x128xf32>
    %5 = tpu.matmul %3, %4, %cst_7 {dimension_numbers = #tpu.dot_dimension_numbers<[1], [0], [0], [1], [0, 0, 1, 1], [], []>} : vector<32x288xbf16>, vector<288x128xbf16>, vector<32x128xf32> -> vector<32x128xf32>
    %6 = arith.addf %2, %5 : vector<32x128xf32>
    %c0_8 = arith.constant 0 : index
    %c0_9 = arith.constant 0 : index
    %7 = vector.load %arg5[%c0_8, %c0_9] : memref<1x128xf32, #tpu.memory_space<vmem>>, vector<1x128xf32>
    %8 = vector.broadcast %7 : vector<1x128xf32> to vector<32x128xf32>
    %9 = arith.addf %6, %8 : vector<32x128xf32>
    %cst_10 = arith.constant 0.000000e+00 : f32
    %10 = vector.broadcast %cst_10 : f32 to vector<32x128xf32>
    %11 = arith.maximumf %9, %10 : vector<32x128xf32>
    %12 = arith.mulf %11, %11 : vector<32x128xf32>
    %c1_i32 = arith.constant 1 : i32
    %13 = tpu.dynamic_rotate %12 by %c1_i32 dim 1 : vector<32x128xf32>, i32 -> vector<32x128xf32>
    %14 = arith.addf %12, %13 : vector<32x128xf32>
    %c2_i32 = arith.constant 2 : i32
    %15 = tpu.dynamic_rotate %12 by %c2_i32 dim 1 : vector<32x128xf32>, i32 -> vector<32x128xf32>
    %16 = arith.addf %14, %15 : vector<32x128xf32>
    %c127_i32 = arith.constant 127 : i32
    %17 = tpu.dynamic_rotate %12 by %c127_i32 dim 1 : vector<32x128xf32>, i32 -> vector<32x128xf32>
    %18 = arith.addf %16, %17 : vector<32x128xf32>
    %c126_i32 = arith.constant 126 : i32
    %19 = tpu.dynamic_rotate %12 by %c126_i32 dim 1 : vector<32x128xf32>, i32 -> vector<32x128xf32>
    %20 = arith.addf %18, %19 : vector<32x128xf32>
    %cst_11 = arith.constant 2.000000e-04 : f32
    %21 = vector.broadcast %cst_11 : f32 to vector<32x128xf32>
    %22 = arith.mulf %21, %20 : vector<32x128xf32>
    %cst_12 = arith.constant 1.000000e+00 : f32
    %23 = vector.broadcast %cst_12 : f32 to vector<32x128xf32>
    %24 = arith.addf %23, %22 : vector<32x128xf32>
    %25 = math.rsqrt %24 : vector<32x128xf32>
    %26 = arith.mulf %11, %25 : vector<32x128xf32>
    %27 = arith.truncf %26 : vector<32x128xf32> to vector<32x128xbf16>
    %c0_13 = arith.constant 0 : index
    %c0_14 = arith.constant 0 : index
    %28 = vector.load %arg6[%c0_13, %c0_14] : memref<32x128xbf16, #tpu.memory_space<vmem>>, vector<32x128xbf16>
    tpu.vector_store %arg6[%c0_13, %c0_14], %27 {strides = array<i32>} : memref<32x128xbf16, #tpu.memory_space<vmem>>, vector<32x128xbf16>,
    return
  }
  func.func @transform_0(%arg0: i32) -> (i32, i32) {
    %c0_i32 = arith.constant 0 : i32
    %c0_i32_0 = arith.constant 0 : i32
    return %arg0, %c0_i32 : i32, i32
  }
  func.func @transform_1(%arg0: i32) -> (i32, i32) {
    %c0_i32 = arith.constant 0 : i32
    %c0_i32_0 = arith.constant 0 : i32
    return %arg0, %c0_i32 : i32, i32
  }
  func.func @transform_2(%arg0: i32) -> (i32, i32) {
    %c0_i32 = arith.constant 0 : i32
    %c0_i32_0 = arith.constant 0 : i32
    %c0_i32_1 = arith.constant 0 : i32
    return %c0_i32, %c0_i32_0 : i32, i32
  }
  func.func @transform_3(%arg0: i32) -> (i32, i32) {
    %c0_i32 = arith.constant 0 : i32
    %c0_i32_0 = arith.constant 0 : i32
    %c0_i32_1 = arith.constant 0 : i32
    return %c0_i32, %c0_i32_0 : i32, i32
  }
  func.func @transform_4(%arg0: i32) -> (i32, i32) {
    %c0_i32 = arith.constant 0 : i32
    %c0_i32_0 = arith.constant 0 : i32
    %c0_i32_1 = arith.constant 0 : i32
    return %c0_i32, %c0_i32_0 : i32, i32
  }
  func.func @transform_5(%arg0: i32) -> (i32, i32) {
    %c0_i32 = arith.constant 0 : i32
    %c0_i32_0 = arith.constant 0 : i32
    return %arg0, %c0_i32 : i32, i32
  }
}

module attributes {stable_mosaic.version = 11 : i64} {
  func.func @_readout_kernel(%arg0: i32, %arg1: memref<2x512xbf16, #tpu.memory_space<vmem>>, %arg2: memref<512x256xbf16, #tpu.memory_space<vmem>>, %arg3: memref<1x256xf32, #tpu.memory_space<vmem>>, %arg4: memref<256x256xbf16, #tpu.memory_space<vmem>>, %arg5: memref<1x256xf32, #tpu.memory_space<vmem>>, %arg6: memref<256x128xbf16, #tpu.memory_space<vmem>>, %arg7: memref<1x128xf32, #tpu.memory_space<vmem>>, %arg8: memref<2x128xf32, #tpu.memory_space<vmem>>) attributes {dimension_semantics = [#tpu.dimension_semantics<parallel>], iteration_bounds = array<i64: 1>, scalar_prefetch = 0 : i64, scratch_operands = 0 : i64, tpu.core_type = #tpu.core_type<tc>, window_params = [{transform_indices = @transform_0, window_bounds = array<i64: 2, 512>}, {pipeline_mode = #tpu.pipeline_mode<synchronous>, transform_indices = @transform_1, window_bounds = array<i64: 512, 256>}, {pipeline_mode = #tpu.pipeline_mode<synchronous>, transform_indices = @transform_2, window_bounds = array<i64: 1, 256>}, {pipeline_mode = #tpu.pipeline_mode<synchronous>, transform_indices = @transform_3, window_bounds = array<i64: 256, 256>}, {pipeline_mode = #tpu.pipeline_mode<synchronous>, transform_indices = @transform_4, window_bounds = array<i64: 1, 256>}, {pipeline_mode = #tpu.pipeline_mode<synchronous>, transform_indices = @transform_5, window_bounds = array<i64: 256, 128>}, {pipeline_mode = #tpu.pipeline_mode<synchronous>, transform_indices = @transform_6, window_bounds = array<i64: 1, 128>}, {transform_indices = @transform_7, window_bounds = array<i64: 2, 128>}]} {
    %c0 = arith.constant 0 : index
    %c0_0 = arith.constant 0 : index
    %0 = vector.load %arg1[%c0, %c0_0] : memref<2x512xbf16, #tpu.memory_space<vmem>>, vector<2x512xbf16>
    %c0_1 = arith.constant 0 : index
    %c0_2 = arith.constant 0 : index
    %1 = vector.load %arg2[%c0_1, %c0_2] : memref<512x256xbf16, #tpu.memory_space<vmem>>, vector<512x256xbf16>
    %cst = arith.constant dense<0.000000e+00> : vector<2x256xf32>
    %2 = tpu.matmul %0, %1, %cst {dimension_numbers = #tpu.dot_dimension_numbers<[1], [0], [0], [1], [0, 0, 1, 1], [], []>} : vector<2x512xbf16>, vector<512x256xbf16>, vector<2x256xf32> -> vector<2x256xf32>
    %c0_3 = arith.constant 0 : index
    %c0_4 = arith.constant 0 : index
    %3 = vector.load %arg3[%c0_3, %c0_4] : memref<1x256xf32, #tpu.memory_space<vmem>>, vector<1x256xf32>
    %4 = vector.broadcast %3 : vector<1x256xf32> to vector<2x256xf32>
    %5 = arith.addf %2, %4 : vector<2x256xf32>
    %cst_5 = arith.constant 0.000000e+00 : f32
    %6 = vector.broadcast %cst_5 : f32 to vector<2x256xf32>
    %7 = arith.maximumf %5, %6 : vector<2x256xf32>
    %8 = arith.truncf %7 : vector<2x256xf32> to vector<2x256xbf16>
    %c0_6 = arith.constant 0 : index
    %c0_7 = arith.constant 0 : index
    %9 = vector.load %arg4[%c0_6, %c0_7] : memref<256x256xbf16, #tpu.memory_space<vmem>>, vector<256x256xbf16>
    %cst_8 = arith.constant dense<0.000000e+00> : vector<2x256xf32>
    %10 = tpu.matmul %8, %9, %cst_8 {dimension_numbers = #tpu.dot_dimension_numbers<[1], [0], [0], [1], [0, 0, 1, 1], [], []>} : vector<2x256xbf16>, vector<256x256xbf16>, vector<2x256xf32> -> vector<2x256xf32>
    %c0_9 = arith.constant 0 : index
    %c0_10 = arith.constant 0 : index
    %11 = vector.load %arg5[%c0_9, %c0_10] : memref<1x256xf32, #tpu.memory_space<vmem>>, vector<1x256xf32>
    %12 = vector.broadcast %11 : vector<1x256xf32> to vector<2x256xf32>
    %13 = arith.addf %10, %12 : vector<2x256xf32>
    %cst_11 = arith.constant 0.000000e+00 : f32
    %14 = vector.broadcast %cst_11 : f32 to vector<2x256xf32>
    %15 = arith.maximumf %13, %14 : vector<2x256xf32>
    %16 = arith.truncf %15 : vector<2x256xf32> to vector<2x256xbf16>
    %c0_12 = arith.constant 0 : index
    %c0_13 = arith.constant 0 : index
    %17 = vector.load %arg6[%c0_12, %c0_13] : memref<256x128xbf16, #tpu.memory_space<vmem>>, vector<256x128xbf16>
    %cst_14 = arith.constant dense<0.000000e+00> : vector<2x128xf32>
    %18 = tpu.matmul %16, %17, %cst_14 {dimension_numbers = #tpu.dot_dimension_numbers<[1], [0], [0], [1], [0, 0, 1, 1], [], []>} : vector<2x256xbf16>, vector<256x128xbf16>, vector<2x128xf32> -> vector<2x128xf32>
    %c0_15 = arith.constant 0 : index
    %c0_16 = arith.constant 0 : index
    %19 = vector.load %arg7[%c0_15, %c0_16] : memref<1x128xf32, #tpu.memory_space<vmem>>, vector<1x128xf32>
    %20 = vector.broadcast %19 : vector<1x128xf32> to vector<2x128xf32>
    %21 = arith.addf %18, %20 : vector<2x128xf32>
    %c0_17 = arith.constant 0 : index
    %c0_18 = arith.constant 0 : index
    %22 = vector.load %arg8[%c0_17, %c0_18] : memref<2x128xf32, #tpu.memory_space<vmem>>, vector<2x128xf32>
    tpu.vector_store %arg8[%c0_17, %c0_18], %21 {strides = array<i32>} : memref<2x128xf32, #tpu.memory_space<vmem>>, vector<2x128xf32>,
    return
  }
  func.func @transform_0(%arg0: i32) -> (i32, i32) {
    %c0_i32 = arith.constant 0 : i32
    %c0_i32_0 = arith.constant 0 : i32
    return %arg0, %c0_i32 : i32, i32
  }
  func.func @transform_1(%arg0: i32) -> (i32, i32) {
    %c0_i32 = arith.constant 0 : i32
    %c0_i32_0 = arith.constant 0 : i32
    %c0_i32_1 = arith.constant 0 : i32
    return %c0_i32, %c0_i32_0 : i32, i32
  }
  func.func @transform_2(%arg0: i32) -> (i32, i32) {
    %c0_i32 = arith.constant 0 : i32
    %c0_i32_0 = arith.constant 0 : i32
    %c0_i32_1 = arith.constant 0 : i32
    return %c0_i32, %c0_i32_0 : i32, i32
  }
  func.func @transform_3(%arg0: i32) -> (i32, i32) {
    %c0_i32 = arith.constant 0 : i32
    %c0_i32_0 = arith.constant 0 : i32
    %c0_i32_1 = arith.constant 0 : i32
    return %c0_i32, %c0_i32_0 : i32, i32
  }
  func.func @transform_4(%arg0: i32) -> (i32, i32) {
    %c0_i32 = arith.constant 0 : i32
    %c0_i32_0 = arith.constant 0 : i32
    %c0_i32_1 = arith.constant 0 : i32
    return %c0_i32, %c0_i32_0 : i32, i32
  }
  func.func @transform_5(%arg0: i32) -> (i32, i32) {
    %c0_i32 = arith.constant 0 : i32
    %c0_i32_0 = arith.constant 0 : i32
    %c0_i32_1 = arith.constant 0 : i32
    return %c0_i32, %c0_i32_0 : i32, i32
  }
  func.func @transform_6(%arg0: i32) -> (i32, i32) {
    %c0_i32 = arith.constant 0 : i32
    %c0_i32_0 = arith.constant 0 : i32
    %c0_i32_1 = arith.constant 0 : i32
    return %c0_i32, %c0_i32_0 : i32, i32
  }
  func.func @transform_7(%arg0: i32) -> (i32, i32) {
    %c0_i32 = arith.constant 0 : i32
    %c0_i32_0 = arith.constant 0 : i32
    return %arg0, %c0_i32 : i32, i32
  }
}

</mosaic_0001>

<llo_original>
// kernel: multi_encoder_forward.8
$region0: #{multi_encoder_forward.8}
  #allocation0 [shape = 'u32[]', space=smem, size = 0x4, offset = 0x4, fixed_abs, tag = 'smem constant byte address 0x4 - core index']
  #allocation1 [shape = 'u32[144,128]{1,0:T(1,128)}', space=vmem, size = 0x12000, scoped, tag = 'internal scratch']
  %s0 = inlined_call_operand.vmem [shape: bf16[512,48], index: 0, kind: input, shape index: {}]
  %s1 = inlined_call_operand.vmem [shape: bf16[48,128], index: 1, kind: input, shape index: {}]
  %s2 = inlined_call_operand.vmem [shape: f32[1,128], index: 2, kind: input, shape index: {}]
  %s3 = inlined_call_operand.vmem [shape: bf16[512,128], index: 3, kind: output, shape index: {}]
  %s4 = sld [smem:[#allocation0]]
  $region45: #{multi_encoder_forward.8} parent=0
    _
  %s6 = ssub.s32 1, %s4
  %s7 = scalar_select 0, %s6, %s4
  loop: start=0, step=1, limit=4
  $region2: #{multi_encoder_forward.8} parent=0 // loop_pre_header
    _
  $region3: #{multi_encoder_forward.8} parent=0 // loop_header
    %s9 = sphi 0, %s13
    %p10 = scmp.ge.s32.totalorder %s9, 4
    %s19 = sphi 0, %s21
    %s22 = sphi 0, %s19
    %s23 = sphi 0, %s22
    %s39 = sphi 0, %s23
    %s43 = sphi 0, %s43
    %s45 = sphi 0, %s43
    %s46 = sphi 0, %s45
    %s60 = sphi 0, %s46
    %s64 = sphi 0, %s64
    %s66 = sphi 0, %s64
    %s67 = sphi 0, %s66
    %s81 = sphi 0, %s67
    %s87 = sphi 0, %s89
    %s90 = sphi 0, %s87
    %s91 = sphi 0, %s90
    %s107 = sphi 0, %s91
  $region4: #{multi_encoder_forward.8} parent=0 // loop_header_branch
    %12 = sbr.rel (%p10) target = $region8
  $region5: #{multi_encoder_forward.8} parent=0 // loop_body
    %s14 = ssub.s32 %s9, 1
    %s15 = ssub.s32 %s9, 2
    %s16 = sadd.s32 %s9, 1
    %s17 = ssub.s32 %s9, %s16
    %p18 = scmp.eq.s32.totalorder %s17, 0
    %s20 = sadd.s32 %s19, 1
    %s21 = scalar_select %p18, %s19, %s20
    %p24 = pneg %p18
    %p25 = scmp.eq.s32.totalorder %s9, 1
    %p26 = por %p24, %p25
    %p27 = scmp.ne.s32.totalorder %s19, %s22
    %p28 = scmp.eq.s32.totalorder %s9, 0
    %p29 = por %p27, %p28
    %p30 = scmp.ne.s32.totalorder %s19, %s22
    %p31 = scmp.eq.s32.totalorder %s14, 1
    %p32 = por %p30, %p31
    %p33 = scmp.ne.s32.totalorder %s22, %s23
    %p34 = scmp.eq.s32.totalorder %s14, 0
    %p35 = por %p33, %p34
    %p36 = scmp.ne.s32.totalorder %s22, %s23
    %p37 = scmp.eq.s32.totalorder %s15, 1
    %p38 = por %p36, %p37
    %p40 = scmp.ne.s32.totalorder %s23, %s39
    %p41 = scmp.eq.s32.totalorder %s15, 0
    %p42 = por %p40, %p41
    %s44 = sadd.s32 %s43, 1
    %p47 = scmp.eq.s32.totalorder %s9, 1
    %p48 = scmp.ne.s32.totalorder %s43, %s45
    %p49 = scmp.eq.s32.totalorder %s9, 0
    %p50 = por %p48, %p49
    %p51 = scmp.ne.s32.totalorder %s43, %s45
    %p52 = scmp.eq.s32.totalorder %s14, 1
    %p53 = por %p51, %p52
    %p54 = scmp.ne.s32.totalorder %s45, %s46
    %p55 = scmp.eq.s32.totalorder %s14, 0
    %p56 = por %p54, %p55
    %p57 = scmp.ne.s32.totalorder %s45, %s46
    %p58 = scmp.eq.s32.totalorder %s15, 1
    %p59 = por %p57, %p58
    %p61 = scmp.ne.s32.totalorder %s46, %s60
    %p62 = scmp.eq.s32.totalorder %s15, 0
    %p63 = por %p61, %p62
    %s65 = sadd.s32 %s64, 1
    %p68 = scmp.eq.s32.totalorder %s9, 1
    %p69 = scmp.ne.s32.totalorder %s64, %s66
    %p70 = scmp.eq.s32.totalorder %s9, 0
    %p71 = por %p69, %p70
    %p72 = scmp.ne.s32.totalorder %s64, %s66
    %p73 = scmp.eq.s32.totalorder %s14, 1
    %p74 = por %p72, %p73
    %p75 = scmp.ne.s32.totalorder %s66, %s67
    %p76 = scmp.eq.s32.totalorder %s14, 0
    %p77 = por %p75, %p76
    %p78 = scmp.ne.s32.totalorder %s66, %s67
    %p79 = scmp.eq.s32.totalorder %s15, 1
    %p80 = por %p78, %p79
    %p82 = scmp.ne.s32.totalorder %s67, %s81
    %p83 = scmp.eq.s32.totalorder %s15, 0
    %p84 = por %p82, %p83
    %s85 = ssub.s32 %s9, %s16
    %p86 = scmp.eq.s32.totalorder %s85, 0
    %s88 = sadd.s32 %s87, 1
    %s89 = scalar_select %p86, %s87, %s88
    %p92 = pneg %p86
    %p93 = scmp.eq.s32.totalorder %s9, 1
    %p94 = por %p92, %p93
    %p95 = scmp.ne.s32.totalorder %s87, %s90
    %p96 = scmp.eq.s32.totalorder %s9, 0
    %p97 = por %p95, %p96
    %p98 = scmp.ne.s32.totalorder %s87, %s90
    %p99 = scmp.eq.s32.totalorder %s14, 1
    %p100 = por %p98, %p99
    %p101 = scmp.ne.s32.totalorder %s90, %s91
    %p102 = scmp.eq.s32.totalorder %s14, 0
    %p103 = por %p101, %p102
    %p104 = scmp.ne.s32.totalorder %s90, %s91
    %p105 = scmp.eq.s32.totalorder %s15, 1
    %p106 = por %p104, %p105
    %p108 = scmp.ne.s32.totalorder %s91, %s107
    %p109 = scmp.eq.s32.totalorder %s15, 0
    %p110 = por %p108, %p109
    %p111 = scmp.le.s32.totalorder 1, %s9
    %p112 = scmp.lt.s32.totalorder %s9, 3
    %p113 = pnand %p111, %p112
    %p114 = pneg %p113
    // Predicated region
    $region9: #{multi_encoder_forward.8} parent=5 // pred_check
      _
    $region10: #{multi_encoder_forward.8} parent=5 // pred_check_branch
      %116 = sbr.rel (%p113) target = $region12
    $region11: #{multi_encoder_forward.8} parent=5 // pred_region
      %s117 = ssub.s32 %s9, 1
      // Predicated region
      $region13: #{multi_encoder_forward.8} parent=11 // pred_check
        %p118 = pneg %p56
      $region14: #{multi_encoder_forward.8} parent=11 // pred_check_branch
        %120 = sbr.rel (%p118) target = $region16
      $region15: #{multi_encoder_forward.8} parent=11 // pred_region
        _
      $region16: #{multi_encoder_forward.8} parent=11 // pred_fallthru
        _
      // Predicated region
      $region17: #{multi_encoder_forward.8} parent=11 // pred_check
        %p121 = pneg %p77
      $region18: #{multi_encoder_forward.8} parent=11 // pred_check_branch
        %123 = sbr.rel (%p121) target = $region20
      $region19: #{multi_encoder_forward.8} parent=11 // pred_region
        _
      $region20: #{multi_encoder_forward.8} parent=11 // pred_fallthru
        _
    $region12: #{multi_encoder_forward.8} parent=5 // pred_fallthru
      _
    %p124 = scmp.lt.s32.totalorder %s9, 2
    // Predicated region
    $region21: #{multi_encoder_forward.8} parent=5 // pred_check
      %p125 = pneg %p124
    $region22: #{multi_encoder_forward.8} parent=5 // pred_check_branch
      %127 = sbr.rel (%p125) target = $region24
    $region23: #{multi_encoder_forward.8} parent=5 // pred_region
      // Predicated region
      $region25: #{multi_encoder_forward.8} parent=23 // pred_check
        %p128 = pneg %p29
      $region26: #{multi_encoder_forward.8} parent=23 // pred_check_branch
        %130 = sbr.rel (%p128) target = $region28
      $region27: #{multi_encoder_forward.8} parent=23 // pred_region
        %s131 = smul.u32 32, %s9
        %p132 = scmp.lt.s32.totalorder %s131, 63
        %s133 = scalar_select %p132, %s131, 63
        %s134 = smul.addr %s133, 4
        %s135 = scalar_lea.vmem %s0, %s134
        %s136 = smul.u32 32, %s9
      $region28: #{multi_encoder_forward.8} parent=23 // pred_fallthru
        _
    $region24: #{multi_encoder_forward.8} parent=5 // pred_fallthru
      _
    %p137 = scmp.le.s32.totalorder 1, %s9
    %p138 = scmp.lt.s32.totalorder %s9, 3
    %p139 = pnand %p137, %p138
    %p140 = pneg %p139
    // Predicated region
    $region29: #{multi_encoder_forward.8} parent=5 // pred_check
      _
    $region30: #{multi_encoder_forward.8} parent=5 // pred_check_branch
      %142 = sbr.rel (%p139) target = $region32
    $region31: #{multi_encoder_forward.8} parent=5 // pred_region
      %s143 = ssub.s32 %s9, 1
      %s144 = smul.u32 32, %s14
      %p145 = scmp.lt.s32.totalorder %s144, 63
      %s146 = scalar_select %p145, %s144, 63
      %s147 = smul.addr %s146, 4
      %s148 = scalar_lea.vmem %s0, %s147
      %p149 = pneg %p35
      %p150 = pneg %p32
      %p151 = pneg %p56
      %p152 = pneg %p53
      %p153 = pneg %p77
      %p154 = pneg %p74
      %p155 = pneg %p103
      %p156 = pneg %p100
      %s157 = smul.u32 32, %s14
      %p158 = scmp.lt.s32.totalorder %s157, 63
      %s159 = scalar_select %p158, %s157, 63
      %s160 = smul.addr %s159, 4
      %s161 = scalar_lea.vmem %s3, %s160
      %s162 = smul.u32 32, %s14
      %p163 = scmp.lt.s32.totalorder %s162, 63
      %s164 = scalar_select %p163, %s162, 63
      %s165 = smul.addr %s164, 4
      %s166 = scalar_lea.vmem %s0, %s165
      %s167 = smul.u32 32, %s14
      %s168 = smul.u32 32, %s14
      %p169 = scmp.lt.s32.totalorder %s168, 63
      %s170 = scalar_select %p169, %s168, 63
      %s171 = smul.addr %s170, 4
      %s172 = scalar_lea.vmem %s3, %s171
      %s173 = smul.u32 32, %s14
      %v175 = vld [vmem:[%s166] sm:$0xf]
      %v176 = vld [vmem:[%s166 + $0x4] sm:$0xf]
      %v177 = vld [vmem:[%s166 + $0x8] sm:$0xf]
      %v178 = vld [vmem:[%s166 + $0xc] sm:$0xf]
      %v179 = vld [vmem:[%s166 + $0x10] sm:$0xf]
      %v180 = vld [vmem:[%s166 + $0x14] sm:$0xf]
      %v181 = vld [vmem:[%s166 + $0x18] sm:$0xf]
      %v182 = vld [vmem:[%s166 + $0x1c] sm:$0xf]
      %v183 = vld [vmem:[%s166 + $0x20] sm:$0xf]
      %v184 = vld [vmem:[%s166 + $0x24] sm:$0xf]
      %v185 = vld [vmem:[%s166 + $0x28] sm:$0xf]
      %v186 = vld [vmem:[%s166 + $0x2c] sm:$0xf]
      %v187 = vld [vmem:[%s166 + $0x30] sm:$0xf]
      %v188 = vld [vmem:[%s166 + $0x34] sm:$0xf]
      %v189 = vld [vmem:[%s166 + $0x38] sm:$0xf]
      %v190 = vld [vmem:[%s166 + $0x3c] sm:$0xf]
      %v191 = vld [vmem:[%s166 + $0x40] sm:$0xf]
      %v192 = vld [vmem:[%s166 + $0x44] sm:$0xf]
      %v193 = vld [vmem:[%s166 + $0x48] sm:$0xf]
      %v194 = vld [vmem:[%s166 + $0x4c] sm:$0xf]
      %v195 = vld [vmem:[%s166 + $0x50] sm:$0xf]
      %v196 = vld [vmem:[%s166 + $0x54] sm:$0xf]
      %v197 = vld [vmem:[%s166 + $0x58] sm:$0xf]
      %v198 = vld [vmem:[%s166 + $0x5c] sm:$0xf]
      %v199 = vld [vmem:[%s166 + $0x60] sm:$0xf]
      %v200 = vld [vmem:[%s166 + $0x64] sm:$0xf]
      %v201 = vld [vmem:[%s166 + $0x68] sm:$0xf]
      %v202 = vld [vmem:[%s166 + $0x6c] sm:$0xf]
      %v203 = vld [vmem:[%s166 + $0x70] sm:$0xf]
      %v204 = vld [vmem:[%s166 + $0x74] sm:$0xf]
      %v205 = vld [vmem:[%s166 + $0x78] sm:$0xf]
      %v206 = vld [vmem:[%s166 + $0x7c] sm:$0xf]
      %v207 = vld [vmem:[%s1] sm:$0xf]
      %v208 = vld [vmem:[%s1 + $0x4] sm:$0xf]
      %v209 = vld [vmem:[%s1 + $0x8] sm:$0xf]
      %v210 = vld [vmem:[%s1 + $0xc] sm:$0xf]
      %v211 = vld [vmem:[%s1 + $0x10] sm:$0xf]
      %v212 = vld [vmem:[%s1 + $0x14] sm:$0xf]
      %v213 = vld [vmem:[%s2] sm:$0x1]
      %v215 = vlaneseq
      %v216 = vshrl.u32 %v215, 7
      %v217 = vsub.s32 0, %v216
      %v218 = vrot.slane %v213, %v217
      %v252 = vunpack.c.l.b16 %v175
      %v253 = vunpack.c.l.b16 %v176
      %v254 = vunpack.c.l.b16 %v177
      %v255 = vunpack.c.l.b16 %v178
      %v256 = vunpack.c.l.b16 %v179
      %v257 = vunpack.c.l.b16 %v180
      %v258 = vunpack.c.l.b16 %v181
      %v259 = vunpack.c.l.b16 %v182
      %v260 = vunpack.c.l.b16 %v183
      %v261 = vunpack.c.l.b16 %v184
      %v262 = vunpack.c.l.b16 %v185
      %v263 = vunpack.c.l.b16 %v186
      %v264 = vunpack.c.l.b16 %v187
      %v265 = vunpack.c.l.b16 %v188
      %v266 = vunpack.c.l.b16 %v189
      %v267 = vunpack.c.l.b16 %v190
      %v268 = vunpack.c.l.b16 %v191
      %v269 = vunpack.c.l.b16 %v192
      %v270 = vunpack.c.l.b16 %v193
      %v271 = vunpack.c.l.b16 %v194
      %v272 = vunpack.c.l.b16 %v195
      %v273 = vunpack.c.l.b16 %v196
      %v274 = vunpack.c.l.b16 %v197
      %v275 = vunpack.c.l.b16 %v198
      %v276 = vunpack.c.l.b16 %v199
      %v277 = vunpack.c.l.b16 %v200
      %v278 = vunpack.c.l.b16 %v201
      %v279 = vunpack.c.l.b16 %v202
      %v280 = vunpack.c.l.b16 %v203
      %v281 = vunpack.c.l.b16 %v204
      %v282 = vunpack.c.l.b16 %v205
      %v283 = vunpack.c.l.b16 %v206
      %v284 = vpack.c.b16 %v253, %v252
      %v285 = vpack.c.b16 %v255, %v254
      %v286 = vpack.c.b16 %v257, %v256
      %v287 = vpack.c.b16 %v259, %v258
      %v288 = vpack.c.b16 %v261, %v260
      %v289 = vpack.c.b16 %v263, %v262
      %v290 = vpack.c.b16 %v265, %v264
      %v291 = vpack.c.b16 %v267, %v266
      %v292 = vpack.c.b16 %v269, %v268
      %v293 = vpack.c.b16 %v271, %v270
      %v294 = vpack.c.b16 %v273, %v272
      %v295 = vpack.c.b16 %v275, %v274
      %v296 = vpack.c.b16 %v277, %v276
      %v297 = vpack.c.b16 %v279, %v278
      %v298 = vpack.c.b16 %v281, %v280
      %v299 = vpack.c.b16 %v283, %v282
      %v306 = vunpack.c.l.b16 %v207
      %v307 = vunpack.c.l.b16 %v208
      %v308 = vunpack.c.l.b16 %v209
      %v309 = vunpack.c.l.b16 %v210
      %v310 = vunpack.c.l.b16 %v211
      %v311 = vunpack.c.l.b16 %v212
      %v312 = vpack.c.b16 %v307, %v306
      %v313 = vpack.c.b16 %v309, %v308
      %v314 = vpack.c.b16 %v311, %v310
      %vm318 = vcmask 392192
      %v320 = vsel %vm318, %v284, 0
      %v323 = vsel %vm318, %v285, 0
      %v326 = vsel %vm318, %v286, 0
      %v329 = vsel %vm318, %v287, 0
      %v332 = vsel %vm318, %v288, 0
      %v335 = vsel %vm318, %v289, 0
      %v338 = vsel %vm318, %v290, 0
      %v341 = vsel %vm318, %v291, 0
      %v344 = vsel %vm318, %v292, 0
      %v347 = vsel %vm318, %v293, 0
      %v350 = vsel %vm318, %v294, 0
      %v353 = vsel %vm318, %v295, 0
      %v356 = vsel %vm318, %v296, 0
      %v359 = vsel %vm318, %v297, 0
      %v362 = vsel %vm318, %v298, 0
      %v365 = vsel %vm318, %v299, 0
      %367 = vmatprep.subr.bf16.mxu0 0
      %368 = vmatpush1.bf16.msra.mxu0 %v312
      %369 = vmatprep.subr.bf16.mxu0 0
      %370 = vmatpush1.bf16.msra.mxu0 %v313
      %371 = vmatprep.subr.bf16.mxu0 0
      %372 = vmatpush1.bf16.msra.mxu0 %v314
      %373 = vmatprep.subr.bf16.mxu0 0
      %374 = vmatpush1.bf16.msra.mxu0 0
      %375 = vmatprep.subr.bf16.mxu0 0
      %376 = vmatpush1.bf16.msra.mxu0 0
      %377 = vmatprep.subr.bf16.mxu0 0
      %378 = vmatpush1.bf16.msra.mxu0 0
      %379 = vmatprep.subr.bf16.mxu0 0
      %380 = vmatpush1.bf16.msra.mxu0 0
      %381 = vmatprep.subr.bf16.mxu0 0
      %382 = vmatpush1.bf16.msra.mxu0 0
      %383 = vmatprep.subr.bf16.mxu0 0
      %384 = vmatpush1.bf16.msra.mxu0 0
      %385 = vmatprep.subr.bf16.mxu0 0
      %386 = vmatpush1.bf16.msra.mxu0 0
      %387 = vmatprep.subr.bf16.mxu0 0
      %388 = vmatpush1.bf16.msra.mxu0 0
      %389 = vmatprep.subr.bf16.mxu0 0
      %390 = vmatpush1.bf16.msra.mxu0 0
      %391 = vmatprep.subr.bf16.mxu0 0
      %392 = vmatpush1.bf16.msra.mxu0 0
      %393 = vmatprep.subr.bf16.mxu0 0
      %394 = vmatpush1.bf16.msra.mxu0 0
      %395 = vmatprep.subr.bf16.mxu0 0
      %396 = vmatpush1.bf16.msra.mxu0 0
      %397 = vmatprep.subr.bf16.mxu0 0
      %398 = vmatpush1.bf16.msra.mxu0 0
      %399 = vmatprep.mubr.bf16.mxu0 0
      %400 = vmatmul.mubr.bf16.gmra.mrb[0].mxu0 %v320
      %v401 = vpop.f32.mrb[0].mxu0
      %v402 = vadd.f32 %v218, %v401
      %v403 = vpop.f32.mrb[0].mxu0
      %v404 = vpop.f32.mrb[0].mxu0
      %v405 = vadd.f32 %v218, %v404
      %v406 = vpop.f32.mrb[0].mxu0
      %407 = vmatprep.mubr.bf16.mxu0 0
      %408 = vmatmul.mubr.bf16.gmra.mrb[0].mxu0 %v323
      %v409 = vpop.f32.mrb[0].mxu0
      %v410 = vadd.f32 %v218, %v409
      %v411 = vpop.f32.mrb[0].mxu0
      %v412 = vpop.f32.mrb[0].mxu0
      %v413 = vadd.f32 %v218, %v412
      %v414 = vpop.f32.mrb[0].mxu0
      %415 = vmatprep.mubr.bf16.mxu0 0
      %416 = vmatmul.mubr.bf16.gmra.mrb[0].mxu0 %v326
      %v417 = vpop.f32.mrb[0].mxu0
      %v418 = vadd.f32 %v218, %v417
      %v419 = vpop.f32.mrb[0].mxu0
      %v420 = vpop.f32.mrb[0].mxu0
      %v421 = vadd.f32 %v218, %v420
      %v422 = vpop.f32.mrb[0].mxu0
      %423 = vmatprep.mubr.bf16.mxu0 0
      %424 = vmatmul.mubr.bf16.gmra.mrb[0].mxu0 %v329
      %v425 = vpop.f32.mrb[0].mxu0
      %v426 = vadd.f32 %v218, %v425
      %v427 = vpop.f32.mrb[0].mxu0
      %v428 = vpop.f32.mrb[0].mxu0
      %v429 = vadd.f32 %v218, %v428
      %v430 = vpop.f32.mrb[0].mxu0
      %431 = vmatprep.mubr.bf16.mxu0 0
      %432 = vmatmul.mubr.bf16.gmra.mrb[0].mxu0 %v332
      %v433 = vpop.f32.mrb[0].mxu0
      %v434 = vadd.f32 %v218, %v433
      %v435 = vpop.f32.mrb[0].mxu0
      %v436 = vpop.f32.mrb[0].mxu0
      %v437 = vadd.f32 %v218, %v436
      %v438 = vpop.f32.mrb[0].mxu0
      %439 = vmatprep.mubr.bf16.mxu0 0
      %440 = vmatmul.mubr.bf16.gmra.mrb[0].mxu0 %v335
      %v441 = vpop.f32.mrb[0].mxu0
      %v442 = vadd.f32 %v218, %v441
      %v443 = vpop.f32.mrb[0].mxu0
      %v444 = vpop.f32.mrb[0].mxu0
      %v445 = vadd.f32 %v218, %v444
      %v446 = vpop.f32.mrb[0].mxu0
      %447 = vmatprep.mubr.bf16.mxu0 0
      %448 = vmatmul.mubr.bf16.gmra.mrb[0].mxu0 %v338
      %v449 = vpop.f32.mrb[0].mxu0
      %v450 = vadd.f32 %v218, %v449
      %v451 = vpop.f32.mrb[0].mxu0
      %v452 = vpop.f32.mrb[0].mxu0
      %v453 = vadd.f32 %v218, %v452
      %v454 = vpop.f32.mrb[0].mxu0
      %455 = vmatprep.mubr.bf16.mxu0 0
      %456 = vmatmul.mubr.bf16.gmra.mrb[0].mxu0 %v341
      %v457 = vpop.f32.mrb[0].mxu0
      %v458 = vadd.f32 %v218, %v457
      %v459 = vpop.f32.mrb[0].mxu0
      %v460 = vpop.f32.mrb[0].mxu0
      %v461 = vadd.f32 %v218, %v460
      %v462 = vpop.f32.mrb[0].mxu0
      %463 = vmatprep.mubr.bf16.mxu0 0
      %464 = vmatmul.mubr.bf16.gmra.mrb[0].mxu0 %v344
      %v465 = vpop.f32.mrb[0].mxu0
      %v466 = vadd.f32 %v218, %v465
      %v467 = vpop.f32.mrb[0].mxu0
      %v468 = vpop.f32.mrb[0].mxu0
      %v469 = vadd.f32 %v218, %v468
      %v470 = vpop.f32.mrb[0].mxu0
      %471 = vmatprep.mubr.bf16.mxu0 0
      %472 = vmatmul.mubr.bf16.gmra.mrb[0].mxu0 %v347
      %v473 = vpop.f32.mrb[0].mxu0
      %v474 = vadd.f32 %v218, %v473
      %v475 = vpop.f32.mrb[0].mxu0
      %v476 = vpop.f32.mrb[0].mxu0
      %v477 = vadd.f32 %v218, %v476
      %v478 = vpop.f32.mrb[0].mxu0
      %479 = vmatprep.mubr.bf16.mxu0 0
      %480 = vmatmul.mubr.bf16.gmra.mrb[0].mxu0 %v350
      %v481 = vpop.f32.mrb[0].mxu0
      %v482 = vadd.f32 %v218, %v481
      %v483 = vpop.f32.mrb[0].mxu0
      %v484 = vpop.f32.mrb[0].mxu0
      %v485 = vadd.f32 %v218, %v484
      %v486 = vpop.f32.mrb[0].mxu0
      %487 = vmatprep.mubr.bf16.mxu0 0
      %488 = vmatmul.mubr.bf16.gmra.mrb[0].mxu0 %v353
      %v489 = vpop.f32.mrb[0].mxu0
      %v490 = vadd.f32 %v218, %v489
      %v491 = vpop.f32.mrb[0].mxu0
      %v492 = vpop.f32.mrb[0].mxu0
      %v493 = vadd.f32 %v218, %v492
      %v494 = vpop.f32.mrb[0].mxu0
      %495 = vmatprep.mubr.bf16.mxu0 0
      %496 = vmatmul.mubr.bf16.gmra.mrb[0].mxu0 %v356
      %v497 = vpop.f32.mrb[0].mxu0
      %v498 = vadd.f32 %v218, %v497
      %v499 = vpop.f32.mrb[0].mxu0
      %v500 = vpop.f32.mrb[0].mxu0
      %v501 = vadd.f32 %v218, %v500
      %v502 = vpop.f32.mrb[0].mxu0
      %503 = vmatprep.mubr.bf16.mxu0 0
      %504 = vmatmul.mubr.bf16.gmra.mrb[0].mxu0 %v359
      %v505 = vpop.f32.mrb[0].mxu0
      %v506 = vadd.f32 %v218, %v505
      %v507 = vpop.f32.mrb[0].mxu0
      %v508 = vpop.f32.mrb[0].mxu0
      %v509 = vadd.f32 %v218, %v508
      %v510 = vpop.f32.mrb[0].mxu0
      %511 = vmatprep.mubr.bf16.mxu0 0
      %512 = vmatmul.mubr.bf16.gmra.mrb[0].mxu0 %v362
      %v513 = vpop.f32.mrb[0].mxu0
      %v514 = vadd.f32 %v218, %v513
      %v515 = vpop.f32.mrb[0].mxu0
      %v516 = vpop.f32.mrb[0].mxu0
      %v517 = vadd.f32 %v218, %v516
      %v518 = vpop.f32.mrb[0].mxu0
      %519 = vmatprep.mubr.bf16.mxu0 0
      %520 = vmatmul.mubr.bf16.gmra.mrb[0].mxu0 %v365
      %v521 = vpop.f32.mrb[0].mxu0
      %v522 = vadd.f32 %v218, %v521
      %v523 = vpop.f32.mrb[0].mxu0
      %v524 = vpop.f32.mrb[0].mxu0
      %v525 = vadd.f32 %v218, %v524
      %v526 = vpop.f32.mrb[0].mxu0
      %527 = vdwg.mxu0
      %v528 = vmax.f32 %v402, 0.0
      %v529 = vmax.f32 %v405, 0.0
      %v530 = vmax.f32 %v410, 0.0
      %v531 = vmax.f32 %v413, 0.0
      %v532 = vmax.f32 %v418, 0.0
      %v533 = vmax.f32 %v421, 0.0
      %v534 = vmax.f32 %v426, 0.0
      %v535 = vmax.f32 %v429, 0.0
      %v536 = vmax.f32 %v434, 0.0
      %v537 = vmax.f32 %v437, 0.0
      %v538 = vmax.f32 %v442, 0.0
      %v539 = vmax.f32 %v445, 0.0
      %v540 = vmax.f32 %v450, 0.0
      %v541 = vmax.f32 %v453, 0.0
      %v542 = vmax.f32 %v458, 0.0
      %v543 = vmax.f32 %v461, 0.0
      %v544 = vmax.f32 %v466, 0.0
      %v545 = vmax.f32 %v469, 0.0
      %v546 = vmax.f32 %v474, 0.0
      %v547 = vmax.f32 %v477, 0.0
      %v548 = vmax.f32 %v482, 0.0
      %v549 = vmax.f32 %v485, 0.0
      %v550 = vmax.f32 %v490, 0.0
      %v551 = vmax.f32 %v493, 0.0
      %v552 = vmax.f32 %v498, 0.0
      %v553 = vmax.f32 %v501, 0.0
      %v554 = vmax.f32 %v506, 0.0
      %v555 = vmax.f32 %v509, 0.0
      %v556 = vmax.f32 %v514, 0.0
      %v557 = vmax.f32 %v517, 0.0
      %v558 = vmax.f32 %v522, 0.0
      %v559 = vmax.f32 %v525, 0.0
      %v560 = vmul.f32 %v528, %v528
      %v561 = vmul.f32 %v529, %v529
      %v562 = vmul.f32 %v530, %v530
      %v563 = vmul.f32 %v531, %v531
      %v564 = vmul.f32 %v532, %v532
      %v565 = vmul.f32 %v533, %v533
      %v566 = vmul.f32 %v534, %v534
      %v567 = vmul.f32 %v535, %v535
      %v568 = vmul.f32 %v536, %v536
      %v569 = vmul.f32 %v537, %v537
      %v570 = vmul.f32 %v538, %v538
      %v571 = vmul.f32 %v539, %v539
      %v572 = vmul.f32 %v540, %v540
      %v573 = vmul.f32 %v541, %v541
      %v574 = vmul.f32 %v542, %v542
      %v575 = vmul.f32 %v543, %v543
      %v576 = vmul.f32 %v544, %v544
      %v577 = vmul.f32 %v545, %v545
      %v578 = vmul.f32 %v546, %v546
      %v579 = vmul.f32 %v547, %v547
      %v580 = vmul.f32 %v548, %v548
      %v581 = vmul.f32 %v549, %v549
      %v582 = vmul.f32 %v550, %v550
      %v583 = vmul.f32 %v551, %v551
      %v584 = vmul.f32 %v552, %v552
      %v585 = vmul.f32 %v553, %v553
      %v586 = vmul.f32 %v554, %v554
      %v587 = vmul.f32 %v555, %v555
      %v588 = vmul.f32 %v556, %v556
      %v589 = vmul.f32 %v557, %v557
      %v590 = vmul.f32 %v558, %v558
      %v591 = vmul.f32 %v559, %v559
      %592 = vrot.lane.b32.xlu0 %v560, 1
      %v593 = vpop.permute.xlu0 %592
      %594 = vrot.lane.b32.xlu0 %v561, 1
      %v595 = vpop.permute.xlu0 %594
      %596 = vrot.lane.b32.xlu0 %v562, 1
      %v597 = vpop.permute.xlu0 %596
      %598 = vrot.lane.b32.xlu0 %v563, 1
      %v599 = vpop.permute.xlu0 %598
      %600 = vrot.lane.b32.xlu0 %v564, 1
      %v601 = vpop.permute.xlu0 %600
      %602 = vrot.lane.b32.xlu0 %v565, 1
      %v603 = vpop.permute.xlu0 %602
      %604 = vrot.lane.b32.xlu0 %v566, 1
      %v605 = vpop.permute.xlu0 %604
      %606 = vrot.lane.b32.xlu0 %v567, 1
      %v607 = vpop.permute.xlu0 %606
      %608 = vrot.lane.b32.xlu0 %v568, 1
      %v609 = vpop.permute.xlu0 %608
      %610 = vrot.lane.b32.xlu0 %v569, 1
      %v611 = vpop.permute.xlu0 %610
      %612 = vrot.lane.b32.xlu0 %v570, 1
      %v613 = vpop.permute.xlu0 %612
      %614 = vrot.lane.b32.xlu0 %v571, 1
      %v615 = vpop.permute.xlu0 %614
      %616 = vrot.lane.b32.xlu0 %v572, 1
      %v617 = vpop.permute.xlu0 %616
      %618 = vrot.lane.b32.xlu0 %v573, 1
      %v619 = vpop.permute.xlu0 %618
      %620 = vrot.lane.b32.xlu0 %v574, 1
      %v621 = vpop.permute.xlu0 %620
      %622 = vrot.lane.b32.xlu0 %v575, 1
      %v623 = vpop.permute.xlu0 %622
      %624 = vrot.lane.b32.xlu0 %v576, 1
      %v625 = vpop.permute.xlu0 %624
      %626 = vrot.lane.b32.xlu0 %v577, 1
      %v627 = vpop.permute.xlu0 %626
      %628 = vrot.lane.b32.xlu0 %v578, 1
      %v629 = vpop.permute.xlu0 %628
      %630 = vrot.lane.b32.xlu0 %v579, 1
      %v631 = vpop.permute.xlu0 %630
      %632 = vrot.lane.b32.xlu0 %v580, 1
      %v633 = vpop.permute.xlu0 %632
      %634 = vrot.lane.b32.xlu0 %v581, 1
      %v635 = vpop.permute.xlu0 %634
      %636 = vrot.lane.b32.xlu0 %v582, 1
      %v637 = vpop.permute.xlu0 %636
      %638 = vrot.lane.b32.xlu0 %v583, 1
      %v639 = vpop.permute.xlu0 %638
      %640 = vrot.lane.b32.xlu0 %v584, 1
      %v641 = vpop.permute.xlu0 %640
      %642 = vrot.lane.b32.xlu0 %v585, 1
      %v643 = vpop.permute.xlu0 %642
      %644 = vrot.lane.b32.xlu0 %v586, 1
      %v645 = vpop.permute.xlu0 %644
      %646 = vrot.lane.b32.xlu0 %v587, 1
      %v647 = vpop.permute.xlu0 %646
      %648 = vrot.lane.b32.xlu0 %v588, 1
      %v649 = vpop.permute.xlu0 %648
      %650 = vrot.lane.b32.xlu0 %v589, 1
      %v651 = vpop.permute.xlu0 %650
      %652 = vrot.lane.b32.xlu0 %v590, 1
      %v653 = vpop.permute.xlu0 %652
      %654 = vrot.lane.b32.xlu0 %v591, 1
      %v655 = vpop.permute.xlu0 %654
      %v656 = vadd.f32 %v560, %v593
      %v657 = vadd.f32 %v561, %v595
      %v658 = vadd.f32 %v562, %v597
      %v659 = vadd.f32 %v563, %v599
      %v660 = vadd.f32 %v564, %v601
      %v661 = vadd.f32 %v565, %v603
      %v662 = vadd.f32 %v566, %v605
      %v663 = vadd.f32 %v567, %v607
      %v664 = vadd.f32 %v568, %v609
      %v665 = vadd.f32 %v569, %v611
      %v666 = vadd.f32 %v570, %v613
      %v667 = vadd.f32 %v571, %v615
      %v668 = vadd.f32 %v572, %v617
      %v669 = vadd.f32 %v573, %v619
      %v670 = vadd.f32 %v574, %v621
      %v671 = vadd.f32 %v575, %v623
      %v672 = vadd.f32 %v576, %v625
      %v673 = vadd.f32 %v577, %v627
      %v674 = vadd.f32 %v578, %v629
      %v675 = vadd.f32 %v579, %v631
      %v676 = vadd.f32 %v580, %v633
      %v677 = vadd.f32 %v581, %v635
      %v678 = vadd.f32 %v582, %v637
      %v679 = vadd.f32 %v583, %v639
      %v680 = vadd.f32 %v584, %v641
      %v681 = vadd.f32 %v585, %v643
      %v682 = vadd.f32 %v586, %v645
      %v683 = vadd.f32 %v587, %v647
      %v684 = vadd.f32 %v588, %v649
      %v685 = vadd.f32 %v589, %v651
      %v686 = vadd.f32 %v590, %v653
      %v687 = vadd.f32 %v591, %v655
      %688 = vrot.lane.b32.xlu0 %v560, 2
      %v689 = vpop.permute.xlu0 %688
      %690 = vrot.lane.b32.xlu0 %v561, 2
      %v691 = vpop.permute.xlu0 %690
      %692 = vrot.lane.b32.xlu0 %v562, 2
      %v693 = vpop.permute.xlu0 %692
      %694 = vrot.lane.b32.xlu0 %v563, 2
      %v695 = vpop.permute.xlu0 %694
      %696 = vrot.lane.b32.xlu0 %v564, 2
      %v697 = vpop.permute.xlu0 %696
      %698 = vrot.lane.b32.xlu0 %v565, 2
      %v699 = vpop.permute.xlu0 %698
      %700 = vrot.lane.b32.xlu0 %v566, 2
      %v701 = vpop.permute.xlu0 %700
      %702 = vrot.lane.b32.xlu0 %v567, 2
      %v703 = vpop.permute.xlu0 %702
      %704 = vrot.lane.b32.xlu0 %v568, 2
      %v705 = vpop.permute.xlu0 %704
      %706 = vrot.lane.b32.xlu0 %v569, 2
      %v707 = vpop.permute.xlu0 %706
      %708 = vrot.lane.b32.xlu0 %v570, 2
      %v709 = vpop.permute.xlu0 %708
      %710 = vrot.lane.b32.xlu0 %v571, 2
      %v711 = vpop.permute.xlu0 %710
      %712 = vrot.lane.b32.xlu0 %v572, 2
      %v713 = vpop.permute.xlu0 %712
      %714 = vrot.lane.b32.xlu0 %v573, 2
      %v715 = vpop.permute.xlu0 %714
      %716 = vrot.lane.b32.xlu0 %v574, 2
      %v717 = vpop.permute.xlu0 %716
      %718 = vrot.lane.b32.xlu0 %v575, 2
      %v719 = vpop.permute.xlu0 %718
      %720 = vrot.lane.b32.xlu0 %v576, 2
      %v721 = vpop.permute.xlu0 %720
      %722 = vrot.lane.b32.xlu0 %v577, 2
      %v723 = vpop.permute.xlu0 %722
      %724 = vrot.lane.b32.xlu0 %v578, 2
      %v725 = vpop.permute.xlu0 %724
      %726 = vrot.lane.b32.xlu0 %v579, 2
      %v727 = vpop.permute.xlu0 %726
      %728 = vrot.lane.b32.xlu0 %v580, 2
      %v729 = vpop.permute.xlu0 %728
      %730 = vrot.lane.b32.xlu0 %v581, 2
      %v731 = vpop.permute.xlu0 %730
      %732 = vrot.lane.b32.xlu0 %v582, 2
      %v733 = vpop.permute.xlu0 %732
      %734 = vrot.lane.b32.xlu0 %v583, 2
      %v735 = vpop.permute.xlu0 %734
      %736 = vrot.lane.b32.xlu0 %v584, 2
      %v737 = vpop.permute.xlu0 %736
      %738 = vrot.lane.b32.xlu0 %v585, 2
      %v739 = vpop.permute.xlu0 %738
      %740 = vrot.lane.b32.xlu0 %v586, 2
      %v741 = vpop.permute.xlu0 %740
      %742 = vrot.lane.b32.xlu0 %v587, 2
      %v743 = vpop.permute.xlu0 %742
      %744 = vrot.lane.b32.xlu0 %v588, 2
      %v745 = vpop.permute.xlu0 %744
      %746 = vrot.lane.b32.xlu0 %v589, 2
      %v747 = vpop.permute.xlu0 %746
      %748 = vrot.lane.b32.xlu0 %v590, 2
      %v749 = vpop.permute.xlu0 %748
      %750 = vrot.lane.b32.xlu0 %v591, 2
      %v751 = vpop.permute.xlu0 %750
      %v752 = vadd.f32 %v656, %v689
      %v753 = vadd.f32 %v657, %v691
      %v754 = vadd.f32 %v658, %v693
      %v755 = vadd.f32 %v659, %v695
      %v756 = vadd.f32 %v660, %v697
      %v757 = vadd.f32 %v661, %v699
      %v758 = vadd.f32 %v662, %v701
      %v759 = vadd.f32 %v663, %v703
      %v760 = vadd.f32 %v664, %v705
      %v761 = vadd.f32 %v665, %v707
      %v762 = vadd.f32 %v666, %v709
      %v763 = vadd.f32 %v667, %v711
      %v764 = vadd.f32 %v668, %v713
      %v765 = vadd.f32 %v669, %v715
      %v766 = vadd.f32 %v670, %v717
      %v767 = vadd.f32 %v671, %v719
      %v768 = vadd.f32 %v672, %v721
      %v769 = vadd.f32 %v673, %v723
      %v770 = vadd.f32 %v674, %v725
      %v771 = vadd.f32 %v675, %v727
      %v772 = vadd.f32 %v676, %v729
      %v773 = vadd.f32 %v677, %v731
      %v774 = vadd.f32 %v678, %v733
      %v775 = vadd.f32 %v679, %v735
      %v776 = vadd.f32 %v680, %v737
      %v777 = vadd.f32 %v681, %v739
      %v778 = vadd.f32 %v682, %v741
      %v779 = vadd.f32 %v683, %v743
      %v780 = vadd.f32 %v684, %v745
      %v781 = vadd.f32 %v685, %v747
      %v782 = vadd.f32 %v686, %v749
      %v783 = vadd.f32 %v687, %v751
      %784 = vrot.lane.b32.xlu0 %v560, 127
      %v785 = vpop.permute.xlu0 %784
      %786 = vrot.lane.b32.xlu0 %v561, 127
      %v787 = vpop.permute.xlu0 %786
      %788 = vrot.lane.b32.xlu0 %v562, 127
      %v789 = vpop.permute.xlu0 %788
      %790 = vrot.lane.b32.xlu0 %v563, 127
      %v791 = vpop.permute.xlu0 %790
      %792 = vrot.lane.b32.xlu0 %v564, 127
      %v793 = vpop.permute.xlu0 %792
      %794 = vrot.lane.b32.xlu0 %v565, 127
      %v795 = vpop.permute.xlu0 %794
      %796 = vrot.lane.b32.xlu0 %v566, 127
      %v797 = vpop.permute.xlu0 %796
      %798 = vrot.lane.b32.xlu0 %v567, 127
      %v799 = vpop.permute.xlu0 %798
      %800 = vrot.lane.b32.xlu0 %v568, 127
      %v801 = vpop.permute.xlu0 %800
      %802 = vrot.lane.b32.xlu0 %v569, 127
      %v803 = vpop.permute.xlu0 %802
      %804 = vrot.lane.b32.xlu0 %v570, 127
      %v805 = vpop.permute.xlu0 %804
      %806 = vrot.lane.b32.xlu0 %v571, 127
      %v807 = vpop.permute.xlu0 %806
      %808 = vrot.lane.b32.xlu0 %v572, 127
      %v809 = vpop.permute.xlu0 %808
      %810 = vrot.lane.b32.xlu0 %v573, 127
      %v811 = vpop.permute.xlu0 %810
      %812 = vrot.lane.b32.xlu0 %v574, 127
      %v813 = vpop.permute.xlu0 %812
      %814 = vrot.lane.b32.xlu0 %v575, 127
      %v815 = vpop.permute.xlu0 %814
      %816 = vrot.lane.b32.xlu0 %v576, 127
      %v817 = vpop.permute.xlu0 %816
      %818 = vrot.lane.b32.xlu0 %v577, 127
      %v819 = vpop.permute.xlu0 %818
      %820 = vrot.lane.b32.xlu0 %v578, 127
      %v821 = vpop.permute.xlu0 %820
      %822 = vrot.lane.b32.xlu0 %v579, 127
      %v823 = vpop.permute.xlu0 %822
      %824 = vrot.lane.b32.xlu0 %v580, 127
      %v825 = vpop.permute.xlu0 %824
      %826 = vrot.lane.b32.xlu0 %v581, 127
      %v827 = vpop.permute.xlu0 %826
      %828 = vrot.lane.b32.xlu0 %v582, 127
      %v829 = vpop.permute.xlu0 %828
      %830 = vrot.lane.b32.xlu0 %v583, 127
      %v831 = vpop.permute.xlu0 %830
      %832 = vrot.lane.b32.xlu0 %v584, 127
      %v833 = vpop.permute.xlu0 %832
      %834 = vrot.lane.b32.xlu0 %v585, 127
      %v835 = vpop.permute.xlu0 %834
      %836 = vrot.lane.b32.xlu0 %v586, 127
      %v837 = vpop.permute.xlu0 %836
      %838 = vrot.lane.b32.xlu0 %v587, 127
      %v839 = vpop.permute.xlu0 %838
      %840 = vrot.lane.b32.xlu0 %v588, 127
      %v841 = vpop.permute.xlu0 %840
      %842 = vrot.lane.b32.xlu0 %v589, 127
      %v843 = vpop.permute.xlu0 %842
      %844 = vrot.lane.b32.xlu0 %v590, 127
      %v845 = vpop.permute.xlu0 %844
      %846 = vrot.lane.b32.xlu0 %v591, 127
      %v847 = vpop.permute.xlu0 %846
      %v848 = vadd.f32 %v752, %v785
      %v849 = vadd.f32 %v753, %v787
      %v850 = vadd.f32 %v754, %v789
      %v851 = vadd.f32 %v755, %v791
      %v852 = vadd.f32 %v756, %v793
      %v853 = vadd.f32 %v757, %v795
      %v854 = vadd.f32 %v758, %v797
      %v855 = vadd.f32 %v759, %v799
      %v856 = vadd.f32 %v760, %v801
      %v857 = vadd.f32 %v761, %v803
      %v858 = vadd.f32 %v762, %v805
      %v859 = vadd.f32 %v763, %v807
      %v860 = vadd.f32 %v764, %v809
      %v861 = vadd.f32 %v765, %v811
      %v862 = vadd.f32 %v766, %v813
      %v863 = vadd.f32 %v767, %v815
      %v864 = vadd.f32 %v768, %v817
      %v865 = vadd.f32 %v769, %v819
      %v866 = vadd.f32 %v770, %v821
      %v867 = vadd.f32 %v771, %v823
      %v868 = vadd.f32 %v772, %v825
      %v869 = vadd.f32 %v773, %v827
      %v870 = vadd.f32 %v774, %v829
      %v871 = vadd.f32 %v775, %v831
      %v872 = vadd.f32 %v776, %v833
      %v873 = vadd.f32 %v777, %v835
      %v874 = vadd.f32 %v778, %v837
      %v875 = vadd.f32 %v779, %v839
      %v876 = vadd.f32 %v780, %v841
      %v877 = vadd.f32 %v781, %v843
      %v878 = vadd.f32 %v782, %v845
      %v879 = vadd.f32 %v783, %v847
      %880 = vrot.lane.b32.xlu0 %v560, 126
      %v881 = vpop.permute.xlu0 %880
      %882 = vrot.lane.b32.xlu0 %v561, 126
      %v883 = vpop.permute.xlu0 %882
      %884 = vrot.lane.b32.xlu0 %v562, 126
      %v885 = vpop.permute.xlu0 %884
      %886 = vrot.lane.b32.xlu0 %v563, 126
      %v887 = vpop.permute.xlu0 %886
      %888 = vrot.lane.b32.xlu0 %v564, 126
      %v889 = vpop.permute.xlu0 %888
      %890 = vrot.lane.b32.xlu0 %v565, 126
      %v891 = vpop.permute.xlu0 %890
      %892 = vrot.lane.b32.xlu0 %v566, 126
      %v893 = vpop.permute.xlu0 %892
      %894 = vrot.lane.b32.xlu0 %v567, 126
      %v895 = vpop.permute.xlu0 %894
      %896 = vrot.lane.b32.xlu0 %v568, 126
      %v897 = vpop.permute.xlu0 %896
      %898 = vrot.lane.b32.xlu0 %v569, 126
      %v899 = vpop.permute.xlu0 %898
      %900 = vrot.lane.b32.xlu0 %v570, 126
      %v901 = vpop.permute.xlu0 %900
      %902 = vrot.lane.b32.xlu0 %v571, 126
      %v903 = vpop.permute.xlu0 %902
      %904 = vrot.lane.b32.xlu0 %v572, 126
      %v905 = vpop.permute.xlu0 %904
      %906 = vrot.lane.b32.xlu0 %v573, 126
      %v907 = vpop.permute.xlu0 %906
      %908 = vrot.lane.b32.xlu0 %v574, 126
      %v909 = vpop.permute.xlu0 %908
      %910 = vrot.lane.b32.xlu0 %v575, 126
      %v911 = vpop.permute.xlu0 %910
      %912 = vrot.lane.b32.xlu0 %v576, 126
      %v913 = vpop.permute.xlu0 %912
      %914 = vrot.lane.b32.xlu0 %v577, 126
      %v915 = vpop.permute.xlu0 %914
      %916 = vrot.lane.b32.xlu0 %v578, 126
      %v917 = vpop.permute.xlu0 %916
      %918 = vrot.lane.b32.xlu0 %v579, 126
      %v919 = vpop.permute.xlu0 %918
      %920 = vrot.lane.b32.xlu0 %v580, 126
      %v921 = vpop.permute.xlu0 %920
      %922 = vrot.lane.b32.xlu0 %v581, 126
      %v923 = vpop.permute.xlu0 %922
      %924 = vrot.lane.b32.xlu0 %v582, 126
      %v925 = vpop.permute.xlu0 %924
      %926 = vrot.lane.b32.xlu0 %v583, 126
      %v927 = vpop.permute.xlu0 %926
      %928 = vrot.lane.b32.xlu0 %v584, 126
      %v929 = vpop.permute.xlu0 %928
      %930 = vrot.lane.b32.xlu0 %v585, 126
      %v931 = vpop.permute.xlu0 %930
      %932 = vrot.lane.b32.xlu0 %v586, 126
      %v933 = vpop.permute.xlu0 %932
      %934 = vrot.lane.b32.xlu0 %v587, 126
      %v935 = vpop.permute.xlu0 %934
      %936 = vrot.lane.b32.xlu0 %v588, 126
      %v937 = vpop.permute.xlu0 %936
      %938 = vrot.lane.b32.xlu0 %v589, 126
      %v939 = vpop.permute.xlu0 %938
      %940 = vrot.lane.b32.xlu0 %v590, 126
      %v941 = vpop.permute.xlu0 %940
      %942 = vrot.lane.b32.xlu0 %v591, 126
      %v943 = vpop.permute.xlu0 %942
      %v944 = vadd.f32 %v848, %v881
      %v945 = vadd.f32 %v849, %v883
      %v946 = vadd.f32 %v850, %v885
      %v947 = vadd.f32 %v851, %v887
      %v948 = vadd.f32 %v852, %v889
      %v949 = vadd.f32 %v853, %v891
      %v950 = vadd.f32 %v854, %v893
      %v951 = vadd.f32 %v855, %v895
      %v952 = vadd.f32 %v856, %v897
      %v953 = vadd.f32 %v857, %v899
      %v954 = vadd.f32 %v858, %v901
      %v955 = vadd.f32 %v859, %v903
      %v956 = vadd.f32 %v860, %v905
      %v957 = vadd.f32 %v861, %v907
      %v958 = vadd.f32 %v862, %v909
      %v959 = vadd.f32 %v863, %v911
      %v960 = vadd.f32 %v864, %v913
      %v961 = vadd.f32 %v865, %v915
      %v962 = vadd.f32 %v866, %v917
      %v963 = vadd.f32 %v867, %v919
      %v964 = vadd.f32 %v868, %v921
      %v965 = vadd.f32 %v869, %v923
      %v966 = vadd.f32 %v870, %v925
      %v967 = vadd.f32 %v871, %v927
      %v968 = vadd.f32 %v872, %v929
      %v969 = vadd.f32 %v873, %v931
      %v970 = vadd.f32 %v874, %v933
      %v971 = vadd.f32 %v875, %v935
      %v972 = vadd.f32 %v876, %v937
      %v973 = vadd.f32 %v877, %v939
      %v974 = vadd.f32 %v878, %v941
      %v975 = vadd.f32 %v879, %v943
      %v976 = vmul.f32 %v944, 0.0002
      %v977 = vmul.f32 %v945, 0.0002
      %v978 = vmul.f32 %v946, 0.0002
      %v979 = vmul.f32 %v947, 0.0002
      %v980 = vmul.f32 %v948, 0.0002
      %v981 = vmul.f32 %v949, 0.0002
      %v982 = vmul.f32 %v950, 0.0002
      %v983 = vmul.f32 %v951, 0.0002
      %v984 = vmul.f32 %v952, 0.0002
      %v985 = vmul.f32 %v953, 0.0002
      %v986 = vmul.f32 %v954, 0.0002
      %v987 = vmul.f32 %v955, 0.0002
      %v988 = vmul.f32 %v956, 0.0002
      %v989 = vmul.f32 %v957, 0.0002
      %v990 = vmul.f32 %v958, 0.0002
      %v991 = vmul.f32 %v959, 0.0002
      %v992 = vmul.f32 %v960, 0.0002
      %v993 = vmul.f32 %v961, 0.0002
      %v994 = vmul.f32 %v962, 0.0002
      %v995 = vmul.f32 %v963, 0.0002
      %v996 = vmul.f32 %v964, 0.0002
      %v997 = vmul.f32 %v965, 0.0002
      %v998 = vmul.f32 %v966, 0.0002
      %v999 = vmul.f32 %v967, 0.0002
      %v1000 = vmul.f32 %v968, 0.0002
      %v1001 = vmul.f32 %v969, 0.0002
      %v1002 = vmul.f32 %v970, 0.0002
      %v1003 = vmul.f32 %v971, 0.0002
      %v1004 = vmul.f32 %v972, 0.0002
      %v1005 = vmul.f32 %v973, 0.0002
      %v1006 = vmul.f32 %v974, 0.0002
      %v1007 = vmul.f32 %v975, 0.0002
      %v1008 = vadd.f32 %v976, 1.0
      %v1009 = vadd.f32 %v977, 1.0
      %v1010 = vadd.f32 %v978, 1.0
      %v1011 = vadd.f32 %v979, 1.0
      %v1012 = vadd.f32 %v980, 1.0
      %v1013 = vadd.f32 %v981, 1.0
      %v1014 = vadd.f32 %v982, 1.0
      %v1015 = vadd.f32 %v983, 1.0
      %v1016 = vadd.f32 %v984, 1.0
      %v1017 = vadd.f32 %v985, 1.0
      %v1018 = vadd.f32 %v986, 1.0
      %v1019 = vadd.f32 %v987, 1.0
      %v1020 = vadd.f32 %v988, 1.0
      %v1021 = vadd.f32 %v989, 1.0
      %v1022 = vadd.f32 %v990, 1.0
      %v1023 = vadd.f32 %v991, 1.0
      %v1024 = vadd.f32 %v992, 1.0
      %v1025 = vadd.f32 %v993, 1.0
      %v1026 = vadd.f32 %v994, 1.0
      %v1027 = vadd.f32 %v995, 1.0
      %v1028 = vadd.f32 %v996, 1.0
      %v1029 = vadd.f32 %v997, 1.0
      %v1030 = vadd.f32 %v998, 1.0
      %v1031 = vadd.f32 %v999, 1.0
      %v1032 = vadd.f32 %v1000, 1.0
      %v1033 = vadd.f32 %v1001, 1.0
      %v1034 = vadd.f32 %v1002, 1.0
      %v1035 = vadd.f32 %v1003, 1.0
      %v1036 = vadd.f32 %v1004, 1.0
      %v1037 = vadd.f32 %v1005, 1.0
      %v1038 = vadd.f32 %v1006, 1.0
      %v1039 = vadd.f32 %v1007, 1.0
      %v1040 = vrsqrt.pop %v1008
      %v1041 = vrsqrt.pop %v1009
      %v1042 = vrsqrt.pop %v1010
      %v1043 = vrsqrt.pop %v1011
      %v1044 = vrsqrt.pop %v1012
      %v1045 = vrsqrt.pop %v1013
      %v1046 = vrsqrt.pop %v1014
      %v1047 = vrsqrt.pop %v1015
      %v1048 = vrsqrt.pop %v1016
      %v1049 = vrsqrt.pop %v1017
      %v1050 = vrsqrt.pop %v1018
      %v1051 = vrsqrt.pop %v1019
      %v1052 = vrsqrt.pop %v1020
      %v1053 = vrsqrt.pop %v1021
      %v1054 = vrsqrt.pop %v1022
      %v1055 = vrsqrt.pop %v1023
      %v1056 = vrsqrt.pop %v1024
      %v1057 = vrsqrt.pop %v1025
      %v1058 = vrsqrt.pop %v1026
      %v1059 = vrsqrt.pop %v1027
      %v1060 = vrsqrt.pop %v1028
      %v1061 = vrsqrt.pop %v1029
      %v1062 = vrsqrt.pop %v1030
      %v1063 = vrsqrt.pop %v1031
      %v1064 = vrsqrt.pop %v1032
      %v1065 = vrsqrt.pop %v1033
      %v1066 = vrsqrt.pop %v1034
      %v1067 = vrsqrt.pop %v1035
      %v1068 = vrsqrt.pop %v1036
      %v1069 = vrsqrt.pop %v1037
      %v1070 = vrsqrt.pop %v1038
      %v1071 = vrsqrt.pop %v1039
      %v1072 = vmul.f32 %v528, %v1040
      %v1073 = vmul.f32 %v529, %v1041
      %v1074 = vmul.f32 %v530, %v1042
      %v1075 = vmul.f32 %v531, %v1043
      %v1076 = vmul.f32 %v532, %v1044
      %v1077 = vmul.f32 %v533, %v1045
      %v1078 = vmul.f32 %v534, %v1046
      %v1079 = vmul.f32 %v535, %v1047
      %v1080 = vmul.f32 %v536, %v1048
      %v1081 = vmul.f32 %v537, %v1049
      %v1082 = vmul.f32 %v538, %v1050
      %v1083 = vmul.f32 %v539, %v1051
      %v1084 = vmul.f32 %v540, %v1052
      %v1085 = vmul.f32 %v541, %v1053
      %v1086 = vmul.f32 %v542, %v1054
      %v1087 = vmul.f32 %v543, %v1055
      %v1088 = vmul.f32 %v544, %v1056
      %v1089 = vmul.f32 %v545, %v1057
      %v1090 = vmul.f32 %v546, %v1058
      %v1091 = vmul.f32 %v547, %v1059
      %v1092 = vmul.f32 %v548, %v1060
      %v1093 = vmul.f32 %v549, %v1061
      %v1094 = vmul.f32 %v550, %v1062
      %v1095 = vmul.f32 %v551, %v1063
      %v1096 = vmul.f32 %v552, %v1064
      %v1097 = vmul.f32 %v553, %v1065
      %v1098 = vmul.f32 %v554, %v1066
      %v1099 = vmul.f32 %v555, %v1067
      %v1100 = vmul.f32 %v556, %v1068
      %v1101 = vmul.f32 %v557, %v1069
      %v1102 = vmul.f32 %v558, %v1070
      %v1103 = vmul.f32 %v559, %v1071
      %v1104 = vpack.c.bf16 %v1073, %v1072
      %v1105 = vpack.c.bf16 %v1075, %v1074
      %v1106 = vpack.c.bf16 %v1077, %v1076
      %v1107 = vpack.c.bf16 %v1079, %v1078
      %v1108 = vpack.c.bf16 %v1081, %v1080
      %v1109 = vpack.c.bf16 %v1083, %v1082
      %v1110 = vpack.c.bf16 %v1085, %v1084
      %v1111 = vpack.c.bf16 %v1087, %v1086
      %v1112 = vpack.c.bf16 %v1089, %v1088
      %v1113 = vpack.c.bf16 %v1091, %v1090
      %v1114 = vpack.c.bf16 %v1093, %v1092
      %v1115 = vpack.c.bf16 %v1095, %v1094
      %v1116 = vpack.c.bf16 %v1097, %v1096
      %v1117 = vpack.c.bf16 %v1099, %v1098
      %v1118 = vpack.c.bf16 %v1101, %v1100
      %v1119 = vpack.c.bf16 %v1103, %v1102
      %v1136 = vunpack.c.l.b16 %v1104
      %v1137 = vunpack.c.h.b16 %v1104
      %v1138 = vunpack.c.l.b16 %v1105
      %v1139 = vunpack.c.h.b16 %v1105
      %v1140 = vunpack.c.l.b16 %v1106
      %v1141 = vunpack.c.h.b16 %v1106
      %v1142 = vunpack.c.l.b16 %v1107
      %v1143 = vunpack.c.h.b16 %v1107
      %v1144 = vunpack.c.l.b16 %v1108
      %v1145 = vunpack.c.h.b16 %v1108
      %v1146 = vunpack.c.l.b16 %v1109
      %v1147 = vunpack.c.h.b16 %v1109
      %v1148 = vunpack.c.l.b16 %v1110
      %v1149 = vunpack.c.h.b16 %v1110
      %v1150 = vunpack.c.l.b16 %v1111
      %v1151 = vunpack.c.h.b16 %v1111
      %v1152 = vunpack.c.l.b16 %v1112
      %v1153 = vunpack.c.h.b16 %v1112
      %v1154 = vunpack.c.l.b16 %v1113
      %v1155 = vunpack.c.h.b16 %v1113
      %v1156 = vunpack.c.l.b16 %v1114
      %v1157 = vunpack.c.h.b16 %v1114
      %v1158 = vunpack.c.l.b16 %v1115
      %v1159 = vunpack.c.h.b16 %v1115
      %v1160 = vunpack.c.l.b16 %v1116
      %v1161 = vunpack.c.h.b16 %v1116
      %v1162 = vunpack.c.l.b16 %v1117
      %v1163 = vunpack.c.h.b16 %v1117
      %v1164 = vunpack.c.l.b16 %v1118
      %v1165 = vunpack.c.h.b16 %v1118
      %v1166 = vunpack.c.l.b16 %v1119
      %v1167 = vunpack.c.h.b16 %v1119
      %v1168 = vpack.c.b16 %v1136, %v1136
      %v1169 = vpack.c.b16 %v1137, %v1137
      %v1170 = vpack.c.b16 %v1138, %v1138
      %v1171 = vpack.c.b16 %v1139, %v1139
      %v1172 = vpack.c.b16 %v1140, %v1140
      %v1173 = vpack.c.b16 %v1141, %v1141
      %v1174 = vpack.c.b16 %v1142, %v1142
      %v1175 = vpack.c.b16 %v1143, %v1143
      %v1176 = vpack.c.b16 %v1144, %v1144
      %v1177 = vpack.c.b16 %v1145, %v1145
      %v1178 = vpack.c.b16 %v1146, %v1146
      %v1179 = vpack.c.b16 %v1147, %v1147
      %v1180 = vpack.c.b16 %v1148, %v1148
      %v1181 = vpack.c.b16 %v1149, %v1149
      %v1182 = vpack.c.b16 %v1150, %v1150
      %v1183 = vpack.c.b16 %v1151, %v1151
      %v1184 = vpack.c.b16 %v1152, %v1152
      %v1185 = vpack.c.b16 %v1153, %v1153
      %v1186 = vpack.c.b16 %v1154, %v1154
      %v1187 = vpack.c.b16 %v1155, %v1155
      %v1188 = vpack.c.b16 %v1156, %v1156
      %v1189 = vpack.c.b16 %v1157, %v1157
      %v1190 = vpack.c.b16 %v1158, %v1158
      %v1191 = vpack.c.b16 %v1159, %v1159
      %v1192 = vpack.c.b16 %v1160, %v1160
      %v1193 = vpack.c.b16 %v1161, %v1161
      %v1194 = vpack.c.b16 %v1162, %v1162
      %v1195 = vpack.c.b16 %v1163, %v1163
      %v1196 = vpack.c.b16 %v1164, %v1164
      %v1197 = vpack.c.b16 %v1165, %v1165
      %v1198 = vpack.c.b16 %v1166, %v1166
      %v1199 = vpack.c.b16 %v1167, %v1167
      %1232 = vst [vmem:[%s172] sm:$0xf] %v1168
      %1233 = vst [vmem:[%s172 + $0x4] sm:$0xf] %v1169
      %1234 = vst [vmem:[%s172 + $0x8] sm:$0xf] %v1170
      %1235 = vst [vmem:[%s172 + $0xc] sm:$0xf] %v1171
      %1236 = vst [vmem:[%s172 + $0x10] sm:$0xf] %v1172
      %1237 = vst [vmem:[%s172 + $0x14] sm:$0xf] %v1173
      %1238 = vst [vmem:[%s172 + $0x18] sm:$0xf] %v1174
      %1239 = vst [vmem:[%s172 + $0x1c] sm:$0xf] %v1175
      %1240 = vst [vmem:[%s172 + $0x20] sm:$0xf] %v1176
      %1241 = vst [vmem:[%s172 + $0x24] sm:$0xf] %v1177
      %1242 = vst [vmem:[%s172 + $0x28] sm:$0xf] %v1178
      %1243 = vst [vmem:[%s172 + $0x2c] sm:$0xf] %v1179
      %1244 = vst [vmem:[%s172 + $0x30] sm:$0xf] %v1180
      %1245 = vst [vmem:[%s172 + $0x34] sm:$0xf] %v1181
      %1246 = vst [vmem:[%s172 + $0x38] sm:$0xf] %v1182
      %1247 = vst [vmem:[%s172 + $0x3c] sm:$0xf] %v1183
      %1248 = vst [vmem:[%s172 + $0x40] sm:$0xf] %v1184
      %1249 = vst [vmem:[%s172 + $0x44] sm:$0xf] %v1185
      %1250 = vst [vmem:[%s172 + $0x48] sm:$0xf] %v1186
      %1251 = vst [vmem:[%s172 + $0x4c] sm:$0xf] %v1187
      %1252 = vst [vmem:[%s172 + $0x50] sm:$0xf] %v1188
      %1253 = vst [vmem:[%s172 + $0x54] sm:$0xf] %v1189
      %1254 = vst [vmem:[%s172 + $0x58] sm:$0xf] %v1190
      %1255 = vst [vmem:[%s172 + $0x5c] sm:$0xf] %v1191
      %1256 = vst [vmem:[%s172 + $0x60] sm:$0xf] %v1192
      %1257 = vst [vmem:[%s172 + $0x64] sm:$0xf] %v1193
      %1258 = vst [vmem:[%s172 + $0x68] sm:$0xf] %v1194
      %1259 = vst [vmem:[%s172 + $0x6c] sm:$0xf] %v1195
      %1260 = vst [vmem:[%s172 + $0x70] sm:$0xf] %v1196
      %1261 = vst [vmem:[%s172 + $0x74] sm:$0xf] %v1197
      %1262 = vst [vmem:[%s172 + $0x78] sm:$0xf] %v1198
      %1263 = vst [vmem:[%s172 + $0x7c] sm:$0xf] %v1199
      %s1264 = smul.u32 32, %s14
      %p1265 = scmp.lt.s32.totalorder %s1264, 63
      %s1266 = scalar_select %p1265, %s1264, 63
      %s1267 = smul.addr %s1266, 4
      %s1268 = scalar_lea.vmem %s3, %s1267
      // Predicated region
      $region33: #{multi_encoder_forward.8} parent=31 // pred_check
        %p1269 = pneg %p100
      $region34: #{multi_encoder_forward.8} parent=31 // pred_check_branch
        %1271 = sbr.rel (%p1269) target = $region36
      $region35: #{multi_encoder_forward.8} parent=31 // pred_region
        %s1272 = smul.u32 32, %s14
      $region36: #{multi_encoder_forward.8} parent=31 // pred_fallthru
        _
    $region32: #{multi_encoder_forward.8} parent=5 // pred_fallthru
      _
    %p1273 = scmp.le.s32.totalorder 2, %s9
    // Predicated region
    $region37: #{multi_encoder_forward.8} parent=5 // pred_check
      %p1274 = pneg %p1273
    $region38: #{multi_encoder_forward.8} parent=5 // pred_check_branch
      %1276 = sbr.rel (%p1274) target = $region40
    $region39: #{multi_encoder_forward.8} parent=5 // pred_region
      %s1277 = ssub.s32 %s9, 2
      // Predicated region
      $region41: #{multi_encoder_forward.8} parent=39 // pred_check
        %p1278 = pneg %p106
      $region42: #{multi_encoder_forward.8} parent=39 // pred_check_branch
        %1280 = sbr.rel (%p1278) target = $region44
      $region43: #{multi_encoder_forward.8} parent=39 // pred_region
        %s1281 = smul.u32 32, %s15
        %p1282 = scmp.lt.s32.totalorder %s1281, 63
        %s1283 = scalar_select %p1282, %s1281, 63
        %s1284 = smul.addr %s1283, 4
        %s1285 = scalar_lea.vmem %s3, %s1284
      $region44: #{multi_encoder_forward.8} parent=39 // pred_fallthru
        _
    $region40: #{multi_encoder_forward.8} parent=5 // pred_fallthru
      _
  $region6: #{multi_encoder_forward.8} parent=0 // loop_footer
    %s13 = sadd.s32 1, %s9
  $region7: #{multi_encoder_forward.8} parent=0 // loop_footer_branch
    %8 = sbr.rel target = $region3
  $region8: #{multi_encoder_forward.8} parent=0 // loop_exit
    _

// kernel: multi_encoder_forward.9
$region0: #{multi_encoder_forward.9}
  #allocation0 [shape = 'u32[]', space=smem, size = 0x4, offset = 0x4, fixed_abs, tag = 'smem constant byte address 0x4 - core index']
  #allocation1 [shape = 'u32[144,128]{1,0:T(1,128)}', space=vmem, size = 0x12000, scoped, tag = 'internal scratch']
  %s0 = inlined_call_operand.vmem [shape: bf16[128,512], index: 0, kind: input, shape index: {}]
  %s1 = inlined_call_operand.vmem [shape: bf16[512,128], index: 1, kind: input, shape index: {}]
  %s2 = inlined_call_operand.vmem [shape: f32[1,128], index: 2, kind: input, shape index: {}]
  %s3 = inlined_call_operand.vmem [shape: bf16[128,128], index: 3, kind: output, shape index: {}]
  %s4 = sld [smem:[#allocation0]]
  $region22: #{multi_encoder_forward.9} parent=0
    _
  %s6 = ssub.s32 1, %s4
  %s7 = scalar_select 0, %s6, %s4
  // Predicated region
  $region2: #{multi_encoder_forward.9} parent=0 // pred_check
    _
  $region3: #{multi_encoder_forward.9} parent=0 // pred_check_branch
    %9 = sbr.rel (0) target = $region5
  $region4: #{multi_encoder_forward.9} parent=0 // pred_region
    _
  $region5: #{multi_encoder_forward.9} parent=0 // pred_fallthru
    _
  // Predicated region
  $region6: #{multi_encoder_forward.9} parent=0 // pred_check
    _
  $region7: #{multi_encoder_forward.9} parent=0 // pred_check_branch
    %11 = sbr.rel (0) target = $region9
  $region8: #{multi_encoder_forward.9} parent=0 // pred_region
    _
  $region9: #{multi_encoder_forward.9} parent=0 // pred_fallthru
    _
  // Predicated region
  $region10: #{multi_encoder_forward.9} parent=0 // pred_check
    _
  $region11: #{multi_encoder_forward.9} parent=0 // pred_check_branch
    %13 = sbr.rel (0) target = $region13
  $region12: #{multi_encoder_forward.9} parent=0 // pred_region
    _
  $region13: #{multi_encoder_forward.9} parent=0 // pred_fallthru
    _
  %v15 = vld [vmem:[%s0] sm:$0xff]
  %v16 = vld [vmem:[%s0 + $0x8] sm:$0xff]
  %v17 = vld [vmem:[%s0 + $0x10] sm:$0xff]
  %v18 = vld [vmem:[%s0 + $0x18] sm:$0xff]
  %v19 = vld [vmem:[%s0 + $0x20] sm:$0xff]
  %v20 = vld [vmem:[%s0 + $0x28] sm:$0xff]
  %v21 = vld [vmem:[%s0 + $0x30] sm:$0xff]
  %v22 = vld [vmem:[%s0 + $0x38] sm:$0xff]
  %v23 = vld [vmem:[%s0 + $0x40] sm:$0xff]
  %v24 = vld [vmem:[%s0 + $0x48] sm:$0xff]
  %v25 = vld [vmem:[%s0 + $0x50] sm:$0xff]
  %v26 = vld [vmem:[%s0 + $0x58] sm:$0xff]
  %v27 = vld [vmem:[%s0 + $0x60] sm:$0xff]
  %v28 = vld [vmem:[%s0 + $0x68] sm:$0xff]
  %v29 = vld [vmem:[%s0 + $0x70] sm:$0xff]
  %v30 = vld [vmem:[%s0 + $0x78] sm:$0xff]
  %v31 = vld [vmem:[%s0 + $0x80] sm:$0xff]
  %v32 = vld [vmem:[%s0 + $0x88] sm:$0xff]
  %v33 = vld [vmem:[%s0 + $0x90] sm:$0xff]
  %v34 = vld [vmem:[%s0 + $0x98] sm:$0xff]
  %v35 = vld [vmem:[%s0 + $0xa0] sm:$0xff]
  %v36 = vld [vmem:[%s0 + $0xa8] sm:$0xff]
  %v37 = vld [vmem:[%s0 + $0xb0] sm:$0xff]
  %v38 = vld [vmem:[%s0 + $0xb8] sm:$0xff]
  %v39 = vld [vmem:[%s0 + $0xc0] sm:$0xff]
  %v40 = vld [vmem:[%s0 + $0xc8] sm:$0xff]
  %v41 = vld [vmem:[%s0 + $0xd0] sm:$0xff]
  %v42 = vld [vmem:[%s0 + $0xd8] sm:$0xff]
  %v43 = vld [vmem:[%s0 + $0xe0] sm:$0xff]
  %v44 = vld [vmem:[%s0 + $0xe8] sm:$0xff]
  %v45 = vld [vmem:[%s0 + $0xf0] sm:$0xff]
  %v46 = vld [vmem:[%s0 + $0xf8] sm:$0xff]
  %v47 = vld [vmem:[%s1] sm:$0xf]
  %v48 = vld [vmem:[%s1 + $0x4] sm:$0xf]
  %v49 = vld [vmem:[%s1 + $0x8] sm:$0xf]
  %v50 = vld [vmem:[%s1 + $0xc] sm:$0xf]
  %v51 = vld [vmem:[%s1 + $0x10] sm:$0xf]
  %v52 = vld [vmem:[%s1 + $0x14] sm:$0xf]
  %v53 = vld [vmem:[%s1 + $0x18] sm:$0xf]
  %v54 = vld [vmem:[%s1 + $0x1c] sm:$0xf]
  %v55 = vld [vmem:[%s1 + $0x20] sm:$0xf]
  %v56 = vld [vmem:[%s1 + $0x24] sm:$0xf]
  %v57 = vld [vmem:[%s1 + $0x28] sm:$0xf]
  %v58 = vld [vmem:[%s1 + $0x2c] sm:$0xf]
  %v59 = vld [vmem:[%s1 + $0x30] sm:$0xf]
  %v60 = vld [vmem:[%s1 + $0x34] sm:$0xf]
  %v61 = vld [vmem:[%s1 + $0x38] sm:$0xf]
  %v62 = vld [vmem:[%s1 + $0x3c] sm:$0xf]
  %v63 = vld [vmem:[%s1 + $0x40] sm:$0xf]
  %v64 = vld [vmem:[%s1 + $0x44] sm:$0xf]
  %v65 = vld [vmem:[%s1 + $0x48] sm:$0xf]
  %v66 = vld [vmem:[%s1 + $0x4c] sm:$0xf]
  %v67 = vld [vmem:[%s1 + $0x50] sm:$0xf]
  %v68 = vld [vmem:[%s1 + $0x54] sm:$0xf]
  %v69 = vld [vmem:[%s1 + $0x58] sm:$0xf]
  %v70 = vld [vmem:[%s1 + $0x5c] sm:$0xf]
  %v71 = vld [vmem:[%s1 + $0x60] sm:$0xf]
  %v72 = vld [vmem:[%s1 + $0x64] sm:$0xf]
  %v73 = vld [vmem:[%s1 + $0x68] sm:$0xf]
  %v74 = vld [vmem:[%s1 + $0x6c] sm:$0xf]
  %v75 = vld [vmem:[%s1 + $0x70] sm:$0xf]
  %v76 = vld [vmem:[%s1 + $0x74] sm:$0xf]
  %v77 = vld [vmem:[%s1 + $0x78] sm:$0xf]
  %v78 = vld [vmem:[%s1 + $0x7c] sm:$0xf]
  %v79 = vld [vmem:[%s1 + $0x80] sm:$0xf]
  %v80 = vld [vmem:[%s1 + $0x84] sm:$0xf]
  %v81 = vld [vmem:[%s1 + $0x88] sm:$0xf]
  %v82 = vld [vmem:[%s1 + $0x8c] sm:$0xf]
  %v83 = vld [vmem:[%s1 + $0x90] sm:$0xf]
  %v84 = vld [vmem:[%s1 + $0x94] sm:$0xf]
  %v85 = vld [vmem:[%s1 + $0x98] sm:$0xf]
  %v86 = vld [vmem:[%s1 + $0x9c] sm:$0xf]
  %v87 = vld [vmem:[%s1 + $0xa0] sm:$0xf]
  %v88 = vld [vmem:[%s1 + $0xa4] sm:$0xf]
  %v89 = vld [vmem:[%s1 + $0xa8] sm:$0xf]
  %v90 = vld [vmem:[%s1 + $0xac] sm:$0xf]
  %v91 = vld [vmem:[%s1 + $0xb0] sm:$0xf]
  %v92 = vld [vmem:[%s1 + $0xb4] sm:$0xf]
  %v93 = vld [vmem:[%s1 + $0xb8] sm:$0xf]
  %v94 = vld [vmem:[%s1 + $0xbc] sm:$0xf]
  %v95 = vld [vmem:[%s1 + $0xc0] sm:$0xf]
  %v96 = vld [vmem:[%s1 + $0xc4] sm:$0xf]
  %v97 = vld [vmem:[%s1 + $0xc8] sm:$0xf]
  %v98 = vld [vmem:[%s1 + $0xcc] sm:$0xf]
  %v99 = vld [vmem:[%s1 + $0xd0] sm:$0xf]
  %v100 = vld [vmem:[%s1 + $0xd4] sm:$0xf]
  %v101 = vld [vmem:[%s1 + $0xd8] sm:$0xf]
  %v102 = vld [vmem:[%s1 + $0xdc] sm:$0xf]
  %v103 = vld [vmem:[%s1 + $0xe0] sm:$0xf]
  %v104 = vld [vmem:[%s1 + $0xe4] sm:$0xf]
  %v105 = vld [vmem:[%s1 + $0xe8] sm:$0xf]
  %v106 = vld [vmem:[%s1 + $0xec] sm:$0xf]
  %v107 = vld [vmem:[%s1 + $0xf0] sm:$0xf]
  %v108 = vld [vmem:[%s1 + $0xf4] sm:$0xf]
  %v109 = vld [vmem:[%s1 + $0xf8] sm:$0xf]
  %v110 = vld [vmem:[%s1 + $0xfc] sm:$0xf]
  %v111 = vld [vmem:[%s2] sm:$0x1]
  %v113 = vlaneseq
  %v114 = vshrl.u32 %v113, 7
  %v115 = vsub.s32 0, %v114
  %v116 = vrot.slane %v111, %v115
  %v150 = vunpack.c.l.b16 %v15
  %v151 = vunpack.c.h.b16 %v15
  %v152 = vunpack.c.l.b16 %v16
  %v153 = vunpack.c.h.b16 %v16
  %v154 = vunpack.c.l.b16 %v17
  %v155 = vunpack.c.h.b16 %v17
  %v156 = vunpack.c.l.b16 %v18
  %v157 = vunpack.c.h.b16 %v18
  %v158 = vunpack.c.l.b16 %v19
  %v159 = vunpack.c.h.b16 %v19
  %v160 = vunpack.c.l.b16 %v20
  %v161 = vunpack.c.h.b16 %v20
  %v162 = vunpack.c.l.b16 %v21
  %v163 = vunpack.c.h.b16 %v21
  %v164 = vunpack.c.l.b16 %v22
  %v165 = vunpack.c.h.b16 %v22
  %v166 = vunpack.c.l.b16 %v23
  %v167 = vunpack.c.h.b16 %v23
  %v168 = vunpack.c.l.b16 %v24
  %v169 = vunpack.c.h.b16 %v24
  %v170 = vunpack.c.l.b16 %v25
  %v171 = vunpack.c.h.b16 %v25
  %v172 = vunpack.c.l.b16 %v26
  %v173 = vunpack.c.h.b16 %v26
  %v174 = vunpack.c.l.b16 %v27
  %v175 = vunpack.c.h.b16 %v27
  %v176 = vunpack.c.l.b16 %v28
  %v177 = vunpack.c.h.b16 %v28
  %v178 = vunpack.c.l.b16 %v29
  %v179 = vunpack.c.h.b16 %v29
  %v180 = vunpack.c.l.b16 %v30
  %v181 = vunpack.c.h.b16 %v30
  %v182 = vunpack.c.l.b16 %v31
  %v183 = vunpack.c.h.b16 %v31
  %v184 = vunpack.c.l.b16 %v32
  %v185 = vunpack.c.h.b16 %v32
  %v186 = vunpack.c.l.b16 %v33
  %v187 = vunpack.c.h.b16 %v33
  %v188 = vunpack.c.l.b16 %v34
  %v189 = vunpack.c.h.b16 %v34
  %v190 = vunpack.c.l.b16 %v35
  %v191 = vunpack.c.h.b16 %v35
  %v192 = vunpack.c.l.b16 %v36
  %v193 = vunpack.c.h.b16 %v36
  %v194 = vunpack.c.l.b16 %v37
  %v195 = vunpack.c.h.b16 %v37
  %v196 = vunpack.c.l.b16 %v38
  %v197 = vunpack.c.h.b16 %v38
  %v198 = vunpack.c.l.b16 %v39
  %v199 = vunpack.c.h.b16 %v39
  %v200 = vunpack.c.l.b16 %v40
  %v201 = vunpack.c.h.b16 %v40
  %v202 = vunpack.c.l.b16 %v41
  %v203 = vunpack.c.h.b16 %v41
  %v204 = vunpack.c.l.b16 %v42
  %v205 = vunpack.c.h.b16 %v42
  %v206 = vunpack.c.l.b16 %v43
  %v207 = vunpack.c.h.b16 %v43
  %v208 = vunpack.c.l.b16 %v44
  %v209 = vunpack.c.h.b16 %v44
  %v210 = vunpack.c.l.b16 %v45
  %v211 = vunpack.c.h.b16 %v45
  %v212 = vunpack.c.l.b16 %v46
  %v213 = vunpack.c.h.b16 %v46
  %v214 = vpack.c.b16 %v154, %v150
  %v215 = vpack.c.b16 %v155, %v151
  %v216 = vpack.c.b16 %v156, %v152
  %v217 = vpack.c.b16 %v157, %v153
  %v218 = vpack.c.b16 %v162, %v158
  %v219 = vpack.c.b16 %v163, %v159
  %v220 = vpack.c.b16 %v164, %v160
  %v221 = vpack.c.b16 %v165, %v161
  %v222 = vpack.c.b16 %v170, %v166
  %v223 = vpack.c.b16 %v171, %v167
  %v224 = vpack.c.b16 %v172, %v168
  %v225 = vpack.c.b16 %v173, %v169
  %v226 = vpack.c.b16 %v178, %v174
  %v227 = vpack.c.b16 %v179, %v175
  %v228 = vpack.c.b16 %v180, %v176
  %v229 = vpack.c.b16 %v181, %v177
  %v230 = vpack.c.b16 %v186, %v182
  %v231 = vpack.c.b16 %v187, %v183
  %v232 = vpack.c.b16 %v188, %v184
  %v233 = vpack.c.b16 %v189, %v185
  %v234 = vpack.c.b16 %v194, %v190
  %v235 = vpack.c.b16 %v195, %v191
  %v236 = vpack.c.b16 %v196, %v192
  %v237 = vpack.c.b16 %v197, %v193
  %v238 = vpack.c.b16 %v202, %v198
  %v239 = vpack.c.b16 %v203, %v199
  %v240 = vpack.c.b16 %v204, %v200
  %v241 = vpack.c.b16 %v205, %v201
  %v242 = vpack.c.b16 %v210, %v206
  %v243 = vpack.c.b16 %v211, %v207
  %v244 = vpack.c.b16 %v212, %v208
  %v245 = vpack.c.b16 %v213, %v209
  %v342 = vunpack.c.l.b16 %v47
  %v343 = vunpack.c.l.b16 %v48
  %v344 = vunpack.c.l.b16 %v49
  %v345 = vunpack.c.l.b16 %v50
  %v346 = vunpack.c.l.b16 %v51
  %v347 = vunpack.c.l.b16 %v52
  %v348 = vunpack.c.l.b16 %v53
  %v349 = vunpack.c.l.b16 %v54
  %v350 = vunpack.c.l.b16 %v55
  %v351 = vunpack.c.l.b16 %v56
  %v352 = vunpack.c.l.b16 %v57
  %v353 = vunpack.c.l.b16 %v58
  %v354 = vunpack.c.l.b16 %v59
  %v355 = vunpack.c.l.b16 %v60
  %v356 = vunpack.c.l.b16 %v61
  %v357 = vunpack.c.l.b16 %v62
  %v358 = vunpack.c.l.b16 %v63
  %v359 = vunpack.c.l.b16 %v64
  %v360 = vunpack.c.l.b16 %v65
  %v361 = vunpack.c.l.b16 %v66
  %v362 = vunpack.c.l.b16 %v67
  %v363 = vunpack.c.l.b16 %v68
  %v364 = vunpack.c.l.b16 %v69
  %v365 = vunpack.c.l.b16 %v70
  %v366 = vunpack.c.l.b16 %v71
  %v367 = vunpack.c.l.b16 %v72
  %v368 = vunpack.c.l.b16 %v73
  %v369 = vunpack.c.l.b16 %v74
  %v370 = vunpack.c.l.b16 %v75
  %v371 = vunpack.c.l.b16 %v76
  %v372 = vunpack.c.l.b16 %v77
  %v373 = vunpack.c.l.b16 %v78
  %v374 = vunpack.c.l.b16 %v79
  %v375 = vunpack.c.l.b16 %v80
  %v376 = vunpack.c.l.b16 %v81
  %v377 = vunpack.c.l.b16 %v82
  %v378 = vunpack.c.l.b16 %v83
  %v379 = vunpack.c.l.b16 %v84
  %v380 = vunpack.c.l.b16 %v85
  %v381 = vunpack.c.l.b16 %v86
  %v382 = vunpack.c.l.b16 %v87
  %v383 = vunpack.c.l.b16 %v88
  %v384 = vunpack.c.l.b16 %v89
  %v385 = vunpack.c.l.b16 %v90
  %v386 = vunpack.c.l.b16 %v91
  %v387 = vunpack.c.l.b16 %v92
  %v388 = vunpack.c.l.b16 %v93
  %v389 = vunpack.c.l.b16 %v94
  %v390 = vunpack.c.l.b16 %v95
  %v391 = vunpack.c.l.b16 %v96
  %v392 = vunpack.c.l.b16 %v97
  %v393 = vunpack.c.l.b16 %v98
  %v394 = vunpack.c.l.b16 %v99
  %v395 = vunpack.c.l.b16 %v100
  %v396 = vunpack.c.l.b16 %v101
  %v397 = vunpack.c.l.b16 %v102
  %v398 = vunpack.c.l.b16 %v103
  %v399 = vunpack.c.l.b16 %v104
  %v400 = vunpack.c.l.b16 %v105
  %v401 = vunpack.c.l.b16 %v106
  %v402 = vunpack.c.l.b16 %v107
  %v403 = vunpack.c.l.b16 %v108
  %v404 = vunpack.c.l.b16 %v109
  %v405 = vunpack.c.l.b16 %v110
  %v406 = vpack.c.b16 %v343, %v342
  %v407 = vpack.c.b16 %v345, %v344
  %v408 = vpack.c.b16 %v347, %v346
  %v409 = vpack.c.b16 %v349, %v348
  %v410 = vpack.c.b16 %v351, %v350
  %v411 = vpack.c.b16 %v353, %v352
  %v412 = vpack.c.b16 %v355, %v354
  %v413 = vpack.c.b16 %v357, %v356
  %v414 = vpack.c.b16 %v359, %v358
  %v415 = vpack.c.b16 %v361, %v360
  %v416 = vpack.c.b16 %v363, %v362
  %v417 = vpack.c.b16 %v365, %v364
  %v418 = vpack.c.b16 %v367, %v366
  %v419 = vpack.c.b16 %v369, %v368
  %v420 = vpack.c.b16 %v371, %v370
  %v421 = vpack.c.b16 %v373, %v372
  %v422 = vpack.c.b16 %v375, %v374
  %v423 = vpack.c.b16 %v377, %v376
  %v424 = vpack.c.b16 %v379, %v378
  %v425 = vpack.c.b16 %v381, %v380
  %v426 = vpack.c.b16 %v383, %v382
  %v427 = vpack.c.b16 %v385, %v384
  %v428 = vpack.c.b16 %v387, %v386
  %v429 = vpack.c.b16 %v389, %v388
  %v430 = vpack.c.b16 %v391, %v390
  %v431 = vpack.c.b16 %v393, %v392
  %v432 = vpack.c.b16 %v395, %v394
  %v433 = vpack.c.b16 %v397, %v396
  %v434 = vpack.c.b16 %v399, %v398
  %v435 = vpack.c.b16 %v401, %v400
  %v436 = vpack.c.b16 %v403, %v402
  %v437 = vpack.c.b16 %v405, %v404
  %470 = vmatprep.subr.bf16.mxu0 0
  %471 = vmatpush1.bf16.msra.mxu0 %v406
  %472 = vmatprep.subr.bf16.mxu0 0
  %473 = vmatpush1.bf16.msra.mxu0 %v407
  %474 = vmatprep.subr.bf16.mxu0 0
  %475 = vmatpush1.bf16.msra.mxu0 %v408
  %476 = vmatprep.subr.bf16.mxu0 0
  %477 = vmatpush1.bf16.msra.mxu0 %v409
  %478 = vmatprep.subr.bf16.mxu0 0
  %479 = vmatpush1.bf16.msra.mxu0 %v410
  %480 = vmatprep.subr.bf16.mxu0 0
  %481 = vmatpush1.bf16.msra.mxu0 %v411
  %482 = vmatprep.subr.bf16.mxu0 0
  %483 = vmatpush1.bf16.msra.mxu0 %v412
  %484 = vmatprep.subr.bf16.mxu0 0
  %485 = vmatpush1.bf16.msra.mxu0 %v413
  %486 = vmatprep.subr.bf16.mxu0 0
  %487 = vmatpush1.bf16.msra.mxu0 %v414
  %488 = vmatprep.subr.bf16.mxu0 0
  %489 = vmatpush1.bf16.msra.mxu0 %v415
  %490 = vmatprep.subr.bf16.mxu0 0
  %491 = vmatpush1.bf16.msra.mxu0 %v416
  %492 = vmatprep.subr.bf16.mxu0 0
  %493 = vmatpush1.bf16.msra.mxu0 %v417
  %494 = vmatprep.subr.bf16.mxu0 0
  %495 = vmatpush1.bf16.msra.mxu0 %v418
  %496 = vmatprep.subr.bf16.mxu0 0
  %497 = vmatpush1.bf16.msra.mxu0 %v419
  %498 = vmatprep.subr.bf16.mxu0 0
  %499 = vmatpush1.bf16.msra.mxu0 %v420
  %500 = vmatprep.subr.bf16.mxu0 0
  %501 = vmatpush1.bf16.msra.mxu0 %v421
  %502 = vmatprep.mubr.bf16.mxu0 %v215
  %503 = vmatmul.mubr.bf16.gmra.mrb[0].mxu0 %v214
  %v504 = vpop.f32.mrb[0].mxu0
  %v505 = vadd.f32 %v116, %v504
  %v506 = vpop.f32.mrb[0].mxu0
  %v507 = vpop.f32.mrb[0].mxu0
  %v508 = vadd.f32 %v116, %v507
  %v509 = vpop.f32.mrb[0].mxu0
  %510 = vmatprep.mubr.bf16.mxu0 %v219
  %511 = vmatmul.mubr.bf16.gmra.mrb[0].mxu0 %v218
  %v512 = vpop.f32.mrb[0].mxu0
  %v513 = vadd.f32 %v116, %v512
  %v514 = vpop.f32.mrb[0].mxu0
  %v515 = vpop.f32.mrb[0].mxu0
  %v516 = vadd.f32 %v116, %v515
  %v517 = vpop.f32.mrb[0].mxu0
  %518 = vmatprep.mubr.bf16.mxu0 %v223
  %519 = vmatmul.mubr.bf16.gmra.mrb[0].mxu0 %v222
  %v520 = vpop.f32.mrb[0].mxu0
  %v521 = vadd.f32 %v116, %v520
  %v522 = vpop.f32.mrb[0].mxu0
  %v523 = vpop.f32.mrb[0].mxu0
  %v524 = vadd.f32 %v116, %v523
  %v525 = vpop.f32.mrb[0].mxu0
  %526 = vmatprep.mubr.bf16.mxu0 %v227
  %527 = vmatmul.mubr.bf16.gmra.mrb[0].mxu0 %v226
  %v528 = vpop.f32.mrb[0].mxu0
  %v529 = vadd.f32 %v116, %v528
  %v530 = vpop.f32.mrb[0].mxu0
  %v531 = vpop.f32.mrb[0].mxu0
  %v532 = vadd.f32 %v116, %v531
  %v533 = vpop.f32.mrb[0].mxu0
  %534 = vmatprep.mubr.bf16.mxu0 %v231
  %535 = vmatmul.mubr.bf16.gmra.mrb[0].mxu0 %v230
  %v536 = vpop.f32.mrb[0].mxu0
  %v537 = vadd.f32 %v116, %v536
  %v538 = vpop.f32.mrb[0].mxu0
  %v539 = vpop.f32.mrb[0].mxu0
  %v540 = vadd.f32 %v116, %v539
  %v541 = vpop.f32.mrb[0].mxu0
  %542 = vmatprep.mubr.bf16.mxu0 %v235
  %543 = vmatmul.mubr.bf16.gmra.mrb[0].mxu0 %v234
  %v544 = vpop.f32.mrb[0].mxu0
  %v545 = vadd.f32 %v116, %v544
  %v546 = vpop.f32.mrb[0].mxu0
  %v547 = vpop.f32.mrb[0].mxu0
  %v548 = vadd.f32 %v116, %v547
  %v549 = vpop.f32.mrb[0].mxu0
  %550 = vmatprep.mubr.bf16.mxu0 %v239
  %551 = vmatmul.mubr.bf16.gmra.mrb[0].mxu0 %v238
  %v552 = vpop.f32.mrb[0].mxu0
  %v553 = vadd.f32 %v116, %v552
  %v554 = vpop.f32.mrb[0].mxu0
  %v555 = vpop.f32.mrb[0].mxu0
  %v556 = vadd.f32 %v116, %v555
  %v557 = vpop.f32.mrb[0].mxu0
  %558 = vmatprep.mubr.bf16.mxu0 %v243
  %559 = vmatmul.mubr.bf16.gmra.mrb[0].mxu0 %v242
  %v560 = vpop.f32.mrb[0].mxu0
  %v561 = vadd.f32 %v116, %v560
  %v562 = vpop.f32.mrb[0].mxu0
  %v563 = vpop.f32.mrb[0].mxu0
  %v564 = vadd.f32 %v116, %v563
  %v565 = vpop.f32.mrb[0].mxu0
  %566 = vdwg.mxu0
  %567 = vmatprep.subr.bf16.mxu0 0
  %568 = vmatpush1.bf16.msra.mxu0 %v422
  %569 = vmatprep.subr.bf16.mxu0 0
  %570 = vmatpush1.bf16.msra.mxu0 %v423
  %571 = vmatprep.subr.bf16.mxu0 0
  %572 = vmatpush1.bf16.msra.mxu0 %v424
  %573 = vmatprep.subr.bf16.mxu0 0
  %574 = vmatpush1.bf16.msra.mxu0 %v425
  %575 = vmatprep.subr.bf16.mxu0 0
  %576 = vmatpush1.bf16.msra.mxu0 %v426
  %577 = vmatprep.subr.bf16.mxu0 0
  %578 = vmatpush1.bf16.msra.mxu0 %v427
  %579 = vmatprep.subr.bf16.mxu0 0
  %580 = vmatpush1.bf16.msra.mxu0 %v428
  %581 = vmatprep.subr.bf16.mxu0 0
  %582 = vmatpush1.bf16.msra.mxu0 %v429
  %583 = vmatprep.subr.bf16.mxu0 0
  %584 = vmatpush1.bf16.msra.mxu0 %v430
  %585 = vmatprep.subr.bf16.mxu0 0
  %586 = vmatpush1.bf16.msra.mxu0 %v431
  %587 = vmatprep.subr.bf16.mxu0 0
  %588 = vmatpush1.bf16.msra.mxu0 %v432
  %589 = vmatprep.subr.bf16.mxu0 0
  %590 = vmatpush1.bf16.msra.mxu0 %v433
  %591 = vmatprep.subr.bf16.mxu0 0
  %592 = vmatpush1.bf16.msra.mxu0 %v434
  %593 = vmatprep.subr.bf16.mxu0 0
  %594 = vmatpush1.bf16.msra.mxu0 %v435
  %595 = vmatprep.subr.bf16.mxu0 0
  %596 = vmatpush1.bf16.msra.mxu0 %v436
  %597 = vmatprep.subr.bf16.mxu0 0
  %598 = vmatpush1.bf16.msra.mxu0 %v437
  %599 = vmatprep.mubr.bf16.mxu0 %v217
  %600 = vmatmul.mubr.bf16.gmra.mrb[0].mxu0 %v216
  %v601 = vpop.f32.mrb[0].mxu0
  %v602 = vadd.f32 %v505, %v601
  %v603 = vpop.f32.mrb[0].mxu0
  %v604 = vpop.f32.mrb[0].mxu0
  %v605 = vadd.f32 %v508, %v604
  %v606 = vpop.f32.mrb[0].mxu0
  %607 = vmatprep.mubr.bf16.mxu0 %v221
  %608 = vmatmul.mubr.bf16.gmra.mrb[0].mxu0 %v220
  %v609 = vpop.f32.mrb[0].mxu0
  %v610 = vadd.f32 %v513, %v609
  %v611 = vpop.f32.mrb[0].mxu0
  %v612 = vpop.f32.mrb[0].mxu0
  %v613 = vadd.f32 %v516, %v612
  %v614 = vpop.f32.mrb[0].mxu0
  %615 = vmatprep.mubr.bf16.mxu0 %v225
  %616 = vmatmul.mubr.bf16.gmra.mrb[0].mxu0 %v224
  %v617 = vpop.f32.mrb[0].mxu0
  %v618 = vadd.f32 %v521, %v617
  %v619 = vpop.f32.mrb[0].mxu0
  %v620 = vpop.f32.mrb[0].mxu0
  %v621 = vadd.f32 %v524, %v620
  %v622 = vpop.f32.mrb[0].mxu0
  %623 = vmatprep.mubr.bf16.mxu0 %v229
  %624 = vmatmul.mubr.bf16.gmra.mrb[0].mxu0 %v228
  %v625 = vpop.f32.mrb[0].mxu0
  %v626 = vadd.f32 %v529, %v625
  %v627 = vpop.f32.mrb[0].mxu0
  %v628 = vpop.f32.mrb[0].mxu0
  %v629 = vadd.f32 %v532, %v628
  %v630 = vpop.f32.mrb[0].mxu0
  %631 = vmatprep.mubr.bf16.mxu0 %v233
  %632 = vmatmul.mubr.bf16.gmra.mrb[0].mxu0 %v232
  %v633 = vpop.f32.mrb[0].mxu0
  %v634 = vadd.f32 %v537, %v633
  %v635 = vpop.f32.mrb[0].mxu0
  %v636 = vpop.f32.mrb[0].mxu0
  %v637 = vadd.f32 %v540, %v636
  %v638 = vpop.f32.mrb[0].mxu0
  %639 = vmatprep.mubr.bf16.mxu0 %v237
  %640 = vmatmul.mubr.bf16.gmra.mrb[0].mxu0 %v236
  %v641 = vpop.f32.mrb[0].mxu0
  %v642 = vadd.f32 %v545, %v641
  %v643 = vpop.f32.mrb[0].mxu0
  %v644 = vpop.f32.mrb[0].mxu0
  %v645 = vadd.f32 %v548, %v644
  %v646 = vpop.f32.mrb[0].mxu0
  %647 = vmatprep.mubr.bf16.mxu0 %v241
  %648 = vmatmul.mubr.bf16.gmra.mrb[0].mxu0 %v240
  %v649 = vpop.f32.mrb[0].mxu0
  %v650 = vadd.f32 %v553, %v649
  %v651 = vpop.f32.mrb[0].mxu0
  %v652 = vpop.f32.mrb[0].mxu0
  %v653 = vadd.f32 %v556, %v652
  %v654 = vpop.f32.mrb[0].mxu0
  %655 = vmatprep.mubr.bf16.mxu0 %v245
  %656 = vmatmul.mubr.bf16.gmra.mrb[0].mxu0 %v244
  %v657 = vpop.f32.mrb[0].mxu0
  %v658 = vadd.f32 %v561, %v657
  %v659 = vpop.f32.mrb[0].mxu0
  %v660 = vpop.f32.mrb[0].mxu0
  %v661 = vadd.f32 %v564, %v660
  %v662 = vpop.f32.mrb[0].mxu0
  %663 = vdwg.mxu0
  %v664 = vmax.f32 %v602, 0.0
  %v665 = vmax.f32 %v605, 0.0
  %v666 = vmax.f32 %v610, 0.0
  %v667 = vmax.f32 %v613, 0.0
  %v668 = vmax.f32 %v618, 0.0
  %v669 = vmax.f32 %v621, 0.0
  %v670 = vmax.f32 %v626, 0.0
  %v671 = vmax.f32 %v629, 0.0
  %v672 = vmax.f32 %v634, 0.0
  %v673 = vmax.f32 %v637, 0.0
  %v674 = vmax.f32 %v642, 0.0
  %v675 = vmax.f32 %v645, 0.0
  %v676 = vmax.f32 %v650, 0.0
  %v677 = vmax.f32 %v653, 0.0
  %v678 = vmax.f32 %v658, 0.0
  %v679 = vmax.f32 %v661, 0.0
  %v680 = vmul.f32 %v664, %v664
  %v681 = vmul.f32 %v665, %v665
  %v682 = vmul.f32 %v666, %v666
  %v683 = vmul.f32 %v667, %v667
  %v684 = vmul.f32 %v668, %v668
  %v685 = vmul.f32 %v669, %v669
  %v686 = vmul.f32 %v670, %v670
  %v687 = vmul.f32 %v671, %v671
  %v688 = vmul.f32 %v672, %v672
  %v689 = vmul.f32 %v673, %v673
  %v690 = vmul.f32 %v674, %v674
  %v691 = vmul.f32 %v675, %v675
  %v692 = vmul.f32 %v676, %v676
  %v693 = vmul.f32 %v677, %v677
  %v694 = vmul.f32 %v678, %v678
  %v695 = vmul.f32 %v679, %v679
  %696 = vrot.lane.b32.xlu0 %v680, 1
  %v697 = vpop.permute.xlu0 %696
  %698 = vrot.lane.b32.xlu0 %v681, 1
  %v699 = vpop.permute.xlu0 %698
  %700 = vrot.lane.b32.xlu0 %v682, 1
  %v701 = vpop.permute.xlu0 %700
  %702 = vrot.lane.b32.xlu0 %v683, 1
  %v703 = vpop.permute.xlu0 %702
  %704 = vrot.lane.b32.xlu0 %v684, 1
  %v705 = vpop.permute.xlu0 %704
  %706 = vrot.lane.b32.xlu0 %v685, 1
  %v707 = vpop.permute.xlu0 %706
  %708 = vrot.lane.b32.xlu0 %v686, 1
  %v709 = vpop.permute.xlu0 %708
  %710 = vrot.lane.b32.xlu0 %v687, 1
  %v711 = vpop.permute.xlu0 %710
  %712 = vrot.lane.b32.xlu0 %v688, 1
  %v713 = vpop.permute.xlu0 %712
  %714 = vrot.lane.b32.xlu0 %v689, 1
  %v715 = vpop.permute.xlu0 %714
  %716 = vrot.lane.b32.xlu0 %v690, 1
  %v717 = vpop.permute.xlu0 %716
  %718 = vrot.lane.b32.xlu0 %v691, 1
  %v719 = vpop.permute.xlu0 %718
  %720 = vrot.lane.b32.xlu0 %v692, 1
  %v721 = vpop.permute.xlu0 %720
  %722 = vrot.lane.b32.xlu0 %v693, 1
  %v723 = vpop.permute.xlu0 %722
  %724 = vrot.lane.b32.xlu0 %v694, 1
  %v725 = vpop.permute.xlu0 %724
  %726 = vrot.lane.b32.xlu0 %v695, 1
  %v727 = vpop.permute.xlu0 %726
  %v728 = vadd.f32 %v680, %v697
  %v729 = vadd.f32 %v681, %v699
  %v730 = vadd.f32 %v682, %v701
  %v731 = vadd.f32 %v683, %v703
  %v732 = vadd.f32 %v684, %v705
  %v733 = vadd.f32 %v685, %v707
  %v734 = vadd.f32 %v686, %v709
  %v735 = vadd.f32 %v687, %v711
  %v736 = vadd.f32 %v688, %v713
  %v737 = vadd.f32 %v689, %v715
  %v738 = vadd.f32 %v690, %v717
  %v739 = vadd.f32 %v691, %v719
  %v740 = vadd.f32 %v692, %v721
  %v741 = vadd.f32 %v693, %v723
  %v742 = vadd.f32 %v694, %v725
  %v743 = vadd.f32 %v695, %v727
  %744 = vrot.lane.b32.xlu0 %v680, 2
  %v745 = vpop.permute.xlu0 %744
  %746 = vrot.lane.b32.xlu0 %v681, 2
  %v747 = vpop.permute.xlu0 %746
  %748 = vrot.lane.b32.xlu0 %v682, 2
  %v749 = vpop.permute.xlu0 %748
  %750 = vrot.lane.b32.xlu0 %v683, 2
  %v751 = vpop.permute.xlu0 %750
  %752 = vrot.lane.b32.xlu0 %v684, 2
  %v753 = vpop.permute.xlu0 %752
  %754 = vrot.lane.b32.xlu0 %v685, 2
  %v755 = vpop.permute.xlu0 %754
  %756 = vrot.lane.b32.xlu0 %v686, 2
  %v757 = vpop.permute.xlu0 %756
  %758 = vrot.lane.b32.xlu0 %v687, 2
  %v759 = vpop.permute.xlu0 %758
  %760 = vrot.lane.b32.xlu0 %v688, 2
  %v761 = vpop.permute.xlu0 %760
  %762 = vrot.lane.b32.xlu0 %v689, 2
  %v763 = vpop.permute.xlu0 %762
  %764 = vrot.lane.b32.xlu0 %v690, 2
  %v765 = vpop.permute.xlu0 %764
  %766 = vrot.lane.b32.xlu0 %v691, 2
  %v767 = vpop.permute.xlu0 %766
  %768 = vrot.lane.b32.xlu0 %v692, 2
  %v769 = vpop.permute.xlu0 %768
  %770 = vrot.lane.b32.xlu0 %v693, 2
  %v771 = vpop.permute.xlu0 %770
  %772 = vrot.lane.b32.xlu0 %v694, 2
  %v773 = vpop.permute.xlu0 %772
  %774 = vrot.lane.b32.xlu0 %v695, 2
  %v775 = vpop.permute.xlu0 %774
  %v776 = vadd.f32 %v728, %v745
  %v777 = vadd.f32 %v729, %v747
  %v778 = vadd.f32 %v730, %v749
  %v779 = vadd.f32 %v731, %v751
  %v780 = vadd.f32 %v732, %v753
  %v781 = vadd.f32 %v733, %v755
  %v782 = vadd.f32 %v734, %v757
  %v783 = vadd.f32 %v735, %v759
  %v784 = vadd.f32 %v736, %v761
  %v785 = vadd.f32 %v737, %v763
  %v786 = vadd.f32 %v738, %v765
  %v787 = vadd.f32 %v739, %v767
  %v788 = vadd.f32 %v740, %v769
  %v789 = vadd.f32 %v741, %v771
  %v790 = vadd.f32 %v742, %v773
  %v791 = vadd.f32 %v743, %v775
  %792 = vrot.lane.b32.xlu0 %v680, 127
  %v793 = vpop.permute.xlu0 %792
  %794 = vrot.lane.b32.xlu0 %v681, 127
  %v795 = vpop.permute.xlu0 %794
  %796 = vrot.lane.b32.xlu0 %v682, 127
  %v797 = vpop.permute.xlu0 %796
  %798 = vrot.lane.b32.xlu0 %v683, 127
  %v799 = vpop.permute.xlu0 %798
  %800 = vrot.lane.b32.xlu0 %v684, 127
  %v801 = vpop.permute.xlu0 %800
  %802 = vrot.lane.b32.xlu0 %v685, 127
  %v803 = vpop.permute.xlu0 %802
  %804 = vrot.lane.b32.xlu0 %v686, 127
  %v805 = vpop.permute.xlu0 %804
  %806 = vrot.lane.b32.xlu0 %v687, 127
  %v807 = vpop.permute.xlu0 %806
  %808 = vrot.lane.b32.xlu0 %v688, 127
  %v809 = vpop.permute.xlu0 %808
  %810 = vrot.lane.b32.xlu0 %v689, 127
  %v811 = vpop.permute.xlu0 %810
  %812 = vrot.lane.b32.xlu0 %v690, 127
  %v813 = vpop.permute.xlu0 %812
  %814 = vrot.lane.b32.xlu0 %v691, 127
  %v815 = vpop.permute.xlu0 %814
  %816 = vrot.lane.b32.xlu0 %v692, 127
  %v817 = vpop.permute.xlu0 %816
  %818 = vrot.lane.b32.xlu0 %v693, 127
  %v819 = vpop.permute.xlu0 %818
  %820 = vrot.lane.b32.xlu0 %v694, 127
  %v821 = vpop.permute.xlu0 %820
  %822 = vrot.lane.b32.xlu0 %v695, 127
  %v823 = vpop.permute.xlu0 %822
  %v824 = vadd.f32 %v776, %v793
  %v825 = vadd.f32 %v777, %v795
  %v826 = vadd.f32 %v778, %v797
  %v827 = vadd.f32 %v779, %v799
  %v828 = vadd.f32 %v780, %v801
  %v829 = vadd.f32 %v781, %v803
  %v830 = vadd.f32 %v782, %v805
  %v831 = vadd.f32 %v783, %v807
  %v832 = vadd.f32 %v784, %v809
  %v833 = vadd.f32 %v785, %v811
  %v834 = vadd.f32 %v786, %v813
  %v835 = vadd.f32 %v787, %v815
  %v836 = vadd.f32 %v788, %v817
  %v837 = vadd.f32 %v789, %v819
  %v838 = vadd.f32 %v790, %v821
  %v839 = vadd.f32 %v791, %v823
  %840 = vrot.lane.b32.xlu0 %v680, 126
  %v841 = vpop.permute.xlu0 %840
  %842 = vrot.lane.b32.xlu0 %v681, 126
  %v843 = vpop.permute.xlu0 %842
  %844 = vrot.lane.b32.xlu0 %v682, 126
  %v845 = vpop.permute.xlu0 %844
  %846 = vrot.lane.b32.xlu0 %v683, 126
  %v847 = vpop.permute.xlu0 %846
  %848 = vrot.lane.b32.xlu0 %v684, 126
  %v849 = vpop.permute.xlu0 %848
  %850 = vrot.lane.b32.xlu0 %v685, 126
  %v851 = vpop.permute.xlu0 %850
  %852 = vrot.lane.b32.xlu0 %v686, 126
  %v853 = vpop.permute.xlu0 %852
  %854 = vrot.lane.b32.xlu0 %v687, 126
  %v855 = vpop.permute.xlu0 %854
  %856 = vrot.lane.b32.xlu0 %v688, 126
  %v857 = vpop.permute.xlu0 %856
  %858 = vrot.lane.b32.xlu0 %v689, 126
  %v859 = vpop.permute.xlu0 %858
  %860 = vrot.lane.b32.xlu0 %v690, 126
  %v861 = vpop.permute.xlu0 %860
  %862 = vrot.lane.b32.xlu0 %v691, 126
  %v863 = vpop.permute.xlu0 %862
  %864 = vrot.lane.b32.xlu0 %v692, 126
  %v865 = vpop.permute.xlu0 %864
  %866 = vrot.lane.b32.xlu0 %v693, 126
  %v867 = vpop.permute.xlu0 %866
  %868 = vrot.lane.b32.xlu0 %v694, 126
  %v869 = vpop.permute.xlu0 %868
  %870 = vrot.lane.b32.xlu0 %v695, 126
  %v871 = vpop.permute.xlu0 %870
  %v872 = vadd.f32 %v824, %v841
  %v873 = vadd.f32 %v825, %v843
  %v874 = vadd.f32 %v826, %v845
  %v875 = vadd.f32 %v827, %v847
  %v876 = vadd.f32 %v828, %v849
  %v877 = vadd.f32 %v829, %v851
  %v878 = vadd.f32 %v830, %v853
  %v879 = vadd.f32 %v831, %v855
  %v880 = vadd.f32 %v832, %v857
  %v881 = vadd.f32 %v833, %v859
  %v882 = vadd.f32 %v834, %v861
  %v883 = vadd.f32 %v835, %v863
  %v884 = vadd.f32 %v836, %v865
  %v885 = vadd.f32 %v837, %v867
  %v886 = vadd.f32 %v838, %v869
  %v887 = vadd.f32 %v839, %v871
  %v888 = vmul.f32 %v872, 0.0002
  %v889 = vmul.f32 %v873, 0.0002
  %v890 = vmul.f32 %v874, 0.0002
  %v891 = vmul.f32 %v875, 0.0002
  %v892 = vmul.f32 %v876, 0.0002
  %v893 = vmul.f32 %v877, 0.0002
  %v894 = vmul.f32 %v878, 0.0002
  %v895 = vmul.f32 %v879, 0.0002
  %v896 = vmul.f32 %v880, 0.0002
  %v897 = vmul.f32 %v881, 0.0002
  %v898 = vmul.f32 %v882, 0.0002
  %v899 = vmul.f32 %v883, 0.0002
  %v900 = vmul.f32 %v884, 0.0002
  %v901 = vmul.f32 %v885, 0.0002
  %v902 = vmul.f32 %v886, 0.0002
  %v903 = vmul.f32 %v887, 0.0002
  %v904 = vadd.f32 %v888, 1.0
  %v905 = vadd.f32 %v889, 1.0
  %v906 = vadd.f32 %v890, 1.0
  %v907 = vadd.f32 %v891, 1.0
  %v908 = vadd.f32 %v892, 1.0
  %v909 = vadd.f32 %v893, 1.0
  %v910 = vadd.f32 %v894, 1.0
  %v911 = vadd.f32 %v895, 1.0
  %v912 = vadd.f32 %v896, 1.0
  %v913 = vadd.f32 %v897, 1.0
  %v914 = vadd.f32 %v898, 1.0
  %v915 = vadd.f32 %v899, 1.0
  %v916 = vadd.f32 %v900, 1.0
  %v917 = vadd.f32 %v901, 1.0
  %v918 = vadd.f32 %v902, 1.0
  %v919 = vadd.f32 %v903, 1.0
  %v920 = vrsqrt.pop %v904
  %v921 = vrsqrt.pop %v905
  %v922 = vrsqrt.pop %v906
  %v923 = vrsqrt.pop %v907
  %v924 = vrsqrt.pop %v908
  %v925 = vrsqrt.pop %v909
  %v926 = vrsqrt.pop %v910
  %v927 = vrsqrt.pop %v911
  %v928 = vrsqrt.pop %v912
  %v929 = vrsqrt.pop %v913
  %v930 = vrsqrt.pop %v914
  %v931 = vrsqrt.pop %v915
  %v932 = vrsqrt.pop %v916
  %v933 = vrsqrt.pop %v917
  %v934 = vrsqrt.pop %v918
  %v935 = vrsqrt.pop %v919
  %v936 = vmul.f32 %v664, %v920
  %v937 = vmul.f32 %v665, %v921
  %v938 = vmul.f32 %v666, %v922
  %v939 = vmul.f32 %v667, %v923
  %v940 = vmul.f32 %v668, %v924
  %v941 = vmul.f32 %v669, %v925
  %v942 = vmul.f32 %v670, %v926
  %v943 = vmul.f32 %v671, %v927
  %v944 = vmul.f32 %v672, %v928
  %v945 = vmul.f32 %v673, %v929
  %v946 = vmul.f32 %v674, %v930
  %v947 = vmul.f32 %v675, %v931
  %v948 = vmul.f32 %v676, %v932
  %v949 = vmul.f32 %v677, %v933
  %v950 = vmul.f32 %v678, %v934
  %v951 = vmul.f32 %v679, %v935
  %v952 = vpack.c.bf16 %v937, %v936
  %v953 = vpack.c.bf16 %v939, %v938
  %v954 = vpack.c.bf16 %v941, %v940
  %v955 = vpack.c.bf16 %v943, %v942
  %v956 = vpack.c.bf16 %v945, %v944
  %v957 = vpack.c.bf16 %v947, %v946
  %v958 = vpack.c.bf16 %v949, %v948
  %v959 = vpack.c.bf16 %v951, %v950
  %v968 = vunpack.c.l.b16 %v952
  %v969 = vunpack.c.h.b16 %v952
  %v970 = vunpack.c.l.b16 %v953
  %v971 = vunpack.c.h.b16 %v953
  %v972 = vunpack.c.l.b16 %v954
  %v973 = vunpack.c.h.b16 %v954
  %v974 = vunpack.c.l.b16 %v955
  %v975 = vunpack.c.h.b16 %v955
  %v976 = vunpack.c.l.b16 %v956
  %v977 = vunpack.c.h.b16 %v956
  %v978 = vunpack.c.l.b16 %v957
  %v979 = vunpack.c.h.b16 %v957
  %v980 = vunpack.c.l.b16 %v958
  %v981 = vunpack.c.h.b16 %v958
  %v982 = vunpack.c.l.b16 %v959
  %v983 = vunpack.c.h.b16 %v959
  %v984 = vpack.c.b16 %v968, %v968
  %v985 = vpack.c.b16 %v969, %v969
  %v986 = vpack.c.b16 %v970, %v970
  %v987 = vpack.c.b16 %v971, %v971
  %v988 = vpack.c.b16 %v972, %v972
  %v989 = vpack.c.b16 %v973, %v973
  %v990 = vpack.c.b16 %v974, %v974
  %v991 = vpack.c.b16 %v975, %v975
  %v992 = vpack.c.b16 %v976, %v976
  %v993 = vpack.c.b16 %v977, %v977
  %v994 = vpack.c.b16 %v978, %v978
  %v995 = vpack.c.b16 %v979, %v979
  %v996 = vpack.c.b16 %v980, %v980
  %v997 = vpack.c.b16 %v981, %v981
  %v998 = vpack.c.b16 %v982, %v982
  %v999 = vpack.c.b16 %v983, %v983
  %1016 = vst [vmem:[%s3] sm:$0xf] %v984
  %1017 = vst [vmem:[%s3 + $0x4] sm:$0xf] %v985
  %1018 = vst [vmem:[%s3 + $0x8] sm:$0xf] %v986
  %1019 = vst [vmem:[%s3 + $0xc] sm:$0xf] %v987
  %1020 = vst [vmem:[%s3 + $0x10] sm:$0xf] %v988
  %1021 = vst [vmem:[%s3 + $0x14] sm:$0xf] %v989
  %1022 = vst [vmem:[%s3 + $0x18] sm:$0xf] %v990
  %1023 = vst [vmem:[%s3 + $0x1c] sm:$0xf] %v991
  %1024 = vst [vmem:[%s3 + $0x20] sm:$0xf] %v992
  %1025 = vst [vmem:[%s3 + $0x24] sm:$0xf] %v993
  %1026 = vst [vmem:[%s3 + $0x28] sm:$0xf] %v994
  %1027 = vst [vmem:[%s3 + $0x2c] sm:$0xf] %v995
  %1028 = vst [vmem:[%s3 + $0x30] sm:$0xf] %v996
  %1029 = vst [vmem:[%s3 + $0x34] sm:$0xf] %v997
  %1030 = vst [vmem:[%s3 + $0x38] sm:$0xf] %v998
  %1031 = vst [vmem:[%s3 + $0x3c] sm:$0xf] %v999
  // Predicated region
  $region14: #{multi_encoder_forward.9} parent=0 // pred_check
    _
  $region15: #{multi_encoder_forward.9} parent=0 // pred_check_branch
    %1033 = sbr.rel (0) target = $region17
  $region16: #{multi_encoder_forward.9} parent=0 // pred_region
    _
  $region17: #{multi_encoder_forward.9} parent=0 // pred_fallthru
    _
  // Predicated region
  $region18: #{multi_encoder_forward.9} parent=0 // pred_check
    _
  $region19: #{multi_encoder_forward.9} parent=0 // pred_check_branch
    %1035 = sbr.rel (0) target = $region21
  $region20: #{multi_encoder_forward.9} parent=0 // pred_region
    _
  $region21: #{multi_encoder_forward.9} parent=0 // pred_fallthru
    _

// kernel: multi_encoder_forward.10
$region0: #{multi_encoder_forward.10}
  #allocation0 [shape = 'u32[]', space=smem, size = 0x4, offset = 0x4, fixed_abs, tag = 'smem constant byte address 0x4 - core index']
  #allocation1 [shape = 'u32[144,128]{1,0:T(1,128)}', space=vmem, size = 0x12000, scoped, tag = 'internal scratch']
  %s0 = inlined_call_operand.vmem [shape: bf16[32,512], index: 0, kind: input, shape index: {}]
  %s1 = inlined_call_operand.vmem [shape: bf16[512,128], index: 1, kind: input, shape index: {}]
  %s2 = inlined_call_operand.vmem [shape: f32[1,128], index: 2, kind: input, shape index: {}]
  %s3 = inlined_call_operand.vmem [shape: bf16[32,128], index: 3, kind: output, shape index: {}]
  %s4 = sld [smem:[#allocation0]]
  $region22: #{multi_encoder_forward.10} parent=0
    _
  %s6 = ssub.s32 1, %s4
  %s7 = scalar_select 0, %s6, %s4
  // Predicated region
  $region2: #{multi_encoder_forward.10} parent=0 // pred_check
    _
  $region3: #{multi_encoder_forward.10} parent=0 // pred_check_branch
    %9 = sbr.rel (0) target = $region5
  $region4: #{multi_encoder_forward.10} parent=0 // pred_region
    _
  $region5: #{multi_encoder_forward.10} parent=0 // pred_fallthru
    _
  // Predicated region
  $region6: #{multi_encoder_forward.10} parent=0 // pred_check
    _
  $region7: #{multi_encoder_forward.10} parent=0 // pred_check_branch
    %11 = sbr.rel (0) target = $region9
  $region8: #{multi_encoder_forward.10} parent=0 // pred_region
    _
  $region9: #{multi_encoder_forward.10} parent=0 // pred_fallthru
    _
  // Predicated region
  $region10: #{multi_encoder_forward.10} parent=0 // pred_check
    _
  $region11: #{multi_encoder_forward.10} parent=0 // pred_check_branch
    %13 = sbr.rel (0) target = $region13
  $region12: #{multi_encoder_forward.10} parent=0 // pred_region
    _
  $region13: #{multi_encoder_forward.10} parent=0 // pred_fallthru
    _
  %v15 = vld [vmem:[%s0] sm:$0xff]
  %v16 = vld [vmem:[%s0 + $0x8] sm:$0xff]
  %v17 = vld [vmem:[%s0 + $0x10] sm:$0xff]
  %v18 = vld [vmem:[%s0 + $0x18] sm:$0xff]
  %v19 = vld [vmem:[%s0 + $0x20] sm:$0xff]
  %v20 = vld [vmem:[%s0 + $0x28] sm:$0xff]
  %v21 = vld [vmem:[%s0 + $0x30] sm:$0xff]
  %v22 = vld [vmem:[%s0 + $0x38] sm:$0xff]
  %v23 = vld [vmem:[%s1] sm:$0xf]
  %v24 = vld [vmem:[%s1 + $0x4] sm:$0xf]
  %v25 = vld [vmem:[%s1 + $0x8] sm:$0xf]
  %v26 = vld [vmem:[%s1 + $0xc] sm:$0xf]
  %v27 = vld [vmem:[%s1 + $0x10] sm:$0xf]
  %v28 = vld [vmem:[%s1 + $0x14] sm:$0xf]
  %v29 = vld [vmem:[%s1 + $0x18] sm:$0xf]
  %v30 = vld [vmem:[%s1 + $0x1c] sm:$0xf]
  %v31 = vld [vmem:[%s1 + $0x20] sm:$0xf]
  %v32 = vld [vmem:[%s1 + $0x24] sm:$0xf]
  %v33 = vld [vmem:[%s1 + $0x28] sm:$0xf]
  %v34 = vld [vmem:[%s1 + $0x2c] sm:$0xf]
  %v35 = vld [vmem:[%s1 + $0x30] sm:$0xf]
  %v36 = vld [vmem:[%s1 + $0x34] sm:$0xf]
  %v37 = vld [vmem:[%s1 + $0x38] sm:$0xf]
  %v38 = vld [vmem:[%s1 + $0x3c] sm:$0xf]
  %v39 = vld [vmem:[%s1 + $0x40] sm:$0xf]
  %v40 = vld [vmem:[%s1 + $0x44] sm:$0xf]
  %v41 = vld [vmem:[%s1 + $0x48] sm:$0xf]
  %v42 = vld [vmem:[%s1 + $0x4c] sm:$0xf]
  %v43 = vld [vmem:[%s1 + $0x50] sm:$0xf]
  %v44 = vld [vmem:[%s1 + $0x54] sm:$0xf]
  %v45 = vld [vmem:[%s1 + $0x58] sm:$0xf]
  %v46 = vld [vmem:[%s1 + $0x5c] sm:$0xf]
  %v47 = vld [vmem:[%s1 + $0x60] sm:$0xf]
  %v48 = vld [vmem:[%s1 + $0x64] sm:$0xf]
  %v49 = vld [vmem:[%s1 + $0x68] sm:$0xf]
  %v50 = vld [vmem:[%s1 + $0x6c] sm:$0xf]
  %v51 = vld [vmem:[%s1 + $0x70] sm:$0xf]
  %v52 = vld [vmem:[%s1 + $0x74] sm:$0xf]
  %v53 = vld [vmem:[%s1 + $0x78] sm:$0xf]
  %v54 = vld [vmem:[%s1 + $0x7c] sm:$0xf]
  %v55 = vld [vmem:[%s1 + $0x80] sm:$0xf]
  %v56 = vld [vmem:[%s1 + $0x84] sm:$0xf]
  %v57 = vld [vmem:[%s1 + $0x88] sm:$0xf]
  %v58 = vld [vmem:[%s1 + $0x8c] sm:$0xf]
  %v59 = vld [vmem:[%s1 + $0x90] sm:$0xf]
  %v60 = vld [vmem:[%s1 + $0x94] sm:$0xf]
  %v61 = vld [vmem:[%s1 + $0x98] sm:$0xf]
  %v62 = vld [vmem:[%s1 + $0x9c] sm:$0xf]
  %v63 = vld [vmem:[%s1 + $0xa0] sm:$0xf]
  %v64 = vld [vmem:[%s1 + $0xa4] sm:$0xf]
  %v65 = vld [vmem:[%s1 + $0xa8] sm:$0xf]
  %v66 = vld [vmem:[%s1 + $0xac] sm:$0xf]
  %v67 = vld [vmem:[%s1 + $0xb0] sm:$0xf]
  %v68 = vld [vmem:[%s1 + $0xb4] sm:$0xf]
  %v69 = vld [vmem:[%s1 + $0xb8] sm:$0xf]
  %v70 = vld [vmem:[%s1 + $0xbc] sm:$0xf]
  %v71 = vld [vmem:[%s1 + $0xc0] sm:$0xf]
  %v72 = vld [vmem:[%s1 + $0xc4] sm:$0xf]
  %v73 = vld [vmem:[%s1 + $0xc8] sm:$0xf]
  %v74 = vld [vmem:[%s1 + $0xcc] sm:$0xf]
  %v75 = vld [vmem:[%s1 + $0xd0] sm:$0xf]
  %v76 = vld [vmem:[%s1 + $0xd4] sm:$0xf]
  %v77 = vld [vmem:[%s1 + $0xd8] sm:$0xf]
  %v78 = vld [vmem:[%s1 + $0xdc] sm:$0xf]
  %v79 = vld [vmem:[%s1 + $0xe0] sm:$0xf]
  %v80 = vld [vmem:[%s1 + $0xe4] sm:$0xf]
  %v81 = vld [vmem:[%s1 + $0xe8] sm:$0xf]
  %v82 = vld [vmem:[%s1 + $0xec] sm:$0xf]
  %v83 = vld [vmem:[%s1 + $0xf0] sm:$0xf]
  %v84 = vld [vmem:[%s1 + $0xf4] sm:$0xf]
  %v85 = vld [vmem:[%s1 + $0xf8] sm:$0xf]
  %v86 = vld [vmem:[%s1 + $0xfc] sm:$0xf]
  %v87 = vld [vmem:[%s2] sm:$0x1]
  %v89 = vlaneseq
  %v90 = vshrl.u32 %v89, 7
  %v91 = vsub.s32 0, %v90
  %v92 = vrot.slane %v87, %v91
  %v102 = vunpack.c.l.b16 %v15
  %v103 = vunpack.c.h.b16 %v15
  %v104 = vunpack.c.l.b16 %v16
  %v105 = vunpack.c.h.b16 %v16
  %v106 = vunpack.c.l.b16 %v17
  %v107 = vunpack.c.h.b16 %v17
  %v108 = vunpack.c.l.b16 %v18
  %v109 = vunpack.c.h.b16 %v18
  %v110 = vunpack.c.l.b16 %v19
  %v111 = vunpack.c.h.b16 %v19
  %v112 = vunpack.c.l.b16 %v20
  %v113 = vunpack.c.h.b16 %v20
  %v114 = vunpack.c.l.b16 %v21
  %v115 = vunpack.c.h.b16 %v21
  %v116 = vunpack.c.l.b16 %v22
  %v117 = vunpack.c.h.b16 %v22
  %v118 = vpack.c.b16 %v106, %v102
  %v119 = vpack.c.b16 %v107, %v103
  %v120 = vpack.c.b16 %v108, %v104
  %v121 = vpack.c.b16 %v109, %v105
  %v122 = vpack.c.b16 %v114, %v110
  %v123 = vpack.c.b16 %v115, %v111
  %v124 = vpack.c.b16 %v116, %v112
  %v125 = vpack.c.b16 %v117, %v113
  %v198 = vunpack.c.l.b16 %v23
  %v199 = vunpack.c.l.b16 %v24
  %v200 = vunpack.c.l.b16 %v25
  %v201 = vunpack.c.l.b16 %v26
  %v202 = vunpack.c.l.b16 %v27
  %v203 = vunpack.c.l.b16 %v28
  %v204 = vunpack.c.l.b16 %v29
  %v205 = vunpack.c.l.b16 %v30
  %v206 = vunpack.c.l.b16 %v31
  %v207 = vunpack.c.l.b16 %v32
  %v208 = vunpack.c.l.b16 %v33
  %v209 = vunpack.c.l.b16 %v34
  %v210 = vunpack.c.l.b16 %v35
  %v211 = vunpack.c.l.b16 %v36
  %v212 = vunpack.c.l.b16 %v37
  %v213 = vunpack.c.l.b16 %v38
  %v214 = vunpack.c.l.b16 %v39
  %v215 = vunpack.c.l.b16 %v40
  %v216 = vunpack.c.l.b16 %v41
  %v217 = vunpack.c.l.b16 %v42
  %v218 = vunpack.c.l.b16 %v43
  %v219 = vunpack.c.l.b16 %v44
  %v220 = vunpack.c.l.b16 %v45
  %v221 = vunpack.c.l.b16 %v46
  %v222 = vunpack.c.l.b16 %v47
  %v223 = vunpack.c.l.b16 %v48
  %v224 = vunpack.c.l.b16 %v49
  %v225 = vunpack.c.l.b16 %v50
  %v226 = vunpack.c.l.b16 %v51
  %v227 = vunpack.c.l.b16 %v52
  %v228 = vunpack.c.l.b16 %v53
  %v229 = vunpack.c.l.b16 %v54
  %v230 = vunpack.c.l.b16 %v55
  %v231 = vunpack.c.l.b16 %v56
  %v232 = vunpack.c.l.b16 %v57
  %v233 = vunpack.c.l.b16 %v58
  %v234 = vunpack.c.l.b16 %v59
  %v235 = vunpack.c.l.b16 %v60
  %v236 = vunpack.c.l.b16 %v61
  %v237 = vunpack.c.l.b16 %v62
  %v238 = vunpack.c.l.b16 %v63
  %v239 = vunpack.c.l.b16 %v64
  %v240 = vunpack.c.l.b16 %v65
  %v241 = vunpack.c.l.b16 %v66
  %v242 = vunpack.c.l.b16 %v67
  %v243 = vunpack.c.l.b16 %v68
  %v244 = vunpack.c.l.b16 %v69
  %v245 = vunpack.c.l.b16 %v70
  %v246 = vunpack.c.l.b16 %v71
  %v247 = vunpack.c.l.b16 %v72
  %v248 = vunpack.c.l.b16 %v73
  %v249 = vunpack.c.l.b16 %v74
  %v250 = vunpack.c.l.b16 %v75
  %v251 = vunpack.c.l.b16 %v76
  %v252 = vunpack.c.l.b16 %v77
  %v253 = vunpack.c.l.b16 %v78
  %v254 = vunpack.c.l.b16 %v79
  %v255 = vunpack.c.l.b16 %v80
  %v256 = vunpack.c.l.b16 %v81
  %v257 = vunpack.c.l.b16 %v82
  %v258 = vunpack.c.l.b16 %v83
  %v259 = vunpack.c.l.b16 %v84
  %v260 = vunpack.c.l.b16 %v85
  %v261 = vunpack.c.l.b16 %v86
  %v262 = vpack.c.b16 %v199, %v198
  %v263 = vpack.c.b16 %v201, %v200
  %v264 = vpack.c.b16 %v203, %v202
  %v265 = vpack.c.b16 %v205, %v204
  %v266 = vpack.c.b16 %v207, %v206
  %v267 = vpack.c.b16 %v209, %v208
  %v268 = vpack.c.b16 %v211, %v210
  %v269 = vpack.c.b16 %v213, %v212
  %v270 = vpack.c.b16 %v215, %v214
  %v271 = vpack.c.b16 %v217, %v216
  %v272 = vpack.c.b16 %v219, %v218
  %v273 = vpack.c.b16 %v221, %v220
  %v274 = vpack.c.b16 %v223, %v222
  %v275 = vpack.c.b16 %v225, %v224
  %v276 = vpack.c.b16 %v227, %v226
  %v277 = vpack.c.b16 %v229, %v228
  %v278 = vpack.c.b16 %v231, %v230
  %v279 = vpack.c.b16 %v233, %v232
  %v280 = vpack.c.b16 %v235, %v234
  %v281 = vpack.c.b16 %v237, %v236
  %v282 = vpack.c.b16 %v239, %v238
  %v283 = vpack.c.b16 %v241, %v240
  %v284 = vpack.c.b16 %v243, %v242
  %v285 = vpack.c.b16 %v245, %v244
  %v286 = vpack.c.b16 %v247, %v246
  %v287 = vpack.c.b16 %v249, %v248
  %v288 = vpack.c.b16 %v251, %v250
  %v289 = vpack.c.b16 %v253, %v252
  %v290 = vpack.c.b16 %v255, %v254
  %v291 = vpack.c.b16 %v257, %v256
  %v292 = vpack.c.b16 %v259, %v258
  %v293 = vpack.c.b16 %v261, %v260
  %326 = vmatprep.subr.bf16.mxu0 0
  %327 = vmatpush1.bf16.msra.mxu0 %v262
  %328 = vmatprep.subr.bf16.mxu0 0
  %329 = vmatpush1.bf16.msra.mxu0 %v263
  %330 = vmatprep.subr.bf16.mxu0 0
  %331 = vmatpush1.bf16.msra.mxu0 %v264
  %332 = vmatprep.subr.bf16.mxu0 0
  %333 = vmatpush1.bf16.msra.mxu0 %v265
  %334 = vmatprep.subr.bf16.mxu0 0
  %335 = vmatpush1.bf16.msra.mxu0 %v266
  %336 = vmatprep.subr.bf16.mxu0 0
  %337 = vmatpush1.bf16.msra.mxu0 %v267
  %338 = vmatprep.subr.bf16.mxu0 0
  %339 = vmatpush1.bf16.msra.mxu0 %v268
  %340 = vmatprep.subr.bf16.mxu0 0
  %341 = vmatpush1.bf16.msra.mxu0 %v269
  %342 = vmatprep.subr.bf16.mxu0 0
  %343 = vmatpush1.bf16.msra.mxu0 %v270
  %344 = vmatprep.subr.bf16.mxu0 0
  %345 = vmatpush1.bf16.msra.mxu0 %v271
  %346 = vmatprep.subr.bf16.mxu0 0
  %347 = vmatpush1.bf16.msra.mxu0 %v272
  %348 = vmatprep.subr.bf16.mxu0 0
  %349 = vmatpush1.bf16.msra.mxu0 %v273
  %350 = vmatprep.subr.bf16.mxu0 0
  %351 = vmatpush1.bf16.msra.mxu0 %v274
  %352 = vmatprep.subr.bf16.mxu0 0
  %353 = vmatpush1.bf16.msra.mxu0 %v275
  %354 = vmatprep.subr.bf16.mxu0 0
  %355 = vmatpush1.bf16.msra.mxu0 %v276
  %356 = vmatprep.subr.bf16.mxu0 0
  %357 = vmatpush1.bf16.msra.mxu0 %v277
  %358 = vmatprep.mubr.bf16.mxu0 %v119
  %359 = vmatmul.mubr.bf16.gmra.mrb[0].mxu0 %v118
  %v360 = vpop.f32.mrb[0].mxu0
  %v361 = vadd.f32 %v92, %v360
  %v362 = vpop.f32.mrb[0].mxu0
  %v363 = vpop.f32.mrb[0].mxu0
  %v364 = vadd.f32 %v92, %v363
  %v365 = vpop.f32.mrb[0].mxu0
  %366 = vmatprep.mubr.bf16.mxu0 %v123
  %367 = vmatmul.mubr.bf16.gmra.mrb[0].mxu0 %v122
  %v368 = vpop.f32.mrb[0].mxu0
  %v369 = vadd.f32 %v92, %v368
  %v370 = vpop.f32.mrb[0].mxu0
  %v371 = vpop.f32.mrb[0].mxu0
  %v372 = vadd.f32 %v92, %v371
  %v373 = vpop.f32.mrb[0].mxu0
  %374 = vdwg.mxu0
  %375 = vmatprep.subr.bf16.mxu0 0
  %376 = vmatpush1.bf16.msra.mxu0 %v278
  %377 = vmatprep.subr.bf16.mxu0 0
  %378 = vmatpush1.bf16.msra.mxu0 %v279
  %379 = vmatprep.subr.bf16.mxu0 0
  %380 = vmatpush1.bf16.msra.mxu0 %v280
  %381 = vmatprep.subr.bf16.mxu0 0
  %382 = vmatpush1.bf16.msra.mxu0 %v281
  %383 = vmatprep.subr.bf16.mxu0 0
  %384 = vmatpush1.bf16.msra.mxu0 %v282
  %385 = vmatprep.subr.bf16.mxu0 0
  %386 = vmatpush1.bf16.msra.mxu0 %v283
  %387 = vmatprep.subr.bf16.mxu0 0
  %388 = vmatpush1.bf16.msra.mxu0 %v284
  %389 = vmatprep.subr.bf16.mxu0 0
  %390 = vmatpush1.bf16.msra.mxu0 %v285
  %391 = vmatprep.subr.bf16.mxu0 0
  %392 = vmatpush1.bf16.msra.mxu0 %v286
  %393 = vmatprep.subr.bf16.mxu0 0
  %394 = vmatpush1.bf16.msra.mxu0 %v287
  %395 = vmatprep.subr.bf16.mxu0 0
  %396 = vmatpush1.bf16.msra.mxu0 %v288
  %397 = vmatprep.subr.bf16.mxu0 0
  %398 = vmatpush1.bf16.msra.mxu0 %v289
  %399 = vmatprep.subr.bf16.mxu0 0
  %400 = vmatpush1.bf16.msra.mxu0 %v290
  %401 = vmatprep.subr.bf16.mxu0 0
  %402 = vmatpush1.bf16.msra.mxu0 %v291
  %403 = vmatprep.subr.bf16.mxu0 0
  %404 = vmatpush1.bf16.msra.mxu0 %v292
  %405 = vmatprep.subr.bf16.mxu0 0
  %406 = vmatpush1.bf16.msra.mxu0 %v293
  %407 = vmatprep.mubr.bf16.mxu0 %v121
  %408 = vmatmul.mubr.bf16.gmra.mrb[0].mxu0 %v120
  %v409 = vpop.f32.mrb[0].mxu0
  %v410 = vadd.f32 %v361, %v409
  %v411 = vpop.f32.mrb[0].mxu0
  %v412 = vpop.f32.mrb[0].mxu0
  %v413 = vadd.f32 %v364, %v412
  %v414 = vpop.f32.mrb[0].mxu0
  %415 = vmatprep.mubr.bf16.mxu0 %v125
  %416 = vmatmul.mubr.bf16.gmra.mrb[0].mxu0 %v124
  %v417 = vpop.f32.mrb[0].mxu0
  %v418 = vadd.f32 %v369, %v417
  %v419 = vpop.f32.mrb[0].mxu0
  %v420 = vpop.f32.mrb[0].mxu0
  %v421 = vadd.f32 %v372, %v420
  %v422 = vpop.f32.mrb[0].mxu0
  %423 = vdwg.mxu0
  %v424 = vmax.f32 %v410, 0.0
  %v425 = vmax.f32 %v413, 0.0
  %v426 = vmax.f32 %v418, 0.0
  %v427 = vmax.f32 %v421, 0.0
  %v428 = vmul.f32 %v424, %v424
  %v429 = vmul.f32 %v425, %v425
  %v430 = vmul.f32 %v426, %v426
  %v431 = vmul.f32 %v427, %v427
  %432 = vrot.lane.b32.xlu0 %v428, 1
  %v433 = vpop.permute.xlu0 %432
  %434 = vrot.lane.b32.xlu0 %v429, 1
  %v435 = vpop.permute.xlu0 %434
  %436 = vrot.lane.b32.xlu0 %v430, 1
  %v437 = vpop.permute.xlu0 %436
  %438 = vrot.lane.b32.xlu0 %v431, 1
  %v439 = vpop.permute.xlu0 %438
  %v440 = vadd.f32 %v428, %v433
  %v441 = vadd.f32 %v429, %v435
  %v442 = vadd.f32 %v430, %v437
  %v443 = vadd.f32 %v431, %v439
  %444 = vrot.lane.b32.xlu0 %v428, 2
  %v445 = vpop.permute.xlu0 %444
  %446 = vrot.lane.b32.xlu0 %v429, 2
  %v447 = vpop.permute.xlu0 %446
  %448 = vrot.lane.b32.xlu0 %v430, 2
  %v449 = vpop.permute.xlu0 %448
  %450 = vrot.lane.b32.xlu0 %v431, 2
  %v451 = vpop.permute.xlu0 %450
  %v452 = vadd.f32 %v440, %v445
  %v453 = vadd.f32 %v441, %v447
  %v454 = vadd.f32 %v442, %v449
  %v455 = vadd.f32 %v443, %v451
  %456 = vrot.lane.b32.xlu0 %v428, 127
  %v457 = vpop.permute.xlu0 %456
  %458 = vrot.lane.b32.xlu0 %v429, 127
  %v459 = vpop.permute.xlu0 %458
  %460 = vrot.lane.b32.xlu0 %v430, 127
  %v461 = vpop.permute.xlu0 %460
  %462 = vrot.lane.b32.xlu0 %v431, 127
  %v463 = vpop.permute.xlu0 %462
  %v464 = vadd.f32 %v452, %v457
  %v465 = vadd.f32 %v453, %v459
  %v466 = vadd.f32 %v454, %v461
  %v467 = vadd.f32 %v455, %v463
  %468 = vrot.lane.b32.xlu0 %v428, 126
  %v469 = vpop.permute.xlu0 %468
  %470 = vrot.lane.b32.xlu0 %v429, 126
  %v471 = vpop.permute.xlu0 %470
  %472 = vrot.lane.b32.xlu0 %v430, 126
  %v473 = vpop.permute.xlu0 %472
  %474 = vrot.lane.b32.xlu0 %v431, 126
  %v475 = vpop.permute.xlu0 %474
  %v476 = vadd.f32 %v464, %v469
  %v477 = vadd.f32 %v465, %v471
  %v478 = vadd.f32 %v466, %v473
  %v479 = vadd.f32 %v467, %v475
  %v480 = vmul.f32 %v476, 0.0002
  %v481 = vmul.f32 %v477, 0.0002
  %v482 = vmul.f32 %v478, 0.0002
  %v483 = vmul.f32 %v479, 0.0002
  %v484 = vadd.f32 %v480, 1.0
  %v485 = vadd.f32 %v481, 1.0
  %v486 = vadd.f32 %v482, 1.0
  %v487 = vadd.f32 %v483, 1.0
  %v488 = vrsqrt.pop %v484
  %v489 = vrsqrt.pop %v485
  %v490 = vrsqrt.pop %v486
  %v491 = vrsqrt.pop %v487
  %v492 = vmul.f32 %v424, %v488
  %v493 = vmul.f32 %v425, %v489
  %v494 = vmul.f32 %v426, %v490
  %v495 = vmul.f32 %v427, %v491
  %v496 = vpack.c.bf16 %v493, %v492
  %v497 = vpack.c.bf16 %v495, %v494
  %v500 = vunpack.c.l.b16 %v496
  %v501 = vunpack.c.h.b16 %v496
  %v502 = vunpack.c.l.b16 %v497
  %v503 = vunpack.c.h.b16 %v497
  %v504 = vpack.c.b16 %v500, %v500
  %v505 = vpack.c.b16 %v501, %v501
  %v506 = vpack.c.b16 %v502, %v502
  %v507 = vpack.c.b16 %v503, %v503
  %512 = vst [vmem:[%s3] sm:$0xf] %v504
  %513 = vst [vmem:[%s3 + $0x4] sm:$0xf] %v505
  %514 = vst [vmem:[%s3 + $0x8] sm:$0xf] %v506
  %515 = vst [vmem:[%s3 + $0xc] sm:$0xf] %v507
  // Predicated region
  $region14: #{multi_encoder_forward.10} parent=0 // pred_check
    _
  $region15: #{multi_encoder_forward.10} parent=0 // pred_check_branch
    %517 = sbr.rel (0) target = $region17
  $region16: #{multi_encoder_forward.10} parent=0 // pred_region
    _
  $region17: #{multi_encoder_forward.10} parent=0 // pred_fallthru
    _
  // Predicated region
  $region18: #{multi_encoder_forward.10} parent=0 // pred_check
    _
  $region19: #{multi_encoder_forward.10} parent=0 // pred_check_branch
    %519 = sbr.rel (0) target = $region21
  $region20: #{multi_encoder_forward.10} parent=0 // pred_region
    _
  $region21: #{multi_encoder_forward.10} parent=0 // pred_fallthru
    _

// kernel: multi_encoder_forward.12
$region0: #{multi_encoder_forward.12}
  #allocation0 [shape = 'u32[]', space=smem, size = 0x4, offset = 0x4, fixed_abs, tag = 'smem constant byte address 0x4 - core index']
  #allocation1 [shape = 'u32[144,128]{1,0:T(1,128)}', space=vmem, size = 0x12000, scoped, tag = 'internal scratch']
  %s0 = inlined_call_operand.vmem [shape: bf16[512,48], index: 0, kind: input, shape index: {}]
  %s1 = inlined_call_operand.vmem [shape: bf16[512,288], index: 1, kind: input, shape index: {}]
  %s2 = inlined_call_operand.vmem [shape: bf16[512,512], index: 2, kind: input, shape index: {}]
  %s3 = inlined_call_operand.vmem [shape: bf16[48,128], index: 3, kind: input, shape index: {}]
  %s4 = inlined_call_operand.vmem [shape: bf16[288,128], index: 4, kind: input, shape index: {}]
  %s5 = inlined_call_operand.vmem [shape: bf16[512,128], index: 5, kind: input, shape index: {}]
  %s6 = inlined_call_operand.vmem [shape: f32[1,128], index: 6, kind: input, shape index: {}]
  %s7 = inlined_call_operand.vmem [shape: bf16[512,128], index: 7, kind: output, shape index: {}]
  %s8 = sld [smem:[#allocation0]]
  $region61: #{multi_encoder_forward.12} parent=0
    _
  %s10 = ssub.s32 1, %s8
  %s11 = scalar_select 0, %s10, %s8
  loop: start=0, step=1, limit=4
  $region2: #{multi_encoder_forward.12} parent=0 // loop_pre_header
    _
  $region3: #{multi_encoder_forward.12} parent=0 // loop_header
    %s13 = sphi 0, %s17
    %p14 = scmp.ge.s32.totalorder %s13, 4
    %s23 = sphi 0, %s25
    %s26 = sphi 0, %s23
    %s27 = sphi 0, %s26
    %s43 = sphi 0, %s27
    %s49 = sphi 0, %s51
    %s52 = sphi 0, %s49
    %s53 = sphi 0, %s52
    %s69 = sphi 0, %s53
    %s75 = sphi 0, %s77
    %s78 = sphi 0, %s75
    %s79 = sphi 0, %s78
    %s95 = sphi 0, %s79
    %s99 = sphi 0, %s99
    %s101 = sphi 0, %s99
    %s102 = sphi 0, %s101
    %s116 = sphi 0, %s102
    %s120 = sphi 0, %s120
    %s122 = sphi 0, %s120
    %s123 = sphi 0, %s122
    %s137 = sphi 0, %s123
    %s141 = sphi 0, %s141
    %s143 = sphi 0, %s141
    %s144 = sphi 0, %s143
    %s158 = sphi 0, %s144
    %s162 = sphi 0, %s162
    %s164 = sphi 0, %s162
    %s165 = sphi 0, %s164
    %s179 = sphi 0, %s165
    %s185 = sphi 0, %s187
    %s188 = sphi 0, %s185
    %s189 = sphi 0, %s188
    %s205 = sphi 0, %s189
  $region4: #{multi_encoder_forward.12} parent=0 // loop_header_branch
    %16 = sbr.rel (%p14) target = $region8
  $region5: #{multi_encoder_forward.12} parent=0 // loop_body
    %s18 = ssub.s32 %s13, 1
    %s19 = ssub.s32 %s13, 2
    %s20 = sadd.s32 %s13, 1
    %s21 = ssub.s32 %s13, %s20
    %p22 = scmp.eq.s32.totalorder %s21, 0
    %s24 = sadd.s32 %s23, 1
    %s25 = scalar_select %p22, %s23, %s24
    %p28 = pneg %p22
    %p29 = scmp.eq.s32.totalorder %s13, 1
    %p30 = por %p28, %p29
    %p31 = scmp.ne.s32.totalorder %s23, %s26
    %p32 = scmp.eq.s32.totalorder %s13, 0
    %p33 = por %p31, %p32
    %p34 = scmp.ne.s32.totalorder %s23, %s26
    %p35 = scmp.eq.s32.totalorder %s18, 1
    %p36 = por %p34, %p35
    %p37 = scmp.ne.s32.totalorder %s26, %s27
    %p38 = scmp.eq.s32.totalorder %s18, 0
    %p39 = por %p37, %p38
    %p40 = scmp.ne.s32.totalorder %s26, %s27
    %p41 = scmp.eq.s32.totalorder %s19, 1
    %p42 = por %p40, %p41
    %p44 = scmp.ne.s32.totalorder %s27, %s43
    %p45 = scmp.eq.s32.totalorder %s19, 0
    %p46 = por %p44, %p45
    %s47 = ssub.s32 %s13, %s20
    %p48 = scmp.eq.s32.totalorder %s47, 0
    %s50 = sadd.s32 %s49, 1
    %s51 = scalar_select %p48, %s49, %s50
    %p54 = pneg %p48
    %p55 = scmp.eq.s32.totalorder %s13, 1
    %p56 = por %p54, %p55
    %p57 = scmp.ne.s32.totalorder %s49, %s52
    %p58 = scmp.eq.s32.totalorder %s13, 0
    %p59 = por %p57, %p58
    %p60 = scmp.ne.s32.totalorder %s49, %s52
    %p61 = scmp.eq.s32.totalorder %s18, 1
    %p62 = por %p60, %p61
    %p63 = scmp.ne.s32.totalorder %s52, %s53
    %p64 = scmp.eq.s32.totalorder %s18, 0
    %p65 = por %p63, %p64
    %p66 = scmp.ne.s32.totalorder %s52, %s53
    %p67 = scmp.eq.s32.totalorder %s19, 1
    %p68 = por %p66, %p67
    %p70 = scmp.ne.s32.totalorder %s53, %s69
    %p71 = scmp.eq.s32.totalorder %s19, 0
    %p72 = por %p70, %p71
    %s73 = ssub.s32 %s13, %s20
    %p74 = scmp.eq.s32.totalorder %s73, 0
    %s76 = sadd.s32 %s75, 1
    %s77 = scalar_select %p74, %s75, %s76
    %p80 = pneg %p74
    %p81 = scmp.eq.s32.totalorder %s13, 1
    %p82 = por %p80, %p81
    %p83 = scmp.ne.s32.totalorder %s75, %s78
    %p84 = scmp.eq.s32.totalorder %s13, 0
    %p85 = por %p83, %p84
    %p86 = scmp.ne.s32.totalorder %s75, %s78
    %p87 = scmp.eq.s32.totalorder %s18, 1
    %p88 = por %p86, %p87
    %p89 = scmp.ne.s32.totalorder %s78, %s79
    %p90 = scmp.eq.s32.totalorder %s18, 0
    %p91 = por %p89, %p90
    %p92 = scmp.ne.s32.totalorder %s78, %s79
    %p93 = scmp.eq.s32.totalorder %s19, 1
    %p94 = por %p92, %p93
    %p96 = scmp.ne.s32.totalorder %s79, %s95
    %p97 = scmp.eq.s32.totalorder %s19, 0
    %p98 = por %p96, %p97
    %s100 = sadd.s32 %s99, 1
    %p103 = scmp.eq.s32.totalorder %s13, 1
    %p104 = scmp.ne.s32.totalorder %s99, %s101
    %p105 = scmp.eq.s32.totalorder %s13, 0
    %p106 = por %p104, %p105
    %p107 = scmp.ne.s32.totalorder %s99, %s101
    %p108 = scmp.eq.s32.totalorder %s18, 1
    %p109 = por %p107, %p108
    %p110 = scmp.ne.s32.totalorder %s101, %s102
    %p111 = scmp.eq.s32.totalorder %s18, 0
    %p112 = por %p110, %p111
    %p113 = scmp.ne.s32.totalorder %s101, %s102
    %p114 = scmp.eq.s32.totalorder %s19, 1
    %p115 = por %p113, %p114
    %p117 = scmp.ne.s32.totalorder %s102, %s116
    %p118 = scmp.eq.s32.totalorder %s19, 0
    %p119 = por %p117, %p118
    %s121 = sadd.s32 %s120, 1
    %p124 = scmp.eq.s32.totalorder %s13, 1
    %p125 = scmp.ne.s32.totalorder %s120, %s122
    %p126 = scmp.eq.s32.totalorder %s13, 0
    %p127 = por %p125, %p126
    %p128 = scmp.ne.s32.totalorder %s120, %s122
    %p129 = scmp.eq.s32.totalorder %s18, 1
    %p130 = por %p128, %p129
    %p131 = scmp.ne.s32.totalorder %s122, %s123
    %p132 = scmp.eq.s32.totalorder %s18, 0
    %p133 = por %p131, %p132
    %p134 = scmp.ne.s32.totalorder %s122, %s123
    %p135 = scmp.eq.s32.totalorder %s19, 1
    %p136 = por %p134, %p135
    %p138 = scmp.ne.s32.totalorder %s123, %s137
    %p139 = scmp.eq.s32.totalorder %s19, 0
    %p140 = por %p138, %p139
    %s142 = sadd.s32 %s141, 1
    %p145 = scmp.eq.s32.totalorder %s13, 1
    %p146 = scmp.ne.s32.totalorder %s141, %s143
    %p147 = scmp.eq.s32.totalorder %s13, 0
    %p148 = por %p146, %p147
    %p149 = scmp.ne.s32.totalorder %s141, %s143
    %p150 = scmp.eq.s32.totalorder %s18, 1
    %p151 = por %p149, %p150
    %p152 = scmp.ne.s32.totalorder %s143, %s144
    %p153 = scmp.eq.s32.totalorder %s18, 0
    %p154 = por %p152, %p153
    %p155 = scmp.ne.s32.totalorder %s143, %s144
    %p156 = scmp.eq.s32.totalorder %s19, 1
    %p157 = por %p155, %p156
    %p159 = scmp.ne.s32.totalorder %s144, %s158
    %p160 = scmp.eq.s32.totalorder %s19, 0
    %p161 = por %p159, %p160
    %s163 = sadd.s32 %s162, 1
    %p166 = scmp.eq.s32.totalorder %s13, 1
    %p167 = scmp.ne.s32.totalorder %s162, %s164
    %p168 = scmp.eq.s32.totalorder %s13, 0
    %p169 = por %p167, %p168
    %p170 = scmp.ne.s32.totalorder %s162, %s164
    %p171 = scmp.eq.s32.totalorder %s18, 1
    %p172 = por %p170, %p171
    %p173 = scmp.ne.s32.totalorder %s164, %s165
    %p174 = scmp.eq.s32.totalorder %s18, 0
    %p175 = por %p173, %p174
    %p176 = scmp.ne.s32.totalorder %s164, %s165
    %p177 = scmp.eq.s32.totalorder %s19, 1
    %p178 = por %p176, %p177
    %p180 = scmp.ne.s32.totalorder %s165, %s179
    %p181 = scmp.eq.s32.totalorder %s19, 0
    %p182 = por %p180, %p181
    %s183 = ssub.s32 %s13, %s20
    %p184 = scmp.eq.s32.totalorder %s183, 0
    %s186 = sadd.s32 %s185, 1
    %s187 = scalar_select %p184, %s185, %s186
    %p190 = pneg %p184
    %p191 = scmp.eq.s32.totalorder %s13, 1
    %p192 = por %p190, %p191
    %p193 = scmp.ne.s32.totalorder %s185, %s188
    %p194 = scmp.eq.s32.totalorder %s13, 0
    %p195 = por %p193, %p194
    %p196 = scmp.ne.s32.totalorder %s185, %s188
    %p197 = scmp.eq.s32.totalorder %s18, 1
    %p198 = por %p196, %p197
    %p199 = scmp.ne.s32.totalorder %s188, %s189
    %p200 = scmp.eq.s32.totalorder %s18, 0
    %p201 = por %p199, %p200
    %p202 = scmp.ne.s32.totalorder %s188, %s189
    %p203 = scmp.eq.s32.totalorder %s19, 1
    %p204 = por %p202, %p203
    %p206 = scmp.ne.s32.totalorder %s189, %s205
    %p207 = scmp.eq.s32.totalorder %s19, 0
    %p208 = por %p206, %p207
    %p209 = scmp.le.s32.totalorder 1, %s13
    %p210 = scmp.lt.s32.totalorder %s13, 3
    %p211 = pnand %p209, %p210
    %p212 = pneg %p211
    // Predicated region
    $region9: #{multi_encoder_forward.12} parent=5 // pred_check
      _
    $region10: #{multi_encoder_forward.12} parent=5 // pred_check_branch
      %214 = sbr.rel (%p211) target = $region12
    $region11: #{multi_encoder_forward.12} parent=5 // pred_region
      %s215 = ssub.s32 %s13, 1
      // Predicated region
      $region13: #{multi_encoder_forward.12} parent=11 // pred_check
        %p216 = pneg %p112
      $region14: #{multi_encoder_forward.12} parent=11 // pred_check_branch
        %218 = sbr.rel (%p216) target = $region16
      $region15: #{multi_encoder_forward.12} parent=11 // pred_region
        _
      $region16: #{multi_encoder_forward.12} parent=11 // pred_fallthru
        _
      // Predicated region
      $region17: #{multi_encoder_forward.12} parent=11 // pred_check
        %p219 = pneg %p133
      $region18: #{multi_encoder_forward.12} parent=11 // pred_check_branch
        %221 = sbr.rel (%p219) target = $region20
      $region19: #{multi_encoder_forward.12} parent=11 // pred_region
        _
      $region20: #{multi_encoder_forward.12} parent=11 // pred_fallthru
        _
      // Predicated region
      $region21: #{multi_encoder_forward.12} parent=11 // pred_check
        %p222 = pneg %p154
      $region22: #{multi_encoder_forward.12} parent=11 // pred_check_branch
        %224 = sbr.rel (%p222) target = $region24
      $region23: #{multi_encoder_forward.12} parent=11 // pred_region
        _
      $region24: #{multi_encoder_forward.12} parent=11 // pred_fallthru
        _
      // Predicated region
      $region25: #{multi_encoder_forward.12} parent=11 // pred_check
        %p225 = pneg %p175
      $region26: #{multi_encoder_forward.12} parent=11 // pred_check_branch
        %227 = sbr.rel (%p225) target = $region28
      $region27: #{multi_encoder_forward.12} parent=11 // pred_region
        _
      $region28: #{multi_encoder_forward.12} parent=11 // pred_fallthru
        _
    $region12: #{multi_encoder_forward.12} parent=5 // pred_fallthru
      _
    %p228 = scmp.lt.s32.totalorder %s13, 2
    // Predicated region
    $region29: #{multi_encoder_forward.12} parent=5 // pred_check
      %p229 = pneg %p228
    $region30: #{multi_encoder_forward.12} parent=5 // pred_check_branch
      %231 = sbr.rel (%p229) target = $region32
    $region31: #{multi_encoder_forward.12} parent=5 // pred_region
      // Predicated region
      $region33: #{multi_encoder_forward.12} parent=31 // pred_check
        %p232 = pneg %p33
      $region34: #{multi_encoder_forward.12} parent=31 // pred_check_branch
        %234 = sbr.rel (%p232) target = $region36
      $region35: #{multi_encoder_forward.12} parent=31 // pred_region
        %s235 = smul.u32 32, %s13
        %p236 = scmp.lt.s32.totalorder %s235, 63
        %s237 = scalar_select %p236, %s235, 63
        %s238 = smul.addr %s237, 4
        %s239 = scalar_lea.vmem %s0, %s238
        %s240 = smul.u32 32, %s13
      $region36: #{multi_encoder_forward.12} parent=31 // pred_fallthru
        _
      // Predicated region
      $region37: #{multi_encoder_forward.12} parent=31 // pred_check
        %p241 = pneg %p59
      $region38: #{multi_encoder_forward.12} parent=31 // pred_check_branch
        %243 = sbr.rel (%p241) target = $region40
      $region39: #{multi_encoder_forward.12} parent=31 // pred_region
        %s244 = smul.u32 32, %s13
        %p245 = scmp.lt.s32.totalorder %s244, 63
        %s246 = scalar_select %p245, %s244, 63
        %s247 = smul.addr %s246, 3
        %s248 = smul.addr %s247, 4
        %s249 = scalar_lea.vmem %s1, %s248
        %s250 = smul.u32 32, %s13
      $region40: #{multi_encoder_forward.12} parent=31 // pred_fallthru
        _
      // Predicated region
      $region41: #{multi_encoder_forward.12} parent=31 // pred_check
        %p251 = pneg %p85
      $region42: #{multi_encoder_forward.12} parent=31 // pred_check_branch
        %253 = sbr.rel (%p251) target = $region44
      $region43: #{multi_encoder_forward.12} parent=31 // pred_region
        %s254 = smul.u32 32, %s13
        %p255 = scmp.lt.s32.totalorder %s254, 63
        %s256 = scalar_select %p255, %s254, 63
        %s257 = smul.addr %s256, 4
        %s258 = smul.addr %s257, 4
        %s259 = scalar_lea.vmem %s2, %s258
        %s260 = smul.u32 32, %s13
      $region44: #{multi_encoder_forward.12} parent=31 // pred_fallthru
        _
    $region32: #{multi_encoder_forward.12} parent=5 // pred_fallthru
      _
    %p261 = scmp.le.s32.totalorder 1, %s13
    %p262 = scmp.lt.s32.totalorder %s13, 3
    %p263 = pnand %p261, %p262
    %p264 = pneg %p263
    // Predicated region
    $region45: #{multi_encoder_forward.12} parent=5 // pred_check
      _
    $region46: #{multi_encoder_forward.12} parent=5 // pred_check_branch
      %266 = sbr.rel (%p263) target = $region48
    $region47: #{multi_encoder_forward.12} parent=5 // pred_region
      %s267 = ssub.s32 %s13, 1
      %s268 = smul.u32 32, %s18
      %p269 = scmp.lt.s32.totalorder %s268, 63
      %s270 = scalar_select %p269, %s268, 63
      %s271 = smul.addr %s270, 4
      %s272 = scalar_lea.vmem %s0, %s271
      %p273 = pneg %p39
      %p274 = pneg %p36
      %s275 = smul.u32 32, %s18
      %p276 = scmp.lt.s32.totalorder %s275, 63
      %s277 = scalar_select %p276, %s275, 63
      %s278 = smul.addr %s277, 3
      %s279 = smul.addr %s278, 4
      %s280 = scalar_lea.vmem %s1, %s279
      %p281 = pneg %p65
      %p282 = pneg %p62
      %s283 = smul.u32 32, %s18
      %p284 = scmp.lt.s32.totalorder %s283, 63
      %s285 = scalar_select %p284, %s283, 63
      %s286 = smul.addr %s285, 4
      %s287 = smul.addr %s286, 4
      %s288 = scalar_lea.vmem %s2, %s287
      %p289 = pneg %p91
      %p290 = pneg %p88
      %p291 = pneg %p112
      %p292 = pneg %p109
      %p293 = pneg %p133
      %p294 = pneg %p130
      %p295 = pneg %p154
      %p296 = pneg %p151
      %p297 = pneg %p175
      %p298 = pneg %p172
      %p299 = pneg %p201
      %p300 = pneg %p198
      %s301 = smul.u32 32, %s18
      %p302 = scmp.lt.s32.totalorder %s301, 63
      %s303 = scalar_select %p302, %s301, 63
      %s304 = smul.addr %s303, 4
      %s305 = scalar_lea.vmem %s7, %s304
      %s306 = smul.u32 32, %s18
      %p307 = scmp.lt.s32.totalorder %s306, 63
      %s308 = scalar_select %p307, %s306, 63
      %s309 = smul.addr %s308, 4
      %s310 = scalar_lea.vmem %s0, %s309
      %s311 = smul.u32 32, %s18
      %s312 = smul.u32 32, %s18
      %p313 = scmp.lt.s32.totalorder %s312, 63
      %s314 = scalar_select %p313, %s312, 63
      %s315 = smul.addr %s314, 3
      %s316 = smul.addr %s315, 4
      %s317 = scalar_lea.vmem %s1, %s316
      %s318 = smul.u32 32, %s18
      %s319 = smul.u32 32, %s18
      %p320 = scmp.lt.s32.totalorder %s319, 63
      %s321 = scalar_select %p320, %s319, 63
      %s322 = smul.addr %s321, 4
      %s323 = smul.addr %s322, 4
      %s324 = scalar_lea.vmem %s2, %s323
      %s325 = smul.u32 32, %s18
      %s326 = smul.u32 32, %s18
      %p327 = scmp.lt.s32.totalorder %s326, 63
      %s328 = scalar_select %p327, %s326, 63
      %s329 = smul.addr %s328, 4
      %s330 = scalar_lea.vmem %s7, %s329
      %s331 = smul.u32 32, %s18
      %v333 = vld [vmem:[%s310] sm:$0xf]
      %v334 = vld [vmem:[%s310 + $0x4] sm:$0xf]
      %v335 = vld [vmem:[%s310 + $0x8] sm:$0xf]
      %v336 = vld [vmem:[%s310 + $0xc] sm:$0xf]
      %v337 = vld [vmem:[%s310 + $0x10] sm:$0xf]
      %v338 = vld [vmem:[%s310 + $0x14] sm:$0xf]
      %v339 = vld [vmem:[%s310 + $0x18] sm:$0xf]
      %v340 = vld [vmem:[%s310 + $0x1c] sm:$0xf]
      %v341 = vld [vmem:[%s310 + $0x20] sm:$0xf]
      %v342 = vld [vmem:[%s310 + $0x24] sm:$0xf]
      %v343 = vld [vmem:[%s310 + $0x28] sm:$0xf]
      %v344 = vld [vmem:[%s310 + $0x2c] sm:$0xf]
      %v345 = vld [vmem:[%s310 + $0x30] sm:$0xf]
      %v346 = vld [vmem:[%s310 + $0x34] sm:$0xf]
      %v347 = vld [vmem:[%s310 + $0x38] sm:$0xf]
      %v348 = vld [vmem:[%s310 + $0x3c] sm:$0xf]
      %v349 = vld [vmem:[%s310 + $0x40] sm:$0xf]
      %v350 = vld [vmem:[%s310 + $0x44] sm:$0xf]
      %v351 = vld [vmem:[%s310 + $0x48] sm:$0xf]
      %v352 = vld [vmem:[%s310 + $0x4c] sm:$0xf]
      %v353 = vld [vmem:[%s310 + $0x50] sm:$0xf]
      %v354 = vld [vmem:[%s310 + $0x54] sm:$0xf]
      %v355 = vld [vmem:[%s310 + $0x58] sm:$0xf]
      %v356 = vld [vmem:[%s310 + $0x5c] sm:$0xf]
      %v357 = vld [vmem:[%s310 + $0x60] sm:$0xf]
      %v358 = vld [vmem:[%s310 + $0x64] sm:$0xf]
      %v359 = vld [vmem:[%s310 + $0x68] sm:$0xf]
      %v360 = vld [vmem:[%s310 + $0x6c] sm:$0xf]
      %v361 = vld [vmem:[%s310 + $0x70] sm:$0xf]
      %v362 = vld [vmem:[%s310 + $0x74] sm:$0xf]
      %v363 = vld [vmem:[%s310 + $0x78] sm:$0xf]
      %v364 = vld [vmem:[%s310 + $0x7c] sm:$0xf]
      %v365 = vld [vmem:[%s3] sm:$0xf]
      %v366 = vld [vmem:[%s3 + $0x4] sm:$0xf]
      %v367 = vld [vmem:[%s3 + $0x8] sm:$0xf]
      %v368 = vld [vmem:[%s3 + $0xc] sm:$0xf]
      %v369 = vld [vmem:[%s3 + $0x10] sm:$0xf]
      %v370 = vld [vmem:[%s3 + $0x14] sm:$0xf]
      %v371 = vld [vmem:[%s317] sm:$0xff]
      %v372 = vld [vmem:[%s317 + $0x8] sm:$0xf]
      %v373 = vld [vmem:[%s317 + $0xc] sm:$0xff]
      %v374 = vld [vmem:[%s317 + $0x14] sm:$0xf]
      %v375 = vld [vmem:[%s317 + $0x18] sm:$0xff]
      %v376 = vld [vmem:[%s317 + $0x20] sm:$0xf]
      %v377 = vld [vmem:[%s317 + $0x24] sm:$0xff]
      %v378 = vld [vmem:[%s317 + $0x2c] sm:$0xf]
      %v379 = vld [vmem:[%s317 + $0x30] sm:$0xff]
      %v380 = vld [vmem:[%s317 + $0x38] sm:$0xf]
      %v381 = vld [vmem:[%s317 + $0x3c] sm:$0xff]
      %v382 = vld [vmem:[%s317 + $0x44] sm:$0xf]
      %v383 = vld [vmem:[%s317 + $0x48] sm:$0xff]
      %v384 = vld [vmem:[%s317 + $0x50] sm:$0xf]
      %v385 = vld [vmem:[%s317 + $0x54] sm:$0xff]
      %v386 = vld [vmem:[%s317 + $0x5c] sm:$0xf]
      %v387 = vld [vmem:[%s317 + $0x60] sm:$0xff]
      %v388 = vld [vmem:[%s317 + $0x68] sm:$0xf]
      %v389 = vld [vmem:[%s317 + $0x6c] sm:$0xff]
      %v390 = vld [vmem:[%s317 + $0x74] sm:$0xf]
      %v391 = vld [vmem:[%s317 + $0x78] sm:$0xff]
      %v392 = vld [vmem:[%s317 + $0x80] sm:$0xf]
      %v393 = vld [vmem:[%s317 + $0x84] sm:$0xff]
      %v394 = vld [vmem:[%s317 + $0x8c] sm:$0xf]
      %v395 = vld [vmem:[%s317 + $0x90] sm:$0xff]
      %v396 = vld [vmem:[%s317 + $0x98] sm:$0xf]
      %v397 = vld [vmem:[%s317 + $0x9c] sm:$0xff]
      %v398 = vld [vmem:[%s317 + $0xa4] sm:$0xf]
      %v399 = vld [vmem:[%s317 + $0xa8] sm:$0xff]
      %v400 = vld [vmem:[%s317 + $0xb0] sm:$0xf]
      %v401 = vld [vmem:[%s317 + $0xb4] sm:$0xff]
      %v402 = vld [vmem:[%s317 + $0xbc] sm:$0xf]
      %v403 = vld [vmem:[%s317 + $0xc0] sm:$0xff]
      %v404 = vld [vmem:[%s317 + $0xc8] sm:$0xf]
      %v405 = vld [vmem:[%s317 + $0xcc] sm:$0xff]
      %v406 = vld [vmem:[%s317 + $0xd4] sm:$0xf]
      %v407 = vld [vmem:[%s317 + $0xd8] sm:$0xff]
      %v408 = vld [vmem:[%s317 + $0xe0] sm:$0xf]
      %v409 = vld [vmem:[%s317 + $0xe4] sm:$0xff]
      %v410 = vld [vmem:[%s317 + $0xec] sm:$0xf]
      %v411 = vld [vmem:[%s317 + $0xf0] sm:$0xff]
      %v412 = vld [vmem:[%s317 + $0xf8] sm:$0xf]
      %v413 = vld [vmem:[%s317 + $0xfc] sm:$0xff]
      %v414 = vld [vmem:[%s317 + $0x104] sm:$0xf]
      %v415 = vld [vmem:[%s317 + $0x108] sm:$0xff]
      %v416 = vld [vmem:[%s317 + $0x110] sm:$0xf]
      %v417 = vld [vmem:[%s317 + $0x114] sm:$0xff]
      %v418 = vld [vmem:[%s317 + $0x11c] sm:$0xf]
      %v419 = vld [vmem:[%s317 + $0x120] sm:$0xff]
      %v420 = vld [vmem:[%s317 + $0x128] sm:$0xf]
      %v421 = vld [vmem:[%s317 + $0x12c] sm:$0xff]
      %v422 = vld [vmem:[%s317 + $0x134] sm:$0xf]
      %v423 = vld [vmem:[%s317 + $0x138] sm:$0xff]
      %v424 = vld [vmem:[%s317 + $0x140] sm:$0xf]
      %v425 = vld [vmem:[%s317 + $0x144] sm:$0xff]
      %v426 = vld [vmem:[%s317 + $0x14c] sm:$0xf]
      %v427 = vld [vmem:[%s317 + $0x150] sm:$0xff]
      %v428 = vld [vmem:[%s317 + $0x158] sm:$0xf]
      %v429 = vld [vmem:[%s317 + $0x15c] sm:$0xff]
      %v430 = vld [vmem:[%s317 + $0x164] sm:$0xf]
      %v431 = vld [vmem:[%s317 + $0x168] sm:$0xff]
      %v432 = vld [vmem:[%s317 + $0x170] sm:$0xf]
      %v433 = vld [vmem:[%s317 + $0x174] sm:$0xff]
      %v434 = vld [vmem:[%s317 + $0x17c] sm:$0xf]
      %v435 = vld [vmem:[%s4] sm:$0xf]
      %v436 = vld [vmem:[%s4 + $0x4] sm:$0xf]
      %v437 = vld [vmem:[%s4 + $0x8] sm:$0xf]
      %v438 = vld [vmem:[%s4 + $0xc] sm:$0xf]
      %v439 = vld [vmem:[%s4 + $0x10] sm:$0xf]
      %v440 = vld [vmem:[%s4 + $0x14] sm:$0xf]
      %v441 = vld [vmem:[%s4 + $0x18] sm:$0xf]
      %v442 = vld [vmem:[%s4 + $0x1c] sm:$0xf]
      %v443 = vld [vmem:[%s4 + $0x20] sm:$0xf]
      %v444 = vld [vmem:[%s4 + $0x24] sm:$0xf]
      %v445 = vld [vmem:[%s4 + $0x28] sm:$0xf]
      %v446 = vld [vmem:[%s4 + $0x2c] sm:$0xf]
      %v447 = vld [vmem:[%s4 + $0x30] sm:$0xf]
      %v448 = vld [vmem:[%s4 + $0x34] sm:$0xf]
      %v449 = vld [vmem:[%s4 + $0x38] sm:$0xf]
      %v450 = vld [vmem:[%s4 + $0x3c] sm:$0xf]
      %v451 = vld [vmem:[%s4 + $0x40] sm:$0xf]
      %v452 = vld [vmem:[%s4 + $0x44] sm:$0xf]
      %v453 = vld [vmem:[%s4 + $0x48] sm:$0xf]
      %v454 = vld [vmem:[%s4 + $0x4c] sm:$0xf]
      %v455 = vld [vmem:[%s4 + $0x50] sm:$0xf]
      %v456 = vld [vmem:[%s4 + $0x54] sm:$0xf]
      %v457 = vld [vmem:[%s4 + $0x58] sm:$0xf]
      %v458 = vld [vmem:[%s4 + $0x5c] sm:$0xf]
      %v459 = vld [vmem:[%s4 + $0x60] sm:$0xf]
      %v460 = vld [vmem:[%s4 + $0x64] sm:$0xf]
      %v461 = vld [vmem:[%s4 + $0x68] sm:$0xf]
      %v462 = vld [vmem:[%s4 + $0x6c] sm:$0xf]
      %v463 = vld [vmem:[%s4 + $0x70] sm:$0xf]
      %v464 = vld [vmem:[%s4 + $0x74] sm:$0xf]
      %v465 = vld [vmem:[%s4 + $0x78] sm:$0xf]
      %v466 = vld [vmem:[%s4 + $0x7c] sm:$0xf]
      %v467 = vld [vmem:[%s4 + $0x80] sm:$0xf]
      %v468 = vld [vmem:[%s4 + $0x84] sm:$0xf]
      %v469 = vld [vmem:[%s4 + $0x88] sm:$0xf]
      %v470 = vld [vmem:[%s4 + $0x8c] sm:$0xf]
      %v535 = vunpack.c.l.b16 %v371
      %v536 = vunpack.c.h.b16 %v371
      %v537 = vunpack.c.l.b16 %v372
      %v538 = vunpack.c.l.b16 %v373
      %v539 = vunpack.c.h.b16 %v373
      %v540 = vunpack.c.l.b16 %v374
      %v541 = vunpack.c.l.b16 %v375
      %v542 = vunpack.c.h.b16 %v375
      %v543 = vunpack.c.l.b16 %v376
      %v544 = vunpack.c.l.b16 %v377
      %v545 = vunpack.c.h.b16 %v377
      %v546 = vunpack.c.l.b16 %v378
      %v547 = vunpack.c.l.b16 %v379
      %v548 = vunpack.c.h.b16 %v379
      %v549 = vunpack.c.l.b16 %v380
      %v550 = vunpack.c.l.b16 %v381
      %v551 = vunpack.c.h.b16 %v381
      %v552 = vunpack.c.l.b16 %v382
      %v553 = vunpack.c.l.b16 %v383
      %v554 = vunpack.c.h.b16 %v383
      %v555 = vunpack.c.l.b16 %v384
      %v556 = vunpack.c.l.b16 %v385
      %v557 = vunpack.c.h.b16 %v385
      %v558 = vunpack.c.l.b16 %v386
      %v559 = vunpack.c.l.b16 %v387
      %v560 = vunpack.c.h.b16 %v387
      %v561 = vunpack.c.l.b16 %v388
      %v562 = vunpack.c.l.b16 %v389
      %v563 = vunpack.c.h.b16 %v389
      %v564 = vunpack.c.l.b16 %v390
      %v565 = vunpack.c.l.b16 %v391
      %v566 = vunpack.c.h.b16 %v391
      %v567 = vunpack.c.l.b16 %v392
      %v568 = vunpack.c.l.b16 %v393
      %v569 = vunpack.c.h.b16 %v393
      %v570 = vunpack.c.l.b16 %v394
      %v571 = vunpack.c.l.b16 %v395
      %v572 = vunpack.c.h.b16 %v395
      %v573 = vunpack.c.l.b16 %v396
      %v574 = vunpack.c.l.b16 %v397
      %v575 = vunpack.c.h.b16 %v397
      %v576 = vunpack.c.l.b16 %v398
      %v577 = vunpack.c.l.b16 %v399
      %v578 = vunpack.c.h.b16 %v399
      %v579 = vunpack.c.l.b16 %v400
      %v580 = vunpack.c.l.b16 %v401
      %v581 = vunpack.c.h.b16 %v401
      %v582 = vunpack.c.l.b16 %v402
      %v583 = vunpack.c.l.b16 %v403
      %v584 = vunpack.c.h.b16 %v403
      %v585 = vunpack.c.l.b16 %v404
      %v586 = vunpack.c.l.b16 %v405
      %v587 = vunpack.c.h.b16 %v405
      %v588 = vunpack.c.l.b16 %v406
      %v589 = vunpack.c.l.b16 %v407
      %v590 = vunpack.c.h.b16 %v407
      %v591 = vunpack.c.l.b16 %v408
      %v592 = vunpack.c.l.b16 %v409
      %v593 = vunpack.c.h.b16 %v409
      %v594 = vunpack.c.l.b16 %v410
      %v595 = vunpack.c.l.b16 %v411
      %v596 = vunpack.c.h.b16 %v411
      %v597 = vunpack.c.l.b16 %v412
      %v598 = vunpack.c.l.b16 %v413
      %v599 = vunpack.c.h.b16 %v413
      %v600 = vunpack.c.l.b16 %v414
      %v601 = vunpack.c.l.b16 %v415
      %v602 = vunpack.c.h.b16 %v415
      %v603 = vunpack.c.l.b16 %v416
      %v604 = vunpack.c.l.b16 %v417
      %v605 = vunpack.c.h.b16 %v417
      %v606 = vunpack.c.l.b16 %v418
      %v607 = vunpack.c.l.b16 %v419
      %v608 = vunpack.c.h.b16 %v419
      %v609 = vunpack.c.l.b16 %v420
      %v610 = vunpack.c.l.b16 %v421
      %v611 = vunpack.c.h.b16 %v421
      %v612 = vunpack.c.l.b16 %v422
      %v613 = vunpack.c.l.b16 %v423
      %v614 = vunpack.c.h.b16 %v423
      %v615 = vunpack.c.l.b16 %v424
      %v616 = vunpack.c.l.b16 %v425
      %v617 = vunpack.c.h.b16 %v425
      %v618 = vunpack.c.l.b16 %v426
      %v619 = vunpack.c.l.b16 %v427
      %v620 = vunpack.c.h.b16 %v427
      %v621 = vunpack.c.l.b16 %v428
      %v622 = vunpack.c.l.b16 %v429
      %v623 = vunpack.c.h.b16 %v429
      %v624 = vunpack.c.l.b16 %v430
      %v625 = vunpack.c.l.b16 %v431
      %v626 = vunpack.c.h.b16 %v431
      %v627 = vunpack.c.l.b16 %v432
      %v628 = vunpack.c.l.b16 %v433
      %v629 = vunpack.c.h.b16 %v433
      %v630 = vunpack.c.l.b16 %v434
      %v631 = vpack.c.b16 %v538, %v535
      %v632 = vpack.c.b16 %v539, %v536
      %v633 = vpack.c.b16 %v540, %v537
      %v634 = vpack.c.b16 %v544, %v541
      %v635 = vpack.c.b16 %v545, %v542
      %v636 = vpack.c.b16 %v546, %v543
      %v637 = vpack.c.b16 %v550, %v547
      %v638 = vpack.c.b16 %v551, %v548
      %v639 = vpack.c.b16 %v552, %v549
      %v640 = vpack.c.b16 %v556, %v553
      %v641 = vpack.c.b16 %v557, %v554
      %v642 = vpack.c.b16 %v558, %v555
      %v643 = vpack.c.b16 %v562, %v559
      %v644 = vpack.c.b16 %v563, %v560
      %v645 = vpack.c.b16 %v564, %v561
      %v646 = vpack.c.b16 %v568, %v565
      %v647 = vpack.c.b16 %v569, %v566
      %v648 = vpack.c.b16 %v570, %v567
      %v649 = vpack.c.b16 %v574, %v571
      %v650 = vpack.c.b16 %v575, %v572
      %v651 = vpack.c.b16 %v576, %v573
      %v652 = vpack.c.b16 %v580, %v577
      %v653 = vpack.c.b16 %v581, %v578
      %v654 = vpack.c.b16 %v582, %v579
      %v655 = vpack.c.b16 %v586, %v583
      %v656 = vpack.c.b16 %v587, %v584
      %v657 = vpack.c.b16 %v588, %v585
      %v658 = vpack.c.b16 %v592, %v589
      %v659 = vpack.c.b16 %v593, %v590
      %v660 = vpack.c.b16 %v594, %v591
      %v661 = vpack.c.b16 %v598, %v595
      %v662 = vpack.c.b16 %v599, %v596
      %v663 = vpack.c.b16 %v600, %v597
      %v664 = vpack.c.b16 %v604, %v601
      %v665 = vpack.c.b16 %v605, %v602
      %v666 = vpack.c.b16 %v606, %v603
      %v667 = vpack.c.b16 %v610, %v607
      %v668 = vpack.c.b16 %v611, %v608
      %v669 = vpack.c.b16 %v612, %v609
      %v670 = vpack.c.b16 %v616, %v613
      %v671 = vpack.c.b16 %v617, %v614
      %v672 = vpack.c.b16 %v618, %v615
      %v673 = vpack.c.b16 %v622, %v619
      %v674 = vpack.c.b16 %v623, %v620
      %v675 = vpack.c.b16 %v624, %v621
      %v676 = vpack.c.b16 %v628, %v625
      %v677 = vpack.c.b16 %v629, %v626
      %v678 = vpack.c.b16 %v630, %v627
      %v747 = vunpack.c.l.b16 %v435
      %v748 = vunpack.c.l.b16 %v436
      %v749 = vunpack.c.l.b16 %v437
      %v750 = vunpack.c.l.b16 %v438
      %v751 = vunpack.c.l.b16 %v439
      %v752 = vunpack.c.l.b16 %v440
      %v753 = vunpack.c.l.b16 %v441
      %v754 = vunpack.c.l.b16 %v442
      %v755 = vunpack.c.l.b16 %v443
      %v756 = vunpack.c.l.b16 %v444
      %v757 = vunpack.c.l.b16 %v445
      %v758 = vunpack.c.l.b16 %v446
      %v759 = vunpack.c.l.b16 %v447
      %v760 = vunpack.c.l.b16 %v448
      %v761 = vunpack.c.l.b16 %v449
      %v762 = vunpack.c.l.b16 %v450
      %v763 = vunpack.c.l.b16 %v451
      %v764 = vunpack.c.l.b16 %v452
      %v765 = vunpack.c.l.b16 %v453
      %v766 = vunpack.c.l.b16 %v454
      %v767 = vunpack.c.l.b16 %v455
      %v768 = vunpack.c.l.b16 %v456
      %v769 = vunpack.c.l.b16 %v457
      %v770 = vunpack.c.l.b16 %v458
      %v771 = vunpack.c.l.b16 %v459
      %v772 = vunpack.c.l.b16 %v460
      %v773 = vunpack.c.l.b16 %v461
      %v774 = vunpack.c.l.b16 %v462
      %v775 = vunpack.c.l.b16 %v463
      %v776 = vunpack.c.l.b16 %v464
      %v777 = vunpack.c.l.b16 %v465
      %v778 = vunpack.c.l.b16 %v466
      %v779 = vunpack.c.l.b16 %v467
      %v780 = vunpack.c.l.b16 %v468
      %v781 = vunpack.c.l.b16 %v469
      %v782 = vunpack.c.l.b16 %v470
      %v783 = vpack.c.b16 %v748, %v747
      %v784 = vpack.c.b16 %v750, %v749
      %v785 = vpack.c.b16 %v752, %v751
      %v786 = vpack.c.b16 %v754, %v753
      %v787 = vpack.c.b16 %v756, %v755
      %v788 = vpack.c.b16 %v758, %v757
      %v789 = vpack.c.b16 %v760, %v759
      %v790 = vpack.c.b16 %v762, %v761
      %v791 = vpack.c.b16 %v764, %v763
      %v792 = vpack.c.b16 %v766, %v765
      %v793 = vpack.c.b16 %v768, %v767
      %v794 = vpack.c.b16 %v770, %v769
      %v795 = vpack.c.b16 %v772, %v771
      %v796 = vpack.c.b16 %v774, %v773
      %v797 = vpack.c.b16 %v776, %v775
      %v798 = vpack.c.b16 %v778, %v777
      %v799 = vpack.c.b16 %v780, %v779
      %v800 = vpack.c.b16 %v782, %v781
      %vm819 = vcmask 261120
      %v821 = vsel %vm819, %v633, 0
      %v824 = vsel %vm819, %v636, 0
      %v827 = vsel %vm819, %v639, 0
      %v830 = vsel %vm819, %v642, 0
      %v833 = vsel %vm819, %v645, 0
      %v836 = vsel %vm819, %v648, 0
      %v839 = vsel %vm819, %v651, 0
      %v842 = vsel %vm819, %v654, 0
      %v845 = vsel %vm819, %v657, 0
      %v848 = vsel %vm819, %v660, 0
      %v851 = vsel %vm819, %v663, 0
      %v854 = vsel %vm819, %v666, 0
      %v857 = vsel %vm819, %v669, 0
      %v860 = vsel %vm819, %v672, 0
      %v863 = vsel %vm819, %v675, 0
      %v866 = vsel %vm819, %v678, 0
      %868 = vmatprep.subr.bf16.mxu0 0
      %869 = vmatpush1.bf16.msra.mxu0 %v783
      %870 = vmatprep.subr.bf16.mxu0 0
      %871 = vmatpush1.bf16.msra.mxu0 %v784
      %872 = vmatprep.subr.bf16.mxu0 0
      %873 = vmatpush1.bf16.msra.mxu0 %v785
      %874 = vmatprep.subr.bf16.mxu0 0
      %875 = vmatpush1.bf16.msra.mxu0 %v786
      %876 = vmatprep.subr.bf16.mxu0 0
      %877 = vmatpush1.bf16.msra.mxu0 %v787
      %878 = vmatprep.subr.bf16.mxu0 0
      %879 = vmatpush1.bf16.msra.mxu0 %v788
      %880 = vmatprep.subr.bf16.mxu0 0
      %881 = vmatpush1.bf16.msra.mxu0 %v789
      %882 = vmatprep.subr.bf16.mxu0 0
      %883 = vmatpush1.bf16.msra.mxu0 %v790
      %884 = vmatprep.subr.bf16.mxu0 0
      %885 = vmatpush1.bf16.msra.mxu0 %v791
      %886 = vmatprep.subr.bf16.mxu0 0
      %887 = vmatpush1.bf16.msra.mxu0 %v792
      %888 = vmatprep.subr.bf16.mxu0 0
      %889 = vmatpush1.bf16.msra.mxu0 %v793
      %890 = vmatprep.subr.bf16.mxu0 0
      %891 = vmatpush1.bf16.msra.mxu0 %v794
      %892 = vmatprep.subr.bf16.mxu0 0
      %893 = vmatpush1.bf16.msra.mxu0 %v795
      %894 = vmatprep.subr.bf16.mxu0 0
      %895 = vmatpush1.bf16.msra.mxu0 %v796
      %896 = vmatprep.subr.bf16.mxu0 0
      %897 = vmatpush1.bf16.msra.mxu0 %v797
      %898 = vmatprep.subr.bf16.mxu0 0
      %899 = vmatpush1.bf16.msra.mxu0 %v798
      %900 = vmatprep.mubr.bf16.mxu0 %v632
      %901 = vmatmul.mubr.bf16.gmra.mrb[0].mxu0 %v631
      %v902 = vpop.f32.mrb[0].mxu0
      %v903 = vadd.f32 0.0, %v902
      %v904 = vpop.f32.mrb[0].mxu0
      %v905 = vpop.f32.mrb[0].mxu0
      %v906 = vadd.f32 0.0, %v905
      %v907 = vpop.f32.mrb[0].mxu0
      %908 = vmatprep.mubr.bf16.mxu0 %v635
      %909 = vmatmul.mubr.bf16.gmra.mrb[0].mxu0 %v634
      %v910 = vpop.f32.mrb[0].mxu0
      %v911 = vadd.f32 0.0, %v910
      %v912 = vpop.f32.mrb[0].mxu0
      %v913 = vpop.f32.mrb[0].mxu0
      %v914 = vadd.f32 0.0, %v913
      %v915 = vpop.f32.mrb[0].mxu0
      %916 = vmatprep.mubr.bf16.mxu0 %v638
      %917 = vmatmul.mubr.bf16.gmra.mrb[0].mxu0 %v637
      %v918 = vpop.f32.mrb[0].mxu0
      %v919 = vadd.f32 0.0, %v918
      %v920 = vpop.f32.mrb[0].mxu0
      %v921 = vpop.f32.mrb[0].mxu0
      %v922 = vadd.f32 0.0, %v921
      %v923 = vpop.f32.mrb[0].mxu0
      %924 = vmatprep.mubr.bf16.mxu0 %v641
      %925 = vmatmul.mubr.bf16.gmra.mrb[0].mxu0 %v640
      %v926 = vpop.f32.mrb[0].mxu0
      %v927 = vadd.f32 0.0, %v926
      %v928 = vpop.f32.mrb[0].mxu0
      %v929 = vpop.f32.mrb[0].mxu0
      %v930 = vadd.f32 0.0, %v929
      %v931 = vpop.f32.mrb[0].mxu0
      %932 = vmatprep.mubr.bf16.mxu0 %v644
      %933 = vmatmul.mubr.bf16.gmra.mrb[0].mxu0 %v643
      %v934 = vpop.f32.mrb[0].mxu0
      %v935 = vadd.f32 0.0, %v934
      %v936 = vpop.f32.mrb[0].mxu0
      %v937 = vpop.f32.mrb[0].mxu0
      %v938 = vadd.f32 0.0, %v937
      %v939 = vpop.f32.mrb[0].mxu0
      %940 = vmatprep.mubr.bf16.mxu0 %v647
      %941 = vmatmul.mubr.bf16.gmra.mrb[0].mxu0 %v646
      %v942 = vpop.f32.mrb[0].mxu0
      %v943 = vadd.f32 0.0, %v942
      %v944 = vpop.f32.mrb[0].mxu0
      %v945 = vpop.f32.mrb[0].mxu0
      %v946 = vadd.f32 0.0, %v945
      %v947 = vpop.f32.mrb[0].mxu0
      %948 = vmatprep.mubr.bf16.mxu0 %v650
      %949 = vmatmul.mubr.bf16.gmra.mrb[0].mxu0 %v649
      %v950 = vpop.f32.mrb[0].mxu0
      %v951 = vadd.f32 0.0, %v950
      %v952 = vpop.f32.mrb[0].mxu0
      %v953 = vpop.f32.mrb[0].mxu0
      %v954 = vadd.f32 0.0, %v953
      %v955 = vpop.f32.mrb[0].mxu0
      %956 = vmatprep.mubr.bf16.mxu0 %v653
      %957 = vmatmul.mubr.bf16.gmra.mrb[0].mxu0 %v652
      %v958 = vpop.f32.mrb[0].mxu0
      %v959 = vadd.f32 0.0, %v958
      %v960 = vpop.f32.mrb[0].mxu0
      %v961 = vpop.f32.mrb[0].mxu0
      %v962 = vadd.f32 0.0, %v961
      %v963 = vpop.f32.mrb[0].mxu0
      %964 = vmatprep.mubr.bf16.mxu0 %v656
      %965 = vmatmul.mubr.bf16.gmra.mrb[0].mxu0 %v655
      %v966 = vpop.f32.mrb[0].mxu0
      %v967 = vadd.f32 0.0, %v966
      %v968 = vpop.f32.mrb[0].mxu0
      %v969 = vpop.f32.mrb[0].mxu0
      %v970 = vadd.f32 0.0, %v969
      %v971 = vpop.f32.mrb[0].mxu0
      %972 = vmatprep.mubr.bf16.mxu0 %v659
      %973 = vmatmul.mubr.bf16.gmra.mrb[0].mxu0 %v658
      %v974 = vpop.f32.mrb[0].mxu0
      %v975 = vadd.f32 0.0, %v974
      %v976 = vpop.f32.mrb[0].mxu0
      %v977 = vpop.f32.mrb[0].mxu0
      %v978 = vadd.f32 0.0, %v977
      %v979 = vpop.f32.mrb[0].mxu0
      %980 = vmatprep.mubr.bf16.mxu0 %v662
      %981 = vmatmul.mubr.bf16.gmra.mrb[0].mxu0 %v661
      %v982 = vpop.f32.mrb[0].mxu0
      %v983 = vadd.f32 0.0, %v982
      %v984 = vpop.f32.mrb[0].mxu0
      %v985 = vpop.f32.mrb[0].mxu0
      %v986 = vadd.f32 0.0, %v985
      %v987 = vpop.f32.mrb[0].mxu0
      %988 = vmatprep.mubr.bf16.mxu0 %v665
      %989 = vmatmul.mubr.bf16.gmra.mrb[0].mxu0 %v664
      %v990 = vpop.f32.mrb[0].mxu0
      %v991 = vadd.f32 0.0, %v990
      %v992 = vpop.f32.mrb[0].mxu0
      %v993 = vpop.f32.mrb[0].mxu0
      %v994 = vadd.f32 0.0, %v993
      %v995 = vpop.f32.mrb[0].mxu0
      %996 = vmatprep.mubr.bf16.mxu0 %v668
      %997 = vmatmul.mubr.bf16.gmra.mrb[0].mxu0 %v667
      %v998 = vpop.f32.mrb[0].mxu0
      %v999 = vadd.f32 0.0, %v998
      %v1000 = vpop.f32.mrb[0].mxu0
      %v1001 = vpop.f32.mrb[0].mxu0
      %v1002 = vadd.f32 0.0, %v1001
      %v1003 = vpop.f32.mrb[0].mxu0
      %1004 = vmatprep.mubr.bf16.mxu0 %v671
      %1005 = vmatmul.mubr.bf16.gmra.mrb[0].mxu0 %v670
      %v1006 = vpop.f32.mrb[0].mxu0
      %v1007 = vadd.f32 0.0, %v1006
      %v1008 = vpop.f32.mrb[0].mxu0
      %v1009 = vpop.f32.mrb[0].mxu0
      %v1010 = vadd.f32 0.0, %v1009
      %v1011 = vpop.f32.mrb[0].mxu0
      %1012 = vmatprep.mubr.bf16.mxu0 %v674
      %1013 = vmatmul.mubr.bf16.gmra.mrb[0].mxu0 %v673
      %v1014 = vpop.f32.mrb[0].mxu0
      %v1015 = vadd.f32 0.0, %v1014
      %v1016 = vpop.f32.mrb[0].mxu0
      %v1017 = vpop.f32.mrb[0].mxu0
      %v1018 = vadd.f32 0.0, %v1017
      %v1019 = vpop.f32.mrb[0].mxu0
      %1020 = vmatprep.mubr.bf16.mxu0 %v677
      %1021 = vmatmul.mubr.bf16.gmra.mrb[0].mxu0 %v676
      %v1022 = vpop.f32.mrb[0].mxu0
      %v1023 = vadd.f32 0.0, %v1022
      %v1024 = vpop.f32.mrb[0].mxu0
      %v1025 = vpop.f32.mrb[0].mxu0
      %v1026 = vadd.f32 0.0, %v1025
      %v1027 = vpop.f32.mrb[0].mxu0
      %1028 = vdwg.mxu0
      %1029 = vmatprep.subr.bf16.mxu0 0
      %1030 = vmatpush1.bf16.msra.mxu0 %v799
      %1031 = vmatprep.subr.bf16.mxu0 0
      %1032 = vmatpush1.bf16.msra.mxu0 %v800
      %1033 = vmatprep.subr.bf16.mxu0 0
      %1034 = vmatpush1.bf16.msra.mxu0 0
      %1035 = vmatprep.subr.bf16.mxu0 0
      %1036 = vmatpush1.bf16.msra.mxu0 0
      %1037 = vmatprep.subr.bf16.mxu0 0
      %1038 = vmatpush1.bf16.msra.mxu0 0
      %1039 = vmatprep.subr.bf16.mxu0 0
      %1040 = vmatpush1.bf16.msra.mxu0 0
      %1041 = vmatprep.subr.bf16.mxu0 0
      %1042 = vmatpush1.bf16.msra.mxu0 0
      %1043 = vmatprep.subr.bf16.mxu0 0
      %1044 = vmatpush1.bf16.msra.mxu0 0
      %1045 = vmatprep.subr.bf16.mxu0 0
      %1046 = vmatpush1.bf16.msra.mxu0 0
      %1047 = vmatprep.subr.bf16.mxu0 0
      %1048 = vmatpush1.bf16.msra.mxu0 0
      %1049 = vmatprep.subr.bf16.mxu0 0
      %1050 = vmatpush1.bf16.msra.mxu0 0
      %1051 = vmatprep.subr.bf16.mxu0 0
      %1052 = vmatpush1.bf16.msra.mxu0 0
      %1053 = vmatprep.subr.bf16.mxu0 0
      %1054 = vmatpush1.bf16.msra.mxu0 0
      %1055 = vmatprep.subr.bf16.mxu0 0
      %1056 = vmatpush1.bf16.msra.mxu0 0
      %1057 = vmatprep.subr.bf16.mxu0 0
      %1058 = vmatpush1.bf16.msra.mxu0 0
      %1059 = vmatprep.subr.bf16.mxu0 0
      %1060 = vmatpush1.bf16.msra.mxu0 0
      %1061 = vmatprep.mubr.bf16.mxu0 0
      %1062 = vmatmul.mubr.bf16.gmra.mrb[0].mxu0 %v821
      %v1063 = vpop.f32.mrb[0].mxu0
      %v1064 = vadd.f32 %v903, %v1063
      %v1065 = vpop.f32.mrb[0].mxu0
      %v1066 = vpop.f32.mrb[0].mxu0
      %v1067 = vadd.f32 %v906, %v1066
      %v1068 = vpop.f32.mrb[0].mxu0
      %1069 = vmatprep.mubr.bf16.mxu0 0
      %1070 = vmatmul.mubr.bf16.gmra.mrb[0].mxu0 %v824
      %v1071 = vpop.f32.mrb[0].mxu0
      %v1072 = vadd.f32 %v911, %v1071
      %v1073 = vpop.f32.mrb[0].mxu0
      %v1074 = vpop.f32.mrb[0].mxu0
      %v1075 = vadd.f32 %v914, %v1074
      %v1076 = vpop.f32.mrb[0].mxu0
      %1077 = vmatprep.mubr.bf16.mxu0 0
      %1078 = vmatmul.mubr.bf16.gmra.mrb[0].mxu0 %v827
      %v1079 = vpop.f32.mrb[0].mxu0
      %v1080 = vadd.f32 %v919, %v1079
      %v1081 = vpop.f32.mrb[0].mxu0
      %v1082 = vpop.f32.mrb[0].mxu0
      %v1083 = vadd.f32 %v922, %v1082
      %v1084 = vpop.f32.mrb[0].mxu0
      %1085 = vmatprep.mubr.bf16.mxu0 0
      %1086 = vmatmul.mubr.bf16.gmra.mrb[0].mxu0 %v830
      %v1087 = vpop.f32.mrb[0].mxu0
      %v1088 = vadd.f32 %v927, %v1087
      %v1089 = vpop.f32.mrb[0].mxu0
      %v1090 = vpop.f32.mrb[0].mxu0
      %v1091 = vadd.f32 %v930, %v1090
      %v1092 = vpop.f32.mrb[0].mxu0
      %1093 = vmatprep.mubr.bf16.mxu0 0
      %1094 = vmatmul.mubr.bf16.gmra.mrb[0].mxu0 %v833
      %v1095 = vpop.f32.mrb[0].mxu0
      %v1096 = vadd.f32 %v935, %v1095
      %v1097 = vpop.f32.mrb[0].mxu0
      %v1098 = vpop.f32.mrb[0].mxu0
      %v1099 = vadd.f32 %v938, %v1098
      %v1100 = vpop.f32.mrb[0].mxu0
      %1101 = vmatprep.mubr.bf16.mxu0 0
      %1102 = vmatmul.mubr.bf16.gmra.mrb[0].mxu0 %v836
      %v1103 = vpop.f32.mrb[0].mxu0
      %v1104 = vadd.f32 %v943, %v1103
      %v1105 = vpop.f32.mrb[0].mxu0
      %v1106 = vpop.f32.mrb[0].mxu0
      %v1107 = vadd.f32 %v946, %v1106
      %v1108 = vpop.f32.mrb[0].mxu0
      %1109 = vmatprep.mubr.bf16.mxu0 0
      %1110 = vmatmul.mubr.bf16.gmra.mrb[0].mxu0 %v839
      %v1111 = vpop.f32.mrb[0].mxu0
      %v1112 = vadd.f32 %v951, %v1111
      %v1113 = vpop.f32.mrb[0].mxu0
      %v1114 = vpop.f32.mrb[0].mxu0
      %v1115 = vadd.f32 %v954, %v1114
      %v1116 = vpop.f32.mrb[0].mxu0
      %1117 = vmatprep.mubr.bf16.mxu0 0
      %1118 = vmatmul.mubr.bf16.gmra.mrb[0].mxu0 %v842
      %v1119 = vpop.f32.mrb[0].mxu0
      %v1120 = vadd.f32 %v959, %v1119
      %v1121 = vpop.f32.mrb[0].mxu0
      %v1122 = vpop.f32.mrb[0].mxu0
      %v1123 = vadd.f32 %v962, %v1122
      %v1124 = vpop.f32.mrb[0].mxu0
      %1125 = vmatprep.mubr.bf16.mxu0 0
      %1126 = vmatmul.mubr.bf16.gmra.mrb[0].mxu0 %v845
      %v1127 = vpop.f32.mrb[0].mxu0
      %v1128 = vadd.f32 %v967, %v1127
      %v1129 = vpop.f32.mrb[0].mxu0
      %v1130 = vpop.f32.mrb[0].mxu0
      %v1131 = vadd.f32 %v970, %v1130
      %v1132 = vpop.f32.mrb[0].mxu0
      %1133 = vmatprep.mubr.bf16.mxu0 0
      %1134 = vmatmul.mubr.bf16.gmra.mrb[0].mxu0 %v848
      %v1135 = vpop.f32.mrb[0].mxu0
      %v1136 = vadd.f32 %v975, %v1135
      %v1137 = vpop.f32.mrb[0].mxu0
      %v1138 = vpop.f32.mrb[0].mxu0
      %v1139 = vadd.f32 %v978, %v1138
      %v1140 = vpop.f32.mrb[0].mxu0
      %1141 = vmatprep.mubr.bf16.mxu0 0
      %1142 = vmatmul.mubr.bf16.gmra.mrb[0].mxu0 %v851
      %v1143 = vpop.f32.mrb[0].mxu0
      %v1144 = vadd.f32 %v983, %v1143
      %v1145 = vpop.f32.mrb[0].mxu0
      %v1146 = vpop.f32.mrb[0].mxu0
      %v1147 = vadd.f32 %v986, %v1146
      %v1148 = vpop.f32.mrb[0].mxu0
      %1149 = vmatprep.mubr.bf16.mxu0 0
      %1150 = vmatmul.mubr.bf16.gmra.mrb[0].mxu0 %v854
      %v1151 = vpop.f32.mrb[0].mxu0
      %v1152 = vadd.f32 %v991, %v1151
      %v1153 = vpop.f32.mrb[0].mxu0
      %v1154 = vpop.f32.mrb[0].mxu0
      %v1155 = vadd.f32 %v994, %v1154
      %v1156 = vpop.f32.mrb[0].mxu0
      %1157 = vmatprep.mubr.bf16.mxu0 0
      %1158 = vmatmul.mubr.bf16.gmra.mrb[0].mxu0 %v857
      %v1159 = vpop.f32.mrb[0].mxu0
      %v1160 = vadd.f32 %v999, %v1159
      %v1161 = vpop.f32.mrb[0].mxu0
      %v1162 = vpop.f32.mrb[0].mxu0
      %v1163 = vadd.f32 %v1002, %v1162
      %v1164 = vpop.f32.mrb[0].mxu0
      %1165 = vmatprep.mubr.bf16.mxu0 0
      %1166 = vmatmul.mubr.bf16.gmra.mrb[0].mxu0 %v860
      %v1167 = vpop.f32.mrb[0].mxu0
      %v1168 = vadd.f32 %v1007, %v1167
      %v1169 = vpop.f32.mrb[0].mxu0
      %v1170 = vpop.f32.mrb[0].mxu0
      %v1171 = vadd.f32 %v1010, %v1170
      %v1172 = vpop.f32.mrb[0].mxu0
      %1173 = vmatprep.mubr.bf16.mxu0 0
      %1174 = vmatmul.mubr.bf16.gmra.mrb[0].mxu0 %v863
      %v1175 = vpop.f32.mrb[0].mxu0
      %v1176 = vadd.f32 %v1015, %v1175
      %v1177 = vpop.f32.mrb[0].mxu0
      %v1178 = vpop.f32.mrb[0].mxu0
      %v1179 = vadd.f32 %v1018, %v1178
      %v1180 = vpop.f32.mrb[0].mxu0
      %1181 = vmatprep.mubr.bf16.mxu0 0
      %1182 = vmatmul.mubr.bf16.gmra.mrb[0].mxu0 %v866
      %v1183 = vpop.f32.mrb[0].mxu0
      %v1184 = vadd.f32 %v1023, %v1183
      %v1185 = vpop.f32.mrb[0].mxu0
      %v1186 = vpop.f32.mrb[0].mxu0
      %v1187 = vadd.f32 %v1026, %v1186
      %v1188 = vpop.f32.mrb[0].mxu0
      %1189 = vdwg.mxu0
      %v1222 = vunpack.c.l.b16 %v333
      %v1223 = vunpack.c.l.b16 %v334
      %v1224 = vunpack.c.l.b16 %v335
      %v1225 = vunpack.c.l.b16 %v336
      %v1226 = vunpack.c.l.b16 %v337
      %v1227 = vunpack.c.l.b16 %v338
      %v1228 = vunpack.c.l.b16 %v339
      %v1229 = vunpack.c.l.b16 %v340
      %v1230 = vunpack.c.l.b16 %v341
      %v1231 = vunpack.c.l.b16 %v342
      %v1232 = vunpack.c.l.b16 %v343
      %v1233 = vunpack.c.l.b16 %v344
      %v1234 = vunpack.c.l.b16 %v345
      %v1235 = vunpack.c.l.b16 %v346
      %v1236 = vunpack.c.l.b16 %v347
      %v1237 = vunpack.c.l.b16 %v348
      %v1238 = vunpack.c.l.b16 %v349
      %v1239 = vunpack.c.l.b16 %v350
      %v1240 = vunpack.c.l.b16 %v351
      %v1241 = vunpack.c.l.b16 %v352
      %v1242 = vunpack.c.l.b16 %v353
      %v1243 = vunpack.c.l.b16 %v354
      %v1244 = vunpack.c.l.b16 %v355
      %v1245 = vunpack.c.l.b16 %v356
      %v1246 = vunpack.c.l.b16 %v357
      %v1247 = vunpack.c.l.b16 %v358
      %v1248 = vunpack.c.l.b16 %v359
      %v1249 = vunpack.c.l.b16 %v360
      %v1250 = vunpack.c.l.b16 %v361
      %v1251 = vunpack.c.l.b16 %v362
      %v1252 = vunpack.c.l.b16 %v363
      %v1253 = vunpack.c.l.b16 %v364
      %v1254 = vpack.c.b16 %v1223, %v1222
      %v1255 = vpack.c.b16 %v1225, %v1224
      %v1256 = vpack.c.b16 %v1227, %v1226
      %v1257 = vpack.c.b16 %v1229, %v1228
      %v1258 = vpack.c.b16 %v1231, %v1230
      %v1259 = vpack.c.b16 %v1233, %v1232
      %v1260 = vpack.c.b16 %v1235, %v1234
      %v1261 = vpack.c.b16 %v1237, %v1236
      %v1262 = vpack.c.b16 %v1239, %v1238
      %v1263 = vpack.c.b16 %v1241, %v1240
      %v1264 = vpack.c.b16 %v1243, %v1242
      %v1265 = vpack.c.b16 %v1245, %v1244
      %v1266 = vpack.c.b16 %v1247, %v1246
      %v1267 = vpack.c.b16 %v1249, %v1248
      %v1268 = vpack.c.b16 %v1251, %v1250
      %v1269 = vpack.c.b16 %v1253, %v1252
      %v1276 = vunpack.c.l.b16 %v365
      %v1277 = vunpack.c.l.b16 %v366
      %v1278 = vunpack.c.l.b16 %v367
      %v1279 = vunpack.c.l.b16 %v368
      %v1280 = vunpack.c.l.b16 %v369
      %v1281 = vunpack.c.l.b16 %v370
      %v1282 = vpack.c.b16 %v1277, %v1276
      %v1283 = vpack.c.b16 %v1279, %v1278
      %v1284 = vpack.c.b16 %v1281, %v1280
      %vm1288 = vcmask 392192
      %v1290 = vsel %vm1288, %v1254, 0
      %v1293 = vsel %vm1288, %v1255, 0
      %v1296 = vsel %vm1288, %v1256, 0
      %v1299 = vsel %vm1288, %v1257, 0
      %v1302 = vsel %vm1288, %v1258, 0
      %v1305 = vsel %vm1288, %v1259, 0
      %v1308 = vsel %vm1288, %v1260, 0
      %v1311 = vsel %vm1288, %v1261, 0
      %v1314 = vsel %vm1288, %v1262, 0
      %v1317 = vsel %vm1288, %v1263, 0
      %v1320 = vsel %vm1288, %v1264, 0
      %v1323 = vsel %vm1288, %v1265, 0
      %v1326 = vsel %vm1288, %v1266, 0
      %v1329 = vsel %vm1288, %v1267, 0
      %v1332 = vsel %vm1288, %v1268, 0
      %v1335 = vsel %vm1288, %v1269, 0
      %1337 = vmatprep.subr.bf16.mxu0 0
      %1338 = vmatpush1.bf16.msra.mxu0 %v1282
      %1339 = vmatprep.subr.bf16.mxu0 0
      %1340 = vmatpush1.bf16.msra.mxu0 %v1283
      %1341 = vmatprep.subr.bf16.mxu0 0
      %1342 = vmatpush1.bf16.msra.mxu0 %v1284
      %1343 = vmatprep.subr.bf16.mxu0 0
      %1344 = vmatpush1.bf16.msra.mxu0 0
      %1345 = vmatprep.subr.bf16.mxu0 0
      %1346 = vmatpush1.bf16.msra.mxu0 0
      %1347 = vmatprep.subr.bf16.mxu0 0
      %1348 = vmatpush1.bf16.msra.mxu0 0
      %1349 = vmatprep.subr.bf16.mxu0 0
      %1350 = vmatpush1.bf16.msra.mxu0 0
      %1351 = vmatprep.subr.bf16.mxu0 0
      %1352 = vmatpush1.bf16.msra.mxu0 0
      %1353 = vmatprep.subr.bf16.mxu0 0
      %1354 = vmatpush1.bf16.msra.mxu0 0
      %1355 = vmatprep.subr.bf16.mxu0 0
      %1356 = vmatpush1.bf16.msra.mxu0 0
      %1357 = vmatprep.subr.bf16.mxu0 0
      %1358 = vmatpush1.bf16.msra.mxu0 0
      %1359 = vmatprep.subr.bf16.mxu0 0
      %1360 = vmatpush1.bf16.msra.mxu0 0
      %1361 = vmatprep.subr.bf16.mxu0 0
      %1362 = vmatpush1.bf16.msra.mxu0 0
      %1363 = vmatprep.subr.bf16.mxu0 0
      %1364 = vmatpush1.bf16.msra.mxu0 0
      %1365 = vmatprep.subr.bf16.mxu0 0
      %1366 = vmatpush1.bf16.msra.mxu0 0
      %1367 = vmatprep.subr.bf16.mxu0 0
      %1368 = vmatpush1.bf16.msra.mxu0 0
      %1369 = vmatprep.mubr.bf16.mxu0 0
      %1370 = vmatmul.mubr.bf16.gmra.mrb[0].mxu0 %v1290
      %v1371 = vpop.f32.mrb[0].mxu0
      %v1372 = vadd.f32 %v1064, %v1371
      %v1373 = vpop.f32.mrb[0].mxu0
      %v1374 = vpop.f32.mrb[0].mxu0
      %v1375 = vadd.f32 %v1067, %v1374
      %v1376 = vpop.f32.mrb[0].mxu0
      %1377 = vmatprep.mubr.bf16.mxu0 0
      %1378 = vmatmul.mubr.bf16.gmra.mrb[0].mxu0 %v1293
      %v1379 = vpop.f32.mrb[0].mxu0
      %v1380 = vadd.f32 %v1072, %v1379
      %v1381 = vpop.f32.mrb[0].mxu0
      %v1382 = vpop.f32.mrb[0].mxu0
      %v1383 = vadd.f32 %v1075, %v1382
      %v1384 = vpop.f32.mrb[0].mxu0
      %1385 = vmatprep.mubr.bf16.mxu0 0
      %1386 = vmatmul.mubr.bf16.gmra.mrb[0].mxu0 %v1296
      %v1387 = vpop.f32.mrb[0].mxu0
      %v1388 = vadd.f32 %v1080, %v1387
      %v1389 = vpop.f32.mrb[0].mxu0
      %v1390 = vpop.f32.mrb[0].mxu0
      %v1391 = vadd.f32 %v1083, %v1390
      %v1392 = vpop.f32.mrb[0].mxu0
      %1393 = vmatprep.mubr.bf16.mxu0 0
      %1394 = vmatmul.mubr.bf16.gmra.mrb[0].mxu0 %v1299
      %v1395 = vpop.f32.mrb[0].mxu0
      %v1396 = vadd.f32 %v1088, %v1395
      %v1397 = vpop.f32.mrb[0].mxu0
      %v1398 = vpop.f32.mrb[0].mxu0
      %v1399 = vadd.f32 %v1091, %v1398
      %v1400 = vpop.f32.mrb[0].mxu0
      %1401 = vmatprep.mubr.bf16.mxu0 0
      %1402 = vmatmul.mubr.bf16.gmra.mrb[0].mxu0 %v1302
      %v1403 = vpop.f32.mrb[0].mxu0
      %v1404 = vadd.f32 %v1096, %v1403
      %v1405 = vpop.f32.mrb[0].mxu0
      %v1406 = vpop.f32.mrb[0].mxu0
      %v1407 = vadd.f32 %v1099, %v1406
      %v1408 = vpop.f32.mrb[0].mxu0
      %1409 = vmatprep.mubr.bf16.mxu0 0
      %1410 = vmatmul.mubr.bf16.gmra.mrb[0].mxu0 %v1305
      %v1411 = vpop.f32.mrb[0].mxu0
      %v1412 = vadd.f32 %v1104, %v1411
      %v1413 = vpop.f32.mrb[0].mxu0
      %v1414 = vpop.f32.mrb[0].mxu0
      %v1415 = vadd.f32 %v1107, %v1414
      %v1416 = vpop.f32.mrb[0].mxu0
      %1417 = vmatprep.mubr.bf16.mxu0 0
      %1418 = vmatmul.mubr.bf16.gmra.mrb[0].mxu0 %v1308
      %v1419 = vpop.f32.mrb[0].mxu0
      %v1420 = vadd.f32 %v1112, %v1419
      %v1421 = vpop.f32.mrb[0].mxu0
      %v1422 = vpop.f32.mrb[0].mxu0
      %v1423 = vadd.f32 %v1115, %v1422
      %v1424 = vpop.f32.mrb[0].mxu0
      %1425 = vmatprep.mubr.bf16.mxu0 0
      %1426 = vmatmul.mubr.bf16.gmra.mrb[0].mxu0 %v1311
      %v1427 = vpop.f32.mrb[0].mxu0
      %v1428 = vadd.f32 %v1120, %v1427
      %v1429 = vpop.f32.mrb[0].mxu0
      %v1430 = vpop.f32.mrb[0].mxu0
      %v1431 = vadd.f32 %v1123, %v1430
      %v1432 = vpop.f32.mrb[0].mxu0
      %1433 = vmatprep.mubr.bf16.mxu0 0
      %1434 = vmatmul.mubr.bf16.gmra.mrb[0].mxu0 %v1314
      %v1435 = vpop.f32.mrb[0].mxu0
      %v1436 = vadd.f32 %v1128, %v1435
      %v1437 = vpop.f32.mrb[0].mxu0
      %v1438 = vpop.f32.mrb[0].mxu0
      %v1439 = vadd.f32 %v1131, %v1438
      %v1440 = vpop.f32.mrb[0].mxu0
      %1441 = vmatprep.mubr.bf16.mxu0 0
      %1442 = vmatmul.mubr.bf16.gmra.mrb[0].mxu0 %v1317
      %v1443 = vpop.f32.mrb[0].mxu0
      %v1444 = vadd.f32 %v1136, %v1443
      %v1445 = vpop.f32.mrb[0].mxu0
      %v1446 = vpop.f32.mrb[0].mxu0
      %v1447 = vadd.f32 %v1139, %v1446
      %v1448 = vpop.f32.mrb[0].mxu0
      %1449 = vmatprep.mubr.bf16.mxu0 0
      %1450 = vmatmul.mubr.bf16.gmra.mrb[0].mxu0 %v1320
      %v1451 = vpop.f32.mrb[0].mxu0
      %v1452 = vadd.f32 %v1144, %v1451
      %v1453 = vpop.f32.mrb[0].mxu0
      %v1454 = vpop.f32.mrb[0].mxu0
      %v1455 = vadd.f32 %v1147, %v1454
      %v1456 = vpop.f32.mrb[0].mxu0
      %1457 = vmatprep.mubr.bf16.mxu0 0
      %1458 = vmatmul.mubr.bf16.gmra.mrb[0].mxu0 %v1323
      %v1459 = vpop.f32.mrb[0].mxu0
      %v1460 = vadd.f32 %v1152, %v1459
      %v1461 = vpop.f32.mrb[0].mxu0
      %v1462 = vpop.f32.mrb[0].mxu0
      %v1463 = vadd.f32 %v1155, %v1462
      %v1464 = vpop.f32.mrb[0].mxu0
      %1465 = vmatprep.mubr.bf16.mxu0 0
      %1466 = vmatmul.mubr.bf16.gmra.mrb[0].mxu0 %v1326
      %v1467 = vpop.f32.mrb[0].mxu0
      %v1468 = vadd.f32 %v1160, %v1467
      %v1469 = vpop.f32.mrb[0].mxu0
      %v1470 = vpop.f32.mrb[0].mxu0
      %v1471 = vadd.f32 %v1163, %v1470
      %v1472 = vpop.f32.mrb[0].mxu0
      %1473 = vmatprep.mubr.bf16.mxu0 0
      %1474 = vmatmul.mubr.bf16.gmra.mrb[0].mxu0 %v1329
      %v1475 = vpop.f32.mrb[0].mxu0
      %v1476 = vadd.f32 %v1168, %v1475
      %v1477 = vpop.f32.mrb[0].mxu0
      %v1478 = vpop.f32.mrb[0].mxu0
      %v1479 = vadd.f32 %v1171, %v1478
      %v1480 = vpop.f32.mrb[0].mxu0
      %1481 = vmatprep.mubr.bf16.mxu0 0
      %1482 = vmatmul.mubr.bf16.gmra.mrb[0].mxu0 %v1332
      %v1483 = vpop.f32.mrb[0].mxu0
      %v1484 = vadd.f32 %v1176, %v1483
      %v1485 = vpop.f32.mrb[0].mxu0
      %v1486 = vpop.f32.mrb[0].mxu0
      %v1487 = vadd.f32 %v1179, %v1486
      %v1488 = vpop.f32.mrb[0].mxu0
      %1489 = vmatprep.mubr.bf16.mxu0 0
      %1490 = vmatmul.mubr.bf16.gmra.mrb[0].mxu0 %v1335
      %v1491 = vpop.f32.mrb[0].mxu0
      %v1492 = vadd.f32 %v1184, %v1491
      %v1493 = vpop.f32.mrb[0].mxu0
      %v1494 = vpop.f32.mrb[0].mxu0
      %v1495 = vadd.f32 %v1187, %v1494
      %v1496 = vpop.f32.mrb[0].mxu0
      %1497 = vdwg.mxu0
      %v1498 = vld [vmem:[%s324] sm:$0xff]
      %v1499 = vld [vmem:[%s324 + $0x8] sm:$0xff]
      %v1500 = vld [vmem:[%s324 + $0x10] sm:$0xff]
      %v1501 = vld [vmem:[%s324 + $0x18] sm:$0xff]
      %v1502 = vld [vmem:[%s324 + $0x20] sm:$0xff]
      %v1503 = vld [vmem:[%s324 + $0x28] sm:$0xff]
      %v1504 = vld [vmem:[%s324 + $0x30] sm:$0xff]
      %v1505 = vld [vmem:[%s324 + $0x38] sm:$0xff]
      %v1506 = vld [vmem:[%s324 + $0x40] sm:$0xff]
      %v1507 = vld [vmem:[%s324 + $0x48] sm:$0xff]
      %v1508 = vld [vmem:[%s324 + $0x50] sm:$0xff]
      %v1509 = vld [vmem:[%s324 + $0x58] sm:$0xff]
      %v1510 = vld [vmem:[%s324 + $0x60] sm:$0xff]
      %v1511 = vld [vmem:[%s324 + $0x68] sm:$0xff]
      %v1512 = vld [vmem:[%s324 + $0x70] sm:$0xff]
      %v1513 = vld [vmem:[%s324 + $0x78] sm:$0xff]
      %v1514 = vld [vmem:[%s324 + $0x80] sm:$0xff]
      %v1515 = vld [vmem:[%s324 + $0x88] sm:$0xff]
      %v1516 = vld [vmem:[%s324 + $0x90] sm:$0xff]
      %v1517 = vld [vmem:[%s324 + $0x98] sm:$0xff]
      %v1518 = vld [vmem:[%s324 + $0xa0] sm:$0xff]
      %v1519 = vld [vmem:[%s324 + $0xa8] sm:$0xff]
      %v1520 = vld [vmem:[%s324 + $0xb0] sm:$0xff]
      %v1521 = vld [vmem:[%s324 + $0xb8] sm:$0xff]
      %v1522 = vld [vmem:[%s324 + $0xc0] sm:$0xff]
      %v1523 = vld [vmem:[%s324 + $0xc8] sm:$0xff]
      %v1524 = vld [vmem:[%s324 + $0xd0] sm:$0xff]
      %v1525 = vld [vmem:[%s324 + $0xd8] sm:$0xff]
      %v1526 = vld [vmem:[%s324 + $0xe0] sm:$0xff]
      %v1527 = vld [vmem:[%s324 + $0xe8] sm:$0xff]
      %v1528 = vld [vmem:[%s324 + $0xf0] sm:$0xff]
      %v1529 = vld [vmem:[%s324 + $0xf8] sm:$0xff]
      %v1530 = vld [vmem:[%s324 + $0x100] sm:$0xff]
      %v1531 = vld [vmem:[%s324 + $0x108] sm:$0xff]
      %v1532 = vld [vmem:[%s324 + $0x110] sm:$0xff]
      %v1533 = vld [vmem:[%s324 + $0x118] sm:$0xff]
      %v1534 = vld [vmem:[%s324 + $0x120] sm:$0xff]
      %v1535 = vld [vmem:[%s324 + $0x128] sm:$0xff]
      %v1536 = vld [vmem:[%s324 + $0x130] sm:$0xff]
      %v1537 = vld [vmem:[%s324 + $0x138] sm:$0xff]
      %v1538 = vld [vmem:[%s324 + $0x140] sm:$0xff]
      %v1539 = vld [vmem:[%s324 + $0x148] sm:$0xff]
      %v1540 = vld [vmem:[%s324 + $0x150] sm:$0xff]
      %v1541 = vld [vmem:[%s324 + $0x158] sm:$0xff]
      %v1542 = vld [vmem:[%s324 + $0x160] sm:$0xff]
      %v1543 = vld [vmem:[%s324 + $0x168] sm:$0xff]
      %v1544 = vld [vmem:[%s324 + $0x170] sm:$0xff]
      %v1545 = vld [vmem:[%s324 + $0x178] sm:$0xff]
      %v1546 = vld [vmem:[%s324 + $0x180] sm:$0xff]
      %v1547 = vld [vmem:[%s324 + $0x188] sm:$0xff]
      %v1548 = vld [vmem:[%s324 + $0x190] sm:$0xff]
      %v1549 = vld [vmem:[%s324 + $0x198] sm:$0xff]
      %v1550 = vld [vmem:[%s324 + $0x1a0] sm:$0xff]
      %v1551 = vld [vmem:[%s324 + $0x1a8] sm:$0xff]
      %v1552 = vld [vmem:[%s324 + $0x1b0] sm:$0xff]
      %v1553 = vld [vmem:[%s324 + $0x1b8] sm:$0xff]
      %v1554 = vld [vmem:[%s324 + $0x1c0] sm:$0xff]
      %v1555 = vld [vmem:[%s324 + $0x1c8] sm:$0xff]
      %v1556 = vld [vmem:[%s324 + $0x1d0] sm:$0xff]
      %v1557 = vld [vmem:[%s324 + $0x1d8] sm:$0xff]
      %v1558 = vld [vmem:[%s324 + $0x1e0] sm:$0xff]
      %v1559 = vld [vmem:[%s324 + $0x1e8] sm:$0xff]
      %v1560 = vld [vmem:[%s324 + $0x1f0] sm:$0xff]
      %v1561 = vld [vmem:[%s324 + $0x1f8] sm:$0xff]
      %v1562 = vld [vmem:[%s5] sm:$0xf]
      %v1563 = vld [vmem:[%s5 + $0x4] sm:$0xf]
      %v1564 = vld [vmem:[%s5 + $0x8] sm:$0xf]
      %v1565 = vld [vmem:[%s5 + $0xc] sm:$0xf]
      %v1566 = vld [vmem:[%s5 + $0x10] sm:$0xf]
      %v1567 = vld [vmem:[%s5 + $0x14] sm:$0xf]
      %v1568 = vld [vmem:[%s5 + $0x18] sm:$0xf]
      %v1569 = vld [vmem:[%s5 + $0x1c] sm:$0xf]
      %v1570 = vld [vmem:[%s5 + $0x20] sm:$0xf]
      %v1571 = vld [vmem:[%s5 + $0x24] sm:$0xf]
      %v1572 = vld [vmem:[%s5 + $0x28] sm:$0xf]
      %v1573 = vld [vmem:[%s5 + $0x2c] sm:$0xf]
      %v1574 = vld [vmem:[%s5 + $0x30] sm:$0xf]
      %v1575 = vld [vmem:[%s5 + $0x34] sm:$0xf]
      %v1576 = vld [vmem:[%s5 + $0x38] sm:$0xf]
      %v1577 = vld [vmem:[%s5 + $0x3c] sm:$0xf]
      %v1578 = vld [vmem:[%s5 + $0x40] sm:$0xf]
      %v1579 = vld [vmem:[%s5 + $0x44] sm:$0xf]
      %v1580 = vld [vmem:[%s5 + $0x48] sm:$0xf]
      %v1581 = vld [vmem:[%s5 + $0x4c] sm:$0xf]
      %v1582 = vld [vmem:[%s5 + $0x50] sm:$0xf]
      %v1583 = vld [vmem:[%s5 + $0x54] sm:$0xf]
      %v1584 = vld [vmem:[%s5 + $0x58] sm:$0xf]
      %v1585 = vld [vmem:[%s5 + $0x5c] sm:$0xf]
      %v1586 = vld [vmem:[%s5 + $0x60] sm:$0xf]
      %v1587 = vld [vmem:[%s5 + $0x64] sm:$0xf]
      %v1588 = vld [vmem:[%s5 + $0x68] sm:$0xf]
      %v1589 = vld [vmem:[%s5 + $0x6c] sm:$0xf]
      %v1590 = vld [vmem:[%s5 + $0x70] sm:$0xf]
      %v1591 = vld [vmem:[%s5 + $0x74] sm:$0xf]
      %v1592 = vld [vmem:[%s5 + $0x78] sm:$0xf]
      %v1593 = vld [vmem:[%s5 + $0x7c] sm:$0xf]
      %v1594 = vld [vmem:[%s5 + $0x80] sm:$0xf]
      %v1595 = vld [vmem:[%s5 + $0x84] sm:$0xf]
      %v1596 = vld [vmem:[%s5 + $0x88] sm:$0xf]
      %v1597 = vld [vmem:[%s5 + $0x8c] sm:$0xf]
      %v1598 = vld [vmem:[%s5 + $0x90] sm:$0xf]
      %v1599 = vld [vmem:[%s5 + $0x94] sm:$0xf]
      %v1600 = vld [vmem:[%s5 + $0x98] sm:$0xf]
      %v1601 = vld [vmem:[%s5 + $0x9c] sm:$0xf]
      %v1602 = vld [vmem:[%s5 + $0xa0] sm:$0xf]
      %v1603 = vld [vmem:[%s5 + $0xa4] sm:$0xf]
      %v1604 = vld [vmem:[%s5 + $0xa8] sm:$0xf]
      %v1605 = vld [vmem:[%s5 + $0xac] sm:$0xf]
      %v1606 = vld [vmem:[%s5 + $0xb0] sm:$0xf]
      %v1607 = vld [vmem:[%s5 + $0xb4] sm:$0xf]
      %v1608 = vld [vmem:[%s5 + $0xb8] sm:$0xf]
      %v1609 = vld [vmem:[%s5 + $0xbc] sm:$0xf]
      %v1610 = vld [vmem:[%s5 + $0xc0] sm:$0xf]
      %v1611 = vld [vmem:[%s5 + $0xc4] sm:$0xf]
      %v1612 = vld [vmem:[%s5 + $0xc8] sm:$0xf]
      %v1613 = vld [vmem:[%s5 + $0xcc] sm:$0xf]
      %v1614 = vld [vmem:[%s5 + $0xd0] sm:$0xf]
      %v1615 = vld [vmem:[%s5 + $0xd4] sm:$0xf]
      %v1616 = vld [vmem:[%s5 + $0xd8] sm:$0xf]
      %v1617 = vld [vmem:[%s5 + $0xdc] sm:$0xf]
      %v1618 = vld [vmem:[%s5 + $0xe0] sm:$0xf]
      %v1619 = vld [vmem:[%s5 + $0xe4] sm:$0xf]
      %v1620 = vld [vmem:[%s5 + $0xe8] sm:$0xf]
      %v1621 = vld [vmem:[%s5 + $0xec] sm:$0xf]
      %v1622 = vld [vmem:[%s5 + $0xf0] sm:$0xf]
      %v1623 = vld [vmem:[%s5 + $0xf4] sm:$0xf]
      %v1624 = vld [vmem:[%s5 + $0xf8] sm:$0xf]
      %v1625 = vld [vmem:[%s5 + $0xfc] sm:$0xf]
      %v1690 = vunpack.c.l.b16 %v1498
      %v1691 = vunpack.c.h.b16 %v1498
      %v1692 = vunpack.c.l.b16 %v1499
      %v1693 = vunpack.c.h.b16 %v1499
      %v1694 = vunpack.c.l.b16 %v1500
      %v1695 = vunpack.c.h.b16 %v1500
      %v1696 = vunpack.c.l.b16 %v1501
      %v1697 = vunpack.c.h.b16 %v1501
      %v1698 = vunpack.c.l.b16 %v1502
      %v1699 = vunpack.c.h.b16 %v1502
      %v1700 = vunpack.c.l.b16 %v1503
      %v1701 = vunpack.c.h.b16 %v1503
      %v1702 = vunpack.c.l.b16 %v1504
      %v1703 = vunpack.c.h.b16 %v1504
      %v1704 = vunpack.c.l.b16 %v1505
      %v1705 = vunpack.c.h.b16 %v1505
      %v1706 = vunpack.c.l.b16 %v1506
      %v1707 = vunpack.c.h.b16 %v1506
      %v1708 = vunpack.c.l.b16 %v1507
      %v1709 = vunpack.c.h.b16 %v1507
      %v1710 = vunpack.c.l.b16 %v1508
      %v1711 = vunpack.c.h.b16 %v1508
      %v1712 = vunpack.c.l.b16 %v1509
      %v1713 = vunpack.c.h.b16 %v1509
      %v1714 = vunpack.c.l.b16 %v1510
      %v1715 = vunpack.c.h.b16 %v1510
      %v1716 = vunpack.c.l.b16 %v1511
      %v1717 = vunpack.c.h.b16 %v1511
      %v1718 = vunpack.c.l.b16 %v1512
      %v1719 = vunpack.c.h.b16 %v1512
      %v1720 = vunpack.c.l.b16 %v1513
      %v1721 = vunpack.c.h.b16 %v1513
      %v1722 = vunpack.c.l.b16 %v1514
      %v1723 = vunpack.c.h.b16 %v1514
      %v1724 = vunpack.c.l.b16 %v1515
      %v1725 = vunpack.c.h.b16 %v1515
      %v1726 = vunpack.c.l.b16 %v1516
      %v1727 = vunpack.c.h.b16 %v1516
      %v1728 = vunpack.c.l.b16 %v1517
      %v1729 = vunpack.c.h.b16 %v1517
      %v1730 = vunpack.c.l.b16 %v1518
      %v1731 = vunpack.c.h.b16 %v1518
      %v1732 = vunpack.c.l.b16 %v1519
      %v1733 = vunpack.c.h.b16 %v1519
      %v1734 = vunpack.c.l.b16 %v1520
      %v1735 = vunpack.c.h.b16 %v1520
      %v1736 = vunpack.c.l.b16 %v1521
      %v1737 = vunpack.c.h.b16 %v1521
      %v1738 = vunpack.c.l.b16 %v1522
      %v1739 = vunpack.c.h.b16 %v1522
      %v1740 = vunpack.c.l.b16 %v1523
      %v1741 = vunpack.c.h.b16 %v1523
      %v1742 = vunpack.c.l.b16 %v1524
      %v1743 = vunpack.c.h.b16 %v1524
      %v1744 = vunpack.c.l.b16 %v1525
      %v1745 = vunpack.c.h.b16 %v1525
      %v1746 = vunpack.c.l.b16 %v1526
      %v1747 = vunpack.c.h.b16 %v1526
      %v1748 = vunpack.c.l.b16 %v1527
      %v1749 = vunpack.c.h.b16 %v1527
      %v1750 = vunpack.c.l.b16 %v1528
      %v1751 = vunpack.c.h.b16 %v1528
      %v1752 = vunpack.c.l.b16 %v1529
      %v1753 = vunpack.c.h.b16 %v1529
      %v1754 = vunpack.c.l.b16 %v1530
      %v1755 = vunpack.c.h.b16 %v1530
      %v1756 = vunpack.c.l.b16 %v1531
      %v1757 = vunpack.c.h.b16 %v1531
      %v1758 = vunpack.c.l.b16 %v1532
      %v1759 = vunpack.c.h.b16 %v1532
      %v1760 = vunpack.c.l.b16 %v1533
      %v1761 = vunpack.c.h.b16 %v1533
      %v1762 = vunpack.c.l.b16 %v1534
      %v1763 = vunpack.c.h.b16 %v1534
      %v1764 = vunpack.c.l.b16 %v1535
      %v1765 = vunpack.c.h.b16 %v1535
      %v1766 = vunpack.c.l.b16 %v1536
      %v1767 = vunpack.c.h.b16 %v1536
      %v1768 = vunpack.c.l.b16 %v1537
      %v1769 = vunpack.c.h.b16 %v1537
      %v1770 = vunpack.c.l.b16 %v1538
      %v1771 = vunpack.c.h.b16 %v1538
      %v1772 = vunpack.c.l.b16 %v1539
      %v1773 = vunpack.c.h.b16 %v1539
      %v1774 = vunpack.c.l.b16 %v1540
      %v1775 = vunpack.c.h.b16 %v1540
      %v1776 = vunpack.c.l.b16 %v1541
      %v1777 = vunpack.c.h.b16 %v1541
      %v1778 = vunpack.c.l.b16 %v1542
      %v1779 = vunpack.c.h.b16 %v1542
      %v1780 = vunpack.c.l.b16 %v1543
      %v1781 = vunpack.c.h.b16 %v1543
      %v1782 = vunpack.c.l.b16 %v1544
      %v1783 = vunpack.c.h.b16 %v1544
      %v1784 = vunpack.c.l.b16 %v1545
      %v1785 = vunpack.c.h.b16 %v1545
      %v1786 = vunpack.c.l.b16 %v1546
      %v1787 = vunpack.c.h.b16 %v1546
      %v1788 = vunpack.c.l.b16 %v1547
      %v1789 = vunpack.c.h.b16 %v1547
      %v1790 = vunpack.c.l.b16 %v1548
      %v1791 = vunpack.c.h.b16 %v1548
      %v1792 = vunpack.c.l.b16 %v1549
      %v1793 = vunpack.c.h.b16 %v1549
      %v1794 = vunpack.c.l.b16 %v1550
      %v1795 = vunpack.c.h.b16 %v1550
      %v1796 = vunpack.c.l.b16 %v1551
      %v1797 = vunpack.c.h.b16 %v1551
      %v1798 = vunpack.c.l.b16 %v1552
      %v1799 = vunpack.c.h.b16 %v1552
      %v1800 = vunpack.c.l.b16 %v1553
      %v1801 = vunpack.c.h.b16 %v1553
      %v1802 = vunpack.c.l.b16 %v1554
      %v1803 = vunpack.c.h.b16 %v1554
      %v1804 = vunpack.c.l.b16 %v1555
      %v1805 = vunpack.c.h.b16 %v1555
      %v1806 = vunpack.c.l.b16 %v1556
      %v1807 = vunpack.c.h.b16 %v1556
      %v1808 = vunpack.c.l.b16 %v1557
      %v1809 = vunpack.c.h.b16 %v1557
      %v1810 = vunpack.c.l.b16 %v1558
      %v1811 = vunpack.c.h.b16 %v1558
      %v1812 = vunpack.c.l.b16 %v1559
      %v1813 = vunpack.c.h.b16 %v1559
      %v1814 = vunpack.c.l.b16 %v1560
      %v1815 = vunpack.c.h.b16 %v1560
      %v1816 = vunpack.c.l.b16 %v1561
      %v1817 = vunpack.c.h.b16 %v1561
      %v1818 = vpack.c.b16 %v1694, %v1690
      %v1819 = vpack.c.b16 %v1695, %v1691
      %v1820 = vpack.c.b16 %v1696, %v1692
      %v1821 = vpack.c.b16 %v1697, %v1693
      %v1822 = vpack.c.b16 %v1702, %v1698
      %v1823 = vpack.c.b16 %v1703, %v1699
      %v1824 = vpack.c.b16 %v1704, %v1700
      %v1825 = vpack.c.b16 %v1705, %v1701
      %v1826 = vpack.c.b16 %v1710, %v1706
      %v1827 = vpack.c.b16 %v1711, %v1707
      %v1828 = vpack.c.b16 %v1712, %v1708
      %v1829 = vpack.c.b16 %v1713, %v1709
      %v1830 = vpack.c.b16 %v1718, %v1714
      %v1831 = vpack.c.b16 %v1719, %v1715
      %v1832 = vpack.c.b16 %v1720, %v1716
      %v1833 = vpack.c.b16 %v1721, %v1717
      %v1834 = vpack.c.b16 %v1726, %v1722
      %v1835 = vpack.c.b16 %v1727, %v1723
      %v1836 = vpack.c.b16 %v1728, %v1724
      %v1837 = vpack.c.b16 %v1729, %v1725
      %v1838 = vpack.c.b16 %v1734, %v1730
      %v1839 = vpack.c.b16 %v1735, %v1731
      %v1840 = vpack.c.b16 %v1736, %v1732
      %v1841 = vpack.c.b16 %v1737, %v1733
      %v1842 = vpack.c.b16 %v1742, %v1738
      %v1843 = vpack.c.b16 %v1743, %v1739
      %v1844 = vpack.c.b16 %v1744, %v1740
      %v1845 = vpack.c.b16 %v1745, %v1741
      %v1846 = vpack.c.b16 %v1750, %v1746
      %v1847 = vpack.c.b16 %v1751, %v1747
      %v1848 = vpack.c.b16 %v1752, %v1748
      %v1849 = vpack.c.b16 %v1753, %v1749
      %v1850 = vpack.c.b16 %v1758, %v1754
      %v1851 = vpack.c.b16 %v1759, %v1755
      %v1852 = vpack.c.b16 %v1760, %v1756
      %v1853 = vpack.c.b16 %v1761, %v1757
      %v1854 = vpack.c.b16 %v1766, %v1762
      %v1855 = vpack.c.b16 %v1767, %v1763
      %v1856 = vpack.c.b16 %v1768, %v1764
      %v1857 = vpack.c.b16 %v1769, %v1765
      %v1858 = vpack.c.b16 %v1774, %v1770
      %v1859 = vpack.c.b16 %v1775, %v1771
      %v1860 = vpack.c.b16 %v1776, %v1772
      %v1861 = vpack.c.b16 %v1777, %v1773
      %v1862 = vpack.c.b16 %v1782, %v1778
      %v1863 = vpack.c.b16 %v1783, %v1779
      %v1864 = vpack.c.b16 %v1784, %v1780
      %v1865 = vpack.c.b16 %v1785, %v1781
      %v1866 = vpack.c.b16 %v1790, %v1786
      %v1867 = vpack.c.b16 %v1791, %v1787
      %v1868 = vpack.c.b16 %v1792, %v1788
      %v1869 = vpack.c.b16 %v1793, %v1789
      %v1870 = vpack.c.b16 %v1798, %v1794
      %v1871 = vpack.c.b16 %v1799, %v1795
      %v1872 = vpack.c.b16 %v1800, %v1796
      %v1873 = vpack.c.b16 %v1801, %v1797
      %v1874 = vpack.c.b16 %v1806, %v1802
      %v1875 = vpack.c.b16 %v1807, %v1803
      %v1876 = vpack.c.b16 %v1808, %v1804
      %v1877 = vpack.c.b16 %v1809, %v1805
      %v1878 = vpack.c.b16 %v1814, %v1810
      %v1879 = vpack.c.b16 %v1815, %v1811
      %v1880 = vpack.c.b16 %v1816, %v1812
      %v1881 = vpack.c.b16 %v1817, %v1813
      %v2010 = vunpack.c.l.b16 %v1562
      %v2011 = vunpack.c.l.b16 %v1563
      %v2012 = vunpack.c.l.b16 %v1564
      %v2013 = vunpack.c.l.b16 %v1565
      %v2014 = vunpack.c.l.b16 %v1566
      %v2015 = vunpack.c.l.b16 %v1567
      %v2016 = vunpack.c.l.b16 %v1568
      %v2017 = vunpack.c.l.b16 %v1569
      %v2018 = vunpack.c.l.b16 %v1570
      %v2019 = vunpack.c.l.b16 %v1571
      %v2020 = vunpack.c.l.b16 %v1572
      %v2021 = vunpack.c.l.b16 %v1573
      %v2022 = vunpack.c.l.b16 %v1574
      %v2023 = vunpack.c.l.b16 %v1575
      %v2024 = vunpack.c.l.b16 %v1576
      %v2025 = vunpack.c.l.b16 %v1577
      %v2026 = vunpack.c.l.b16 %v1578
      %v2027 = vunpack.c.l.b16 %v1579
      %v2028 = vunpack.c.l.b16 %v1580
      %v2029 = vunpack.c.l.b16 %v1581
      %v2030 = vunpack.c.l.b16 %v1582
      %v2031 = vunpack.c.l.b16 %v1583
      %v2032 = vunpack.c.l.b16 %v1584
      %v2033 = vunpack.c.l.b16 %v1585
      %v2034 = vunpack.c.l.b16 %v1586
      %v2035 = vunpack.c.l.b16 %v1587
      %v2036 = vunpack.c.l.b16 %v1588
      %v2037 = vunpack.c.l.b16 %v1589
      %v2038 = vunpack.c.l.b16 %v1590
      %v2039 = vunpack.c.l.b16 %v1591
      %v2040 = vunpack.c.l.b16 %v1592
      %v2041 = vunpack.c.l.b16 %v1593
      %v2042 = vunpack.c.l.b16 %v1594
      %v2043 = vunpack.c.l.b16 %v1595
      %v2044 = vunpack.c.l.b16 %v1596
      %v2045 = vunpack.c.l.b16 %v1597
      %v2046 = vunpack.c.l.b16 %v1598
      %v2047 = vunpack.c.l.b16 %v1599
      %v2048 = vunpack.c.l.b16 %v1600
      %v2049 = vunpack.c.l.b16 %v1601
      %v2050 = vunpack.c.l.b16 %v1602
      %v2051 = vunpack.c.l.b16 %v1603
      %v2052 = vunpack.c.l.b16 %v1604
      %v2053 = vunpack.c.l.b16 %v1605
      %v2054 = vunpack.c.l.b16 %v1606
      %v2055 = vunpack.c.l.b16 %v1607
      %v2056 = vunpack.c.l.b16 %v1608
      %v2057 = vunpack.c.l.b16 %v1609
      %v2058 = vunpack.c.l.b16 %v1610
      %v2059 = vunpack.c.l.b16 %v1611
      %v2060 = vunpack.c.l.b16 %v1612
      %v2061 = vunpack.c.l.b16 %v1613
      %v2062 = vunpack.c.l.b16 %v1614
      %v2063 = vunpack.c.l.b16 %v1615
      %v2064 = vunpack.c.l.b16 %v1616
      %v2065 = vunpack.c.l.b16 %v1617
      %v2066 = vunpack.c.l.b16 %v1618
      %v2067 = vunpack.c.l.b16 %v1619
      %v2068 = vunpack.c.l.b16 %v1620
      %v2069 = vunpack.c.l.b16 %v1621
      %v2070 = vunpack.c.l.b16 %v1622
      %v2071 = vunpack.c.l.b16 %v1623
      %v2072 = vunpack.c.l.b16 %v1624
      %v2073 = vunpack.c.l.b16 %v1625
      %v2074 = vpack.c.b16 %v2011, %v2010
      %v2075 = vpack.c.b16 %v2013, %v2012
      %v2076 = vpack.c.b16 %v2015, %v2014
      %v2077 = vpack.c.b16 %v2017, %v2016
      %v2078 = vpack.c.b16 %v2019, %v2018
      %v2079 = vpack.c.b16 %v2021, %v2020
      %v2080 = vpack.c.b16 %v2023, %v2022
      %v2081 = vpack.c.b16 %v2025, %v2024
      %v2082 = vpack.c.b16 %v2027, %v2026
      %v2083 = vpack.c.b16 %v2029, %v2028
      %v2084 = vpack.c.b16 %v2031, %v2030
      %v2085 = vpack.c.b16 %v2033, %v2032
      %v2086 = vpack.c.b16 %v2035, %v2034
      %v2087 = vpack.c.b16 %v2037, %v2036
      %v2088 = vpack.c.b16 %v2039, %v2038
      %v2089 = vpack.c.b16 %v2041, %v2040
      %v2090 = vpack.c.b16 %v2043, %v2042
      %v2091 = vpack.c.b16 %v2045, %v2044
      %v2092 = vpack.c.b16 %v2047, %v2046
      %v2093 = vpack.c.b16 %v2049, %v2048
      %v2094 = vpack.c.b16 %v2051, %v2050
      %v2095 = vpack.c.b16 %v2053, %v2052
      %v2096 = vpack.c.b16 %v2055, %v2054
      %v2097 = vpack.c.b16 %v2057, %v2056
      %v2098 = vpack.c.b16 %v2059, %v2058
      %v2099 = vpack.c.b16 %v2061, %v2060
      %v2100 = vpack.c.b16 %v2063, %v2062
      %v2101 = vpack.c.b16 %v2065, %v2064
      %v2102 = vpack.c.b16 %v2067, %v2066
      %v2103 = vpack.c.b16 %v2069, %v2068
      %v2104 = vpack.c.b16 %v2071, %v2070
      %v2105 = vpack.c.b16 %v2073, %v2072
      %2138 = vmatprep.subr.bf16.mxu0 0
      %2139 = vmatpush1.bf16.msra.mxu0 %v2074
      %2140 = vmatprep.subr.bf16.mxu0 0
      %2141 = vmatpush1.bf16.msra.mxu0 %v2075
      %2142 = vmatprep.subr.bf16.mxu0 0
      %2143 = vmatpush1.bf16.msra.mxu0 %v2076
      %2144 = vmatprep.subr.bf16.mxu0 0
      %2145 = vmatpush1.bf16.msra.mxu0 %v2077
      %2146 = vmatprep.subr.bf16.mxu0 0
      %2147 = vmatpush1.bf16.msra.mxu0 %v2078
      %2148 = vmatprep.subr.bf16.mxu0 0
      %2149 = vmatpush1.bf16.msra.mxu0 %v2079
      %2150 = vmatprep.subr.bf16.mxu0 0
      %2151 = vmatpush1.bf16.msra.mxu0 %v2080
      %2152 = vmatprep.subr.bf16.mxu0 0
      %2153 = vmatpush1.bf16.msra.mxu0 %v2081
      %2154 = vmatprep.subr.bf16.mxu0 0
      %2155 = vmatpush1.bf16.msra.mxu0 %v2082
      %2156 = vmatprep.subr.bf16.mxu0 0
      %2157 = vmatpush1.bf16.msra.mxu0 %v2083
      %2158 = vmatprep.subr.bf16.mxu0 0
      %2159 = vmatpush1.bf16.msra.mxu0 %v2084
      %2160 = vmatprep.subr.bf16.mxu0 0
      %2161 = vmatpush1.bf16.msra.mxu0 %v2085
      %2162 = vmatprep.subr.bf16.mxu0 0
      %2163 = vmatpush1.bf16.msra.mxu0 %v2086
      %2164 = vmatprep.subr.bf16.mxu0 0
      %2165 = vmatpush1.bf16.msra.mxu0 %v2087
      %2166 = vmatprep.subr.bf16.mxu0 0
      %2167 = vmatpush1.bf16.msra.mxu0 %v2088
      %2168 = vmatprep.subr.bf16.mxu0 0
      %2169 = vmatpush1.bf16.msra.mxu0 %v2089
      %2170 = vmatprep.mubr.bf16.mxu0 %v1819
      %2171 = vmatmul.mubr.bf16.gmra.mrb[0].mxu0 %v1818
      %v2172 = vpop.f32.mrb[0].mxu0
      %v2173 = vadd.f32 0.0, %v2172
      %v2174 = vpop.f32.mrb[0].mxu0
      %v2175 = vpop.f32.mrb[0].mxu0
      %v2176 = vadd.f32 0.0, %v2175
      %v2177 = vpop.f32.mrb[0].mxu0
      %2178 = vmatprep.mubr.bf16.mxu0 %v1823
      %2179 = vmatmul.mubr.bf16.gmra.mrb[0].mxu0 %v1822
      %v2180 = vpop.f32.mrb[0].mxu0
      %v2181 = vadd.f32 0.0, %v2180
      %v2182 = vpop.f32.mrb[0].mxu0
      %v2183 = vpop.f32.mrb[0].mxu0
      %v2184 = vadd.f32 0.0, %v2183
      %v2185 = vpop.f32.mrb[0].mxu0
      %2186 = vmatprep.mubr.bf16.mxu0 %v1827
      %2187 = vmatmul.mubr.bf16.gmra.mrb[0].mxu0 %v1826
      %v2188 = vpop.f32.mrb[0].mxu0
      %v2189 = vadd.f32 0.0, %v2188
      %v2190 = vpop.f32.mrb[0].mxu0
      %v2191 = vpop.f32.mrb[0].mxu0
      %v2192 = vadd.f32 0.0, %v2191
      %v2193 = vpop.f32.mrb[0].mxu0
      %2194 = vmatprep.mubr.bf16.mxu0 %v1831
      %2195 = vmatmul.mubr.bf16.gmra.mrb[0].mxu0 %v1830
      %v2196 = vpop.f32.mrb[0].mxu0
      %v2197 = vadd.f32 0.0, %v2196
      %v2198 = vpop.f32.mrb[0].mxu0
      %v2199 = vpop.f32.mrb[0].mxu0
      %v2200 = vadd.f32 0.0, %v2199
      %v2201 = vpop.f32.mrb[0].mxu0
      %2202 = vmatprep.mubr.bf16.mxu0 %v1835
      %2203 = vmatmul.mubr.bf16.gmra.mrb[0].mxu0 %v1834
      %v2204 = vpop.f32.mrb[0].mxu0
      %v2205 = vadd.f32 0.0, %v2204
      %v2206 = vpop.f32.mrb[0].mxu0
      %v2207 = vpop.f32.mrb[0].mxu0
      %v2208 = vadd.f32 0.0, %v2207
      %v2209 = vpop.f32.mrb[0].mxu0
      %2210 = vmatprep.mubr.bf16.mxu0 %v1839
      %2211 = vmatmul.mubr.bf16.gmra.mrb[0].mxu0 %v1838
      %v2212 = vpop.f32.mrb[0].mxu0
      %v2213 = vadd.f32 0.0, %v2212
      %v2214 = vpop.f32.mrb[0].mxu0
      %v2215 = vpop.f32.mrb[0].mxu0
      %v2216 = vadd.f32 0.0, %v2215
      %v2217 = vpop.f32.mrb[0].mxu0
      %2218 = vmatprep.mubr.bf16.mxu0 %v1843
      %2219 = vmatmul.mubr.bf16.gmra.mrb[0].mxu0 %v1842
      %v2220 = vpop.f32.mrb[0].mxu0
      %v2221 = vadd.f32 0.0, %v2220
      %v2222 = vpop.f32.mrb[0].mxu0
      %v2223 = vpop.f32.mrb[0].mxu0
      %v2224 = vadd.f32 0.0, %v2223
      %v2225 = vpop.f32.mrb[0].mxu0
      %2226 = vmatprep.mubr.bf16.mxu0 %v1847
      %2227 = vmatmul.mubr.bf16.gmra.mrb[0].mxu0 %v1846
      %v2228 = vpop.f32.mrb[0].mxu0
      %v2229 = vadd.f32 0.0, %v2228
      %v2230 = vpop.f32.mrb[0].mxu0
      %v2231 = vpop.f32.mrb[0].mxu0
      %v2232 = vadd.f32 0.0, %v2231
      %v2233 = vpop.f32.mrb[0].mxu0
      %2234 = vmatprep.mubr.bf16.mxu0 %v1851
      %2235 = vmatmul.mubr.bf16.gmra.mrb[0].mxu0 %v1850
      %v2236 = vpop.f32.mrb[0].mxu0
      %v2237 = vadd.f32 0.0, %v2236
      %v2238 = vpop.f32.mrb[0].mxu0
      %v2239 = vpop.f32.mrb[0].mxu0
      %v2240 = vadd.f32 0.0, %v2239
      %v2241 = vpop.f32.mrb[0].mxu0
      %2242 = vmatprep.mubr.bf16.mxu0 %v1855
      %2243 = vmatmul.mubr.bf16.gmra.mrb[0].mxu0 %v1854
      %v2244 = vpop.f32.mrb[0].mxu0
      %v2245 = vadd.f32 0.0, %v2244
      %v2246 = vpop.f32.mrb[0].mxu0
      %v2247 = vpop.f32.mrb[0].mxu0
      %v2248 = vadd.f32 0.0, %v2247
      %v2249 = vpop.f32.mrb[0].mxu0
      %2250 = vmatprep.mubr.bf16.mxu0 %v1859
      %2251 = vmatmul.mubr.bf16.gmra.mrb[0].mxu0 %v1858
      %v2252 = vpop.f32.mrb[0].mxu0
      %v2253 = vadd.f32 0.0, %v2252
      %v2254 = vpop.f32.mrb[0].mxu0
      %v2255 = vpop.f32.mrb[0].mxu0
      %v2256 = vadd.f32 0.0, %v2255
      %v2257 = vpop.f32.mrb[0].mxu0
      %2258 = vmatprep.mubr.bf16.mxu0 %v1863
      %2259 = vmatmul.mubr.bf16.gmra.mrb[0].mxu0 %v1862
      %v2260 = vpop.f32.mrb[0].mxu0
      %v2261 = vadd.f32 0.0, %v2260
      %v2262 = vpop.f32.mrb[0].mxu0
      %v2263 = vpop.f32.mrb[0].mxu0
      %v2264 = vadd.f32 0.0, %v2263
      %v2265 = vpop.f32.mrb[0].mxu0
      %2266 = vmatprep.mubr.bf16.mxu0 %v1867
      %2267 = vmatmul.mubr.bf16.gmra.mrb[0].mxu0 %v1866
      %v2268 = vpop.f32.mrb[0].mxu0
      %v2269 = vadd.f32 0.0, %v2268
      %v2270 = vpop.f32.mrb[0].mxu0
      %v2271 = vpop.f32.mrb[0].mxu0
      %v2272 = vadd.f32 0.0, %v2271
      %v2273 = vpop.f32.mrb[0].mxu0
      %2274 = vmatprep.mubr.bf16.mxu0 %v1871
      %2275 = vmatmul.mubr.bf16.gmra.mrb[0].mxu0 %v1870
      %v2276 = vpop.f32.mrb[0].mxu0
      %v2277 = vadd.f32 0.0, %v2276
      %v2278 = vpop.f32.mrb[0].mxu0
      %v2279 = vpop.f32.mrb[0].mxu0
      %v2280 = vadd.f32 0.0, %v2279
      %v2281 = vpop.f32.mrb[0].mxu0
      %2282 = vmatprep.mubr.bf16.mxu0 %v1875
      %2283 = vmatmul.mubr.bf16.gmra.mrb[0].mxu0 %v1874
      %v2284 = vpop.f32.mrb[0].mxu0
      %v2285 = vadd.f32 0.0, %v2284
      %v2286 = vpop.f32.mrb[0].mxu0
      %v2287 = vpop.f32.mrb[0].mxu0
      %v2288 = vadd.f32 0.0, %v2287
      %v2289 = vpop.f32.mrb[0].mxu0
      %2290 = vmatprep.mubr.bf16.mxu0 %v1879
      %2291 = vmatmul.mubr.bf16.gmra.mrb[0].mxu0 %v1878
      %v2292 = vpop.f32.mrb[0].mxu0
      %v2293 = vadd.f32 0.0, %v2292
      %v2294 = vpop.f32.mrb[0].mxu0
      %v2295 = vpop.f32.mrb[0].mxu0
      %v2296 = vadd.f32 0.0, %v2295
      %v2297 = vpop.f32.mrb[0].mxu0
      %2298 = vdwg.mxu0
      %2299 = vmatprep.subr.bf16.mxu0 0
      %2300 = vmatpush1.bf16.msra.mxu0 %v2090
      %2301 = vmatprep.subr.bf16.mxu0 0
      %2302 = vmatpush1.bf16.msra.mxu0 %v2091
      %2303 = vmatprep.subr.bf16.mxu0 0
      %2304 = vmatpush1.bf16.msra.mxu0 %v2092
      %2305 = vmatprep.subr.bf16.mxu0 0
      %2306 = vmatpush1.bf16.msra.mxu0 %v2093
      %2307 = vmatprep.subr.bf16.mxu0 0
      %2308 = vmatpush1.bf16.msra.mxu0 %v2094
      %2309 = vmatprep.subr.bf16.mxu0 0
      %2310 = vmatpush1.bf16.msra.mxu0 %v2095
      %2311 = vmatprep.subr.bf16.mxu0 0
      %2312 = vmatpush1.bf16.msra.mxu0 %v2096
      %2313 = vmatprep.subr.bf16.mxu0 0
      %2314 = vmatpush1.bf16.msra.mxu0 %v2097
      %2315 = vmatprep.subr.bf16.mxu0 0
      %2316 = vmatpush1.bf16.msra.mxu0 %v2098
      %2317 = vmatprep.subr.bf16.mxu0 0
      %2318 = vmatpush1.bf16.msra.mxu0 %v2099
      %2319 = vmatprep.subr.bf16.mxu0 0
      %2320 = vmatpush1.bf16.msra.mxu0 %v2100
      %2321 = vmatprep.subr.bf16.mxu0 0
      %2322 = vmatpush1.bf16.msra.mxu0 %v2101
      %2323 = vmatprep.subr.bf16.mxu0 0
      %2324 = vmatpush1.bf16.msra.mxu0 %v2102
      %2325 = vmatprep.subr.bf16.mxu0 0
      %2326 = vmatpush1.bf16.msra.mxu0 %v2103
      %2327 = vmatprep.subr.bf16.mxu0 0
      %2328 = vmatpush1.bf16.msra.mxu0 %v2104
      %2329 = vmatprep.subr.bf16.mxu0 0
      %2330 = vmatpush1.bf16.msra.mxu0 %v2105
      %2331 = vmatprep.mubr.bf16.mxu0 %v1821
      %2332 = vmatmul.mubr.bf16.gmra.mrb[0].mxu0 %v1820
      %v2333 = vpop.f32.mrb[0].mxu0
      %v2334 = vadd.f32 %v2173, %v2333
      %v2335 = vpop.f32.mrb[0].mxu0
      %v2336 = vpop.f32.mrb[0].mxu0
      %v2337 = vadd.f32 %v2176, %v2336
      %v2338 = vpop.f32.mrb[0].mxu0
      %2339 = vmatprep.mubr.bf16.mxu0 %v1825
      %2340 = vmatmul.mubr.bf16.gmra.mrb[0].mxu0 %v1824
      %v2341 = vpop.f32.mrb[0].mxu0
      %v2342 = vadd.f32 %v2181, %v2341
      %v2343 = vpop.f32.mrb[0].mxu0
      %v2344 = vpop.f32.mrb[0].mxu0
      %v2345 = vadd.f32 %v2184, %v2344
      %v2346 = vpop.f32.mrb[0].mxu0
      %2347 = vmatprep.mubr.bf16.mxu0 %v1829
      %2348 = vmatmul.mubr.bf16.gmra.mrb[0].mxu0 %v1828
      %v2349 = vpop.f32.mrb[0].mxu0
      %v2350 = vadd.f32 %v2189, %v2349
      %v2351 = vpop.f32.mrb[0].mxu0
      %v2352 = vpop.f32.mrb[0].mxu0
      %v2353 = vadd.f32 %v2192, %v2352
      %v2354 = vpop.f32.mrb[0].mxu0
      %2355 = vmatprep.mubr.bf16.mxu0 %v1833
      %2356 = vmatmul.mubr.bf16.gmra.mrb[0].mxu0 %v1832
      %v2357 = vpop.f32.mrb[0].mxu0
      %v2358 = vadd.f32 %v2197, %v2357
      %v2359 = vpop.f32.mrb[0].mxu0
      %v2360 = vpop.f32.mrb[0].mxu0
      %v2361 = vadd.f32 %v2200, %v2360
      %v2362 = vpop.f32.mrb[0].mxu0
      %2363 = vmatprep.mubr.bf16.mxu0 %v1837
      %2364 = vmatmul.mubr.bf16.gmra.mrb[0].mxu0 %v1836
      %v2365 = vpop.f32.mrb[0].mxu0
      %v2366 = vadd.f32 %v2205, %v2365
      %v2367 = vpop.f32.mrb[0].mxu0
      %v2368 = vpop.f32.mrb[0].mxu0
      %v2369 = vadd.f32 %v2208, %v2368
      %v2370 = vpop.f32.mrb[0].mxu0
      %2371 = vmatprep.mubr.bf16.mxu0 %v1841
      %2372 = vmatmul.mubr.bf16.gmra.mrb[0].mxu0 %v1840
      %v2373 = vpop.f32.mrb[0].mxu0
      %v2374 = vadd.f32 %v2213, %v2373
      %v2375 = vpop.f32.mrb[0].mxu0
      %v2376 = vpop.f32.mrb[0].mxu0
      %v2377 = vadd.f32 %v2216, %v2376
      %v2378 = vpop.f32.mrb[0].mxu0
      %2379 = vmatprep.mubr.bf16.mxu0 %v1845
      %2380 = vmatmul.mubr.bf16.gmra.mrb[0].mxu0 %v1844
      %v2381 = vpop.f32.mrb[0].mxu0
      %v2382 = vadd.f32 %v2221, %v2381
      %v2383 = vpop.f32.mrb[0].mxu0
      %v2384 = vpop.f32.mrb[0].mxu0
      %v2385 = vadd.f32 %v2224, %v2384
      %v2386 = vpop.f32.mrb[0].mxu0
      %2387 = vmatprep.mubr.bf16.mxu0 %v1849
      %2388 = vmatmul.mubr.bf16.gmra.mrb[0].mxu0 %v1848
      %v2389 = vpop.f32.mrb[0].mxu0
      %v2390 = vadd.f32 %v2229, %v2389
      %v2391 = vpop.f32.mrb[0].mxu0
      %v2392 = vpop.f32.mrb[0].mxu0
      %v2393 = vadd.f32 %v2232, %v2392
      %v2394 = vpop.f32.mrb[0].mxu0
      %2395 = vmatprep.mubr.bf16.mxu0 %v1853
      %2396 = vmatmul.mubr.bf16.gmra.mrb[0].mxu0 %v1852
      %v2397 = vpop.f32.mrb[0].mxu0
      %v2398 = vadd.f32 %v2237, %v2397
      %v2399 = vpop.f32.mrb[0].mxu0
      %v2400 = vpop.f32.mrb[0].mxu0
      %v2401 = vadd.f32 %v2240, %v2400
      %v2402 = vpop.f32.mrb[0].mxu0
      %2403 = vmatprep.mubr.bf16.mxu0 %v1857
      %2404 = vmatmul.mubr.bf16.gmra.mrb[0].mxu0 %v1856
      %v2405 = vpop.f32.mrb[0].mxu0
      %v2406 = vadd.f32 %v2245, %v2405
      %v2407 = vpop.f32.mrb[0].mxu0
      %v2408 = vpop.f32.mrb[0].mxu0
      %v2409 = vadd.f32 %v2248, %v2408
      %v2410 = vpop.f32.mrb[0].mxu0
      %2411 = vmatprep.mubr.bf16.mxu0 %v1861
      %2412 = vmatmul.mubr.bf16.gmra.mrb[0].mxu0 %v1860
      %v2413 = vpop.f32.mrb[0].mxu0
      %v2414 = vadd.f32 %v2253, %v2413
      %v2415 = vpop.f32.mrb[0].mxu0
      %v2416 = vpop.f32.mrb[0].mxu0
      %v2417 = vadd.f32 %v2256, %v2416
      %v2418 = vpop.f32.mrb[0].mxu0
      %2419 = vmatprep.mubr.bf16.mxu0 %v1865
      %2420 = vmatmul.mubr.bf16.gmra.mrb[0].mxu0 %v1864
      %v2421 = vpop.f32.mrb[0].mxu0
      %v2422 = vadd.f32 %v2261, %v2421
      %v2423 = vpop.f32.mrb[0].mxu0
      %v2424 = vpop.f32.mrb[0].mxu0
      %v2425 = vadd.f32 %v2264, %v2424
      %v2426 = vpop.f32.mrb[0].mxu0
      %2427 = vmatprep.mubr.bf16.mxu0 %v1869
      %2428 = vmatmul.mubr.bf16.gmra.mrb[0].mxu0 %v1868
      %v2429 = vpop.f32.mrb[0].mxu0
      %v2430 = vadd.f32 %v2269, %v2429
      %v2431 = vpop.f32.mrb[0].mxu0
      %v2432 = vpop.f32.mrb[0].mxu0
      %v2433 = vadd.f32 %v2272, %v2432
      %v2434 = vpop.f32.mrb[0].mxu0
      %2435 = vmatprep.mubr.bf16.mxu0 %v1873
      %2436 = vmatmul.mubr.bf16.gmra.mrb[0].mxu0 %v1872
      %v2437 = vpop.f32.mrb[0].mxu0
      %v2438 = vadd.f32 %v2277, %v2437
      %v2439 = vpop.f32.mrb[0].mxu0
      %v2440 = vpop.f32.mrb[0].mxu0
      %v2441 = vadd.f32 %v2280, %v2440
      %v2442 = vpop.f32.mrb[0].mxu0
      %2443 = vmatprep.mubr.bf16.mxu0 %v1877
      %2444 = vmatmul.mubr.bf16.gmra.mrb[0].mxu0 %v1876
      %v2445 = vpop.f32.mrb[0].mxu0
      %v2446 = vadd.f32 %v2285, %v2445
      %v2447 = vpop.f32.mrb[0].mxu0
      %v2448 = vpop.f32.mrb[0].mxu0
      %v2449 = vadd.f32 %v2288, %v2448
      %v2450 = vpop.f32.mrb[0].mxu0
      %2451 = vmatprep.mubr.bf16.mxu0 %v1881
      %2452 = vmatmul.mubr.bf16.gmra.mrb[0].mxu0 %v1880
      %v2453 = vpop.f32.mrb[0].mxu0
      %v2454 = vadd.f32 %v2293, %v2453
      %v2455 = vpop.f32.mrb[0].mxu0
      %v2456 = vpop.f32.mrb[0].mxu0
      %v2457 = vadd.f32 %v2296, %v2456
      %v2458 = vpop.f32.mrb[0].mxu0
      %2459 = vdwg.mxu0
      %v2460 = vadd.f32 %v1372, %v2334
      %v2461 = vadd.f32 %v1375, %v2337
      %v2462 = vadd.f32 %v1380, %v2342
      %v2463 = vadd.f32 %v1383, %v2345
      %v2464 = vadd.f32 %v1388, %v2350
      %v2465 = vadd.f32 %v1391, %v2353
      %v2466 = vadd.f32 %v1396, %v2358
      %v2467 = vadd.f32 %v1399, %v2361
      %v2468 = vadd.f32 %v1404, %v2366
      %v2469 = vadd.f32 %v1407, %v2369
      %v2470 = vadd.f32 %v1412, %v2374
      %v2471 = vadd.f32 %v1415, %v2377
      %v2472 = vadd.f32 %v1420, %v2382
      %v2473 = vadd.f32 %v1423, %v2385
      %v2474 = vadd.f32 %v1428, %v2390
      %v2475 = vadd.f32 %v1431, %v2393
      %v2476 = vadd.f32 %v1436, %v2398
      %v2477 = vadd.f32 %v1439, %v2401
      %v2478 = vadd.f32 %v1444, %v2406
      %v2479 = vadd.f32 %v1447, %v2409
      %v2480 = vadd.f32 %v1452, %v2414
      %v2481 = vadd.f32 %v1455, %v2417
      %v2482 = vadd.f32 %v1460, %v2422
      %v2483 = vadd.f32 %v1463, %v2425
      %v2484 = vadd.f32 %v1468, %v2430
      %v2485 = vadd.f32 %v1471, %v2433
      %v2486 = vadd.f32 %v1476, %v2438
      %v2487 = vadd.f32 %v1479, %v2441
      %v2488 = vadd.f32 %v1484, %v2446
      %v2489 = vadd.f32 %v1487, %v2449
      %v2490 = vadd.f32 %v1492, %v2454
      %v2491 = vadd.f32 %v1495, %v2457
      %v2492 = vld [vmem:[%s6] sm:$0x1]
      %v2494 = vlaneseq
      %v2495 = vshrl.u32 %v2494, 7
      %v2496 = vsub.s32 0, %v2495
      %v2497 = vrot.slane %v2492, %v2496
      %v2499 = vadd.f32 %v2460, %v2497
      %v2500 = vadd.f32 %v2461, %v2497
      %v2501 = vadd.f32 %v2462, %v2497
      %v2502 = vadd.f32 %v2463, %v2497
      %v2503 = vadd.f32 %v2464, %v2497
      %v2504 = vadd.f32 %v2465, %v2497
      %v2505 = vadd.f32 %v2466, %v2497
      %v2506 = vadd.f32 %v2467, %v2497
      %v2507 = vadd.f32 %v2468, %v2497
      %v2508 = vadd.f32 %v2469, %v2497
      %v2509 = vadd.f32 %v2470, %v2497
      %v2510 = vadd.f32 %v2471, %v2497
      %v2511 = vadd.f32 %v2472, %v2497
      %v2512 = vadd.f32 %v2473, %v2497
      %v2513 = vadd.f32 %v2474, %v2497
      %v2514 = vadd.f32 %v2475, %v2497
      %v2515 = vadd.f32 %v2476, %v2497
      %v2516 = vadd.f32 %v2477, %v2497
      %v2517 = vadd.f32 %v2478, %v2497
      %v2518 = vadd.f32 %v2479, %v2497
      %v2519 = vadd.f32 %v2480, %v2497
      %v2520 = vadd.f32 %v2481, %v2497
      %v2521 = vadd.f32 %v2482, %v2497
      %v2522 = vadd.f32 %v2483, %v2497
      %v2523 = vadd.f32 %v2484, %v2497
      %v2524 = vadd.f32 %v2485, %v2497
      %v2525 = vadd.f32 %v2486, %v2497
      %v2526 = vadd.f32 %v2487, %v2497
      %v2527 = vadd.f32 %v2488, %v2497
      %v2528 = vadd.f32 %v2489, %v2497
      %v2529 = vadd.f32 %v2490, %v2497
      %v2530 = vadd.f32 %v2491, %v2497
      %v2531 = vmax.f32 %v2499, 0.0
      %v2532 = vmax.f32 %v2500, 0.0
      %v2533 = vmax.f32 %v2501, 0.0
      %v2534 = vmax.f32 %v2502, 0.0
      %v2535 = vmax.f32 %v2503, 0.0
      %v2536 = vmax.f32 %v2504, 0.0
      %v2537 = vmax.f32 %v2505, 0.0
      %v2538 = vmax.f32 %v2506, 0.0
      %v2539 = vmax.f32 %v2507, 0.0
      %v2540 = vmax.f32 %v2508, 0.0
      %v2541 = vmax.f32 %v2509, 0.0
      %v2542 = vmax.f32 %v2510, 0.0
      %v2543 = vmax.f32 %v2511, 0.0
      %v2544 = vmax.f32 %v2512, 0.0
      %v2545 = vmax.f32 %v2513, 0.0
      %v2546 = vmax.f32 %v2514, 0.0
      %v2547 = vmax.f32 %v2515, 0.0
      %v2548 = vmax.f32 %v2516, 0.0
      %v2549 = vmax.f32 %v2517, 0.0
      %v2550 = vmax.f32 %v2518, 0.0
      %v2551 = vmax.f32 %v2519, 0.0
      %v2552 = vmax.f32 %v2520, 0.0
      %v2553 = vmax.f32 %v2521, 0.0
      %v2554 = vmax.f32 %v2522, 0.0
      %v2555 = vmax.f32 %v2523, 0.0
      %v2556 = vmax.f32 %v2524, 0.0
      %v2557 = vmax.f32 %v2525, 0.0
      %v2558 = vmax.f32 %v2526, 0.0
      %v2559 = vmax.f32 %v2527, 0.0
      %v2560 = vmax.f32 %v2528, 0.0
      %v2561 = vmax.f32 %v2529, 0.0
      %v2562 = vmax.f32 %v2530, 0.0
      %v2563 = vmul.f32 %v2531, %v2531
      %v2564 = vmul.f32 %v2532, %v2532
      %v2565 = vmul.f32 %v2533, %v2533
      %v2566 = vmul.f32 %v2534, %v2534
      %v2567 = vmul.f32 %v2535, %v2535
      %v2568 = vmul.f32 %v2536, %v2536
      %v2569 = vmul.f32 %v2537, %v2537
      %v2570 = vmul.f32 %v2538, %v2538
      %v2571 = vmul.f32 %v2539, %v2539
      %v2572 = vmul.f32 %v2540, %v2540
      %v2573 = vmul.f32 %v2541, %v2541
      %v2574 = vmul.f32 %v2542, %v2542
      %v2575 = vmul.f32 %v2543, %v2543
      %v2576 = vmul.f32 %v2544, %v2544
      %v2577 = vmul.f32 %v2545, %v2545
      %v2578 = vmul.f32 %v2546, %v2546
      %v2579 = vmul.f32 %v2547, %v2547
      %v2580 = vmul.f32 %v2548, %v2548
      %v2581 = vmul.f32 %v2549, %v2549
      %v2582 = vmul.f32 %v2550, %v2550
      %v2583 = vmul.f32 %v2551, %v2551
      %v2584 = vmul.f32 %v2552, %v2552
      %v2585 = vmul.f32 %v2553, %v2553
      %v2586 = vmul.f32 %v2554, %v2554
      %v2587 = vmul.f32 %v2555, %v2555
      %v2588 = vmul.f32 %v2556, %v2556
      %v2589 = vmul.f32 %v2557, %v2557
      %v2590 = vmul.f32 %v2558, %v2558
      %v2591 = vmul.f32 %v2559, %v2559
      %v2592 = vmul.f32 %v2560, %v2560
      %v2593 = vmul.f32 %v2561, %v2561
      %v2594 = vmul.f32 %v2562, %v2562
      %2595 = vrot.lane.b32.xlu0 %v2563, 1
      %v2596 = vpop.permute.xlu0 %2595
      %2597 = vrot.lane.b32.xlu0 %v2564, 1
      %v2598 = vpop.permute.xlu0 %2597
      %2599 = vrot.lane.b32.xlu0 %v2565, 1
      %v2600 = vpop.permute.xlu0 %2599
      %2601 = vrot.lane.b32.xlu0 %v2566, 1
      %v2602 = vpop.permute.xlu0 %2601
      %2603 = vrot.lane.b32.xlu0 %v2567, 1
      %v2604 = vpop.permute.xlu0 %2603
      %2605 = vrot.lane.b32.xlu0 %v2568, 1
      %v2606 = vpop.permute.xlu0 %2605
      %2607 = vrot.lane.b32.xlu0 %v2569, 1
      %v2608 = vpop.permute.xlu0 %2607
      %2609 = vrot.lane.b32.xlu0 %v2570, 1
      %v2610 = vpop.permute.xlu0 %2609
      %2611 = vrot.lane.b32.xlu0 %v2571, 1
      %v2612 = vpop.permute.xlu0 %2611
      %2613 = vrot.lane.b32.xlu0 %v2572, 1
      %v2614 = vpop.permute.xlu0 %2613
      %2615 = vrot.lane.b32.xlu0 %v2573, 1
      %v2616 = vpop.permute.xlu0 %2615
      %2617 = vrot.lane.b32.xlu0 %v2574, 1
      %v2618 = vpop.permute.xlu0 %2617
      %2619 = vrot.lane.b32.xlu0 %v2575, 1
      %v2620 = vpop.permute.xlu0 %2619
      %2621 = vrot.lane.b32.xlu0 %v2576, 1
      %v2622 = vpop.permute.xlu0 %2621
      %2623 = vrot.lane.b32.xlu0 %v2577, 1
      %v2624 = vpop.permute.xlu0 %2623
      %2625 = vrot.lane.b32.xlu0 %v2578, 1
      %v2626 = vpop.permute.xlu0 %2625
      %2627 = vrot.lane.b32.xlu0 %v2579, 1
      %v2628 = vpop.permute.xlu0 %2627
      %2629 = vrot.lane.b32.xlu0 %v2580, 1
      %v2630 = vpop.permute.xlu0 %2629
      %2631 = vrot.lane.b32.xlu0 %v2581, 1
      %v2632 = vpop.permute.xlu0 %2631
      %2633 = vrot.lane.b32.xlu0 %v2582, 1
      %v2634 = vpop.permute.xlu0 %2633
      %2635 = vrot.lane.b32.xlu0 %v2583, 1
      %v2636 = vpop.permute.xlu0 %2635
      %2637 = vrot.lane.b32.xlu0 %v2584, 1
      %v2638 = vpop.permute.xlu0 %2637
      %2639 = vrot.lane.b32.xlu0 %v2585, 1
      %v2640 = vpop.permute.xlu0 %2639
      %2641 = vrot.lane.b32.xlu0 %v2586, 1
      %v2642 = vpop.permute.xlu0 %2641
      %2643 = vrot.lane.b32.xlu0 %v2587, 1
      %v2644 = vpop.permute.xlu0 %2643
      %2645 = vrot.lane.b32.xlu0 %v2588, 1
      %v2646 = vpop.permute.xlu0 %2645
      %2647 = vrot.lane.b32.xlu0 %v2589, 1
      %v2648 = vpop.permute.xlu0 %2647
      %2649 = vrot.lane.b32.xlu0 %v2590, 1
      %v2650 = vpop.permute.xlu0 %2649
      %2651 = vrot.lane.b32.xlu0 %v2591, 1
      %v2652 = vpop.permute.xlu0 %2651
      %2653 = vrot.lane.b32.xlu0 %v2592, 1
      %v2654 = vpop.permute.xlu0 %2653
      %2655 = vrot.lane.b32.xlu0 %v2593, 1
      %v2656 = vpop.permute.xlu0 %2655
      %2657 = vrot.lane.b32.xlu0 %v2594, 1
      %v2658 = vpop.permute.xlu0 %2657
      %v2659 = vadd.f32 %v2563, %v2596
      %v2660 = vadd.f32 %v2564, %v2598
      %v2661 = vadd.f32 %v2565, %v2600
      %v2662 = vadd.f32 %v2566, %v2602
      %v2663 = vadd.f32 %v2567, %v2604
      %v2664 = vadd.f32 %v2568, %v2606
      %v2665 = vadd.f32 %v2569, %v2608
      %v2666 = vadd.f32 %v2570, %v2610
      %v2667 = vadd.f32 %v2571, %v2612
      %v2668 = vadd.f32 %v2572, %v2614
      %v2669 = vadd.f32 %v2573, %v2616
      %v2670 = vadd.f32 %v2574, %v2618
      %v2671 = vadd.f32 %v2575, %v2620
      %v2672 = vadd.f32 %v2576, %v2622
      %v2673 = vadd.f32 %v2577, %v2624
      %v2674 = vadd.f32 %v2578, %v2626
      %v2675 = vadd.f32 %v2579, %v2628
      %v2676 = vadd.f32 %v2580, %v2630
      %v2677 = vadd.f32 %v2581, %v2632
      %v2678 = vadd.f32 %v2582, %v2634
      %v2679 = vadd.f32 %v2583, %v2636
      %v2680 = vadd.f32 %v2584, %v2638
      %v2681 = vadd.f32 %v2585, %v2640
      %v2682 = vadd.f32 %v2586, %v2642
      %v2683 = vadd.f32 %v2587, %v2644
      %v2684 = vadd.f32 %v2588, %v2646
      %v2685 = vadd.f32 %v2589, %v2648
      %v2686 = vadd.f32 %v2590, %v2650
      %v2687 = vadd.f32 %v2591, %v2652
      %v2688 = vadd.f32 %v2592, %v2654
      %v2689 = vadd.f32 %v2593, %v2656
      %v2690 = vadd.f32 %v2594, %v2658
      %2691 = vrot.lane.b32.xlu0 %v2563, 2
      %v2692 = vpop.permute.xlu0 %2691
      %2693 = vrot.lane.b32.xlu0 %v2564, 2
      %v2694 = vpop.permute.xlu0 %2693
      %2695 = vrot.lane.b32.xlu0 %v2565, 2
      %v2696 = vpop.permute.xlu0 %2695
      %2697 = vrot.lane.b32.xlu0 %v2566, 2
      %v2698 = vpop.permute.xlu0 %2697
      %2699 = vrot.lane.b32.xlu0 %v2567, 2
      %v2700 = vpop.permute.xlu0 %2699
      %2701 = vrot.lane.b32.xlu0 %v2568, 2
      %v2702 = vpop.permute.xlu0 %2701
      %2703 = vrot.lane.b32.xlu0 %v2569, 2
      %v2704 = vpop.permute.xlu0 %2703
      %2705 = vrot.lane.b32.xlu0 %v2570, 2
      %v2706 = vpop.permute.xlu0 %2705
      %2707 = vrot.lane.b32.xlu0 %v2571, 2
      %v2708 = vpop.permute.xlu0 %2707
      %2709 = vrot.lane.b32.xlu0 %v2572, 2
      %v2710 = vpop.permute.xlu0 %2709
      %2711 = vrot.lane.b32.xlu0 %v2573, 2
      %v2712 = vpop.permute.xlu0 %2711
      %2713 = vrot.lane.b32.xlu0 %v2574, 2
      %v2714 = vpop.permute.xlu0 %2713
      %2715 = vrot.lane.b32.xlu0 %v2575, 2
      %v2716 = vpop.permute.xlu0 %2715
      %2717 = vrot.lane.b32.xlu0 %v2576, 2
      %v2718 = vpop.permute.xlu0 %2717
      %2719 = vrot.lane.b32.xlu0 %v2577, 2
      %v2720 = vpop.permute.xlu0 %2719
      %2721 = vrot.lane.b32.xlu0 %v2578, 2
      %v2722 = vpop.permute.xlu0 %2721
      %2723 = vrot.lane.b32.xlu0 %v2579, 2
      %v2724 = vpop.permute.xlu0 %2723
      %2725 = vrot.lane.b32.xlu0 %v2580, 2
      %v2726 = vpop.permute.xlu0 %2725
      %2727 = vrot.lane.b32.xlu0 %v2581, 2
      %v2728 = vpop.permute.xlu0 %2727
      %2729 = vrot.lane.b32.xlu0 %v2582, 2
      %v2730 = vpop.permute.xlu0 %2729
      %2731 = vrot.lane.b32.xlu0 %v2583, 2
      %v2732 = vpop.permute.xlu0 %2731
      %2733 = vrot.lane.b32.xlu0 %v2584, 2
      %v2734 = vpop.permute.xlu0 %2733
      %2735 = vrot.lane.b32.xlu0 %v2585, 2
      %v2736 = vpop.permute.xlu0 %2735
      %2737 = vrot.lane.b32.xlu0 %v2586, 2
      %v2738 = vpop.permute.xlu0 %2737
      %2739 = vrot.lane.b32.xlu0 %v2587, 2
      %v2740 = vpop.permute.xlu0 %2739
      %2741 = vrot.lane.b32.xlu0 %v2588, 2
      %v2742 = vpop.permute.xlu0 %2741
      %2743 = vrot.lane.b32.xlu0 %v2589, 2
      %v2744 = vpop.permute.xlu0 %2743
      %2745 = vrot.lane.b32.xlu0 %v2590, 2
      %v2746 = vpop.permute.xlu0 %2745
      %2747 = vrot.lane.b32.xlu0 %v2591, 2
      %v2748 = vpop.permute.xlu0 %2747
      %2749 = vrot.lane.b32.xlu0 %v2592, 2
      %v2750 = vpop.permute.xlu0 %2749
      %2751 = vrot.lane.b32.xlu0 %v2593, 2
      %v2752 = vpop.permute.xlu0 %2751
      %2753 = vrot.lane.b32.xlu0 %v2594, 2
      %v2754 = vpop.permute.xlu0 %2753
      %v2755 = vadd.f32 %v2659, %v2692
      %v2756 = vadd.f32 %v2660, %v2694
      %v2757 = vadd.f32 %v2661, %v2696
      %v2758 = vadd.f32 %v2662, %v2698
      %v2759 = vadd.f32 %v2663, %v2700
      %v2760 = vadd.f32 %v2664, %v2702
      %v2761 = vadd.f32 %v2665, %v2704
      %v2762 = vadd.f32 %v2666, %v2706
      %v2763 = vadd.f32 %v2667, %v2708
      %v2764 = vadd.f32 %v2668, %v2710
      %v2765 = vadd.f32 %v2669, %v2712
      %v2766 = vadd.f32 %v2670, %v2714
      %v2767 = vadd.f32 %v2671, %v2716
      %v2768 = vadd.f32 %v2672, %v2718
      %v2769 = vadd.f32 %v2673, %v2720
      %v2770 = vadd.f32 %v2674, %v2722
      %v2771 = vadd.f32 %v2675, %v2724
      %v2772 = vadd.f32 %v2676, %v2726
      %v2773 = vadd.f32 %v2677, %v2728
      %v2774 = vadd.f32 %v2678, %v2730
      %v2775 = vadd.f32 %v2679, %v2732
      %v2776 = vadd.f32 %v2680, %v2734
      %v2777 = vadd.f32 %v2681, %v2736
      %v2778 = vadd.f32 %v2682, %v2738
      %v2779 = vadd.f32 %v2683, %v2740
      %v2780 = vadd.f32 %v2684, %v2742
      %v2781 = vadd.f32 %v2685, %v2744
      %v2782 = vadd.f32 %v2686, %v2746
      %v2783 = vadd.f32 %v2687, %v2748
      %v2784 = vadd.f32 %v2688, %v2750
      %v2785 = vadd.f32 %v2689, %v2752
      %v2786 = vadd.f32 %v2690, %v2754
      %2787 = vrot.lane.b32.xlu0 %v2563, 127
      %v2788 = vpop.permute.xlu0 %2787
      %2789 = vrot.lane.b32.xlu0 %v2564, 127
      %v2790 = vpop.permute.xlu0 %2789
      %2791 = vrot.lane.b32.xlu0 %v2565, 127
      %v2792 = vpop.permute.xlu0 %2791
      %2793 = vrot.lane.b32.xlu0 %v2566, 127
      %v2794 = vpop.permute.xlu0 %2793
      %2795 = vrot.lane.b32.xlu0 %v2567, 127
      %v2796 = vpop.permute.xlu0 %2795
      %2797 = vrot.lane.b32.xlu0 %v2568, 127
      %v2798 = vpop.permute.xlu0 %2797
      %2799 = vrot.lane.b32.xlu0 %v2569, 127
      %v2800 = vpop.permute.xlu0 %2799
      %2801 = vrot.lane.b32.xlu0 %v2570, 127
      %v2802 = vpop.permute.xlu0 %2801
      %2803 = vrot.lane.b32.xlu0 %v2571, 127
      %v2804 = vpop.permute.xlu0 %2803
      %2805 = vrot.lane.b32.xlu0 %v2572, 127
      %v2806 = vpop.permute.xlu0 %2805
      %2807 = vrot.lane.b32.xlu0 %v2573, 127
      %v2808 = vpop.permute.xlu0 %2807
      %2809 = vrot.lane.b32.xlu0 %v2574, 127
      %v2810 = vpop.permute.xlu0 %2809
      %2811 = vrot.lane.b32.xlu0 %v2575, 127
      %v2812 = vpop.permute.xlu0 %2811
      %2813 = vrot.lane.b32.xlu0 %v2576, 127
      %v2814 = vpop.permute.xlu0 %2813
      %2815 = vrot.lane.b32.xlu0 %v2577, 127
      %v2816 = vpop.permute.xlu0 %2815
      %2817 = vrot.lane.b32.xlu0 %v2578, 127
      %v2818 = vpop.permute.xlu0 %2817
      %2819 = vrot.lane.b32.xlu0 %v2579, 127
      %v2820 = vpop.permute.xlu0 %2819
      %2821 = vrot.lane.b32.xlu0 %v2580, 127
      %v2822 = vpop.permute.xlu0 %2821
      %2823 = vrot.lane.b32.xlu0 %v2581, 127
      %v2824 = vpop.permute.xlu0 %2823
      %2825 = vrot.lane.b32.xlu0 %v2582, 127
      %v2826 = vpop.permute.xlu0 %2825
      %2827 = vrot.lane.b32.xlu0 %v2583, 127
      %v2828 = vpop.permute.xlu0 %2827
      %2829 = vrot.lane.b32.xlu0 %v2584, 127
      %v2830 = vpop.permute.xlu0 %2829
      %2831 = vrot.lane.b32.xlu0 %v2585, 127
      %v2832 = vpop.permute.xlu0 %2831
      %2833 = vrot.lane.b32.xlu0 %v2586, 127
      %v2834 = vpop.permute.xlu0 %2833
      %2835 = vrot.lane.b32.xlu0 %v2587, 127
      %v2836 = vpop.permute.xlu0 %2835
      %2837 = vrot.lane.b32.xlu0 %v2588, 127
      %v2838 = vpop.permute.xlu0 %2837
      %2839 = vrot.lane.b32.xlu0 %v2589, 127
      %v2840 = vpop.permute.xlu0 %2839
      %2841 = vrot.lane.b32.xlu0 %v2590, 127
      %v2842 = vpop.permute.xlu0 %2841
      %2843 = vrot.lane.b32.xlu0 %v2591, 127
      %v2844 = vpop.permute.xlu0 %2843
      %2845 = vrot.lane.b32.xlu0 %v2592, 127
      %v2846 = vpop.permute.xlu0 %2845
      %2847 = vrot.lane.b32.xlu0 %v2593, 127
      %v2848 = vpop.permute.xlu0 %2847
      %2849 = vrot.lane.b32.xlu0 %v2594, 127
      %v2850 = vpop.permute.xlu0 %2849
      %v2851 = vadd.f32 %v2755, %v2788
      %v2852 = vadd.f32 %v2756, %v2790
      %v2853 = vadd.f32 %v2757, %v2792
      %v2854 = vadd.f32 %v2758, %v2794
      %v2855 = vadd.f32 %v2759, %v2796
      %v2856 = vadd.f32 %v2760, %v2798
      %v2857 = vadd.f32 %v2761, %v2800
      %v2858 = vadd.f32 %v2762, %v2802
      %v2859 = vadd.f32 %v2763, %v2804
      %v2860 = vadd.f32 %v2764, %v2806
      %v2861 = vadd.f32 %v2765, %v2808
      %v2862 = vadd.f32 %v2766, %v2810
      %v2863 = vadd.f32 %v2767, %v2812
      %v2864 = vadd.f32 %v2768, %v2814
      %v2865 = vadd.f32 %v2769, %v2816
      %v2866 = vadd.f32 %v2770, %v2818
      %v2867 = vadd.f32 %v2771, %v2820
      %v2868 = vadd.f32 %v2772, %v2822
      %v2869 = vadd.f32 %v2773, %v2824
      %v2870 = vadd.f32 %v2774, %v2826
      %v2871 = vadd.f32 %v2775, %v2828
      %v2872 = vadd.f32 %v2776, %v2830
      %v2873 = vadd.f32 %v2777, %v2832
      %v2874 = vadd.f32 %v2778, %v2834
      %v2875 = vadd.f32 %v2779, %v2836
      %v2876 = vadd.f32 %v2780, %v2838
      %v2877 = vadd.f32 %v2781, %v2840
      %v2878 = vadd.f32 %v2782, %v2842
      %v2879 = vadd.f32 %v2783, %v2844
      %v2880 = vadd.f32 %v2784, %v2846
      %v2881 = vadd.f32 %v2785, %v2848
      %v2882 = vadd.f32 %v2786, %v2850
      %2883 = vrot.lane.b32.xlu0 %v2563, 126
      %v2884 = vpop.permute.xlu0 %2883
      %2885 = vrot.lane.b32.xlu0 %v2564, 126
      %v2886 = vpop.permute.xlu0 %2885
      %2887 = vrot.lane.b32.xlu0 %v2565, 126
      %v2888 = vpop.permute.xlu0 %2887
      %2889 = vrot.lane.b32.xlu0 %v2566, 126
      %v2890 = vpop.permute.xlu0 %2889
      %2891 = vrot.lane.b32.xlu0 %v2567, 126
      %v2892 = vpop.permute.xlu0 %2891
      %2893 = vrot.lane.b32.xlu0 %v2568, 126
      %v2894 = vpop.permute.xlu0 %2893
      %2895 = vrot.lane.b32.xlu0 %v2569, 126
      %v2896 = vpop.permute.xlu0 %2895
      %2897 = vrot.lane.b32.xlu0 %v2570, 126
      %v2898 = vpop.permute.xlu0 %2897
      %2899 = vrot.lane.b32.xlu0 %v2571, 126
      %v2900 = vpop.permute.xlu0 %2899
      %2901 = vrot.lane.b32.xlu0 %v2572, 126
      %v2902 = vpop.permute.xlu0 %2901
      %2903 = vrot.lane.b32.xlu0 %v2573, 126
      %v2904 = vpop.permute.xlu0 %2903
      %2905 = vrot.lane.b32.xlu0 %v2574, 126
      %v2906 = vpop.permute.xlu0 %2905
      %2907 = vrot.lane.b32.xlu0 %v2575, 126
      %v2908 = vpop.permute.xlu0 %2907
      %2909 = vrot.lane.b32.xlu0 %v2576, 126
      %v2910 = vpop.permute.xlu0 %2909
      %2911 = vrot.lane.b32.xlu0 %v2577, 126
      %v2912 = vpop.permute.xlu0 %2911
      %2913 = vrot.lane.b32.xlu0 %v2578, 126
      %v2914 = vpop.permute.xlu0 %2913
      %2915 = vrot.lane.b32.xlu0 %v2579, 126
      %v2916 = vpop.permute.xlu0 %2915
      %2917 = vrot.lane.b32.xlu0 %v2580, 126
      %v2918 = vpop.permute.xlu0 %2917
      %2919 = vrot.lane.b32.xlu0 %v2581, 126
      %v2920 = vpop.permute.xlu0 %2919
      %2921 = vrot.lane.b32.xlu0 %v2582, 126
      %v2922 = vpop.permute.xlu0 %2921
      %2923 = vrot.lane.b32.xlu0 %v2583, 126
      %v2924 = vpop.permute.xlu0 %2923
      %2925 = vrot.lane.b32.xlu0 %v2584, 126
      %v2926 = vpop.permute.xlu0 %2925
      %2927 = vrot.lane.b32.xlu0 %v2585, 126
      %v2928 = vpop.permute.xlu0 %2927
      %2929 = vrot.lane.b32.xlu0 %v2586, 126
      %v2930 = vpop.permute.xlu0 %2929
      %2931 = vrot.lane.b32.xlu0 %v2587, 126
      %v2932 = vpop.permute.xlu0 %2931
      %2933 = vrot.lane.b32.xlu0 %v2588, 126
      %v2934 = vpop.permute.xlu0 %2933
      %2935 = vrot.lane.b32.xlu0 %v2589, 126
      %v2936 = vpop.permute.xlu0 %2935
      %2937 = vrot.lane.b32.xlu0 %v2590, 126
      %v2938 = vpop.permute.xlu0 %2937
      %2939 = vrot.lane.b32.xlu0 %v2591, 126
      %v2940 = vpop.permute.xlu0 %2939
      %2941 = vrot.lane.b32.xlu0 %v2592, 126
      %v2942 = vpop.permute.xlu0 %2941
      %2943 = vrot.lane.b32.xlu0 %v2593, 126
      %v2944 = vpop.permute.xlu0 %2943
      %2945 = vrot.lane.b32.xlu0 %v2594, 126
      %v2946 = vpop.permute.xlu0 %2945
      %v2947 = vadd.f32 %v2851, %v2884
      %v2948 = vadd.f32 %v2852, %v2886
      %v2949 = vadd.f32 %v2853, %v2888
      %v2950 = vadd.f32 %v2854, %v2890
      %v2951 = vadd.f32 %v2855, %v2892
      %v2952 = vadd.f32 %v2856, %v2894
      %v2953 = vadd.f32 %v2857, %v2896
      %v2954 = vadd.f32 %v2858, %v2898
      %v2955 = vadd.f32 %v2859, %v2900
      %v2956 = vadd.f32 %v2860, %v2902
      %v2957 = vadd.f32 %v2861, %v2904
      %v2958 = vadd.f32 %v2862, %v2906
      %v2959 = vadd.f32 %v2863, %v2908
      %v2960 = vadd.f32 %v2864, %v2910
      %v2961 = vadd.f32 %v2865, %v2912
      %v2962 = vadd.f32 %v2866, %v2914
      %v2963 = vadd.f32 %v2867, %v2916
      %v2964 = vadd.f32 %v2868, %v2918
      %v2965 = vadd.f32 %v2869, %v2920
      %v2966 = vadd.f32 %v2870, %v2922
      %v2967 = vadd.f32 %v2871, %v2924
      %v2968 = vadd.f32 %v2872, %v2926
      %v2969 = vadd.f32 %v2873, %v2928
      %v2970 = vadd.f32 %v2874, %v2930
      %v2971 = vadd.f32 %v2875, %v2932
      %v2972 = vadd.f32 %v2876, %v2934
      %v2973 = vadd.f32 %v2877, %v2936
      %v2974 = vadd.f32 %v2878, %v2938
      %v2975 = vadd.f32 %v2879, %v2940
      %v2976 = vadd.f32 %v2880, %v2942
      %v2977 = vadd.f32 %v2881, %v2944
      %v2978 = vadd.f32 %v2882, %v2946
      %v2979 = vmul.f32 %v2947, 0.0002
      %v2980 = vmul.f32 %v2948, 0.0002
      %v2981 = vmul.f32 %v2949, 0.0002
      %v2982 = vmul.f32 %v2950, 0.0002
      %v2983 = vmul.f32 %v2951, 0.0002
      %v2984 = vmul.f32 %v2952, 0.0002
      %v2985 = vmul.f32 %v2953, 0.0002
      %v2986 = vmul.f32 %v2954, 0.0002
      %v2987 = vmul.f32 %v2955, 0.0002
      %v2988 = vmul.f32 %v2956, 0.0002
      %v2989 = vmul.f32 %v2957, 0.0002
      %v2990 = vmul.f32 %v2958, 0.0002
      %v2991 = vmul.f32 %v2959, 0.0002
      %v2992 = vmul.f32 %v2960, 0.0002
      %v2993 = vmul.f32 %v2961, 0.0002
      %v2994 = vmul.f32 %v2962, 0.0002
      %v2995 = vmul.f32 %v2963, 0.0002
      %v2996 = vmul.f32 %v2964, 0.0002
      %v2997 = vmul.f32 %v2965, 0.0002
      %v2998 = vmul.f32 %v2966, 0.0002
      %v2999 = vmul.f32 %v2967, 0.0002
      %v3000 = vmul.f32 %v2968, 0.0002
      %v3001 = vmul.f32 %v2969, 0.0002
      %v3002 = vmul.f32 %v2970, 0.0002
      %v3003 = vmul.f32 %v2971, 0.0002
      %v3004 = vmul.f32 %v2972, 0.0002
      %v3005 = vmul.f32 %v2973, 0.0002
      %v3006 = vmul.f32 %v2974, 0.0002
      %v3007 = vmul.f32 %v2975, 0.0002
      %v3008 = vmul.f32 %v2976, 0.0002
      %v3009 = vmul.f32 %v2977, 0.0002
      %v3010 = vmul.f32 %v2978, 0.0002
      %v3011 = vadd.f32 %v2979, 1.0
      %v3012 = vadd.f32 %v2980, 1.0
      %v3013 = vadd.f32 %v2981, 1.0
      %v3014 = vadd.f32 %v2982, 1.0
      %v3015 = vadd.f32 %v2983, 1.0
      %v3016 = vadd.f32 %v2984, 1.0
      %v3017 = vadd.f32 %v2985, 1.0
      %v3018 = vadd.f32 %v2986, 1.0
      %v3019 = vadd.f32 %v2987, 1.0
      %v3020 = vadd.f32 %v2988, 1.0
      %v3021 = vadd.f32 %v2989, 1.0
      %v3022 = vadd.f32 %v2990, 1.0
      %v3023 = vadd.f32 %v2991, 1.0
      %v3024 = vadd.f32 %v2992, 1.0
      %v3025 = vadd.f32 %v2993, 1.0
      %v3026 = vadd.f32 %v2994, 1.0
      %v3027 = vadd.f32 %v2995, 1.0
      %v3028 = vadd.f32 %v2996, 1.0
      %v3029 = vadd.f32 %v2997, 1.0
      %v3030 = vadd.f32 %v2998, 1.0
      %v3031 = vadd.f32 %v2999, 1.0
      %v3032 = vadd.f32 %v3000, 1.0
      %v3033 = vadd.f32 %v3001, 1.0
      %v3034 = vadd.f32 %v3002, 1.0
      %v3035 = vadd.f32 %v3003, 1.0
      %v3036 = vadd.f32 %v3004, 1.0
      %v3037 = vadd.f32 %v3005, 1.0
      %v3038 = vadd.f32 %v3006, 1.0
      %v3039 = vadd.f32 %v3007, 1.0
      %v3040 = vadd.f32 %v3008, 1.0
      %v3041 = vadd.f32 %v3009, 1.0
      %v3042 = vadd.f32 %v3010, 1.0
      %v3043 = vrsqrt.pop %v3011
      %v3044 = vrsqrt.pop %v3012
      %v3045 = vrsqrt.pop %v3013
      %v3046 = vrsqrt.pop %v3014
      %v3047 = vrsqrt.pop %v3015
      %v3048 = vrsqrt.pop %v3016
      %v3049 = vrsqrt.pop %v3017
      %v3050 = vrsqrt.pop %v3018
      %v3051 = vrsqrt.pop %v3019
      %v3052 = vrsqrt.pop %v3020
      %v3053 = vrsqrt.pop %v3021
      %v3054 = vrsqrt.pop %v3022
      %v3055 = vrsqrt.pop %v3023
      %v3056 = vrsqrt.pop %v3024
      %v3057 = vrsqrt.pop %v3025
      %v3058 = vrsqrt.pop %v3026
      %v3059 = vrsqrt.pop %v3027
      %v3060 = vrsqrt.pop %v3028
      %v3061 = vrsqrt.pop %v3029
      %v3062 = vrsqrt.pop %v3030
      %v3063 = vrsqrt.pop %v3031
      %v3064 = vrsqrt.pop %v3032
      %v3065 = vrsqrt.pop %v3033
      %v3066 = vrsqrt.pop %v3034
      %v3067 = vrsqrt.pop %v3035
      %v3068 = vrsqrt.pop %v3036
      %v3069 = vrsqrt.pop %v3037
      %v3070 = vrsqrt.pop %v3038
      %v3071 = vrsqrt.pop %v3039
      %v3072 = vrsqrt.pop %v3040
      %v3073 = vrsqrt.pop %v3041
      %v3074 = vrsqrt.pop %v3042
      %v3075 = vmul.f32 %v2531, %v3043
      %v3076 = vmul.f32 %v2532, %v3044
      %v3077 = vmul.f32 %v2533, %v3045
      %v3078 = vmul.f32 %v2534, %v3046
      %v3079 = vmul.f32 %v2535, %v3047
      %v3080 = vmul.f32 %v2536, %v3048
      %v3081 = vmul.f32 %v2537, %v3049
      %v3082 = vmul.f32 %v2538, %v3050
      %v3083 = vmul.f32 %v2539, %v3051
      %v3084 = vmul.f32 %v2540, %v3052
      %v3085 = vmul.f32 %v2541, %v3053
      %v3086 = vmul.f32 %v2542, %v3054
      %v3087 = vmul.f32 %v2543, %v3055
      %v3088 = vmul.f32 %v2544, %v3056
      %v3089 = vmul.f32 %v2545, %v3057
      %v3090 = vmul.f32 %v2546, %v3058
      %v3091 = vmul.f32 %v2547, %v3059
      %v3092 = vmul.f32 %v2548, %v3060
      %v3093 = vmul.f32 %v2549, %v3061
      %v3094 = vmul.f32 %v2550, %v3062
      %v3095 = vmul.f32 %v2551, %v3063
      %v3096 = vmul.f32 %v2552, %v3064
      %v3097 = vmul.f32 %v2553, %v3065
      %v3098 = vmul.f32 %v2554, %v3066
      %v3099 = vmul.f32 %v2555, %v3067
      %v3100 = vmul.f32 %v2556, %v3068
      %v3101 = vmul.f32 %v2557, %v3069
      %v3102 = vmul.f32 %v2558, %v3070
      %v3103 = vmul.f32 %v2559, %v3071
      %v3104 = vmul.f32 %v2560, %v3072
      %v3105 = vmul.f32 %v2561, %v3073
      %v3106 = vmul.f32 %v2562, %v3074
      %v3107 = vpack.c.bf16 %v3076, %v3075
      %v3108 = vpack.c.bf16 %v3078, %v3077
      %v3109 = vpack.c.bf16 %v3080, %v3079
      %v3110 = vpack.c.bf16 %v3082, %v3081
      %v3111 = vpack.c.bf16 %v3084, %v3083
      %v3112 = vpack.c.bf16 %v3086, %v3085
      %v3113 = vpack.c.bf16 %v3088, %v3087
      %v3114 = vpack.c.bf16 %v3090, %v3089
      %v3115 = vpack.c.bf16 %v3092, %v3091
      %v3116 = vpack.c.bf16 %v3094, %v3093
      %v3117 = vpack.c.bf16 %v3096, %v3095
      %v3118 = vpack.c.bf16 %v3098, %v3097
      %v3119 = vpack.c.bf16 %v3100, %v3099
      %v3120 = vpack.c.bf16 %v3102, %v3101
      %v3121 = vpack.c.bf16 %v3104, %v3103
      %v3122 = vpack.c.bf16 %v3106, %v3105
      %v3139 = vunpack.c.l.b16 %v3107
      %v3140 = vunpack.c.h.b16 %v3107
      %v3141 = vunpack.c.l.b16 %v3108
      %v3142 = vunpack.c.h.b16 %v3108
      %v3143 = vunpack.c.l.b16 %v3109
      %v3144 = vunpack.c.h.b16 %v3109
      %v3145 = vunpack.c.l.b16 %v3110
      %v3146 = vunpack.c.h.b16 %v3110
      %v3147 = vunpack.c.l.b16 %v3111
      %v3148 = vunpack.c.h.b16 %v3111
      %v3149 = vunpack.c.l.b16 %v3112
      %v3150 = vunpack.c.h.b16 %v3112
      %v3151 = vunpack.c.l.b16 %v3113
      %v3152 = vunpack.c.h.b16 %v3113
      %v3153 = vunpack.c.l.b16 %v3114
      %v3154 = vunpack.c.h.b16 %v3114
      %v3155 = vunpack.c.l.b16 %v3115
      %v3156 = vunpack.c.h.b16 %v3115
      %v3157 = vunpack.c.l.b16 %v3116
      %v3158 = vunpack.c.h.b16 %v3116
      %v3159 = vunpack.c.l.b16 %v3117
      %v3160 = vunpack.c.h.b16 %v3117
      %v3161 = vunpack.c.l.b16 %v3118
      %v3162 = vunpack.c.h.b16 %v3118
      %v3163 = vunpack.c.l.b16 %v3119
      %v3164 = vunpack.c.h.b16 %v3119
      %v3165 = vunpack.c.l.b16 %v3120
      %v3166 = vunpack.c.h.b16 %v3120
      %v3167 = vunpack.c.l.b16 %v3121
      %v3168 = vunpack.c.h.b16 %v3121
      %v3169 = vunpack.c.l.b16 %v3122
      %v3170 = vunpack.c.h.b16 %v3122
      %v3171 = vpack.c.b16 %v3139, %v3139
      %v3172 = vpack.c.b16 %v3140, %v3140
      %v3173 = vpack.c.b16 %v3141, %v3141
      %v3174 = vpack.c.b16 %v3142, %v3142
      %v3175 = vpack.c.b16 %v3143, %v3143
      %v3176 = vpack.c.b16 %v3144, %v3144
      %v3177 = vpack.c.b16 %v3145, %v3145
      %v3178 = vpack.c.b16 %v3146, %v3146
      %v3179 = vpack.c.b16 %v3147, %v3147
      %v3180 = vpack.c.b16 %v3148, %v3148
      %v3181 = vpack.c.b16 %v3149, %v3149
      %v3182 = vpack.c.b16 %v3150, %v3150
      %v3183 = vpack.c.b16 %v3151, %v3151
      %v3184 = vpack.c.b16 %v3152, %v3152
      %v3185 = vpack.c.b16 %v3153, %v3153
      %v3186 = vpack.c.b16 %v3154, %v3154
      %v3187 = vpack.c.b16 %v3155, %v3155
      %v3188 = vpack.c.b16 %v3156, %v3156
      %v3189 = vpack.c.b16 %v3157, %v3157
      %v3190 = vpack.c.b16 %v3158, %v3158
      %v3191 = vpack.c.b16 %v3159, %v3159
      %v3192 = vpack.c.b16 %v3160, %v3160
      %v3193 = vpack.c.b16 %v3161, %v3161
      %v3194 = vpack.c.b16 %v3162, %v3162
      %v3195 = vpack.c.b16 %v3163, %v3163
      %v3196 = vpack.c.b16 %v3164, %v3164
      %v3197 = vpack.c.b16 %v3165, %v3165
      %v3198 = vpack.c.b16 %v3166, %v3166
      %v3199 = vpack.c.b16 %v3167, %v3167
      %v3200 = vpack.c.b16 %v3168, %v3168
      %v3201 = vpack.c.b16 %v3169, %v3169
      %v3202 = vpack.c.b16 %v3170, %v3170
      %3235 = vst [vmem:[%s330] sm:$0xf] %v3171
      %3236 = vst [vmem:[%s330 + $0x4] sm:$0xf] %v3172
      %3237 = vst [vmem:[%s330 + $0x8] sm:$0xf] %v3173
      %3238 = vst [vmem:[%s330 + $0xc] sm:$0xf] %v3174
      %3239 = vst [vmem:[%s330 + $0x10] sm:$0xf] %v3175
      %3240 = vst [vmem:[%s330 + $0x14] sm:$0xf] %v3176
      %3241 = vst [vmem:[%s330 + $0x18] sm:$0xf] %v3177
      %3242 = vst [vmem:[%s330 + $0x1c] sm:$0xf] %v3178
      %3243 = vst [vmem:[%s330 + $0x20] sm:$0xf] %v3179
      %3244 = vst [vmem:[%s330 + $0x24] sm:$0xf] %v3180
      %3245 = vst [vmem:[%s330 + $0x28] sm:$0xf] %v3181
      %3246 = vst [vmem:[%s330 + $0x2c] sm:$0xf] %v3182
      %3247 = vst [vmem:[%s330 + $0x30] sm:$0xf] %v3183
      %3248 = vst [vmem:[%s330 + $0x34] sm:$0xf] %v3184
      %3249 = vst [vmem:[%s330 + $0x38] sm:$0xf] %v3185
      %3250 = vst [vmem:[%s330 + $0x3c] sm:$0xf] %v3186
      %3251 = vst [vmem:[%s330 + $0x40] sm:$0xf] %v3187
      %3252 = vst [vmem:[%s330 + $0x44] sm:$0xf] %v3188
      %3253 = vst [vmem:[%s330 + $0x48] sm:$0xf] %v3189
      %3254 = vst [vmem:[%s330 + $0x4c] sm:$0xf] %v3190
      %3255 = vst [vmem:[%s330 + $0x50] sm:$0xf] %v3191
      %3256 = vst [vmem:[%s330 + $0x54] sm:$0xf] %v3192
      %3257 = vst [vmem:[%s330 + $0x58] sm:$0xf] %v3193
      %3258 = vst [vmem:[%s330 + $0x5c] sm:$0xf] %v3194
      %3259 = vst [vmem:[%s330 + $0x60] sm:$0xf] %v3195
      %3260 = vst [vmem:[%s330 + $0x64] sm:$0xf] %v3196
      %3261 = vst [vmem:[%s330 + $0x68] sm:$0xf] %v3197
      %3262 = vst [vmem:[%s330 + $0x6c] sm:$0xf] %v3198
      %3263 = vst [vmem:[%s330 + $0x70] sm:$0xf] %v3199
      %3264 = vst [vmem:[%s330 + $0x74] sm:$0xf] %v3200
      %3265 = vst [vmem:[%s330 + $0x78] sm:$0xf] %v3201
      %3266 = vst [vmem:[%s330 + $0x7c] sm:$0xf] %v3202
      %s3267 = smul.u32 32, %s18
      %p3268 = scmp.lt.s32.totalorder %s3267, 63
      %s3269 = scalar_select %p3268, %s3267, 63
      %s3270 = smul.addr %s3269, 4
      %s3271 = scalar_lea.vmem %s7, %s3270
      // Predicated region
      $region49: #{multi_encoder_forward.12} parent=47 // pred_check
        %p3272 = pneg %p198
      $region50: #{multi_encoder_forward.12} parent=47 // pred_check_branch
        %3274 = sbr.rel (%p3272) target = $region52
      $region51: #{multi_encoder_forward.12} parent=47 // pred_region
        %s3275 = smul.u32 32, %s18
      $region52: #{multi_encoder_forward.12} parent=47 // pred_fallthru
        _
    $region48: #{multi_encoder_forward.12} parent=5 // pred_fallthru
      _
    %p3276 = scmp.le.s32.totalorder 2, %s13
    // Predicated region
    $region53: #{multi_encoder_forward.12} parent=5 // pred_check
      %p3277 = pneg %p3276
    $region54: #{multi_encoder_forward.12} parent=5 // pred_check_branch
      %3279 = sbr.rel (%p3277) target = $region56
    $region55: #{multi_encoder_forward.12} parent=5 // pred_region
      %s3280 = ssub.s32 %s13, 2
      // Predicated region
      $region57: #{multi_encoder_forward.12} parent=55 // pred_check
        %p3281 = pneg %p204
      $region58: #{multi_encoder_forward.12} parent=55 // pred_check_branch
        %3283 = sbr.rel (%p3281) target = $region60
      $region59: #{multi_encoder_forward.12} parent=55 // pred_region
        %s3284 = smul.u32 32, %s19
        %p3285 = scmp.lt.s32.totalorder %s3284, 63
        %s3286 = scalar_select %p3285, %s3284, 63
        %s3287 = smul.addr %s3286, 4
        %s3288 = scalar_lea.vmem %s7, %s3287
      $region60: #{multi_encoder_forward.12} parent=55 // pred_fallthru
        _
    $region56: #{multi_encoder_forward.12} parent=5 // pred_fallthru
      _
  $region6: #{multi_encoder_forward.12} parent=0 // loop_footer
    %s17 = sadd.s32 1, %s13
  $region7: #{multi_encoder_forward.12} parent=0 // loop_footer_branch
    %12 = sbr.rel target = $region3
  $region8: #{multi_encoder_forward.12} parent=0 // loop_exit
    _

// kernel: multi_encoder_forward.14
$region0: #{multi_encoder_forward.14}
  #allocation0 [shape = 'u32[]', space=smem, size = 0x4, offset = 0x4, fixed_abs, tag = 'smem constant byte address 0x4 - core index']
  #allocation1 [shape = 'u32[144,128]{1,0:T(1,128)}', space=vmem, size = 0x12000, scoped, tag = 'internal scratch']
  %s0 = inlined_call_operand.vmem [shape: bf16[32,512], index: 0, kind: input, shape index: {}]
  %s1 = inlined_call_operand.vmem [shape: bf16[32,288], index: 1, kind: input, shape index: {}]
  %s2 = inlined_call_operand.vmem [shape: bf16[512,128], index: 2, kind: input, shape index: {}]
  %s3 = inlined_call_operand.vmem [shape: bf16[288,128], index: 3, kind: input, shape index: {}]
  %s4 = inlined_call_operand.vmem [shape: f32[1,128], index: 4, kind: input, shape index: {}]
  %s5 = inlined_call_operand.vmem [shape: bf16[32,128], index: 5, kind: output, shape index: {}]
  %s6 = sld [smem:[#allocation0]]
  $region30: #{multi_encoder_forward.14} parent=0
    _
  %s8 = ssub.s32 1, %s6
  %s9 = scalar_select 0, %s8, %s6
  // Predicated region
  $region2: #{multi_encoder_forward.14} parent=0 // pred_check
    _
  $region3: #{multi_encoder_forward.14} parent=0 // pred_check_branch
    %11 = sbr.rel (0) target = $region5
  $region4: #{multi_encoder_forward.14} parent=0 // pred_region
    _
  $region5: #{multi_encoder_forward.14} parent=0 // pred_fallthru
    _
  // Predicated region
  $region6: #{multi_encoder_forward.14} parent=0 // pred_check
    _
  $region7: #{multi_encoder_forward.14} parent=0 // pred_check_branch
    %13 = sbr.rel (0) target = $region9
  $region8: #{multi_encoder_forward.14} parent=0 // pred_region
    _
  $region9: #{multi_encoder_forward.14} parent=0 // pred_fallthru
    _
  // Predicated region
  $region10: #{multi_encoder_forward.14} parent=0 // pred_check
    _
  $region11: #{multi_encoder_forward.14} parent=0 // pred_check_branch
    %15 = sbr.rel (0) target = $region13
  $region12: #{multi_encoder_forward.14} parent=0 // pred_region
    _
  $region13: #{multi_encoder_forward.14} parent=0 // pred_fallthru
    _
  // Predicated region
  $region14: #{multi_encoder_forward.14} parent=0 // pred_check
    _
  $region15: #{multi_encoder_forward.14} parent=0 // pred_check_branch
    %17 = sbr.rel (0) target = $region17
  $region16: #{multi_encoder_forward.14} parent=0 // pred_region
    _
  $region17: #{multi_encoder_forward.14} parent=0 // pred_fallthru
    _
  // Predicated region
  $region18: #{multi_encoder_forward.14} parent=0 // pred_check
    _
  $region19: #{multi_encoder_forward.14} parent=0 // pred_check_branch
    %19 = sbr.rel (0) target = $region21
  $region20: #{multi_encoder_forward.14} parent=0 // pred_region
    _
  $region21: #{multi_encoder_forward.14} parent=0 // pred_fallthru
    _
  %v21 = vld [vmem:[%s0] sm:$0xff]
  %v22 = vld [vmem:[%s0 + $0x8] sm:$0xff]
  %v23 = vld [vmem:[%s0 + $0x10] sm:$0xff]
  %v24 = vld [vmem:[%s0 + $0x18] sm:$0xff]
  %v25 = vld [vmem:[%s0 + $0x20] sm:$0xff]
  %v26 = vld [vmem:[%s0 + $0x28] sm:$0xff]
  %v27 = vld [vmem:[%s0 + $0x30] sm:$0xff]
  %v28 = vld [vmem:[%s0 + $0x38] sm:$0xff]
  %v29 = vld [vmem:[%s2] sm:$0xf]
  %v30 = vld [vmem:[%s2 + $0x4] sm:$0xf]
  %v31 = vld [vmem:[%s2 + $0x8] sm:$0xf]
  %v32 = vld [vmem:[%s2 + $0xc] sm:$0xf]
  %v33 = vld [vmem:[%s2 + $0x10] sm:$0xf]
  %v34 = vld [vmem:[%s2 + $0x14] sm:$0xf]
  %v35 = vld [vmem:[%s2 + $0x18] sm:$0xf]
  %v36 = vld [vmem:[%s2 + $0x1c] sm:$0xf]
  %v37 = vld [vmem:[%s2 + $0x20] sm:$0xf]
  %v38 = vld [vmem:[%s2 + $0x24] sm:$0xf]
  %v39 = vld [vmem:[%s2 + $0x28] sm:$0xf]
  %v40 = vld [vmem:[%s2 + $0x2c] sm:$0xf]
  %v41 = vld [vmem:[%s2 + $0x30] sm:$0xf]
  %v42 = vld [vmem:[%s2 + $0x34] sm:$0xf]
  %v43 = vld [vmem:[%s2 + $0x38] sm:$0xf]
  %v44 = vld [vmem:[%s2 + $0x3c] sm:$0xf]
  %v45 = vld [vmem:[%s2 + $0x40] sm:$0xf]
  %v46 = vld [vmem:[%s2 + $0x44] sm:$0xf]
  %v47 = vld [vmem:[%s2 + $0x48] sm:$0xf]
  %v48 = vld [vmem:[%s2 + $0x4c] sm:$0xf]
  %v49 = vld [vmem:[%s2 + $0x50] sm:$0xf]
  %v50 = vld [vmem:[%s2 + $0x54] sm:$0xf]
  %v51 = vld [vmem:[%s2 + $0x58] sm:$0xf]
  %v52 = vld [vmem:[%s2 + $0x5c] sm:$0xf]
  %v53 = vld [vmem:[%s2 + $0x60] sm:$0xf]
  %v54 = vld [vmem:[%s2 + $0x64] sm:$0xf]
  %v55 = vld [vmem:[%s2 + $0x68] sm:$0xf]
  %v56 = vld [vmem:[%s2 + $0x6c] sm:$0xf]
  %v57 = vld [vmem:[%s2 + $0x70] sm:$0xf]
  %v58 = vld [vmem:[%s2 + $0x74] sm:$0xf]
  %v59 = vld [vmem:[%s2 + $0x78] sm:$0xf]
  %v60 = vld [vmem:[%s2 + $0x7c] sm:$0xf]
  %v61 = vld [vmem:[%s2 + $0x80] sm:$0xf]
  %v62 = vld [vmem:[%s2 + $0x84] sm:$0xf]
  %v63 = vld [vmem:[%s2 + $0x88] sm:$0xf]
  %v64 = vld [vmem:[%s2 + $0x8c] sm:$0xf]
  %v65 = vld [vmem:[%s2 + $0x90] sm:$0xf]
  %v66 = vld [vmem:[%s2 + $0x94] sm:$0xf]
  %v67 = vld [vmem:[%s2 + $0x98] sm:$0xf]
  %v68 = vld [vmem:[%s2 + $0x9c] sm:$0xf]
  %v69 = vld [vmem:[%s2 + $0xa0] sm:$0xf]
  %v70 = vld [vmem:[%s2 + $0xa4] sm:$0xf]
  %v71 = vld [vmem:[%s2 + $0xa8] sm:$0xf]
  %v72 = vld [vmem:[%s2 + $0xac] sm:$0xf]
  %v73 = vld [vmem:[%s2 + $0xb0] sm:$0xf]
  %v74 = vld [vmem:[%s2 + $0xb4] sm:$0xf]
  %v75 = vld [vmem:[%s2 + $0xb8] sm:$0xf]
  %v76 = vld [vmem:[%s2 + $0xbc] sm:$0xf]
  %v77 = vld [vmem:[%s2 + $0xc0] sm:$0xf]
  %v78 = vld [vmem:[%s2 + $0xc4] sm:$0xf]
  %v79 = vld [vmem:[%s2 + $0xc8] sm:$0xf]
  %v80 = vld [vmem:[%s2 + $0xcc] sm:$0xf]
  %v81 = vld [vmem:[%s2 + $0xd0] sm:$0xf]
  %v82 = vld [vmem:[%s2 + $0xd4] sm:$0xf]
  %v83 = vld [vmem:[%s2 + $0xd8] sm:$0xf]
  %v84 = vld [vmem:[%s2 + $0xdc] sm:$0xf]
  %v85 = vld [vmem:[%s2 + $0xe0] sm:$0xf]
  %v86 = vld [vmem:[%s2 + $0xe4] sm:$0xf]
  %v87 = vld [vmem:[%s2 + $0xe8] sm:$0xf]
  %v88 = vld [vmem:[%s2 + $0xec] sm:$0xf]
  %v89 = vld [vmem:[%s2 + $0xf0] sm:$0xf]
  %v90 = vld [vmem:[%s2 + $0xf4] sm:$0xf]
  %v91 = vld [vmem:[%s2 + $0xf8] sm:$0xf]
  %v92 = vld [vmem:[%s2 + $0xfc] sm:$0xf]
  %v93 = vld [vmem:[%s1] sm:$0xff]
  %v94 = vld [vmem:[%s1 + $0x8] sm:$0xf]
  %v95 = vld [vmem:[%s1 + $0xc] sm:$0xff]
  %v96 = vld [vmem:[%s1 + $0x14] sm:$0xf]
  %v97 = vld [vmem:[%s1 + $0x18] sm:$0xff]
  %v98 = vld [vmem:[%s1 + $0x20] sm:$0xf]
  %v99 = vld [vmem:[%s1 + $0x24] sm:$0xff]
  %v100 = vld [vmem:[%s1 + $0x2c] sm:$0xf]
  %v101 = vld [vmem:[%s3] sm:$0xf]
  %v102 = vld [vmem:[%s3 + $0x4] sm:$0xf]
  %v103 = vld [vmem:[%s3 + $0x8] sm:$0xf]
  %v104 = vld [vmem:[%s3 + $0xc] sm:$0xf]
  %v105 = vld [vmem:[%s3 + $0x10] sm:$0xf]
  %v106 = vld [vmem:[%s3 + $0x14] sm:$0xf]
  %v107 = vld [vmem:[%s3 + $0x18] sm:$0xf]
  %v108 = vld [vmem:[%s3 + $0x1c] sm:$0xf]
  %v109 = vld [vmem:[%s3 + $0x20] sm:$0xf]
  %v110 = vld [vmem:[%s3 + $0x24] sm:$0xf]
  %v111 = vld [vmem:[%s3 + $0x28] sm:$0xf]
  %v112 = vld [vmem:[%s3 + $0x2c] sm:$0xf]
  %v113 = vld [vmem:[%s3 + $0x30] sm:$0xf]
  %v114 = vld [vmem:[%s3 + $0x34] sm:$0xf]
  %v115 = vld [vmem:[%s3 + $0x38] sm:$0xf]
  %v116 = vld [vmem:[%s3 + $0x3c] sm:$0xf]
  %v117 = vld [vmem:[%s3 + $0x40] sm:$0xf]
  %v118 = vld [vmem:[%s3 + $0x44] sm:$0xf]
  %v119 = vld [vmem:[%s3 + $0x48] sm:$0xf]
  %v120 = vld [vmem:[%s3 + $0x4c] sm:$0xf]
  %v121 = vld [vmem:[%s3 + $0x50] sm:$0xf]
  %v122 = vld [vmem:[%s3 + $0x54] sm:$0xf]
  %v123 = vld [vmem:[%s3 + $0x58] sm:$0xf]
  %v124 = vld [vmem:[%s3 + $0x5c] sm:$0xf]
  %v125 = vld [vmem:[%s3 + $0x60] sm:$0xf]
  %v126 = vld [vmem:[%s3 + $0x64] sm:$0xf]
  %v127 = vld [vmem:[%s3 + $0x68] sm:$0xf]
  %v128 = vld [vmem:[%s3 + $0x6c] sm:$0xf]
  %v129 = vld [vmem:[%s3 + $0x70] sm:$0xf]
  %v130 = vld [vmem:[%s3 + $0x74] sm:$0xf]
  %v131 = vld [vmem:[%s3 + $0x78] sm:$0xf]
  %v132 = vld [vmem:[%s3 + $0x7c] sm:$0xf]
  %v133 = vld [vmem:[%s3 + $0x80] sm:$0xf]
  %v134 = vld [vmem:[%s3 + $0x84] sm:$0xf]
  %v135 = vld [vmem:[%s3 + $0x88] sm:$0xf]
  %v136 = vld [vmem:[%s3 + $0x8c] sm:$0xf]
  %v145 = vunpack.c.l.b16 %v93
  %v146 = vunpack.c.h.b16 %v93
  %v147 = vunpack.c.l.b16 %v94
  %v148 = vunpack.c.l.b16 %v95
  %v149 = vunpack.c.h.b16 %v95
  %v150 = vunpack.c.l.b16 %v96
  %v151 = vunpack.c.l.b16 %v97
  %v152 = vunpack.c.h.b16 %v97
  %v153 = vunpack.c.l.b16 %v98
  %v154 = vunpack.c.l.b16 %v99
  %v155 = vunpack.c.h.b16 %v99
  %v156 = vunpack.c.l.b16 %v100
  %v157 = vpack.c.b16 %v148, %v145
  %v158 = vpack.c.b16 %v149, %v146
  %v159 = vpack.c.b16 %v150, %v147
  %v160 = vpack.c.b16 %v154, %v151
  %v161 = vpack.c.b16 %v155, %v152
  %v162 = vpack.c.b16 %v156, %v153
  %v203 = vunpack.c.l.b16 %v101
  %v204 = vunpack.c.l.b16 %v102
  %v205 = vunpack.c.l.b16 %v103
  %v206 = vunpack.c.l.b16 %v104
  %v207 = vunpack.c.l.b16 %v105
  %v208 = vunpack.c.l.b16 %v106
  %v209 = vunpack.c.l.b16 %v107
  %v210 = vunpack.c.l.b16 %v108
  %v211 = vunpack.c.l.b16 %v109
  %v212 = vunpack.c.l.b16 %v110
  %v213 = vunpack.c.l.b16 %v111
  %v214 = vunpack.c.l.b16 %v112
  %v215 = vunpack.c.l.b16 %v113
  %v216 = vunpack.c.l.b16 %v114
  %v217 = vunpack.c.l.b16 %v115
  %v218 = vunpack.c.l.b16 %v116
  %v219 = vunpack.c.l.b16 %v117
  %v220 = vunpack.c.l.b16 %v118
  %v221 = vunpack.c.l.b16 %v119
  %v222 = vunpack.c.l.b16 %v120
  %v223 = vunpack.c.l.b16 %v121
  %v224 = vunpack.c.l.b16 %v122
  %v225 = vunpack.c.l.b16 %v123
  %v226 = vunpack.c.l.b16 %v124
  %v227 = vunpack.c.l.b16 %v125
  %v228 = vunpack.c.l.b16 %v126
  %v229 = vunpack.c.l.b16 %v127
  %v230 = vunpack.c.l.b16 %v128
  %v231 = vunpack.c.l.b16 %v129
  %v232 = vunpack.c.l.b16 %v130
  %v233 = vunpack.c.l.b16 %v131
  %v234 = vunpack.c.l.b16 %v132
  %v235 = vunpack.c.l.b16 %v133
  %v236 = vunpack.c.l.b16 %v134
  %v237 = vunpack.c.l.b16 %v135
  %v238 = vunpack.c.l.b16 %v136
  %v239 = vpack.c.b16 %v204, %v203
  %v240 = vpack.c.b16 %v206, %v205
  %v241 = vpack.c.b16 %v208, %v207
  %v242 = vpack.c.b16 %v210, %v209
  %v243 = vpack.c.b16 %v212, %v211
  %v244 = vpack.c.b16 %v214, %v213
  %v245 = vpack.c.b16 %v216, %v215
  %v246 = vpack.c.b16 %v218, %v217
  %v247 = vpack.c.b16 %v220, %v219
  %v248 = vpack.c.b16 %v222, %v221
  %v249 = vpack.c.b16 %v224, %v223
  %v250 = vpack.c.b16 %v226, %v225
  %v251 = vpack.c.b16 %v228, %v227
  %v252 = vpack.c.b16 %v230, %v229
  %v253 = vpack.c.b16 %v232, %v231
  %v254 = vpack.c.b16 %v234, %v233
  %v255 = vpack.c.b16 %v236, %v235
  %v256 = vpack.c.b16 %v238, %v237
  %vm275 = vcmask 261120
  %v277 = vsel %vm275, %v159, 0
  %v280 = vsel %vm275, %v162, 0
  %282 = vmatprep.subr.bf16.mxu0 0
  %283 = vmatpush1.bf16.msra.mxu0 %v239
  %284 = vmatprep.subr.bf16.mxu0 0
  %285 = vmatpush1.bf16.msra.mxu0 %v240
  %286 = vmatprep.subr.bf16.mxu0 0
  %287 = vmatpush1.bf16.msra.mxu0 %v241
  %288 = vmatprep.subr.bf16.mxu0 0
  %289 = vmatpush1.bf16.msra.mxu0 %v242
  %290 = vmatprep.subr.bf16.mxu0 0
  %291 = vmatpush1.bf16.msra.mxu0 %v243
  %292 = vmatprep.subr.bf16.mxu0 0
  %293 = vmatpush1.bf16.msra.mxu0 %v244
  %294 = vmatprep.subr.bf16.mxu0 0
  %295 = vmatpush1.bf16.msra.mxu0 %v245
  %296 = vmatprep.subr.bf16.mxu0 0
  %297 = vmatpush1.bf16.msra.mxu0 %v246
  %298 = vmatprep.subr.bf16.mxu0 0
  %299 = vmatpush1.bf16.msra.mxu0 %v247
  %300 = vmatprep.subr.bf16.mxu0 0
  %301 = vmatpush1.bf16.msra.mxu0 %v248
  %302 = vmatprep.subr.bf16.mxu0 0
  %303 = vmatpush1.bf16.msra.mxu0 %v249
  %304 = vmatprep.subr.bf16.mxu0 0
  %305 = vmatpush1.bf16.msra.mxu0 %v250
  %306 = vmatprep.subr.bf16.mxu0 0
  %307 = vmatpush1.bf16.msra.mxu0 %v251
  %308 = vmatprep.subr.bf16.mxu0 0
  %309 = vmatpush1.bf16.msra.mxu0 %v252
  %310 = vmatprep.subr.bf16.mxu0 0
  %311 = vmatpush1.bf16.msra.mxu0 %v253
  %312 = vmatprep.subr.bf16.mxu0 0
  %313 = vmatpush1.bf16.msra.mxu0 %v254
  %314 = vmatprep.mubr.bf16.mxu0 %v158
  %315 = vmatmul.mubr.bf16.gmra.mrb[0].mxu0 %v157
  %v316 = vpop.f32.mrb[0].mxu0
  %v317 = vadd.f32 0.0, %v316
  %v318 = vpop.f32.mrb[0].mxu0
  %v319 = vpop.f32.mrb[0].mxu0
  %v320 = vadd.f32 0.0, %v319
  %v321 = vpop.f32.mrb[0].mxu0
  %322 = vmatprep.mubr.bf16.mxu0 %v161
  %323 = vmatmul.mubr.bf16.gmra.mrb[0].mxu0 %v160
  %v324 = vpop.f32.mrb[0].mxu0
  %v325 = vadd.f32 0.0, %v324
  %v326 = vpop.f32.mrb[0].mxu0
  %v327 = vpop.f32.mrb[0].mxu0
  %v328 = vadd.f32 0.0, %v327
  %v329 = vpop.f32.mrb[0].mxu0
  %330 = vdwg.mxu0
  %331 = vmatprep.subr.bf16.mxu0 0
  %332 = vmatpush1.bf16.msra.mxu0 %v255
  %333 = vmatprep.subr.bf16.mxu0 0
  %334 = vmatpush1.bf16.msra.mxu0 %v256
  %335 = vmatprep.subr.bf16.mxu0 0
  %336 = vmatpush1.bf16.msra.mxu0 0
  %337 = vmatprep.subr.bf16.mxu0 0
  %338 = vmatpush1.bf16.msra.mxu0 0
  %339 = vmatprep.subr.bf16.mxu0 0
  %340 = vmatpush1.bf16.msra.mxu0 0
  %341 = vmatprep.subr.bf16.mxu0 0
  %342 = vmatpush1.bf16.msra.mxu0 0
  %343 = vmatprep.subr.bf16.mxu0 0
  %344 = vmatpush1.bf16.msra.mxu0 0
  %345 = vmatprep.subr.bf16.mxu0 0
  %346 = vmatpush1.bf16.msra.mxu0 0
  %347 = vmatprep.subr.bf16.mxu0 0
  %348 = vmatpush1.bf16.msra.mxu0 0
  %349 = vmatprep.subr.bf16.mxu0 0
  %350 = vmatpush1.bf16.msra.mxu0 0
  %351 = vmatprep.subr.bf16.mxu0 0
  %352 = vmatpush1.bf16.msra.mxu0 0
  %353 = vmatprep.subr.bf16.mxu0 0
  %354 = vmatpush1.bf16.msra.mxu0 0
  %355 = vmatprep.subr.bf16.mxu0 0
  %356 = vmatpush1.bf16.msra.mxu0 0
  %357 = vmatprep.subr.bf16.mxu0 0
  %358 = vmatpush1.bf16.msra.mxu0 0
  %359 = vmatprep.subr.bf16.mxu0 0
  %360 = vmatpush1.bf16.msra.mxu0 0
  %361 = vmatprep.subr.bf16.mxu0 0
  %362 = vmatpush1.bf16.msra.mxu0 0
  %363 = vmatprep.mubr.bf16.mxu0 0
  %364 = vmatmul.mubr.bf16.gmra.mrb[0].mxu0 %v277
  %v365 = vpop.f32.mrb[0].mxu0
  %v366 = vadd.f32 %v317, %v365
  %v367 = vpop.f32.mrb[0].mxu0
  %v368 = vpop.f32.mrb[0].mxu0
  %v369 = vadd.f32 %v320, %v368
  %v370 = vpop.f32.mrb[0].mxu0
  %371 = vmatprep.mubr.bf16.mxu0 0
  %372 = vmatmul.mubr.bf16.gmra.mrb[0].mxu0 %v280
  %v373 = vpop.f32.mrb[0].mxu0
  %v374 = vadd.f32 %v325, %v373
  %v375 = vpop.f32.mrb[0].mxu0
  %v376 = vpop.f32.mrb[0].mxu0
  %v377 = vadd.f32 %v328, %v376
  %v378 = vpop.f32.mrb[0].mxu0
  %379 = vdwg.mxu0
  %v388 = vunpack.c.l.b16 %v21
  %v389 = vunpack.c.h.b16 %v21
  %v390 = vunpack.c.l.b16 %v22
  %v391 = vunpack.c.h.b16 %v22
  %v392 = vunpack.c.l.b16 %v23
  %v393 = vunpack.c.h.b16 %v23
  %v394 = vunpack.c.l.b16 %v24
  %v395 = vunpack.c.h.b16 %v24
  %v396 = vunpack.c.l.b16 %v25
  %v397 = vunpack.c.h.b16 %v25
  %v398 = vunpack.c.l.b16 %v26
  %v399 = vunpack.c.h.b16 %v26
  %v400 = vunpack.c.l.b16 %v27
  %v401 = vunpack.c.h.b16 %v27
  %v402 = vunpack.c.l.b16 %v28
  %v403 = vunpack.c.h.b16 %v28
  %v404 = vpack.c.b16 %v392, %v388
  %v405 = vpack.c.b16 %v393, %v389
  %v406 = vpack.c.b16 %v394, %v390
  %v407 = vpack.c.b16 %v395, %v391
  %v408 = vpack.c.b16 %v400, %v396
  %v409 = vpack.c.b16 %v401, %v397
  %v410 = vpack.c.b16 %v402, %v398
  %v411 = vpack.c.b16 %v403, %v399
  %v484 = vunpack.c.l.b16 %v29
  %v485 = vunpack.c.l.b16 %v30
  %v486 = vunpack.c.l.b16 %v31
  %v487 = vunpack.c.l.b16 %v32
  %v488 = vunpack.c.l.b16 %v33
  %v489 = vunpack.c.l.b16 %v34
  %v490 = vunpack.c.l.b16 %v35
  %v491 = vunpack.c.l.b16 %v36
  %v492 = vunpack.c.l.b16 %v37
  %v493 = vunpack.c.l.b16 %v38
  %v494 = vunpack.c.l.b16 %v39
  %v495 = vunpack.c.l.b16 %v40
  %v496 = vunpack.c.l.b16 %v41
  %v497 = vunpack.c.l.b16 %v42
  %v498 = vunpack.c.l.b16 %v43
  %v499 = vunpack.c.l.b16 %v44
  %v500 = vunpack.c.l.b16 %v45
  %v501 = vunpack.c.l.b16 %v46
  %v502 = vunpack.c.l.b16 %v47
  %v503 = vunpack.c.l.b16 %v48
  %v504 = vunpack.c.l.b16 %v49
  %v505 = vunpack.c.l.b16 %v50
  %v506 = vunpack.c.l.b16 %v51
  %v507 = vunpack.c.l.b16 %v52
  %v508 = vunpack.c.l.b16 %v53
  %v509 = vunpack.c.l.b16 %v54
  %v510 = vunpack.c.l.b16 %v55
  %v511 = vunpack.c.l.b16 %v56
  %v512 = vunpack.c.l.b16 %v57
  %v513 = vunpack.c.l.b16 %v58
  %v514 = vunpack.c.l.b16 %v59
  %v515 = vunpack.c.l.b16 %v60
  %v516 = vunpack.c.l.b16 %v61
  %v517 = vunpack.c.l.b16 %v62
  %v518 = vunpack.c.l.b16 %v63
  %v519 = vunpack.c.l.b16 %v64
  %v520 = vunpack.c.l.b16 %v65
  %v521 = vunpack.c.l.b16 %v66
  %v522 = vunpack.c.l.b16 %v67
  %v523 = vunpack.c.l.b16 %v68
  %v524 = vunpack.c.l.b16 %v69
  %v525 = vunpack.c.l.b16 %v70
  %v526 = vunpack.c.l.b16 %v71
  %v527 = vunpack.c.l.b16 %v72
  %v528 = vunpack.c.l.b16 %v73
  %v529 = vunpack.c.l.b16 %v74
  %v530 = vunpack.c.l.b16 %v75
  %v531 = vunpack.c.l.b16 %v76
  %v532 = vunpack.c.l.b16 %v77
  %v533 = vunpack.c.l.b16 %v78
  %v534 = vunpack.c.l.b16 %v79
  %v535 = vunpack.c.l.b16 %v80
  %v536 = vunpack.c.l.b16 %v81
  %v537 = vunpack.c.l.b16 %v82
  %v538 = vunpack.c.l.b16 %v83
  %v539 = vunpack.c.l.b16 %v84
  %v540 = vunpack.c.l.b16 %v85
  %v541 = vunpack.c.l.b16 %v86
  %v542 = vunpack.c.l.b16 %v87
  %v543 = vunpack.c.l.b16 %v88
  %v544 = vunpack.c.l.b16 %v89
  %v545 = vunpack.c.l.b16 %v90
  %v546 = vunpack.c.l.b16 %v91
  %v547 = vunpack.c.l.b16 %v92
  %v548 = vpack.c.b16 %v485, %v484
  %v549 = vpack.c.b16 %v487, %v486
  %v550 = vpack.c.b16 %v489, %v488
  %v551 = vpack.c.b16 %v491, %v490
  %v552 = vpack.c.b16 %v493, %v492
  %v553 = vpack.c.b16 %v495, %v494
  %v554 = vpack.c.b16 %v497, %v496
  %v555 = vpack.c.b16 %v499, %v498
  %v556 = vpack.c.b16 %v501, %v500
  %v557 = vpack.c.b16 %v503, %v502
  %v558 = vpack.c.b16 %v505, %v504
  %v559 = vpack.c.b16 %v507, %v506
  %v560 = vpack.c.b16 %v509, %v508
  %v561 = vpack.c.b16 %v511, %v510
  %v562 = vpack.c.b16 %v513, %v512
  %v563 = vpack.c.b16 %v515, %v514
  %v564 = vpack.c.b16 %v517, %v516
  %v565 = vpack.c.b16 %v519, %v518
  %v566 = vpack.c.b16 %v521, %v520
  %v567 = vpack.c.b16 %v523, %v522
  %v568 = vpack.c.b16 %v525, %v524
  %v569 = vpack.c.b16 %v527, %v526
  %v570 = vpack.c.b16 %v529, %v528
  %v571 = vpack.c.b16 %v531, %v530
  %v572 = vpack.c.b16 %v533, %v532
  %v573 = vpack.c.b16 %v535, %v534
  %v574 = vpack.c.b16 %v537, %v536
  %v575 = vpack.c.b16 %v539, %v538
  %v576 = vpack.c.b16 %v541, %v540
  %v577 = vpack.c.b16 %v543, %v542
  %v578 = vpack.c.b16 %v545, %v544
  %v579 = vpack.c.b16 %v547, %v546
  %612 = vmatprep.subr.bf16.mxu0 0
  %613 = vmatpush1.bf16.msra.mxu0 %v548
  %614 = vmatprep.subr.bf16.mxu0 0
  %615 = vmatpush1.bf16.msra.mxu0 %v549
  %616 = vmatprep.subr.bf16.mxu0 0
  %617 = vmatpush1.bf16.msra.mxu0 %v550
  %618 = vmatprep.subr.bf16.mxu0 0
  %619 = vmatpush1.bf16.msra.mxu0 %v551
  %620 = vmatprep.subr.bf16.mxu0 0
  %621 = vmatpush1.bf16.msra.mxu0 %v552
  %622 = vmatprep.subr.bf16.mxu0 0
  %623 = vmatpush1.bf16.msra.mxu0 %v553
  %624 = vmatprep.subr.bf16.mxu0 0
  %625 = vmatpush1.bf16.msra.mxu0 %v554
  %626 = vmatprep.subr.bf16.mxu0 0
  %627 = vmatpush1.bf16.msra.mxu0 %v555
  %628 = vmatprep.subr.bf16.mxu0 0
  %629 = vmatpush1.bf16.msra.mxu0 %v556
  %630 = vmatprep.subr.bf16.mxu0 0
  %631 = vmatpush1.bf16.msra.mxu0 %v557
  %632 = vmatprep.subr.bf16.mxu0 0
  %633 = vmatpush1.bf16.msra.mxu0 %v558
  %634 = vmatprep.subr.bf16.mxu0 0
  %635 = vmatpush1.bf16.msra.mxu0 %v559
  %636 = vmatprep.subr.bf16.mxu0 0
  %637 = vmatpush1.bf16.msra.mxu0 %v560
  %638 = vmatprep.subr.bf16.mxu0 0
  %639 = vmatpush1.bf16.msra.mxu0 %v561
  %640 = vmatprep.subr.bf16.mxu0 0
  %641 = vmatpush1.bf16.msra.mxu0 %v562
  %642 = vmatprep.subr.bf16.mxu0 0
  %643 = vmatpush1.bf16.msra.mxu0 %v563
  %644 = vmatprep.mubr.bf16.mxu0 %v405
  %645 = vmatmul.mubr.bf16.gmra.mrb[0].mxu0 %v404
  %v646 = vpop.f32.mrb[0].mxu0
  %v647 = vadd.f32 %v366, %v646
  %v648 = vpop.f32.mrb[0].mxu0
  %v649 = vpop.f32.mrb[0].mxu0
  %v650 = vadd.f32 %v369, %v649
  %v651 = vpop.f32.mrb[0].mxu0
  %652 = vmatprep.mubr.bf16.mxu0 %v409
  %653 = vmatmul.mubr.bf16.gmra.mrb[0].mxu0 %v408
  %v654 = vpop.f32.mrb[0].mxu0
  %v655 = vadd.f32 %v374, %v654
  %v656 = vpop.f32.mrb[0].mxu0
  %v657 = vpop.f32.mrb[0].mxu0
  %v658 = vadd.f32 %v377, %v657
  %v659 = vpop.f32.mrb[0].mxu0
  %660 = vdwg.mxu0
  %661 = vmatprep.subr.bf16.mxu0 0
  %662 = vmatpush1.bf16.msra.mxu0 %v564
  %663 = vmatprep.subr.bf16.mxu0 0
  %664 = vmatpush1.bf16.msra.mxu0 %v565
  %665 = vmatprep.subr.bf16.mxu0 0
  %666 = vmatpush1.bf16.msra.mxu0 %v566
  %667 = vmatprep.subr.bf16.mxu0 0
  %668 = vmatpush1.bf16.msra.mxu0 %v567
  %669 = vmatprep.subr.bf16.mxu0 0
  %670 = vmatpush1.bf16.msra.mxu0 %v568
  %671 = vmatprep.subr.bf16.mxu0 0
  %672 = vmatpush1.bf16.msra.mxu0 %v569
  %673 = vmatprep.subr.bf16.mxu0 0
  %674 = vmatpush1.bf16.msra.mxu0 %v570
  %675 = vmatprep.subr.bf16.mxu0 0
  %676 = vmatpush1.bf16.msra.mxu0 %v571
  %677 = vmatprep.subr.bf16.mxu0 0
  %678 = vmatpush1.bf16.msra.mxu0 %v572
  %679 = vmatprep.subr.bf16.mxu0 0
  %680 = vmatpush1.bf16.msra.mxu0 %v573
  %681 = vmatprep.subr.bf16.mxu0 0
  %682 = vmatpush1.bf16.msra.mxu0 %v574
  %683 = vmatprep.subr.bf16.mxu0 0
  %684 = vmatpush1.bf16.msra.mxu0 %v575
  %685 = vmatprep.subr.bf16.mxu0 0
  %686 = vmatpush1.bf16.msra.mxu0 %v576
  %687 = vmatprep.subr.bf16.mxu0 0
  %688 = vmatpush1.bf16.msra.mxu0 %v577
  %689 = vmatprep.subr.bf16.mxu0 0
  %690 = vmatpush1.bf16.msra.mxu0 %v578
  %691 = vmatprep.subr.bf16.mxu0 0
  %692 = vmatpush1.bf16.msra.mxu0 %v579
  %693 = vmatprep.mubr.bf16.mxu0 %v407
  %694 = vmatmul.mubr.bf16.gmra.mrb[0].mxu0 %v406
  %v695 = vpop.f32.mrb[0].mxu0
  %v696 = vadd.f32 %v647, %v695
  %v697 = vpop.f32.mrb[0].mxu0
  %v698 = vpop.f32.mrb[0].mxu0
  %v699 = vadd.f32 %v650, %v698
  %v700 = vpop.f32.mrb[0].mxu0
  %701 = vmatprep.mubr.bf16.mxu0 %v411
  %702 = vmatmul.mubr.bf16.gmra.mrb[0].mxu0 %v410
  %v703 = vpop.f32.mrb[0].mxu0
  %v704 = vadd.f32 %v655, %v703
  %v705 = vpop.f32.mrb[0].mxu0
  %v706 = vpop.f32.mrb[0].mxu0
  %v707 = vadd.f32 %v658, %v706
  %v708 = vpop.f32.mrb[0].mxu0
  %709 = vdwg.mxu0
  %v710 = vld [vmem:[%s4] sm:$0x1]
  %v712 = vlaneseq
  %v713 = vshrl.u32 %v712, 7
  %v714 = vsub.s32 0, %v713
  %v715 = vrot.slane %v710, %v714
  %v717 = vadd.f32 %v696, %v715
  %v718 = vadd.f32 %v699, %v715
  %v719 = vadd.f32 %v704, %v715
  %v720 = vadd.f32 %v707, %v715
  %v721 = vmax.f32 %v717, 0.0
  %v722 = vmax.f32 %v718, 0.0
  %v723 = vmax.f32 %v719, 0.0
  %v724 = vmax.f32 %v720, 0.0
  %v725 = vmul.f32 %v721, %v721
  %v726 = vmul.f32 %v722, %v722
  %v727 = vmul.f32 %v723, %v723
  %v728 = vmul.f32 %v724, %v724
  %729 = vrot.lane.b32.xlu0 %v725, 1
  %v730 = vpop.permute.xlu0 %729
  %731 = vrot.lane.b32.xlu0 %v726, 1
  %v732 = vpop.permute.xlu0 %731
  %733 = vrot.lane.b32.xlu0 %v727, 1
  %v734 = vpop.permute.xlu0 %733
  %735 = vrot.lane.b32.xlu0 %v728, 1
  %v736 = vpop.permute.xlu0 %735
  %v737 = vadd.f32 %v725, %v730
  %v738 = vadd.f32 %v726, %v732
  %v739 = vadd.f32 %v727, %v734
  %v740 = vadd.f32 %v728, %v736
  %741 = vrot.lane.b32.xlu0 %v725, 2
  %v742 = vpop.permute.xlu0 %741
  %743 = vrot.lane.b32.xlu0 %v726, 2
  %v744 = vpop.permute.xlu0 %743
  %745 = vrot.lane.b32.xlu0 %v727, 2
  %v746 = vpop.permute.xlu0 %745
  %747 = vrot.lane.b32.xlu0 %v728, 2
  %v748 = vpop.permute.xlu0 %747
  %v749 = vadd.f32 %v737, %v742
  %v750 = vadd.f32 %v738, %v744
  %v751 = vadd.f32 %v739, %v746
  %v752 = vadd.f32 %v740, %v748
  %753 = vrot.lane.b32.xlu0 %v725, 127
  %v754 = vpop.permute.xlu0 %753
  %755 = vrot.lane.b32.xlu0 %v726, 127
  %v756 = vpop.permute.xlu0 %755
  %757 = vrot.lane.b32.xlu0 %v727, 127
  %v758 = vpop.permute.xlu0 %757
  %759 = vrot.lane.b32.xlu0 %v728, 127
  %v760 = vpop.permute.xlu0 %759
  %v761 = vadd.f32 %v749, %v754
  %v762 = vadd.f32 %v750, %v756
  %v763 = vadd.f32 %v751, %v758
  %v764 = vadd.f32 %v752, %v760
  %765 = vrot.lane.b32.xlu0 %v725, 126
  %v766 = vpop.permute.xlu0 %765
  %767 = vrot.lane.b32.xlu0 %v726, 126
  %v768 = vpop.permute.xlu0 %767
  %769 = vrot.lane.b32.xlu0 %v727, 126
  %v770 = vpop.permute.xlu0 %769
  %771 = vrot.lane.b32.xlu0 %v728, 126
  %v772 = vpop.permute.xlu0 %771
  %v773 = vadd.f32 %v761, %v766
  %v774 = vadd.f32 %v762, %v768
  %v775 = vadd.f32 %v763, %v770
  %v776 = vadd.f32 %v764, %v772
  %v777 = vmul.f32 %v773, 0.0002
  %v778 = vmul.f32 %v774, 0.0002
  %v779 = vmul.f32 %v775, 0.0002
  %v780 = vmul.f32 %v776, 0.0002
  %v781 = vadd.f32 %v777, 1.0
  %v782 = vadd.f32 %v778, 1.0
  %v783 = vadd.f32 %v779, 1.0
  %v784 = vadd.f32 %v780, 1.0
  %v785 = vrsqrt.pop %v781
  %v786 = vrsqrt.pop %v782
  %v787 = vrsqrt.pop %v783
  %v788 = vrsqrt.pop %v784
  %v789 = vmul.f32 %v721, %v785
  %v790 = vmul.f32 %v722, %v786
  %v791 = vmul.f32 %v723, %v787
  %v792 = vmul.f32 %v724, %v788
  %v793 = vpack.c.bf16 %v790, %v789
  %v794 = vpack.c.bf16 %v792, %v791
  %v797 = vunpack.c.l.b16 %v793
  %v798 = vunpack.c.h.b16 %v793
  %v799 = vunpack.c.l.b16 %v794
  %v800 = vunpack.c.h.b16 %v794
  %v801 = vpack.c.b16 %v797, %v797
  %v802 = vpack.c.b16 %v798, %v798
  %v803 = vpack.c.b16 %v799, %v799
  %v804 = vpack.c.b16 %v800, %v800
  %809 = vst [vmem:[%s5] sm:$0xf] %v801
  %810 = vst [vmem:[%s5 + $0x4] sm:$0xf] %v802
  %811 = vst [vmem:[%s5 + $0x8] sm:$0xf] %v803
  %812 = vst [vmem:[%s5 + $0xc] sm:$0xf] %v804
  // Predicated region
  $region22: #{multi_encoder_forward.14} parent=0 // pred_check
    _
  $region23: #{multi_encoder_forward.14} parent=0 // pred_check_branch
    %814 = sbr.rel (0) target = $region25
  $region24: #{multi_encoder_forward.14} parent=0 // pred_region
    _
  $region25: #{multi_encoder_forward.14} parent=0 // pred_fallthru
    _
  // Predicated region
  $region26: #{multi_encoder_forward.14} parent=0 // pred_check
    _
  $region27: #{multi_encoder_forward.14} parent=0 // pred_check_branch
    %816 = sbr.rel (0) target = $region29
  $region28: #{multi_encoder_forward.14} parent=0 // pred_region
    _
  $region29: #{multi_encoder_forward.14} parent=0 // pred_fallthru
    _

// kernel: multi_encoder_forward.13
$region0: #{multi_encoder_forward.13}
  #allocation0 [shape = 'u32[]', space=smem, size = 0x4, offset = 0x4, fixed_abs, tag = 'smem constant byte address 0x4 - core index']
  #allocation1 [shape = 'u32[144,128]{1,0:T(1,128)}', space=vmem, size = 0x12000, scoped, tag = 'internal scratch']
  %s0 = inlined_call_operand.vmem [shape: bf16[128,512], index: 0, kind: input, shape index: {}]
  %s1 = inlined_call_operand.vmem [shape: bf16[128,288], index: 1, kind: input, shape index: {}]
  %s2 = inlined_call_operand.vmem [shape: bf16[128,512], index: 2, kind: input, shape index: {}]
  %s3 = inlined_call_operand.vmem [shape: bf16[512,128], index: 3, kind: input, shape index: {}]
  %s4 = inlined_call_operand.vmem [shape: bf16[288,128], index: 4, kind: input, shape index: {}]
  %s5 = inlined_call_operand.vmem [shape: bf16[512,128], index: 5, kind: input, shape index: {}]
  %s6 = inlined_call_operand.vmem [shape: f32[1,128], index: 6, kind: input, shape index: {}]
  %s7 = inlined_call_operand.vmem [shape: bf16[128,128], index: 7, kind: output, shape index: {}]
  %s8 = sld [smem:[#allocation0]]
  $region38: #{multi_encoder_forward.13} parent=0
    _
  %s10 = ssub.s32 1, %s8
  %s11 = scalar_select 0, %s10, %s8
  // Predicated region
  $region2: #{multi_encoder_forward.13} parent=0 // pred_check
    _
  $region3: #{multi_encoder_forward.13} parent=0 // pred_check_branch
    %13 = sbr.rel (0) target = $region5
  $region4: #{multi_encoder_forward.13} parent=0 // pred_region
    _
  $region5: #{multi_encoder_forward.13} parent=0 // pred_fallthru
    _
  // Predicated region
  $region6: #{multi_encoder_forward.13} parent=0 // pred_check
    _
  $region7: #{multi_encoder_forward.13} parent=0 // pred_check_branch
    %15 = sbr.rel (0) target = $region9
  $region8: #{multi_encoder_forward.13} parent=0 // pred_region
    _
  $region9: #{multi_encoder_forward.13} parent=0 // pred_fallthru
    _
  // Predicated region
  $region10: #{multi_encoder_forward.13} parent=0 // pred_check
    _
  $region11: #{multi_encoder_forward.13} parent=0 // pred_check_branch
    %17 = sbr.rel (0) target = $region13
  $region12: #{multi_encoder_forward.13} parent=0 // pred_region
    _
  $region13: #{multi_encoder_forward.13} parent=0 // pred_fallthru
    _
  // Predicated region
  $region14: #{multi_encoder_forward.13} parent=0 // pred_check
    _
  $region15: #{multi_encoder_forward.13} parent=0 // pred_check_branch
    %19 = sbr.rel (0) target = $region17
  $region16: #{multi_encoder_forward.13} parent=0 // pred_region
    _
  $region17: #{multi_encoder_forward.13} parent=0 // pred_fallthru
    _
  // Predicated region
  $region18: #{multi_encoder_forward.13} parent=0 // pred_check
    _
  $region19: #{multi_encoder_forward.13} parent=0 // pred_check_branch
    %21 = sbr.rel (0) target = $region21
  $region20: #{multi_encoder_forward.13} parent=0 // pred_region
    _
  $region21: #{multi_encoder_forward.13} parent=0 // pred_fallthru
    _
  // Predicated region
  $region22: #{multi_encoder_forward.13} parent=0 // pred_check
    _
  $region23: #{multi_encoder_forward.13} parent=0 // pred_check_branch
    %23 = sbr.rel (0) target = $region25
  $region24: #{multi_encoder_forward.13} parent=0 // pred_region
    _
  $region25: #{multi_encoder_forward.13} parent=0 // pred_fallthru
    _
  // Predicated region
  $region26: #{multi_encoder_forward.13} parent=0 // pred_check
    _
  $region27: #{multi_encoder_forward.13} parent=0 // pred_check_branch
    %25 = sbr.rel (0) target = $region29
  $region28: #{multi_encoder_forward.13} parent=0 // pred_region
    _
  $region29: #{multi_encoder_forward.13} parent=0 // pred_fallthru
    _
  %v27 = vld [vmem:[%s0] sm:$0xff]
  %v28 = vld [vmem:[%s0 + $0x8] sm:$0xff]
  %v29 = vld [vmem:[%s0 + $0x10] sm:$0xff]
  %v30 = vld [vmem:[%s0 + $0x18] sm:$0xff]
  %v31 = vld [vmem:[%s0 + $0x20] sm:$0xff]
  %v32 = vld [vmem:[%s0 + $0x28] sm:$0xff]
  %v33 = vld [vmem:[%s0 + $0x30] sm:$0xff]
  %v34 = vld [vmem:[%s0 + $0x38] sm:$0xff]
  %v35 = vld [vmem:[%s0 + $0x40] sm:$0xff]
  %v36 = vld [vmem:[%s0 + $0x48] sm:$0xff]
  %v37 = vld [vmem:[%s0 + $0x50] sm:$0xff]
  %v38 = vld [vmem:[%s0 + $0x58] sm:$0xff]
  %v39 = vld [vmem:[%s0 + $0x60] sm:$0xff]
  %v40 = vld [vmem:[%s0 + $0x68] sm:$0xff]
  %v41 = vld [vmem:[%s0 + $0x70] sm:$0xff]
  %v42 = vld [vmem:[%s0 + $0x78] sm:$0xff]
  %v43 = vld [vmem:[%s0 + $0x80] sm:$0xff]
  %v44 = vld [vmem:[%s0 + $0x88] sm:$0xff]
  %v45 = vld [vmem:[%s0 + $0x90] sm:$0xff]
  %v46 = vld [vmem:[%s0 + $0x98] sm:$0xff]
  %v47 = vld [vmem:[%s0 + $0xa0] sm:$0xff]
  %v48 = vld [vmem:[%s0 + $0xa8] sm:$0xff]
  %v49 = vld [vmem:[%s0 + $0xb0] sm:$0xff]
  %v50 = vld [vmem:[%s0 + $0xb8] sm:$0xff]
  %v51 = vld [vmem:[%s0 + $0xc0] sm:$0xff]
  %v52 = vld [vmem:[%s0 + $0xc8] sm:$0xff]
  %v53 = vld [vmem:[%s0 + $0xd0] sm:$0xff]
  %v54 = vld [vmem:[%s0 + $0xd8] sm:$0xff]
  %v55 = vld [vmem:[%s0 + $0xe0] sm:$0xff]
  %v56 = vld [vmem:[%s0 + $0xe8] sm:$0xff]
  %v57 = vld [vmem:[%s0 + $0xf0] sm:$0xff]
  %v58 = vld [vmem:[%s0 + $0xf8] sm:$0xff]
  %v59 = vld [vmem:[%s3] sm:$0xf]
  %v60 = vld [vmem:[%s3 + $0x4] sm:$0xf]
  %v61 = vld [vmem:[%s3 + $0x8] sm:$0xf]
  %v62 = vld [vmem:[%s3 + $0xc] sm:$0xf]
  %v63 = vld [vmem:[%s3 + $0x10] sm:$0xf]
  %v64 = vld [vmem:[%s3 + $0x14] sm:$0xf]
  %v65 = vld [vmem:[%s3 + $0x18] sm:$0xf]
  %v66 = vld [vmem:[%s3 + $0x1c] sm:$0xf]
  %v67 = vld [vmem:[%s3 + $0x20] sm:$0xf]
  %v68 = vld [vmem:[%s3 + $0x24] sm:$0xf]
  %v69 = vld [vmem:[%s3 + $0x28] sm:$0xf]
  %v70 = vld [vmem:[%s3 + $0x2c] sm:$0xf]
  %v71 = vld [vmem:[%s3 + $0x30] sm:$0xf]
  %v72 = vld [vmem:[%s3 + $0x34] sm:$0xf]
  %v73 = vld [vmem:[%s3 + $0x38] sm:$0xf]
  %v74 = vld [vmem:[%s3 + $0x3c] sm:$0xf]
  %v75 = vld [vmem:[%s3 + $0x40] sm:$0xf]
  %v76 = vld [vmem:[%s3 + $0x44] sm:$0xf]
  %v77 = vld [vmem:[%s3 + $0x48] sm:$0xf]
  %v78 = vld [vmem:[%s3 + $0x4c] sm:$0xf]
  %v79 = vld [vmem:[%s3 + $0x50] sm:$0xf]
  %v80 = vld [vmem:[%s3 + $0x54] sm:$0xf]
  %v81 = vld [vmem:[%s3 + $0x58] sm:$0xf]
  %v82 = vld [vmem:[%s3 + $0x5c] sm:$0xf]
  %v83 = vld [vmem:[%s3 + $0x60] sm:$0xf]
  %v84 = vld [vmem:[%s3 + $0x64] sm:$0xf]
  %v85 = vld [vmem:[%s3 + $0x68] sm:$0xf]
  %v86 = vld [vmem:[%s3 + $0x6c] sm:$0xf]
  %v87 = vld [vmem:[%s3 + $0x70] sm:$0xf]
  %v88 = vld [vmem:[%s3 + $0x74] sm:$0xf]
  %v89 = vld [vmem:[%s3 + $0x78] sm:$0xf]
  %v90 = vld [vmem:[%s3 + $0x7c] sm:$0xf]
  %v91 = vld [vmem:[%s3 + $0x80] sm:$0xf]
  %v92 = vld [vmem:[%s3 + $0x84] sm:$0xf]
  %v93 = vld [vmem:[%s3 + $0x88] sm:$0xf]
  %v94 = vld [vmem:[%s3 + $0x8c] sm:$0xf]
  %v95 = vld [vmem:[%s3 + $0x90] sm:$0xf]
  %v96 = vld [vmem:[%s3 + $0x94] sm:$0xf]
  %v97 = vld [vmem:[%s3 + $0x98] sm:$0xf]
  %v98 = vld [vmem:[%s3 + $0x9c] sm:$0xf]
  %v99 = vld [vmem:[%s3 + $0xa0] sm:$0xf]
  %v100 = vld [vmem:[%s3 + $0xa4] sm:$0xf]
  %v101 = vld [vmem:[%s3 + $0xa8] sm:$0xf]
  %v102 = vld [vmem:[%s3 + $0xac] sm:$0xf]
  %v103 = vld [vmem:[%s3 + $0xb0] sm:$0xf]
  %v104 = vld [vmem:[%s3 + $0xb4] sm:$0xf]
  %v105 = vld [vmem:[%s3 + $0xb8] sm:$0xf]
  %v106 = vld [vmem:[%s3 + $0xbc] sm:$0xf]
  %v107 = vld [vmem:[%s3 + $0xc0] sm:$0xf]
  %v108 = vld [vmem:[%s3 + $0xc4] sm:$0xf]
  %v109 = vld [vmem:[%s3 + $0xc8] sm:$0xf]
  %v110 = vld [vmem:[%s3 + $0xcc] sm:$0xf]
  %v111 = vld [vmem:[%s3 + $0xd0] sm:$0xf]
  %v112 = vld [vmem:[%s3 + $0xd4] sm:$0xf]
  %v113 = vld [vmem:[%s3 + $0xd8] sm:$0xf]
  %v114 = vld [vmem:[%s3 + $0xdc] sm:$0xf]
  %v115 = vld [vmem:[%s3 + $0xe0] sm:$0xf]
  %v116 = vld [vmem:[%s3 + $0xe4] sm:$0xf]
  %v117 = vld [vmem:[%s3 + $0xe8] sm:$0xf]
  %v118 = vld [vmem:[%s3 + $0xec] sm:$0xf]
  %v119 = vld [vmem:[%s3 + $0xf0] sm:$0xf]
  %v120 = vld [vmem:[%s3 + $0xf4] sm:$0xf]
  %v121 = vld [vmem:[%s3 + $0xf8] sm:$0xf]
  %v122 = vld [vmem:[%s3 + $0xfc] sm:$0xf]
  %v123 = vld [vmem:[%s1] sm:$0xff]
  %v124 = vld [vmem:[%s1 + $0x8] sm:$0xf]
  %v125 = vld [vmem:[%s1 + $0xc] sm:$0xff]
  %v126 = vld [vmem:[%s1 + $0x14] sm:$0xf]
  %v127 = vld [vmem:[%s1 + $0x18] sm:$0xff]
  %v128 = vld [vmem:[%s1 + $0x20] sm:$0xf]
  %v129 = vld [vmem:[%s1 + $0x24] sm:$0xff]
  %v130 = vld [vmem:[%s1 + $0x2c] sm:$0xf]
  %v131 = vld [vmem:[%s1 + $0x30] sm:$0xff]
  %v132 = vld [vmem:[%s1 + $0x38] sm:$0xf]
  %v133 = vld [vmem:[%s1 + $0x3c] sm:$0xff]
  %v134 = vld [vmem:[%s1 + $0x44] sm:$0xf]
  %v135 = vld [vmem:[%s1 + $0x48] sm:$0xff]
  %v136 = vld [vmem:[%s1 + $0x50] sm:$0xf]
  %v137 = vld [vmem:[%s1 + $0x54] sm:$0xff]
  %v138 = vld [vmem:[%s1 + $0x5c] sm:$0xf]
  %v139 = vld [vmem:[%s1 + $0x60] sm:$0xff]
  %v140 = vld [vmem:[%s1 + $0x68] sm:$0xf]
  %v141 = vld [vmem:[%s1 + $0x6c] sm:$0xff]
  %v142 = vld [vmem:[%s1 + $0x74] sm:$0xf]
  %v143 = vld [vmem:[%s1 + $0x78] sm:$0xff]
  %v144 = vld [vmem:[%s1 + $0x80] sm:$0xf]
  %v145 = vld [vmem:[%s1 + $0x84] sm:$0xff]
  %v146 = vld [vmem:[%s1 + $0x8c] sm:$0xf]
  %v147 = vld [vmem:[%s1 + $0x90] sm:$0xff]
  %v148 = vld [vmem:[%s1 + $0x98] sm:$0xf]
  %v149 = vld [vmem:[%s1 + $0x9c] sm:$0xff]
  %v150 = vld [vmem:[%s1 + $0xa4] sm:$0xf]
  %v151 = vld [vmem:[%s1 + $0xa8] sm:$0xff]
  %v152 = vld [vmem:[%s1 + $0xb0] sm:$0xf]
  %v153 = vld [vmem:[%s1 + $0xb4] sm:$0xff]
  %v154 = vld [vmem:[%s1 + $0xbc] sm:$0xf]
  %v155 = vld [vmem:[%s4] sm:$0xf]
  %v156 = vld [vmem:[%s4 + $0x4] sm:$0xf]
  %v157 = vld [vmem:[%s4 + $0x8] sm:$0xf]
  %v158 = vld [vmem:[%s4 + $0xc] sm:$0xf]
  %v159 = vld [vmem:[%s4 + $0x10] sm:$0xf]
  %v160 = vld [vmem:[%s4 + $0x14] sm:$0xf]
  %v161 = vld [vmem:[%s4 + $0x18] sm:$0xf]
  %v162 = vld [vmem:[%s4 + $0x1c] sm:$0xf]
  %v163 = vld [vmem:[%s4 + $0x20] sm:$0xf]
  %v164 = vld [vmem:[%s4 + $0x24] sm:$0xf]
  %v165 = vld [vmem:[%s4 + $0x28] sm:$0xf]
  %v166 = vld [vmem:[%s4 + $0x2c] sm:$0xf]
  %v167 = vld [vmem:[%s4 + $0x30] sm:$0xf]
  %v168 = vld [vmem:[%s4 + $0x34] sm:$0xf]
  %v169 = vld [vmem:[%s4 + $0x38] sm:$0xf]
  %v170 = vld [vmem:[%s4 + $0x3c] sm:$0xf]
  %v171 = vld [vmem:[%s4 + $0x40] sm:$0xf]
  %v172 = vld [vmem:[%s4 + $0x44] sm:$0xf]
  %v173 = vld [vmem:[%s4 + $0x48] sm:$0xf]
  %v174 = vld [vmem:[%s4 + $0x4c] sm:$0xf]
  %v175 = vld [vmem:[%s4 + $0x50] sm:$0xf]
  %v176 = vld [vmem:[%s4 + $0x54] sm:$0xf]
  %v177 = vld [vmem:[%s4 + $0x58] sm:$0xf]
  %v178 = vld [vmem:[%s4 + $0x5c] sm:$0xf]
  %v179 = vld [vmem:[%s4 + $0x60] sm:$0xf]
  %v180 = vld [vmem:[%s4 + $0x64] sm:$0xf]
  %v181 = vld [vmem:[%s4 + $0x68] sm:$0xf]
  %v182 = vld [vmem:[%s4 + $0x6c] sm:$0xf]
  %v183 = vld [vmem:[%s4 + $0x70] sm:$0xf]
  %v184 = vld [vmem:[%s4 + $0x74] sm:$0xf]
  %v185 = vld [vmem:[%s4 + $0x78] sm:$0xf]
  %v186 = vld [vmem:[%s4 + $0x7c] sm:$0xf]
  %v187 = vld [vmem:[%s4 + $0x80] sm:$0xf]
  %v188 = vld [vmem:[%s4 + $0x84] sm:$0xf]
  %v189 = vld [vmem:[%s4 + $0x88] sm:$0xf]
  %v190 = vld [vmem:[%s4 + $0x8c] sm:$0xf]
  %v223 = vunpack.c.l.b16 %v123
  %v224 = vunpack.c.h.b16 %v123
  %v225 = vunpack.c.l.b16 %v124
  %v226 = vunpack.c.l.b16 %v125
  %v227 = vunpack.c.h.b16 %v125
  %v228 = vunpack.c.l.b16 %v126
  %v229 = vunpack.c.l.b16 %v127
  %v230 = vunpack.c.h.b16 %v127
  %v231 = vunpack.c.l.b16 %v128
  %v232 = vunpack.c.l.b16 %v129
  %v233 = vunpack.c.h.b16 %v129
  %v234 = vunpack.c.l.b16 %v130
  %v235 = vunpack.c.l.b16 %v131
  %v236 = vunpack.c.h.b16 %v131
  %v237 = vunpack.c.l.b16 %v132
  %v238 = vunpack.c.l.b16 %v133
  %v239 = vunpack.c.h.b16 %v133
  %v240 = vunpack.c.l.b16 %v134
  %v241 = vunpack.c.l.b16 %v135
  %v242 = vunpack.c.h.b16 %v135
  %v243 = vunpack.c.l.b16 %v136
  %v244 = vunpack.c.l.b16 %v137
  %v245 = vunpack.c.h.b16 %v137
  %v246 = vunpack.c.l.b16 %v138
  %v247 = vunpack.c.l.b16 %v139
  %v248 = vunpack.c.h.b16 %v139
  %v249 = vunpack.c.l.b16 %v140
  %v250 = vunpack.c.l.b16 %v141
  %v251 = vunpack.c.h.b16 %v141
  %v252 = vunpack.c.l.b16 %v142
  %v253 = vunpack.c.l.b16 %v143
  %v254 = vunpack.c.h.b16 %v143
  %v255 = vunpack.c.l.b16 %v144
  %v256 = vunpack.c.l.b16 %v145
  %v257 = vunpack.c.h.b16 %v145
  %v258 = vunpack.c.l.b16 %v146
  %v259 = vunpack.c.l.b16 %v147
  %v260 = vunpack.c.h.b16 %v147
  %v261 = vunpack.c.l.b16 %v148
  %v262 = vunpack.c.l.b16 %v149
  %v263 = vunpack.c.h.b16 %v149
  %v264 = vunpack.c.l.b16 %v150
  %v265 = vunpack.c.l.b16 %v151
  %v266 = vunpack.c.h.b16 %v151
  %v267 = vunpack.c.l.b16 %v152
  %v268 = vunpack.c.l.b16 %v153
  %v269 = vunpack.c.h.b16 %v153
  %v270 = vunpack.c.l.b16 %v154
  %v271 = vpack.c.b16 %v226, %v223
  %v272 = vpack.c.b16 %v227, %v224
  %v273 = vpack.c.b16 %v228, %v225
  %v274 = vpack.c.b16 %v232, %v229
  %v275 = vpack.c.b16 %v233, %v230
  %v276 = vpack.c.b16 %v234, %v231
  %v277 = vpack.c.b16 %v238, %v235
  %v278 = vpack.c.b16 %v239, %v236
  %v279 = vpack.c.b16 %v240, %v237
  %v280 = vpack.c.b16 %v244, %v241
  %v281 = vpack.c.b16 %v245, %v242
  %v282 = vpack.c.b16 %v246, %v243
  %v283 = vpack.c.b16 %v250, %v247
  %v284 = vpack.c.b16 %v251, %v248
  %v285 = vpack.c.b16 %v252, %v249
  %v286 = vpack.c.b16 %v256, %v253
  %v287 = vpack.c.b16 %v257, %v254
  %v288 = vpack.c.b16 %v258, %v255
  %v289 = vpack.c.b16 %v262, %v259
  %v290 = vpack.c.b16 %v263, %v260
  %v291 = vpack.c.b16 %v264, %v261
  %v292 = vpack.c.b16 %v268, %v265
  %v293 = vpack.c.b16 %v269, %v266
  %v294 = vpack.c.b16 %v270, %v267
  %v347 = vunpack.c.l.b16 %v155
  %v348 = vunpack.c.l.b16 %v156
  %v349 = vunpack.c.l.b16 %v157
  %v350 = vunpack.c.l.b16 %v158
  %v351 = vunpack.c.l.b16 %v159
  %v352 = vunpack.c.l.b16 %v160
  %v353 = vunpack.c.l.b16 %v161
  %v354 = vunpack.c.l.b16 %v162
  %v355 = vunpack.c.l.b16 %v163
  %v356 = vunpack.c.l.b16 %v164
  %v357 = vunpack.c.l.b16 %v165
  %v358 = vunpack.c.l.b16 %v166
  %v359 = vunpack.c.l.b16 %v167
  %v360 = vunpack.c.l.b16 %v168
  %v361 = vunpack.c.l.b16 %v169
  %v362 = vunpack.c.l.b16 %v170
  %v363 = vunpack.c.l.b16 %v171
  %v364 = vunpack.c.l.b16 %v172
  %v365 = vunpack.c.l.b16 %v173
  %v366 = vunpack.c.l.b16 %v174
  %v367 = vunpack.c.l.b16 %v175
  %v368 = vunpack.c.l.b16 %v176
  %v369 = vunpack.c.l.b16 %v177
  %v370 = vunpack.c.l.b16 %v178
  %v371 = vunpack.c.l.b16 %v179
  %v372 = vunpack.c.l.b16 %v180
  %v373 = vunpack.c.l.b16 %v181
  %v374 = vunpack.c.l.b16 %v182
  %v375 = vunpack.c.l.b16 %v183
  %v376 = vunpack.c.l.b16 %v184
  %v377 = vunpack.c.l.b16 %v185
  %v378 = vunpack.c.l.b16 %v186
  %v379 = vunpack.c.l.b16 %v187
  %v380 = vunpack.c.l.b16 %v188
  %v381 = vunpack.c.l.b16 %v189
  %v382 = vunpack.c.l.b16 %v190
  %v383 = vpack.c.b16 %v348, %v347
  %v384 = vpack.c.b16 %v350, %v349
  %v385 = vpack.c.b16 %v352, %v351
  %v386 = vpack.c.b16 %v354, %v353
  %v387 = vpack.c.b16 %v356, %v355
  %v388 = vpack.c.b16 %v358, %v357
  %v389 = vpack.c.b16 %v360, %v359
  %v390 = vpack.c.b16 %v362, %v361
  %v391 = vpack.c.b16 %v364, %v363
  %v392 = vpack.c.b16 %v366, %v365
  %v393 = vpack.c.b16 %v368, %v367
  %v394 = vpack.c.b16 %v370, %v369
  %v395 = vpack.c.b16 %v372, %v371
  %v396 = vpack.c.b16 %v374, %v373
  %v397 = vpack.c.b16 %v376, %v375
  %v398 = vpack.c.b16 %v378, %v377
  %v399 = vpack.c.b16 %v380, %v379
  %v400 = vpack.c.b16 %v382, %v381
  %vm419 = vcmask 261120
  %v421 = vsel %vm419, %v273, 0
  %v424 = vsel %vm419, %v276, 0
  %v427 = vsel %vm419, %v279, 0
  %v430 = vsel %vm419, %v282, 0
  %v433 = vsel %vm419, %v285, 0
  %v436 = vsel %vm419, %v288, 0
  %v439 = vsel %vm419, %v291, 0
  %v442 = vsel %vm419, %v294, 0
  %444 = vmatprep.subr.bf16.mxu0 0
  %445 = vmatpush1.bf16.msra.mxu0 %v383
  %446 = vmatprep.subr.bf16.mxu0 0
  %447 = vmatpush1.bf16.msra.mxu0 %v384
  %448 = vmatprep.subr.bf16.mxu0 0
  %449 = vmatpush1.bf16.msra.mxu0 %v385
  %450 = vmatprep.subr.bf16.mxu0 0
  %451 = vmatpush1.bf16.msra.mxu0 %v386
  %452 = vmatprep.subr.bf16.mxu0 0
  %453 = vmatpush1.bf16.msra.mxu0 %v387
  %454 = vmatprep.subr.bf16.mxu0 0
  %455 = vmatpush1.bf16.msra.mxu0 %v388
  %456 = vmatprep.subr.bf16.mxu0 0
  %457 = vmatpush1.bf16.msra.mxu0 %v389
  %458 = vmatprep.subr.bf16.mxu0 0
  %459 = vmatpush1.bf16.msra.mxu0 %v390
  %460 = vmatprep.subr.bf16.mxu0 0
  %461 = vmatpush1.bf16.msra.mxu0 %v391
  %462 = vmatprep.subr.bf16.mxu0 0
  %463 = vmatpush1.bf16.msra.mxu0 %v392
  %464 = vmatprep.subr.bf16.mxu0 0
  %465 = vmatpush1.bf16.msra.mxu0 %v393
  %466 = vmatprep.subr.bf16.mxu0 0
  %467 = vmatpush1.bf16.msra.mxu0 %v394
  %468 = vmatprep.subr.bf16.mxu0 0
  %469 = vmatpush1.bf16.msra.mxu0 %v395
  %470 = vmatprep.subr.bf16.mxu0 0
  %471 = vmatpush1.bf16.msra.mxu0 %v396
  %472 = vmatprep.subr.bf16.mxu0 0
  %473 = vmatpush1.bf16.msra.mxu0 %v397
  %474 = vmatprep.subr.bf16.mxu0 0
  %475 = vmatpush1.bf16.msra.mxu0 %v398
  %476 = vmatprep.mubr.bf16.mxu0 %v272
  %477 = vmatmul.mubr.bf16.gmra.mrb[0].mxu0 %v271
  %v478 = vpop.f32.mrb[0].mxu0
  %v479 = vadd.f32 0.0, %v478
  %v480 = vpop.f32.mrb[0].mxu0
  %v481 = vpop.f32.mrb[0].mxu0
  %v482 = vadd.f32 0.0, %v481
  %v483 = vpop.f32.mrb[0].mxu0
  %484 = vmatprep.mubr.bf16.mxu0 %v275
  %485 = vmatmul.mubr.bf16.gmra.mrb[0].mxu0 %v274
  %v486 = vpop.f32.mrb[0].mxu0
  %v487 = vadd.f32 0.0, %v486
  %v488 = vpop.f32.mrb[0].mxu0
  %v489 = vpop.f32.mrb[0].mxu0
  %v490 = vadd.f32 0.0, %v489
  %v491 = vpop.f32.mrb[0].mxu0
  %492 = vmatprep.mubr.bf16.mxu0 %v278
  %493 = vmatmul.mubr.bf16.gmra.mrb[0].mxu0 %v277
  %v494 = vpop.f32.mrb[0].mxu0
  %v495 = vadd.f32 0.0, %v494
  %v496 = vpop.f32.mrb[0].mxu0
  %v497 = vpop.f32.mrb[0].mxu0
  %v498 = vadd.f32 0.0, %v497
  %v499 = vpop.f32.mrb[0].mxu0
  %500 = vmatprep.mubr.bf16.mxu0 %v281
  %501 = vmatmul.mubr.bf16.gmra.mrb[0].mxu0 %v280
  %v502 = vpop.f32.mrb[0].mxu0
  %v503 = vadd.f32 0.0, %v502
  %v504 = vpop.f32.mrb[0].mxu0
  %v505 = vpop.f32.mrb[0].mxu0
  %v506 = vadd.f32 0.0, %v505
  %v507 = vpop.f32.mrb[0].mxu0
  %508 = vmatprep.mubr.bf16.mxu0 %v284
  %509 = vmatmul.mubr.bf16.gmra.mrb[0].mxu0 %v283
  %v510 = vpop.f32.mrb[0].mxu0
  %v511 = vadd.f32 0.0, %v510
  %v512 = vpop.f32.mrb[0].mxu0
  %v513 = vpop.f32.mrb[0].mxu0
  %v514 = vadd.f32 0.0, %v513
  %v515 = vpop.f32.mrb[0].mxu0
  %516 = vmatprep.mubr.bf16.mxu0 %v287
  %517 = vmatmul.mubr.bf16.gmra.mrb[0].mxu0 %v286
  %v518 = vpop.f32.mrb[0].mxu0
  %v519 = vadd.f32 0.0, %v518
  %v520 = vpop.f32.mrb[0].mxu0
  %v521 = vpop.f32.mrb[0].mxu0
  %v522 = vadd.f32 0.0, %v521
  %v523 = vpop.f32.mrb[0].mxu0
  %524 = vmatprep.mubr.bf16.mxu0 %v290
  %525 = vmatmul.mubr.bf16.gmra.mrb[0].mxu0 %v289
  %v526 = vpop.f32.mrb[0].mxu0
  %v527 = vadd.f32 0.0, %v526
  %v528 = vpop.f32.mrb[0].mxu0
  %v529 = vpop.f32.mrb[0].mxu0
  %v530 = vadd.f32 0.0, %v529
  %v531 = vpop.f32.mrb[0].mxu0
  %532 = vmatprep.mubr.bf16.mxu0 %v293
  %533 = vmatmul.mubr.bf16.gmra.mrb[0].mxu0 %v292
  %v534 = vpop.f32.mrb[0].mxu0
  %v535 = vadd.f32 0.0, %v534
  %v536 = vpop.f32.mrb[0].mxu0
  %v537 = vpop.f32.mrb[0].mxu0
  %v538 = vadd.f32 0.0, %v537
  %v539 = vpop.f32.mrb[0].mxu0
  %540 = vdwg.mxu0
  %541 = vmatprep.subr.bf16.mxu0 0
  %542 = vmatpush1.bf16.msra.mxu0 %v399
  %543 = vmatprep.subr.bf16.mxu0 0
  %544 = vmatpush1.bf16.msra.mxu0 %v400
  %545 = vmatprep.subr.bf16.mxu0 0
  %546 = vmatpush1.bf16.msra.mxu0 0
  %547 = vmatprep.subr.bf16.mxu0 0
  %548 = vmatpush1.bf16.msra.mxu0 0
  %549 = vmatprep.subr.bf16.mxu0 0
  %550 = vmatpush1.bf16.msra.mxu0 0
  %551 = vmatprep.subr.bf16.mxu0 0
  %552 = vmatpush1.bf16.msra.mxu0 0
  %553 = vmatprep.subr.bf16.mxu0 0
  %554 = vmatpush1.bf16.msra.mxu0 0
  %555 = vmatprep.subr.bf16.mxu0 0
  %556 = vmatpush1.bf16.msra.mxu0 0
  %557 = vmatprep.subr.bf16.mxu0 0
  %558 = vmatpush1.bf16.msra.mxu0 0
  %559 = vmatprep.subr.bf16.mxu0 0
  %560 = vmatpush1.bf16.msra.mxu0 0
  %561 = vmatprep.subr.bf16.mxu0 0
  %562 = vmatpush1.bf16.msra.mxu0 0
  %563 = vmatprep.subr.bf16.mxu0 0
  %564 = vmatpush1.bf16.msra.mxu0 0
  %565 = vmatprep.subr.bf16.mxu0 0
  %566 = vmatpush1.bf16.msra.mxu0 0
  %567 = vmatprep.subr.bf16.mxu0 0
  %568 = vmatpush1.bf16.msra.mxu0 0
  %569 = vmatprep.subr.bf16.mxu0 0
  %570 = vmatpush1.bf16.msra.mxu0 0
  %571 = vmatprep.subr.bf16.mxu0 0
  %572 = vmatpush1.bf16.msra.mxu0 0
  %573 = vmatprep.mubr.bf16.mxu0 0
  %574 = vmatmul.mubr.bf16.gmra.mrb[0].mxu0 %v421
  %v575 = vpop.f32.mrb[0].mxu0
  %v576 = vadd.f32 %v479, %v575
  %v577 = vpop.f32.mrb[0].mxu0
  %v578 = vpop.f32.mrb[0].mxu0
  %v579 = vadd.f32 %v482, %v578
  %v580 = vpop.f32.mrb[0].mxu0
  %581 = vmatprep.mubr.bf16.mxu0 0
  %582 = vmatmul.mubr.bf16.gmra.mrb[0].mxu0 %v424
  %v583 = vpop.f32.mrb[0].mxu0
  %v584 = vadd.f32 %v487, %v583
  %v585 = vpop.f32.mrb[0].mxu0
  %v586 = vpop.f32.mrb[0].mxu0
  %v587 = vadd.f32 %v490, %v586
  %v588 = vpop.f32.mrb[0].mxu0
  %589 = vmatprep.mubr.bf16.mxu0 0
  %590 = vmatmul.mubr.bf16.gmra.mrb[0].mxu0 %v427
  %v591 = vpop.f32.mrb[0].mxu0
  %v592 = vadd.f32 %v495, %v591
  %v593 = vpop.f32.mrb[0].mxu0
  %v594 = vpop.f32.mrb[0].mxu0
  %v595 = vadd.f32 %v498, %v594
  %v596 = vpop.f32.mrb[0].mxu0
  %597 = vmatprep.mubr.bf16.mxu0 0
  %598 = vmatmul.mubr.bf16.gmra.mrb[0].mxu0 %v430
  %v599 = vpop.f32.mrb[0].mxu0
  %v600 = vadd.f32 %v503, %v599
  %v601 = vpop.f32.mrb[0].mxu0
  %v602 = vpop.f32.mrb[0].mxu0
  %v603 = vadd.f32 %v506, %v602
  %v604 = vpop.f32.mrb[0].mxu0
  %605 = vmatprep.mubr.bf16.mxu0 0
  %606 = vmatmul.mubr.bf16.gmra.mrb[0].mxu0 %v433
  %v607 = vpop.f32.mrb[0].mxu0
  %v608 = vadd.f32 %v511, %v607
  %v609 = vpop.f32.mrb[0].mxu0
  %v610 = vpop.f32.mrb[0].mxu0
  %v611 = vadd.f32 %v514, %v610
  %v612 = vpop.f32.mrb[0].mxu0
  %613 = vmatprep.mubr.bf16.mxu0 0
  %614 = vmatmul.mubr.bf16.gmra.mrb[0].mxu0 %v436
  %v615 = vpop.f32.mrb[0].mxu0
  %v616 = vadd.f32 %v519, %v615
  %v617 = vpop.f32.mrb[0].mxu0
  %v618 = vpop.f32.mrb[0].mxu0
  %v619 = vadd.f32 %v522, %v618
  %v620 = vpop.f32.mrb[0].mxu0
  %621 = vmatprep.mubr.bf16.mxu0 0
  %622 = vmatmul.mubr.bf16.gmra.mrb[0].mxu0 %v439
  %v623 = vpop.f32.mrb[0].mxu0
  %v624 = vadd.f32 %v527, %v623
  %v625 = vpop.f32.mrb[0].mxu0
  %v626 = vpop.f32.mrb[0].mxu0
  %v627 = vadd.f32 %v530, %v626
  %v628 = vpop.f32.mrb[0].mxu0
  %629 = vmatprep.mubr.bf16.mxu0 0
  %630 = vmatmul.mubr.bf16.gmra.mrb[0].mxu0 %v442
  %v631 = vpop.f32.mrb[0].mxu0
  %v632 = vadd.f32 %v535, %v631
  %v633 = vpop.f32.mrb[0].mxu0
  %v634 = vpop.f32.mrb[0].mxu0
  %v635 = vadd.f32 %v538, %v634
  %v636 = vpop.f32.mrb[0].mxu0
  %637 = vdwg.mxu0
  %v670 = vunpack.c.l.b16 %v27
  %v671 = vunpack.c.h.b16 %v27
  %v672 = vunpack.c.l.b16 %v28
  %v673 = vunpack.c.h.b16 %v28
  %v674 = vunpack.c.l.b16 %v29
  %v675 = vunpack.c.h.b16 %v29
  %v676 = vunpack.c.l.b16 %v30
  %v677 = vunpack.c.h.b16 %v30
  %v678 = vunpack.c.l.b16 %v31
  %v679 = vunpack.c.h.b16 %v31
  %v680 = vunpack.c.l.b16 %v32
  %v681 = vunpack.c.h.b16 %v32
  %v682 = vunpack.c.l.b16 %v33
  %v683 = vunpack.c.h.b16 %v33
  %v684 = vunpack.c.l.b16 %v34
  %v685 = vunpack.c.h.b16 %v34
  %v686 = vunpack.c.l.b16 %v35
  %v687 = vunpack.c.h.b16 %v35
  %v688 = vunpack.c.l.b16 %v36
  %v689 = vunpack.c.h.b16 %v36
  %v690 = vunpack.c.l.b16 %v37
  %v691 = vunpack.c.h.b16 %v37
  %v692 = vunpack.c.l.b16 %v38
  %v693 = vunpack.c.h.b16 %v38
  %v694 = vunpack.c.l.b16 %v39
  %v695 = vunpack.c.h.b16 %v39
  %v696 = vunpack.c.l.b16 %v40
  %v697 = vunpack.c.h.b16 %v40
  %v698 = vunpack.c.l.b16 %v41
  %v699 = vunpack.c.h.b16 %v41
  %v700 = vunpack.c.l.b16 %v42
  %v701 = vunpack.c.h.b16 %v42
  %v702 = vunpack.c.l.b16 %v43
  %v703 = vunpack.c.h.b16 %v43
  %v704 = vunpack.c.l.b16 %v44
  %v705 = vunpack.c.h.b16 %v44
  %v706 = vunpack.c.l.b16 %v45
  %v707 = vunpack.c.h.b16 %v45
  %v708 = vunpack.c.l.b16 %v46
  %v709 = vunpack.c.h.b16 %v46
  %v710 = vunpack.c.l.b16 %v47
  %v711 = vunpack.c.h.b16 %v47
  %v712 = vunpack.c.l.b16 %v48
  %v713 = vunpack.c.h.b16 %v48
  %v714 = vunpack.c.l.b16 %v49
  %v715 = vunpack.c.h.b16 %v49
  %v716 = vunpack.c.l.b16 %v50
  %v717 = vunpack.c.h.b16 %v50
  %v718 = vunpack.c.l.b16 %v51
  %v719 = vunpack.c.h.b16 %v51
  %v720 = vunpack.c.l.b16 %v52
  %v721 = vunpack.c.h.b16 %v52
  %v722 = vunpack.c.l.b16 %v53
  %v723 = vunpack.c.h.b16 %v53
  %v724 = vunpack.c.l.b16 %v54
  %v725 = vunpack.c.h.b16 %v54
  %v726 = vunpack.c.l.b16 %v55
  %v727 = vunpack.c.h.b16 %v55
  %v728 = vunpack.c.l.b16 %v56
  %v729 = vunpack.c.h.b16 %v56
  %v730 = vunpack.c.l.b16 %v57
  %v731 = vunpack.c.h.b16 %v57
  %v732 = vunpack.c.l.b16 %v58
  %v733 = vunpack.c.h.b16 %v58
  %v734 = vpack.c.b16 %v674, %v670
  %v735 = vpack.c.b16 %v675, %v671
  %v736 = vpack.c.b16 %v676, %v672
  %v737 = vpack.c.b16 %v677, %v673
  %v738 = vpack.c.b16 %v682, %v678
  %v739 = vpack.c.b16 %v683, %v679
  %v740 = vpack.c.b16 %v684, %v680
  %v741 = vpack.c.b16 %v685, %v681
  %v742 = vpack.c.b16 %v690, %v686
  %v743 = vpack.c.b16 %v691, %v687
  %v744 = vpack.c.b16 %v692, %v688
  %v745 = vpack.c.b16 %v693, %v689
  %v746 = vpack.c.b16 %v698, %v694
  %v747 = vpack.c.b16 %v699, %v695
  %v748 = vpack.c.b16 %v700, %v696
  %v749 = vpack.c.b16 %v701, %v697
  %v750 = vpack.c.b16 %v706, %v702
  %v751 = vpack.c.b16 %v707, %v703
  %v752 = vpack.c.b16 %v708, %v704
  %v753 = vpack.c.b16 %v709, %v705
  %v754 = vpack.c.b16 %v714, %v710
  %v755 = vpack.c.b16 %v715, %v711
  %v756 = vpack.c.b16 %v716, %v712
  %v757 = vpack.c.b16 %v717, %v713
  %v758 = vpack.c.b16 %v722, %v718
  %v759 = vpack.c.b16 %v723, %v719
  %v760 = vpack.c.b16 %v724, %v720
  %v761 = vpack.c.b16 %v725, %v721
  %v762 = vpack.c.b16 %v730, %v726
  %v763 = vpack.c.b16 %v731, %v727
  %v764 = vpack.c.b16 %v732, %v728
  %v765 = vpack.c.b16 %v733, %v729
  %v862 = vunpack.c.l.b16 %v59
  %v863 = vunpack.c.l.b16 %v60
  %v864 = vunpack.c.l.b16 %v61
  %v865 = vunpack.c.l.b16 %v62
  %v866 = vunpack.c.l.b16 %v63
  %v867 = vunpack.c.l.b16 %v64
  %v868 = vunpack.c.l.b16 %v65
  %v869 = vunpack.c.l.b16 %v66
  %v870 = vunpack.c.l.b16 %v67
  %v871 = vunpack.c.l.b16 %v68
  %v872 = vunpack.c.l.b16 %v69
  %v873 = vunpack.c.l.b16 %v70
  %v874 = vunpack.c.l.b16 %v71
  %v875 = vunpack.c.l.b16 %v72
  %v876 = vunpack.c.l.b16 %v73
  %v877 = vunpack.c.l.b16 %v74
  %v878 = vunpack.c.l.b16 %v75
  %v879 = vunpack.c.l.b16 %v76
  %v880 = vunpack.c.l.b16 %v77
  %v881 = vunpack.c.l.b16 %v78
  %v882 = vunpack.c.l.b16 %v79
  %v883 = vunpack.c.l.b16 %v80
  %v884 = vunpack.c.l.b16 %v81
  %v885 = vunpack.c.l.b16 %v82
  %v886 = vunpack.c.l.b16 %v83
  %v887 = vunpack.c.l.b16 %v84
  %v888 = vunpack.c.l.b16 %v85
  %v889 = vunpack.c.l.b16 %v86
  %v890 = vunpack.c.l.b16 %v87
  %v891 = vunpack.c.l.b16 %v88
  %v892 = vunpack.c.l.b16 %v89
  %v893 = vunpack.c.l.b16 %v90
  %v894 = vunpack.c.l.b16 %v91
  %v895 = vunpack.c.l.b16 %v92
  %v896 = vunpack.c.l.b16 %v93
  %v897 = vunpack.c.l.b16 %v94
  %v898 = vunpack.c.l.b16 %v95
  %v899 = vunpack.c.l.b16 %v96
  %v900 = vunpack.c.l.b16 %v97
  %v901 = vunpack.c.l.b16 %v98
  %v902 = vunpack.c.l.b16 %v99
  %v903 = vunpack.c.l.b16 %v100
  %v904 = vunpack.c.l.b16 %v101
  %v905 = vunpack.c.l.b16 %v102
  %v906 = vunpack.c.l.b16 %v103
  %v907 = vunpack.c.l.b16 %v104
  %v908 = vunpack.c.l.b16 %v105
  %v909 = vunpack.c.l.b16 %v106
  %v910 = vunpack.c.l.b16 %v107
  %v911 = vunpack.c.l.b16 %v108
  %v912 = vunpack.c.l.b16 %v109
  %v913 = vunpack.c.l.b16 %v110
  %v914 = vunpack.c.l.b16 %v111
  %v915 = vunpack.c.l.b16 %v112
  %v916 = vunpack.c.l.b16 %v113
  %v917 = vunpack.c.l.b16 %v114
  %v918 = vunpack.c.l.b16 %v115
  %v919 = vunpack.c.l.b16 %v116
  %v920 = vunpack.c.l.b16 %v117
  %v921 = vunpack.c.l.b16 %v118
  %v922 = vunpack.c.l.b16 %v119
  %v923 = vunpack.c.l.b16 %v120
  %v924 = vunpack.c.l.b16 %v121
  %v925 = vunpack.c.l.b16 %v122
  %v926 = vpack.c.b16 %v863, %v862
  %v927 = vpack.c.b16 %v865, %v864
  %v928 = vpack.c.b16 %v867, %v866
  %v929 = vpack.c.b16 %v869, %v868
  %v930 = vpack.c.b16 %v871, %v870
  %v931 = vpack.c.b16 %v873, %v872
  %v932 = vpack.c.b16 %v875, %v874
  %v933 = vpack.c.b16 %v877, %v876
  %v934 = vpack.c.b16 %v879, %v878
  %v935 = vpack.c.b16 %v881, %v880
  %v936 = vpack.c.b16 %v883, %v882
  %v937 = vpack.c.b16 %v885, %v884
  %v938 = vpack.c.b16 %v887, %v886
  %v939 = vpack.c.b16 %v889, %v888
  %v940 = vpack.c.b16 %v891, %v890
  %v941 = vpack.c.b16 %v893, %v892
  %v942 = vpack.c.b16 %v895, %v894
  %v943 = vpack.c.b16 %v897, %v896
  %v944 = vpack.c.b16 %v899, %v898
  %v945 = vpack.c.b16 %v901, %v900
  %v946 = vpack.c.b16 %v903, %v902
  %v947 = vpack.c.b16 %v905, %v904
  %v948 = vpack.c.b16 %v907, %v906
  %v949 = vpack.c.b16 %v909, %v908
  %v950 = vpack.c.b16 %v911, %v910
  %v951 = vpack.c.b16 %v913, %v912
  %v952 = vpack.c.b16 %v915, %v914
  %v953 = vpack.c.b16 %v917, %v916
  %v954 = vpack.c.b16 %v919, %v918
  %v955 = vpack.c.b16 %v921, %v920
  %v956 = vpack.c.b16 %v923, %v922
  %v957 = vpack.c.b16 %v925, %v924
  %990 = vmatprep.subr.bf16.mxu0 0
  %991 = vmatpush1.bf16.msra.mxu0 %v926
  %992 = vmatprep.subr.bf16.mxu0 0
  %993 = vmatpush1.bf16.msra.mxu0 %v927
  %994 = vmatprep.subr.bf16.mxu0 0
  %995 = vmatpush1.bf16.msra.mxu0 %v928
  %996 = vmatprep.subr.bf16.mxu0 0
  %997 = vmatpush1.bf16.msra.mxu0 %v929
  %998 = vmatprep.subr.bf16.mxu0 0
  %999 = vmatpush1.bf16.msra.mxu0 %v930
  %1000 = vmatprep.subr.bf16.mxu0 0
  %1001 = vmatpush1.bf16.msra.mxu0 %v931
  %1002 = vmatprep.subr.bf16.mxu0 0
  %1003 = vmatpush1.bf16.msra.mxu0 %v932
  %1004 = vmatprep.subr.bf16.mxu0 0
  %1005 = vmatpush1.bf16.msra.mxu0 %v933
  %1006 = vmatprep.subr.bf16.mxu0 0
  %1007 = vmatpush1.bf16.msra.mxu0 %v934
  %1008 = vmatprep.subr.bf16.mxu0 0
  %1009 = vmatpush1.bf16.msra.mxu0 %v935
  %1010 = vmatprep.subr.bf16.mxu0 0
  %1011 = vmatpush1.bf16.msra.mxu0 %v936
  %1012 = vmatprep.subr.bf16.mxu0 0
  %1013 = vmatpush1.bf16.msra.mxu0 %v937
  %1014 = vmatprep.subr.bf16.mxu0 0
  %1015 = vmatpush1.bf16.msra.mxu0 %v938
  %1016 = vmatprep.subr.bf16.mxu0 0
  %1017 = vmatpush1.bf16.msra.mxu0 %v939
  %1018 = vmatprep.subr.bf16.mxu0 0
  %1019 = vmatpush1.bf16.msra.mxu0 %v940
  %1020 = vmatprep.subr.bf16.mxu0 0
  %1021 = vmatpush1.bf16.msra.mxu0 %v941
  %1022 = vmatprep.mubr.bf16.mxu0 %v735
  %1023 = vmatmul.mubr.bf16.gmra.mrb[0].mxu0 %v734
  %v1024 = vpop.f32.mrb[0].mxu0
  %v1025 = vadd.f32 %v576, %v1024
  %v1026 = vpop.f32.mrb[0].mxu0
  %v1027 = vpop.f32.mrb[0].mxu0
  %v1028 = vadd.f32 %v579, %v1027
  %v1029 = vpop.f32.mrb[0].mxu0
  %1030 = vmatprep.mubr.bf16.mxu0 %v739
  %1031 = vmatmul.mubr.bf16.gmra.mrb[0].mxu0 %v738
  %v1032 = vpop.f32.mrb[0].mxu0
  %v1033 = vadd.f32 %v584, %v1032
  %v1034 = vpop.f32.mrb[0].mxu0
  %v1035 = vpop.f32.mrb[0].mxu0
  %v1036 = vadd.f32 %v587, %v1035
  %v1037 = vpop.f32.mrb[0].mxu0
  %1038 = vmatprep.mubr.bf16.mxu0 %v743
  %1039 = vmatmul.mubr.bf16.gmra.mrb[0].mxu0 %v742
  %v1040 = vpop.f32.mrb[0].mxu0
  %v1041 = vadd.f32 %v592, %v1040
  %v1042 = vpop.f32.mrb[0].mxu0
  %v1043 = vpop.f32.mrb[0].mxu0
  %v1044 = vadd.f32 %v595, %v1043
  %v1045 = vpop.f32.mrb[0].mxu0
  %1046 = vmatprep.mubr.bf16.mxu0 %v747
  %1047 = vmatmul.mubr.bf16.gmra.mrb[0].mxu0 %v746
  %v1048 = vpop.f32.mrb[0].mxu0
  %v1049 = vadd.f32 %v600, %v1048
  %v1050 = vpop.f32.mrb[0].mxu0
  %v1051 = vpop.f32.mrb[0].mxu0
  %v1052 = vadd.f32 %v603, %v1051
  %v1053 = vpop.f32.mrb[0].mxu0
  %1054 = vmatprep.mubr.bf16.mxu0 %v751
  %1055 = vmatmul.mubr.bf16.gmra.mrb[0].mxu0 %v750
  %v1056 = vpop.f32.mrb[0].mxu0
  %v1057 = vadd.f32 %v608, %v1056
  %v1058 = vpop.f32.mrb[0].mxu0
  %v1059 = vpop.f32.mrb[0].mxu0
  %v1060 = vadd.f32 %v611, %v1059
  %v1061 = vpop.f32.mrb[0].mxu0
  %1062 = vmatprep.mubr.bf16.mxu0 %v755
  %1063 = vmatmul.mubr.bf16.gmra.mrb[0].mxu0 %v754
  %v1064 = vpop.f32.mrb[0].mxu0
  %v1065 = vadd.f32 %v616, %v1064
  %v1066 = vpop.f32.mrb[0].mxu0
  %v1067 = vpop.f32.mrb[0].mxu0
  %v1068 = vadd.f32 %v619, %v1067
  %v1069 = vpop.f32.mrb[0].mxu0
  %1070 = vmatprep.mubr.bf16.mxu0 %v759
  %1071 = vmatmul.mubr.bf16.gmra.mrb[0].mxu0 %v758
  %v1072 = vpop.f32.mrb[0].mxu0
  %v1073 = vadd.f32 %v624, %v1072
  %v1074 = vpop.f32.mrb[0].mxu0
  %v1075 = vpop.f32.mrb[0].mxu0
  %v1076 = vadd.f32 %v627, %v1075
  %v1077 = vpop.f32.mrb[0].mxu0
  %1078 = vmatprep.mubr.bf16.mxu0 %v763
  %1079 = vmatmul.mubr.bf16.gmra.mrb[0].mxu0 %v762
  %v1080 = vpop.f32.mrb[0].mxu0
  %v1081 = vadd.f32 %v632, %v1080
  %v1082 = vpop.f32.mrb[0].mxu0
  %v1083 = vpop.f32.mrb[0].mxu0
  %v1084 = vadd.f32 %v635, %v1083
  %v1085 = vpop.f32.mrb[0].mxu0
  %1086 = vdwg.mxu0
  %1087 = vmatprep.subr.bf16.mxu0 0
  %1088 = vmatpush1.bf16.msra.mxu0 %v942
  %1089 = vmatprep.subr.bf16.mxu0 0
  %1090 = vmatpush1.bf16.msra.mxu0 %v943
  %1091 = vmatprep.subr.bf16.mxu0 0
  %1092 = vmatpush1.bf16.msra.mxu0 %v944
  %1093 = vmatprep.subr.bf16.mxu0 0
  %1094 = vmatpush1.bf16.msra.mxu0 %v945
  %1095 = vmatprep.subr.bf16.mxu0 0
  %1096 = vmatpush1.bf16.msra.mxu0 %v946
  %1097 = vmatprep.subr.bf16.mxu0 0
  %1098 = vmatpush1.bf16.msra.mxu0 %v947
  %1099 = vmatprep.subr.bf16.mxu0 0
  %1100 = vmatpush1.bf16.msra.mxu0 %v948
  %1101 = vmatprep.subr.bf16.mxu0 0
  %1102 = vmatpush1.bf16.msra.mxu0 %v949
  %1103 = vmatprep.subr.bf16.mxu0 0
  %1104 = vmatpush1.bf16.msra.mxu0 %v950
  %1105 = vmatprep.subr.bf16.mxu0 0
  %1106 = vmatpush1.bf16.msra.mxu0 %v951
  %1107 = vmatprep.subr.bf16.mxu0 0
  %1108 = vmatpush1.bf16.msra.mxu0 %v952
  %1109 = vmatprep.subr.bf16.mxu0 0
  %1110 = vmatpush1.bf16.msra.mxu0 %v953
  %1111 = vmatprep.subr.bf16.mxu0 0
  %1112 = vmatpush1.bf16.msra.mxu0 %v954
  %1113 = vmatprep.subr.bf16.mxu0 0
  %1114 = vmatpush1.bf16.msra.mxu0 %v955
  %1115 = vmatprep.subr.bf16.mxu0 0
  %1116 = vmatpush1.bf16.msra.mxu0 %v956
  %1117 = vmatprep.subr.bf16.mxu0 0
  %1118 = vmatpush1.bf16.msra.mxu0 %v957
  %1119 = vmatprep.mubr.bf16.mxu0 %v737
  %1120 = vmatmul.mubr.bf16.gmra.mrb[0].mxu0 %v736
  %v1121 = vpop.f32.mrb[0].mxu0
  %v1122 = vadd.f32 %v1025, %v1121
  %v1123 = vpop.f32.mrb[0].mxu0
  %v1124 = vpop.f32.mrb[0].mxu0
  %v1125 = vadd.f32 %v1028, %v1124
  %v1126 = vpop.f32.mrb[0].mxu0
  %1127 = vmatprep.mubr.bf16.mxu0 %v741
  %1128 = vmatmul.mubr.bf16.gmra.mrb[0].mxu0 %v740
  %v1129 = vpop.f32.mrb[0].mxu0
  %v1130 = vadd.f32 %v1033, %v1129
  %v1131 = vpop.f32.mrb[0].mxu0
  %v1132 = vpop.f32.mrb[0].mxu0
  %v1133 = vadd.f32 %v1036, %v1132
  %v1134 = vpop.f32.mrb[0].mxu0
  %1135 = vmatprep.mubr.bf16.mxu0 %v745
  %1136 = vmatmul.mubr.bf16.gmra.mrb[0].mxu0 %v744
  %v1137 = vpop.f32.mrb[0].mxu0
  %v1138 = vadd.f32 %v1041, %v1137
  %v1139 = vpop.f32.mrb[0].mxu0
  %v1140 = vpop.f32.mrb[0].mxu0
  %v1141 = vadd.f32 %v1044, %v1140
  %v1142 = vpop.f32.mrb[0].mxu0
  %1143 = vmatprep.mubr.bf16.mxu0 %v749
  %1144 = vmatmul.mubr.bf16.gmra.mrb[0].mxu0 %v748
  %v1145 = vpop.f32.mrb[0].mxu0
  %v1146 = vadd.f32 %v1049, %v1145
  %v1147 = vpop.f32.mrb[0].mxu0
  %v1148 = vpop.f32.mrb[0].mxu0
  %v1149 = vadd.f32 %v1052, %v1148
  %v1150 = vpop.f32.mrb[0].mxu0
  %1151 = vmatprep.mubr.bf16.mxu0 %v753
  %1152 = vmatmul.mubr.bf16.gmra.mrb[0].mxu0 %v752
  %v1153 = vpop.f32.mrb[0].mxu0
  %v1154 = vadd.f32 %v1057, %v1153
  %v1155 = vpop.f32.mrb[0].mxu0
  %v1156 = vpop.f32.mrb[0].mxu0
  %v1157 = vadd.f32 %v1060, %v1156
  %v1158 = vpop.f32.mrb[0].mxu0
  %1159 = vmatprep.mubr.bf16.mxu0 %v757
  %1160 = vmatmul.mubr.bf16.gmra.mrb[0].mxu0 %v756
  %v1161 = vpop.f32.mrb[0].mxu0
  %v1162 = vadd.f32 %v1065, %v1161
  %v1163 = vpop.f32.mrb[0].mxu0
  %v1164 = vpop.f32.mrb[0].mxu0
  %v1165 = vadd.f32 %v1068, %v1164
  %v1166 = vpop.f32.mrb[0].mxu0
  %1167 = vmatprep.mubr.bf16.mxu0 %v761
  %1168 = vmatmul.mubr.bf16.gmra.mrb[0].mxu0 %v760
  %v1169 = vpop.f32.mrb[0].mxu0
  %v1170 = vadd.f32 %v1073, %v1169
  %v1171 = vpop.f32.mrb[0].mxu0
  %v1172 = vpop.f32.mrb[0].mxu0
  %v1173 = vadd.f32 %v1076, %v1172
  %v1174 = vpop.f32.mrb[0].mxu0
  %1175 = vmatprep.mubr.bf16.mxu0 %v765
  %1176 = vmatmul.mubr.bf16.gmra.mrb[0].mxu0 %v764
  %v1177 = vpop.f32.mrb[0].mxu0
  %v1178 = vadd.f32 %v1081, %v1177
  %v1179 = vpop.f32.mrb[0].mxu0
  %v1180 = vpop.f32.mrb[0].mxu0
  %v1181 = vadd.f32 %v1084, %v1180
  %v1182 = vpop.f32.mrb[0].mxu0
  %1183 = vdwg.mxu0
  %v1184 = vld [vmem:[%s2] sm:$0xff]
  %v1185 = vld [vmem:[%s2 + $0x8] sm:$0xff]
  %v1186 = vld [vmem:[%s2 + $0x10] sm:$0xff]
  %v1187 = vld [vmem:[%s2 + $0x18] sm:$0xff]
  %v1188 = vld [vmem:[%s2 + $0x20] sm:$0xff]
  %v1189 = vld [vmem:[%s2 + $0x28] sm:$0xff]
  %v1190 = vld [vmem:[%s2 + $0x30] sm:$0xff]
  %v1191 = vld [vmem:[%s2 + $0x38] sm:$0xff]
  %v1192 = vld [vmem:[%s2 + $0x40] sm:$0xff]
  %v1193 = vld [vmem:[%s2 + $0x48] sm:$0xff]
  %v1194 = vld [vmem:[%s2 + $0x50] sm:$0xff]
  %v1195 = vld [vmem:[%s2 + $0x58] sm:$0xff]
  %v1196 = vld [vmem:[%s2 + $0x60] sm:$0xff]
  %v1197 = vld [vmem:[%s2 + $0x68] sm:$0xff]
  %v1198 = vld [vmem:[%s2 + $0x70] sm:$0xff]
  %v1199 = vld [vmem:[%s2 + $0x78] sm:$0xff]
  %v1200 = vld [vmem:[%s2 + $0x80] sm:$0xff]
  %v1201 = vld [vmem:[%s2 + $0x88] sm:$0xff]
  %v1202 = vld [vmem:[%s2 + $0x90] sm:$0xff]
  %v1203 = vld [vmem:[%s2 + $0x98] sm:$0xff]
  %v1204 = vld [vmem:[%s2 + $0xa0] sm:$0xff]
  %v1205 = vld [vmem:[%s2 + $0xa8] sm:$0xff]
  %v1206 = vld [vmem:[%s2 + $0xb0] sm:$0xff]
  %v1207 = vld [vmem:[%s2 + $0xb8] sm:$0xff]
  %v1208 = vld [vmem:[%s2 + $0xc0] sm:$0xff]
  %v1209 = vld [vmem:[%s2 + $0xc8] sm:$0xff]
  %v1210 = vld [vmem:[%s2 + $0xd0] sm:$0xff]
  %v1211 = vld [vmem:[%s2 + $0xd8] sm:$0xff]
  %v1212 = vld [vmem:[%s2 + $0xe0] sm:$0xff]
  %v1213 = vld [vmem:[%s2 + $0xe8] sm:$0xff]
  %v1214 = vld [vmem:[%s2 + $0xf0] sm:$0xff]
  %v1215 = vld [vmem:[%s2 + $0xf8] sm:$0xff]
  %v1216 = vld [vmem:[%s5] sm:$0xf]
  %v1217 = vld [vmem:[%s5 + $0x4] sm:$0xf]
  %v1218 = vld [vmem:[%s5 + $0x8] sm:$0xf]
  %v1219 = vld [vmem:[%s5 + $0xc] sm:$0xf]
  %v1220 = vld [vmem:[%s5 + $0x10] sm:$0xf]
  %v1221 = vld [vmem:[%s5 + $0x14] sm:$0xf]
  %v1222 = vld [vmem:[%s5 + $0x18] sm:$0xf]
  %v1223 = vld [vmem:[%s5 + $0x1c] sm:$0xf]
  %v1224 = vld [vmem:[%s5 + $0x20] sm:$0xf]
  %v1225 = vld [vmem:[%s5 + $0x24] sm:$0xf]
  %v1226 = vld [vmem:[%s5 + $0x28] sm:$0xf]
  %v1227 = vld [vmem:[%s5 + $0x2c] sm:$0xf]
  %v1228 = vld [vmem:[%s5 + $0x30] sm:$0xf]
  %v1229 = vld [vmem:[%s5 + $0x34] sm:$0xf]
  %v1230 = vld [vmem:[%s5 + $0x38] sm:$0xf]
  %v1231 = vld [vmem:[%s5 + $0x3c] sm:$0xf]
  %v1232 = vld [vmem:[%s5 + $0x40] sm:$0xf]
  %v1233 = vld [vmem:[%s5 + $0x44] sm:$0xf]
  %v1234 = vld [vmem:[%s5 + $0x48] sm:$0xf]
  %v1235 = vld [vmem:[%s5 + $0x4c] sm:$0xf]
  %v1236 = vld [vmem:[%s5 + $0x50] sm:$0xf]
  %v1237 = vld [vmem:[%s5 + $0x54] sm:$0xf]
  %v1238 = vld [vmem:[%s5 + $0x58] sm:$0xf]
  %v1239 = vld [vmem:[%s5 + $0x5c] sm:$0xf]
  %v1240 = vld [vmem:[%s5 + $0x60] sm:$0xf]
  %v1241 = vld [vmem:[%s5 + $0x64] sm:$0xf]
  %v1242 = vld [vmem:[%s5 + $0x68] sm:$0xf]
  %v1243 = vld [vmem:[%s5 + $0x6c] sm:$0xf]
  %v1244 = vld [vmem:[%s5 + $0x70] sm:$0xf]
  %v1245 = vld [vmem:[%s5 + $0x74] sm:$0xf]
  %v1246 = vld [vmem:[%s5 + $0x78] sm:$0xf]
  %v1247 = vld [vmem:[%s5 + $0x7c] sm:$0xf]
  %v1248 = vld [vmem:[%s5 + $0x80] sm:$0xf]
  %v1249 = vld [vmem:[%s5 + $0x84] sm:$0xf]
  %v1250 = vld [vmem:[%s5 + $0x88] sm:$0xf]
  %v1251 = vld [vmem:[%s5 + $0x8c] sm:$0xf]
  %v1252 = vld [vmem:[%s5 + $0x90] sm:$0xf]
  %v1253 = vld [vmem:[%s5 + $0x94] sm:$0xf]
  %v1254 = vld [vmem:[%s5 + $0x98] sm:$0xf]
  %v1255 = vld [vmem:[%s5 + $0x9c] sm:$0xf]
  %v1256 = vld [vmem:[%s5 + $0xa0] sm:$0xf]
  %v1257 = vld [vmem:[%s5 + $0xa4] sm:$0xf]
  %v1258 = vld [vmem:[%s5 + $0xa8] sm:$0xf]
  %v1259 = vld [vmem:[%s5 + $0xac] sm:$0xf]
  %v1260 = vld [vmem:[%s5 + $0xb0] sm:$0xf]
  %v1261 = vld [vmem:[%s5 + $0xb4] sm:$0xf]
  %v1262 = vld [vmem:[%s5 + $0xb8] sm:$0xf]
  %v1263 = vld [vmem:[%s5 + $0xbc] sm:$0xf]
  %v1264 = vld [vmem:[%s5 + $0xc0] sm:$0xf]
  %v1265 = vld [vmem:[%s5 + $0xc4] sm:$0xf]
  %v1266 = vld [vmem:[%s5 + $0xc8] sm:$0xf]
  %v1267 = vld [vmem:[%s5 + $0xcc] sm:$0xf]
  %v1268 = vld [vmem:[%s5 + $0xd0] sm:$0xf]
  %v1269 = vld [vmem:[%s5 + $0xd4] sm:$0xf]
  %v1270 = vld [vmem:[%s5 + $0xd8] sm:$0xf]
  %v1271 = vld [vmem:[%s5 + $0xdc] sm:$0xf]
  %v1272 = vld [vmem:[%s5 + $0xe0] sm:$0xf]
  %v1273 = vld [vmem:[%s5 + $0xe4] sm:$0xf]
  %v1274 = vld [vmem:[%s5 + $0xe8] sm:$0xf]
  %v1275 = vld [vmem:[%s5 + $0xec] sm:$0xf]
  %v1276 = vld [vmem:[%s5 + $0xf0] sm:$0xf]
  %v1277 = vld [vmem:[%s5 + $0xf4] sm:$0xf]
  %v1278 = vld [vmem:[%s5 + $0xf8] sm:$0xf]
  %v1279 = vld [vmem:[%s5 + $0xfc] sm:$0xf]
  %v1312 = vunpack.c.l.b16 %v1184
  %v1313 = vunpack.c.h.b16 %v1184
  %v1314 = vunpack.c.l.b16 %v1185
  %v1315 = vunpack.c.h.b16 %v1185
  %v1316 = vunpack.c.l.b16 %v1186
  %v1317 = vunpack.c.h.b16 %v1186
  %v1318 = vunpack.c.l.b16 %v1187
  %v1319 = vunpack.c.h.b16 %v1187
  %v1320 = vunpack.c.l.b16 %v1188
  %v1321 = vunpack.c.h.b16 %v1188
  %v1322 = vunpack.c.l.b16 %v1189
  %v1323 = vunpack.c.h.b16 %v1189
  %v1324 = vunpack.c.l.b16 %v1190
  %v1325 = vunpack.c.h.b16 %v1190
  %v1326 = vunpack.c.l.b16 %v1191
  %v1327 = vunpack.c.h.b16 %v1191
  %v1328 = vunpack.c.l.b16 %v1192
  %v1329 = vunpack.c.h.b16 %v1192
  %v1330 = vunpack.c.l.b16 %v1193
  %v1331 = vunpack.c.h.b16 %v1193
  %v1332 = vunpack.c.l.b16 %v1194
  %v1333 = vunpack.c.h.b16 %v1194
  %v1334 = vunpack.c.l.b16 %v1195
  %v1335 = vunpack.c.h.b16 %v1195
  %v1336 = vunpack.c.l.b16 %v1196
  %v1337 = vunpack.c.h.b16 %v1196
  %v1338 = vunpack.c.l.b16 %v1197
  %v1339 = vunpack.c.h.b16 %v1197
  %v1340 = vunpack.c.l.b16 %v1198
  %v1341 = vunpack.c.h.b16 %v1198
  %v1342 = vunpack.c.l.b16 %v1199
  %v1343 = vunpack.c.h.b16 %v1199
  %v1344 = vunpack.c.l.b16 %v1200
  %v1345 = vunpack.c.h.b16 %v1200
  %v1346 = vunpack.c.l.b16 %v1201
  %v1347 = vunpack.c.h.b16 %v1201
  %v1348 = vunpack.c.l.b16 %v1202
  %v1349 = vunpack.c.h.b16 %v1202
  %v1350 = vunpack.c.l.b16 %v1203
  %v1351 = vunpack.c.h.b16 %v1203
  %v1352 = vunpack.c.l.b16 %v1204
  %v1353 = vunpack.c.h.b16 %v1204
  %v1354 = vunpack.c.l.b16 %v1205
  %v1355 = vunpack.c.h.b16 %v1205
  %v1356 = vunpack.c.l.b16 %v1206
  %v1357 = vunpack.c.h.b16 %v1206
  %v1358 = vunpack.c.l.b16 %v1207
  %v1359 = vunpack.c.h.b16 %v1207
  %v1360 = vunpack.c.l.b16 %v1208
  %v1361 = vunpack.c.h.b16 %v1208
  %v1362 = vunpack.c.l.b16 %v1209
  %v1363 = vunpack.c.h.b16 %v1209
  %v1364 = vunpack.c.l.b16 %v1210
  %v1365 = vunpack.c.h.b16 %v1210
  %v1366 = vunpack.c.l.b16 %v1211
  %v1367 = vunpack.c.h.b16 %v1211
  %v1368 = vunpack.c.l.b16 %v1212
  %v1369 = vunpack.c.h.b16 %v1212
  %v1370 = vunpack.c.l.b16 %v1213
  %v1371 = vunpack.c.h.b16 %v1213
  %v1372 = vunpack.c.l.b16 %v1214
  %v1373 = vunpack.c.h.b16 %v1214
  %v1374 = vunpack.c.l.b16 %v1215
  %v1375 = vunpack.c.h.b16 %v1215
  %v1376 = vpack.c.b16 %v1316, %v1312
  %v1377 = vpack.c.b16 %v1317, %v1313
  %v1378 = vpack.c.b16 %v1318, %v1314
  %v1379 = vpack.c.b16 %v1319, %v1315
  %v1380 = vpack.c.b16 %v1324, %v1320
  %v1381 = vpack.c.b16 %v1325, %v1321
  %v1382 = vpack.c.b16 %v1326, %v1322
  %v1383 = vpack.c.b16 %v1327, %v1323
  %v1384 = vpack.c.b16 %v1332, %v1328
  %v1385 = vpack.c.b16 %v1333, %v1329
  %v1386 = vpack.c.b16 %v1334, %v1330
  %v1387 = vpack.c.b16 %v1335, %v1331
  %v1388 = vpack.c.b16 %v1340, %v1336
  %v1389 = vpack.c.b16 %v1341, %v1337
  %v1390 = vpack.c.b16 %v1342, %v1338
  %v1391 = vpack.c.b16 %v1343, %v1339
  %v1392 = vpack.c.b16 %v1348, %v1344
  %v1393 = vpack.c.b16 %v1349, %v1345
  %v1394 = vpack.c.b16 %v1350, %v1346
  %v1395 = vpack.c.b16 %v1351, %v1347
  %v1396 = vpack.c.b16 %v1356, %v1352
  %v1397 = vpack.c.b16 %v1357, %v1353
  %v1398 = vpack.c.b16 %v1358, %v1354
  %v1399 = vpack.c.b16 %v1359, %v1355
  %v1400 = vpack.c.b16 %v1364, %v1360
  %v1401 = vpack.c.b16 %v1365, %v1361
  %v1402 = vpack.c.b16 %v1366, %v1362
  %v1403 = vpack.c.b16 %v1367, %v1363
  %v1404 = vpack.c.b16 %v1372, %v1368
  %v1405 = vpack.c.b16 %v1373, %v1369
  %v1406 = vpack.c.b16 %v1374, %v1370
  %v1407 = vpack.c.b16 %v1375, %v1371
  %v1504 = vunpack.c.l.b16 %v1216
  %v1505 = vunpack.c.l.b16 %v1217
  %v1506 = vunpack.c.l.b16 %v1218
  %v1507 = vunpack.c.l.b16 %v1219
  %v1508 = vunpack.c.l.b16 %v1220
  %v1509 = vunpack.c.l.b16 %v1221
  %v1510 = vunpack.c.l.b16 %v1222
  %v1511 = vunpack.c.l.b16 %v1223
  %v1512 = vunpack.c.l.b16 %v1224
  %v1513 = vunpack.c.l.b16 %v1225
  %v1514 = vunpack.c.l.b16 %v1226
  %v1515 = vunpack.c.l.b16 %v1227
  %v1516 = vunpack.c.l.b16 %v1228
  %v1517 = vunpack.c.l.b16 %v1229
  %v1518 = vunpack.c.l.b16 %v1230
  %v1519 = vunpack.c.l.b16 %v1231
  %v1520 = vunpack.c.l.b16 %v1232
  %v1521 = vunpack.c.l.b16 %v1233
  %v1522 = vunpack.c.l.b16 %v1234
  %v1523 = vunpack.c.l.b16 %v1235
  %v1524 = vunpack.c.l.b16 %v1236
  %v1525 = vunpack.c.l.b16 %v1237
  %v1526 = vunpack.c.l.b16 %v1238
  %v1527 = vunpack.c.l.b16 %v1239
  %v1528 = vunpack.c.l.b16 %v1240
  %v1529 = vunpack.c.l.b16 %v1241
  %v1530 = vunpack.c.l.b16 %v1242
  %v1531 = vunpack.c.l.b16 %v1243
  %v1532 = vunpack.c.l.b16 %v1244
  %v1533 = vunpack.c.l.b16 %v1245
  %v1534 = vunpack.c.l.b16 %v1246
  %v1535 = vunpack.c.l.b16 %v1247
  %v1536 = vunpack.c.l.b16 %v1248
  %v1537 = vunpack.c.l.b16 %v1249
  %v1538 = vunpack.c.l.b16 %v1250
  %v1539 = vunpack.c.l.b16 %v1251
  %v1540 = vunpack.c.l.b16 %v1252
  %v1541 = vunpack.c.l.b16 %v1253
  %v1542 = vunpack.c.l.b16 %v1254
  %v1543 = vunpack.c.l.b16 %v1255
  %v1544 = vunpack.c.l.b16 %v1256
  %v1545 = vunpack.c.l.b16 %v1257
  %v1546 = vunpack.c.l.b16 %v1258
  %v1547 = vunpack.c.l.b16 %v1259
  %v1548 = vunpack.c.l.b16 %v1260
  %v1549 = vunpack.c.l.b16 %v1261
  %v1550 = vunpack.c.l.b16 %v1262
  %v1551 = vunpack.c.l.b16 %v1263
  %v1552 = vunpack.c.l.b16 %v1264
  %v1553 = vunpack.c.l.b16 %v1265
  %v1554 = vunpack.c.l.b16 %v1266
  %v1555 = vunpack.c.l.b16 %v1267
  %v1556 = vunpack.c.l.b16 %v1268
  %v1557 = vunpack.c.l.b16 %v1269
  %v1558 = vunpack.c.l.b16 %v1270
  %v1559 = vunpack.c.l.b16 %v1271
  %v1560 = vunpack.c.l.b16 %v1272
  %v1561 = vunpack.c.l.b16 %v1273
  %v1562 = vunpack.c.l.b16 %v1274
  %v1563 = vunpack.c.l.b16 %v1275
  %v1564 = vunpack.c.l.b16 %v1276
  %v1565 = vunpack.c.l.b16 %v1277
  %v1566 = vunpack.c.l.b16 %v1278
  %v1567 = vunpack.c.l.b16 %v1279
  %v1568 = vpack.c.b16 %v1505, %v1504
  %v1569 = vpack.c.b16 %v1507, %v1506
  %v1570 = vpack.c.b16 %v1509, %v1508
  %v1571 = vpack.c.b16 %v1511, %v1510
  %v1572 = vpack.c.b16 %v1513, %v1512
  %v1573 = vpack.c.b16 %v1515, %v1514
  %v1574 = vpack.c.b16 %v1517, %v1516
  %v1575 = vpack.c.b16 %v1519, %v1518
  %v1576 = vpack.c.b16 %v1521, %v1520
  %v1577 = vpack.c.b16 %v1523, %v1522
  %v1578 = vpack.c.b16 %v1525, %v1524
  %v1579 = vpack.c.b16 %v1527, %v1526
  %v1580 = vpack.c.b16 %v1529, %v1528
  %v1581 = vpack.c.b16 %v1531, %v1530
  %v1582 = vpack.c.b16 %v1533, %v1532
  %v1583 = vpack.c.b16 %v1535, %v1534
  %v1584 = vpack.c.b16 %v1537, %v1536
  %v1585 = vpack.c.b16 %v1539, %v1538
  %v1586 = vpack.c.b16 %v1541, %v1540
  %v1587 = vpack.c.b16 %v1543, %v1542
  %v1588 = vpack.c.b16 %v1545, %v1544
  %v1589 = vpack.c.b16 %v1547, %v1546
  %v1590 = vpack.c.b16 %v1549, %v1548
  %v1591 = vpack.c.b16 %v1551, %v1550
  %v1592 = vpack.c.b16 %v1553, %v1552
  %v1593 = vpack.c.b16 %v1555, %v1554
  %v1594 = vpack.c.b16 %v1557, %v1556
  %v1595 = vpack.c.b16 %v1559, %v1558
  %v1596 = vpack.c.b16 %v1561, %v1560
  %v1597 = vpack.c.b16 %v1563, %v1562
  %v1598 = vpack.c.b16 %v1565, %v1564
  %v1599 = vpack.c.b16 %v1567, %v1566
  %1632 = vmatprep.subr.bf16.mxu0 0
  %1633 = vmatpush1.bf16.msra.mxu0 %v1568
  %1634 = vmatprep.subr.bf16.mxu0 0
  %1635 = vmatpush1.bf16.msra.mxu0 %v1569
  %1636 = vmatprep.subr.bf16.mxu0 0
  %1637 = vmatpush1.bf16.msra.mxu0 %v1570
  %1638 = vmatprep.subr.bf16.mxu0 0
  %1639 = vmatpush1.bf16.msra.mxu0 %v1571
  %1640 = vmatprep.subr.bf16.mxu0 0
  %1641 = vmatpush1.bf16.msra.mxu0 %v1572
  %1642 = vmatprep.subr.bf16.mxu0 0
  %1643 = vmatpush1.bf16.msra.mxu0 %v1573
  %1644 = vmatprep.subr.bf16.mxu0 0
  %1645 = vmatpush1.bf16.msra.mxu0 %v1574
  %1646 = vmatprep.subr.bf16.mxu0 0
  %1647 = vmatpush1.bf16.msra.mxu0 %v1575
  %1648 = vmatprep.subr.bf16.mxu0 0
  %1649 = vmatpush1.bf16.msra.mxu0 %v1576
  %1650 = vmatprep.subr.bf16.mxu0 0
  %1651 = vmatpush1.bf16.msra.mxu0 %v1577
  %1652 = vmatprep.subr.bf16.mxu0 0
  %1653 = vmatpush1.bf16.msra.mxu0 %v1578
  %1654 = vmatprep.subr.bf16.mxu0 0
  %1655 = vmatpush1.bf16.msra.mxu0 %v1579
  %1656 = vmatprep.subr.bf16.mxu0 0
  %1657 = vmatpush1.bf16.msra.mxu0 %v1580
  %1658 = vmatprep.subr.bf16.mxu0 0
  %1659 = vmatpush1.bf16.msra.mxu0 %v1581
  %1660 = vmatprep.subr.bf16.mxu0 0
  %1661 = vmatpush1.bf16.msra.mxu0 %v1582
  %1662 = vmatprep.subr.bf16.mxu0 0
  %1663 = vmatpush1.bf16.msra.mxu0 %v1583
  %1664 = vmatprep.mubr.bf16.mxu0 %v1377
  %1665 = vmatmul.mubr.bf16.gmra.mrb[0].mxu0 %v1376
  %v1666 = vpop.f32.mrb[0].mxu0
  %v1667 = vadd.f32 0.0, %v1666
  %v1668 = vpop.f32.mrb[0].mxu0
  %v1669 = vpop.f32.mrb[0].mxu0
  %v1670 = vadd.f32 0.0, %v1669
  %v1671 = vpop.f32.mrb[0].mxu0
  %1672 = vmatprep.mubr.bf16.mxu0 %v1381
  %1673 = vmatmul.mubr.bf16.gmra.mrb[0].mxu0 %v1380
  %v1674 = vpop.f32.mrb[0].mxu0
  %v1675 = vadd.f32 0.0, %v1674
  %v1676 = vpop.f32.mrb[0].mxu0
  %v1677 = vpop.f32.mrb[0].mxu0
  %v1678 = vadd.f32 0.0, %v1677
  %v1679 = vpop.f32.mrb[0].mxu0
  %1680 = vmatprep.mubr.bf16.mxu0 %v1385
  %1681 = vmatmul.mubr.bf16.gmra.mrb[0].mxu0 %v1384
  %v1682 = vpop.f32.mrb[0].mxu0
  %v1683 = vadd.f32 0.0, %v1682
  %v1684 = vpop.f32.mrb[0].mxu0
  %v1685 = vpop.f32.mrb[0].mxu0
  %v1686 = vadd.f32 0.0, %v1685
  %v1687 = vpop.f32.mrb[0].mxu0
  %1688 = vmatprep.mubr.bf16.mxu0 %v1389
  %1689 = vmatmul.mubr.bf16.gmra.mrb[0].mxu0 %v1388
  %v1690 = vpop.f32.mrb[0].mxu0
  %v1691 = vadd.f32 0.0, %v1690
  %v1692 = vpop.f32.mrb[0].mxu0
  %v1693 = vpop.f32.mrb[0].mxu0
  %v1694 = vadd.f32 0.0, %v1693
  %v1695 = vpop.f32.mrb[0].mxu0
  %1696 = vmatprep.mubr.bf16.mxu0 %v1393
  %1697 = vmatmul.mubr.bf16.gmra.mrb[0].mxu0 %v1392
  %v1698 = vpop.f32.mrb[0].mxu0
  %v1699 = vadd.f32 0.0, %v1698
  %v1700 = vpop.f32.mrb[0].mxu0
  %v1701 = vpop.f32.mrb[0].mxu0
  %v1702 = vadd.f32 0.0, %v1701
  %v1703 = vpop.f32.mrb[0].mxu0
  %1704 = vmatprep.mubr.bf16.mxu0 %v1397
  %1705 = vmatmul.mubr.bf16.gmra.mrb[0].mxu0 %v1396
  %v1706 = vpop.f32.mrb[0].mxu0
  %v1707 = vadd.f32 0.0, %v1706
  %v1708 = vpop.f32.mrb[0].mxu0
  %v1709 = vpop.f32.mrb[0].mxu0
  %v1710 = vadd.f32 0.0, %v1709
  %v1711 = vpop.f32.mrb[0].mxu0
  %1712 = vmatprep.mubr.bf16.mxu0 %v1401
  %1713 = vmatmul.mubr.bf16.gmra.mrb[0].mxu0 %v1400
  %v1714 = vpop.f32.mrb[0].mxu0
  %v1715 = vadd.f32 0.0, %v1714
  %v1716 = vpop.f32.mrb[0].mxu0
  %v1717 = vpop.f32.mrb[0].mxu0
  %v1718 = vadd.f32 0.0, %v1717
  %v1719 = vpop.f32.mrb[0].mxu0
  %1720 = vmatprep.mubr.bf16.mxu0 %v1405
  %1721 = vmatmul.mubr.bf16.gmra.mrb[0].mxu0 %v1404
  %v1722 = vpop.f32.mrb[0].mxu0
  %v1723 = vadd.f32 0.0, %v1722
  %v1724 = vpop.f32.mrb[0].mxu0
  %v1725 = vpop.f32.mrb[0].mxu0
  %v1726 = vadd.f32 0.0, %v1725
  %v1727 = vpop.f32.mrb[0].mxu0
  %1728 = vdwg.mxu0
  %1729 = vmatprep.subr.bf16.mxu0 0
  %1730 = vmatpush1.bf16.msra.mxu0 %v1584
  %1731 = vmatprep.subr.bf16.mxu0 0
  %1732 = vmatpush1.bf16.msra.mxu0 %v1585
  %1733 = vmatprep.subr.bf16.mxu0 0
  %1734 = vmatpush1.bf16.msra.mxu0 %v1586
  %1735 = vmatprep.subr.bf16.mxu0 0
  %1736 = vmatpush1.bf16.msra.mxu0 %v1587
  %1737 = vmatprep.subr.bf16.mxu0 0
  %1738 = vmatpush1.bf16.msra.mxu0 %v1588
  %1739 = vmatprep.subr.bf16.mxu0 0
  %1740 = vmatpush1.bf16.msra.mxu0 %v1589
  %1741 = vmatprep.subr.bf16.mxu0 0
  %1742 = vmatpush1.bf16.msra.mxu0 %v1590
  %1743 = vmatprep.subr.bf16.mxu0 0
  %1744 = vmatpush1.bf16.msra.mxu0 %v1591
  %1745 = vmatprep.subr.bf16.mxu0 0
  %1746 = vmatpush1.bf16.msra.mxu0 %v1592
  %1747 = vmatprep.subr.bf16.mxu0 0
  %1748 = vmatpush1.bf16.msra.mxu0 %v1593
  %1749 = vmatprep.subr.bf16.mxu0 0
  %1750 = vmatpush1.bf16.msra.mxu0 %v1594
  %1751 = vmatprep.subr.bf16.mxu0 0
  %1752 = vmatpush1.bf16.msra.mxu0 %v1595
  %1753 = vmatprep.subr.bf16.mxu0 0
  %1754 = vmatpush1.bf16.msra.mxu0 %v1596
  %1755 = vmatprep.subr.bf16.mxu0 0
  %1756 = vmatpush1.bf16.msra.mxu0 %v1597
  %1757 = vmatprep.subr.bf16.mxu0 0
  %1758 = vmatpush1.bf16.msra.mxu0 %v1598
  %1759 = vmatprep.subr.bf16.mxu0 0
  %1760 = vmatpush1.bf16.msra.mxu0 %v1599
  %1761 = vmatprep.mubr.bf16.mxu0 %v1379
  %1762 = vmatmul.mubr.bf16.gmra.mrb[0].mxu0 %v1378
  %v1763 = vpop.f32.mrb[0].mxu0
  %v1764 = vadd.f32 %v1667, %v1763
  %v1765 = vpop.f32.mrb[0].mxu0
  %v1766 = vpop.f32.mrb[0].mxu0
  %v1767 = vadd.f32 %v1670, %v1766
  %v1768 = vpop.f32.mrb[0].mxu0
  %1769 = vmatprep.mubr.bf16.mxu0 %v1383
  %1770 = vmatmul.mubr.bf16.gmra.mrb[0].mxu0 %v1382
  %v1771 = vpop.f32.mrb[0].mxu0
  %v1772 = vadd.f32 %v1675, %v1771
  %v1773 = vpop.f32.mrb[0].mxu0
  %v1774 = vpop.f32.mrb[0].mxu0
  %v1775 = vadd.f32 %v1678, %v1774
  %v1776 = vpop.f32.mrb[0].mxu0
  %1777 = vmatprep.mubr.bf16.mxu0 %v1387
  %1778 = vmatmul.mubr.bf16.gmra.mrb[0].mxu0 %v1386
  %v1779 = vpop.f32.mrb[0].mxu0
  %v1780 = vadd.f32 %v1683, %v1779
  %v1781 = vpop.f32.mrb[0].mxu0
  %v1782 = vpop.f32.mrb[0].mxu0
  %v1783 = vadd.f32 %v1686, %v1782
  %v1784 = vpop.f32.mrb[0].mxu0
  %1785 = vmatprep.mubr.bf16.mxu0 %v1391
  %1786 = vmatmul.mubr.bf16.gmra.mrb[0].mxu0 %v1390
  %v1787 = vpop.f32.mrb[0].mxu0
  %v1788 = vadd.f32 %v1691, %v1787
  %v1789 = vpop.f32.mrb[0].mxu0
  %v1790 = vpop.f32.mrb[0].mxu0
  %v1791 = vadd.f32 %v1694, %v1790
  %v1792 = vpop.f32.mrb[0].mxu0
  %1793 = vmatprep.mubr.bf16.mxu0 %v1395
  %1794 = vmatmul.mubr.bf16.gmra.mrb[0].mxu0 %v1394
  %v1795 = vpop.f32.mrb[0].mxu0
  %v1796 = vadd.f32 %v1699, %v1795
  %v1797 = vpop.f32.mrb[0].mxu0
  %v1798 = vpop.f32.mrb[0].mxu0
  %v1799 = vadd.f32 %v1702, %v1798
  %v1800 = vpop.f32.mrb[0].mxu0
  %1801 = vmatprep.mubr.bf16.mxu0 %v1399
  %1802 = vmatmul.mubr.bf16.gmra.mrb[0].mxu0 %v1398
  %v1803 = vpop.f32.mrb[0].mxu0
  %v1804 = vadd.f32 %v1707, %v1803
  %v1805 = vpop.f32.mrb[0].mxu0
  %v1806 = vpop.f32.mrb[0].mxu0
  %v1807 = vadd.f32 %v1710, %v1806
  %v1808 = vpop.f32.mrb[0].mxu0
  %1809 = vmatprep.mubr.bf16.mxu0 %v1403
  %1810 = vmatmul.mubr.bf16.gmra.mrb[0].mxu0 %v1402
  %v1811 = vpop.f32.mrb[0].mxu0
  %v1812 = vadd.f32 %v1715, %v1811
  %v1813 = vpop.f32.mrb[0].mxu0
  %v1814 = vpop.f32.mrb[0].mxu0
  %v1815 = vadd.f32 %v1718, %v1814
  %v1816 = vpop.f32.mrb[0].mxu0
  %1817 = vmatprep.mubr.bf16.mxu0 %v1407
  %1818 = vmatmul.mubr.bf16.gmra.mrb[0].mxu0 %v1406
  %v1819 = vpop.f32.mrb[0].mxu0
  %v1820 = vadd.f32 %v1723, %v1819
  %v1821 = vpop.f32.mrb[0].mxu0
  %v1822 = vpop.f32.mrb[0].mxu0
  %v1823 = vadd.f32 %v1726, %v1822
  %v1824 = vpop.f32.mrb[0].mxu0
  %1825 = vdwg.mxu0
  %v1826 = vadd.f32 %v1122, %v1764
  %v1827 = vadd.f32 %v1125, %v1767
  %v1828 = vadd.f32 %v1130, %v1772
  %v1829 = vadd.f32 %v1133, %v1775
  %v1830 = vadd.f32 %v1138, %v1780
  %v1831 = vadd.f32 %v1141, %v1783
  %v1832 = vadd.f32 %v1146, %v1788
  %v1833 = vadd.f32 %v1149, %v1791
  %v1834 = vadd.f32 %v1154, %v1796
  %v1835 = vadd.f32 %v1157, %v1799
  %v1836 = vadd.f32 %v1162, %v1804
  %v1837 = vadd.f32 %v1165, %v1807
  %v1838 = vadd.f32 %v1170, %v1812
  %v1839 = vadd.f32 %v1173, %v1815
  %v1840 = vadd.f32 %v1178, %v1820
  %v1841 = vadd.f32 %v1181, %v1823
  %v1842 = vld [vmem:[%s6] sm:$0x1]
  %v1844 = vlaneseq
  %v1845 = vshrl.u32 %v1844, 7
  %v1846 = vsub.s32 0, %v1845
  %v1847 = vrot.slane %v1842, %v1846
  %v1849 = vadd.f32 %v1826, %v1847
  %v1850 = vadd.f32 %v1827, %v1847
  %v1851 = vadd.f32 %v1828, %v1847
  %v1852 = vadd.f32 %v1829, %v1847
  %v1853 = vadd.f32 %v1830, %v1847
  %v1854 = vadd.f32 %v1831, %v1847
  %v1855 = vadd.f32 %v1832, %v1847
  %v1856 = vadd.f32 %v1833, %v1847
  %v1857 = vadd.f32 %v1834, %v1847
  %v1858 = vadd.f32 %v1835, %v1847
  %v1859 = vadd.f32 %v1836, %v1847
  %v1860 = vadd.f32 %v1837, %v1847
  %v1861 = vadd.f32 %v1838, %v1847
  %v1862 = vadd.f32 %v1839, %v1847
  %v1863 = vadd.f32 %v1840, %v1847
  %v1864 = vadd.f32 %v1841, %v1847
  %v1865 = vmax.f32 %v1849, 0.0
  %v1866 = vmax.f32 %v1850, 0.0
  %v1867 = vmax.f32 %v1851, 0.0
  %v1868 = vmax.f32 %v1852, 0.0
  %v1869 = vmax.f32 %v1853, 0.0
  %v1870 = vmax.f32 %v1854, 0.0
  %v1871 = vmax.f32 %v1855, 0.0
  %v1872 = vmax.f32 %v1856, 0.0
  %v1873 = vmax.f32 %v1857, 0.0
  %v1874 = vmax.f32 %v1858, 0.0
  %v1875 = vmax.f32 %v1859, 0.0
  %v1876 = vmax.f32 %v1860, 0.0
  %v1877 = vmax.f32 %v1861, 0.0
  %v1878 = vmax.f32 %v1862, 0.0
  %v1879 = vmax.f32 %v1863, 0.0
  %v1880 = vmax.f32 %v1864, 0.0
  %v1881 = vmul.f32 %v1865, %v1865
  %v1882 = vmul.f32 %v1866, %v1866
  %v1883 = vmul.f32 %v1867, %v1867
  %v1884 = vmul.f32 %v1868, %v1868
  %v1885 = vmul.f32 %v1869, %v1869
  %v1886 = vmul.f32 %v1870, %v1870
  %v1887 = vmul.f32 %v1871, %v1871
  %v1888 = vmul.f32 %v1872, %v1872
  %v1889 = vmul.f32 %v1873, %v1873
  %v1890 = vmul.f32 %v1874, %v1874
  %v1891 = vmul.f32 %v1875, %v1875
  %v1892 = vmul.f32 %v1876, %v1876
  %v1893 = vmul.f32 %v1877, %v1877
  %v1894 = vmul.f32 %v1878, %v1878
  %v1895 = vmul.f32 %v1879, %v1879
  %v1896 = vmul.f32 %v1880, %v1880
  %1897 = vrot.lane.b32.xlu0 %v1881, 1
  %v1898 = vpop.permute.xlu0 %1897
  %1899 = vrot.lane.b32.xlu0 %v1882, 1
  %v1900 = vpop.permute.xlu0 %1899
  %1901 = vrot.lane.b32.xlu0 %v1883, 1
  %v1902 = vpop.permute.xlu0 %1901
  %1903 = vrot.lane.b32.xlu0 %v1884, 1
  %v1904 = vpop.permute.xlu0 %1903
  %1905 = vrot.lane.b32.xlu0 %v1885, 1
  %v1906 = vpop.permute.xlu0 %1905
  %1907 = vrot.lane.b32.xlu0 %v1886, 1
  %v1908 = vpop.permute.xlu0 %1907
  %1909 = vrot.lane.b32.xlu0 %v1887, 1
  %v1910 = vpop.permute.xlu0 %1909
  %1911 = vrot.lane.b32.xlu0 %v1888, 1
  %v1912 = vpop.permute.xlu0 %1911
  %1913 = vrot.lane.b32.xlu0 %v1889, 1
  %v1914 = vpop.permute.xlu0 %1913
  %1915 = vrot.lane.b32.xlu0 %v1890, 1
  %v1916 = vpop.permute.xlu0 %1915
  %1917 = vrot.lane.b32.xlu0 %v1891, 1
  %v1918 = vpop.permute.xlu0 %1917
  %1919 = vrot.lane.b32.xlu0 %v1892, 1
  %v1920 = vpop.permute.xlu0 %1919
  %1921 = vrot.lane.b32.xlu0 %v1893, 1
  %v1922 = vpop.permute.xlu0 %1921
  %1923 = vrot.lane.b32.xlu0 %v1894, 1
  %v1924 = vpop.permute.xlu0 %1923
  %1925 = vrot.lane.b32.xlu0 %v1895, 1
  %v1926 = vpop.permute.xlu0 %1925
  %1927 = vrot.lane.b32.xlu0 %v1896, 1
  %v1928 = vpop.permute.xlu0 %1927
  %v1929 = vadd.f32 %v1881, %v1898
  %v1930 = vadd.f32 %v1882, %v1900
  %v1931 = vadd.f32 %v1883, %v1902
  %v1932 = vadd.f32 %v1884, %v1904
  %v1933 = vadd.f32 %v1885, %v1906
  %v1934 = vadd.f32 %v1886, %v1908
  %v1935 = vadd.f32 %v1887, %v1910
  %v1936 = vadd.f32 %v1888, %v1912
  %v1937 = vadd.f32 %v1889, %v1914
  %v1938 = vadd.f32 %v1890, %v1916
  %v1939 = vadd.f32 %v1891, %v1918
  %v1940 = vadd.f32 %v1892, %v1920
  %v1941 = vadd.f32 %v1893, %v1922
  %v1942 = vadd.f32 %v1894, %v1924
  %v1943 = vadd.f32 %v1895, %v1926
  %v1944 = vadd.f32 %v1896, %v1928
  %1945 = vrot.lane.b32.xlu0 %v1881, 2
  %v1946 = vpop.permute.xlu0 %1945
  %1947 = vrot.lane.b32.xlu0 %v1882, 2
  %v1948 = vpop.permute.xlu0 %1947
  %1949 = vrot.lane.b32.xlu0 %v1883, 2
  %v1950 = vpop.permute.xlu0 %1949
  %1951 = vrot.lane.b32.xlu0 %v1884, 2
  %v1952 = vpop.permute.xlu0 %1951
  %1953 = vrot.lane.b32.xlu0 %v1885, 2
  %v1954 = vpop.permute.xlu0 %1953
  %1955 = vrot.lane.b32.xlu0 %v1886, 2
  %v1956 = vpop.permute.xlu0 %1955
  %1957 = vrot.lane.b32.xlu0 %v1887, 2
  %v1958 = vpop.permute.xlu0 %1957
  %1959 = vrot.lane.b32.xlu0 %v1888, 2
  %v1960 = vpop.permute.xlu0 %1959
  %1961 = vrot.lane.b32.xlu0 %v1889, 2
  %v1962 = vpop.permute.xlu0 %1961
  %1963 = vrot.lane.b32.xlu0 %v1890, 2
  %v1964 = vpop.permute.xlu0 %1963
  %1965 = vrot.lane.b32.xlu0 %v1891, 2
  %v1966 = vpop.permute.xlu0 %1965
  %1967 = vrot.lane.b32.xlu0 %v1892, 2
  %v1968 = vpop.permute.xlu0 %1967
  %1969 = vrot.lane.b32.xlu0 %v1893, 2
  %v1970 = vpop.permute.xlu0 %1969
  %1971 = vrot.lane.b32.xlu0 %v1894, 2
  %v1972 = vpop.permute.xlu0 %1971
  %1973 = vrot.lane.b32.xlu0 %v1895, 2
  %v1974 = vpop.permute.xlu0 %1973
  %1975 = vrot.lane.b32.xlu0 %v1896, 2
  %v1976 = vpop.permute.xlu0 %1975
  %v1977 = vadd.f32 %v1929, %v1946
  %v1978 = vadd.f32 %v1930, %v1948
  %v1979 = vadd.f32 %v1931, %v1950
  %v1980 = vadd.f32 %v1932, %v1952
  %v1981 = vadd.f32 %v1933, %v1954
  %v1982 = vadd.f32 %v1934, %v1956
  %v1983 = vadd.f32 %v1935, %v1958
  %v1984 = vadd.f32 %v1936, %v1960
  %v1985 = vadd.f32 %v1937, %v1962
  %v1986 = vadd.f32 %v1938, %v1964
  %v1987 = vadd.f32 %v1939, %v1966
  %v1988 = vadd.f32 %v1940, %v1968
  %v1989 = vadd.f32 %v1941, %v1970
  %v1990 = vadd.f32 %v1942, %v1972
  %v1991 = vadd.f32 %v1943, %v1974
  %v1992 = vadd.f32 %v1944, %v1976
  %1993 = vrot.lane.b32.xlu0 %v1881, 127
  %v1994 = vpop.permute.xlu0 %1993
  %1995 = vrot.lane.b32.xlu0 %v1882, 127
  %v1996 = vpop.permute.xlu0 %1995
  %1997 = vrot.lane.b32.xlu0 %v1883, 127
  %v1998 = vpop.permute.xlu0 %1997
  %1999 = vrot.lane.b32.xlu0 %v1884, 127
  %v2000 = vpop.permute.xlu0 %1999
  %2001 = vrot.lane.b32.xlu0 %v1885, 127
  %v2002 = vpop.permute.xlu0 %2001
  %2003 = vrot.lane.b32.xlu0 %v1886, 127
  %v2004 = vpop.permute.xlu0 %2003
  %2005 = vrot.lane.b32.xlu0 %v1887, 127
  %v2006 = vpop.permute.xlu0 %2005
  %2007 = vrot.lane.b32.xlu0 %v1888, 127
  %v2008 = vpop.permute.xlu0 %2007
  %2009 = vrot.lane.b32.xlu0 %v1889, 127
  %v2010 = vpop.permute.xlu0 %2009
  %2011 = vrot.lane.b32.xlu0 %v1890, 127
  %v2012 = vpop.permute.xlu0 %2011
  %2013 = vrot.lane.b32.xlu0 %v1891, 127
  %v2014 = vpop.permute.xlu0 %2013
  %2015 = vrot.lane.b32.xlu0 %v1892, 127
  %v2016 = vpop.permute.xlu0 %2015
  %2017 = vrot.lane.b32.xlu0 %v1893, 127
  %v2018 = vpop.permute.xlu0 %2017
  %2019 = vrot.lane.b32.xlu0 %v1894, 127
  %v2020 = vpop.permute.xlu0 %2019
  %2021 = vrot.lane.b32.xlu0 %v1895, 127
  %v2022 = vpop.permute.xlu0 %2021
  %2023 = vrot.lane.b32.xlu0 %v1896, 127
  %v2024 = vpop.permute.xlu0 %2023
  %v2025 = vadd.f32 %v1977, %v1994
  %v2026 = vadd.f32 %v1978, %v1996
  %v2027 = vadd.f32 %v1979, %v1998
  %v2028 = vadd.f32 %v1980, %v2000
  %v2029 = vadd.f32 %v1981, %v2002
  %v2030 = vadd.f32 %v1982, %v2004
  %v2031 = vadd.f32 %v1983, %v2006
  %v2032 = vadd.f32 %v1984, %v2008
  %v2033 = vadd.f32 %v1985, %v2010
  %v2034 = vadd.f32 %v1986, %v2012
  %v2035 = vadd.f32 %v1987, %v2014
  %v2036 = vadd.f32 %v1988, %v2016
  %v2037 = vadd.f32 %v1989, %v2018
  %v2038 = vadd.f32 %v1990, %v2020
  %v2039 = vadd.f32 %v1991, %v2022
  %v2040 = vadd.f32 %v1992, %v2024
  %2041 = vrot.lane.b32.xlu0 %v1881, 126
  %v2042 = vpop.permute.xlu0 %2041
  %2043 = vrot.lane.b32.xlu0 %v1882, 126
  %v2044 = vpop.permute.xlu0 %2043
  %2045 = vrot.lane.b32.xlu0 %v1883, 126
  %v2046 = vpop.permute.xlu0 %2045
  %2047 = vrot.lane.b32.xlu0 %v1884, 126
  %v2048 = vpop.permute.xlu0 %2047
  %2049 = vrot.lane.b32.xlu0 %v1885, 126
  %v2050 = vpop.permute.xlu0 %2049
  %2051 = vrot.lane.b32.xlu0 %v1886, 126
  %v2052 = vpop.permute.xlu0 %2051
  %2053 = vrot.lane.b32.xlu0 %v1887, 126
  %v2054 = vpop.permute.xlu0 %2053
  %2055 = vrot.lane.b32.xlu0 %v1888, 126
  %v2056 = vpop.permute.xlu0 %2055
  %2057 = vrot.lane.b32.xlu0 %v1889, 126
  %v2058 = vpop.permute.xlu0 %2057
  %2059 = vrot.lane.b32.xlu0 %v1890, 126
  %v2060 = vpop.permute.xlu0 %2059
  %2061 = vrot.lane.b32.xlu0 %v1891, 126
  %v2062 = vpop.permute.xlu0 %2061
  %2063 = vrot.lane.b32.xlu0 %v1892, 126
  %v2064 = vpop.permute.xlu0 %2063
  %2065 = vrot.lane.b32.xlu0 %v1893, 126
  %v2066 = vpop.permute.xlu0 %2065
  %2067 = vrot.lane.b32.xlu0 %v1894, 126
  %v2068 = vpop.permute.xlu0 %2067
  %2069 = vrot.lane.b32.xlu0 %v1895, 126
  %v2070 = vpop.permute.xlu0 %2069
  %2071 = vrot.lane.b32.xlu0 %v1896, 126
  %v2072 = vpop.permute.xlu0 %2071
  %v2073 = vadd.f32 %v2025, %v2042
  %v2074 = vadd.f32 %v2026, %v2044
  %v2075 = vadd.f32 %v2027, %v2046
  %v2076 = vadd.f32 %v2028, %v2048
  %v2077 = vadd.f32 %v2029, %v2050
  %v2078 = vadd.f32 %v2030, %v2052
  %v2079 = vadd.f32 %v2031, %v2054
  %v2080 = vadd.f32 %v2032, %v2056
  %v2081 = vadd.f32 %v2033, %v2058
  %v2082 = vadd.f32 %v2034, %v2060
  %v2083 = vadd.f32 %v2035, %v2062
  %v2084 = vadd.f32 %v2036, %v2064
  %v2085 = vadd.f32 %v2037, %v2066
  %v2086 = vadd.f32 %v2038, %v2068
  %v2087 = vadd.f32 %v2039, %v2070
  %v2088 = vadd.f32 %v2040, %v2072
  %v2089 = vmul.f32 %v2073, 0.0002
  %v2090 = vmul.f32 %v2074, 0.0002
  %v2091 = vmul.f32 %v2075, 0.0002
  %v2092 = vmul.f32 %v2076, 0.0002
  %v2093 = vmul.f32 %v2077, 0.0002
  %v2094 = vmul.f32 %v2078, 0.0002
  %v2095 = vmul.f32 %v2079, 0.0002
  %v2096 = vmul.f32 %v2080, 0.0002
  %v2097 = vmul.f32 %v2081, 0.0002
  %v2098 = vmul.f32 %v2082, 0.0002
  %v2099 = vmul.f32 %v2083, 0.0002
  %v2100 = vmul.f32 %v2084, 0.0002
  %v2101 = vmul.f32 %v2085, 0.0002
  %v2102 = vmul.f32 %v2086, 0.0002
  %v2103 = vmul.f32 %v2087, 0.0002
  %v2104 = vmul.f32 %v2088, 0.0002
  %v2105 = vadd.f32 %v2089, 1.0
  %v2106 = vadd.f32 %v2090, 1.0
  %v2107 = vadd.f32 %v2091, 1.0
  %v2108 = vadd.f32 %v2092, 1.0
  %v2109 = vadd.f32 %v2093, 1.0
  %v2110 = vadd.f32 %v2094, 1.0
  %v2111 = vadd.f32 %v2095, 1.0
  %v2112 = vadd.f32 %v2096, 1.0
  %v2113 = vadd.f32 %v2097, 1.0
  %v2114 = vadd.f32 %v2098, 1.0
  %v2115 = vadd.f32 %v2099, 1.0
  %v2116 = vadd.f32 %v2100, 1.0
  %v2117 = vadd.f32 %v2101, 1.0
  %v2118 = vadd.f32 %v2102, 1.0
  %v2119 = vadd.f32 %v2103, 1.0
  %v2120 = vadd.f32 %v2104, 1.0
  %v2121 = vrsqrt.pop %v2105
  %v2122 = vrsqrt.pop %v2106
  %v2123 = vrsqrt.pop %v2107
  %v2124 = vrsqrt.pop %v2108
  %v2125 = vrsqrt.pop %v2109
  %v2126 = vrsqrt.pop %v2110
  %v2127 = vrsqrt.pop %v2111
  %v2128 = vrsqrt.pop %v2112
  %v2129 = vrsqrt.pop %v2113
  %v2130 = vrsqrt.pop %v2114
  %v2131 = vrsqrt.pop %v2115
  %v2132 = vrsqrt.pop %v2116
  %v2133 = vrsqrt.pop %v2117
  %v2134 = vrsqrt.pop %v2118
  %v2135 = vrsqrt.pop %v2119
  %v2136 = vrsqrt.pop %v2120
  %v2137 = vmul.f32 %v1865, %v2121
  %v2138 = vmul.f32 %v1866, %v2122
  %v2139 = vmul.f32 %v1867, %v2123
  %v2140 = vmul.f32 %v1868, %v2124
  %v2141 = vmul.f32 %v1869, %v2125
  %v2142 = vmul.f32 %v1870, %v2126
  %v2143 = vmul.f32 %v1871, %v2127
  %v2144 = vmul.f32 %v1872, %v2128
  %v2145 = vmul.f32 %v1873, %v2129
  %v2146 = vmul.f32 %v1874, %v2130
  %v2147 = vmul.f32 %v1875, %v2131
  %v2148 = vmul.f32 %v1876, %v2132
  %v2149 = vmul.f32 %v1877, %v2133
  %v2150 = vmul.f32 %v1878, %v2134
  %v2151 = vmul.f32 %v1879, %v2135
  %v2152 = vmul.f32 %v1880, %v2136
  %v2153 = vpack.c.bf16 %v2138, %v2137
  %v2154 = vpack.c.bf16 %v2140, %v2139
  %v2155 = vpack.c.bf16 %v2142, %v2141
  %v2156 = vpack.c.bf16 %v2144, %v2143
  %v2157 = vpack.c.bf16 %v2146, %v2145
  %v2158 = vpack.c.bf16 %v2148, %v2147
  %v2159 = vpack.c.bf16 %v2150, %v2149
  %v2160 = vpack.c.bf16 %v2152, %v2151
  %v2169 = vunpack.c.l.b16 %v2153
  %v2170 = vunpack.c.h.b16 %v2153
  %v2171 = vunpack.c.l.b16 %v2154
  %v2172 = vunpack.c.h.b16 %v2154
  %v2173 = vunpack.c.l.b16 %v2155
  %v2174 = vunpack.c.h.b16 %v2155
  %v2175 = vunpack.c.l.b16 %v2156
  %v2176 = vunpack.c.h.b16 %v2156
  %v2177 = vunpack.c.l.b16 %v2157
  %v2178 = vunpack.c.h.b16 %v2157
  %v2179 = vunpack.c.l.b16 %v2158
  %v2180 = vunpack.c.h.b16 %v2158
  %v2181 = vunpack.c.l.b16 %v2159
  %v2182 = vunpack.c.h.b16 %v2159
  %v2183 = vunpack.c.l.b16 %v2160
  %v2184 = vunpack.c.h.b16 %v2160
  %v2185 = vpack.c.b16 %v2169, %v2169
  %v2186 = vpack.c.b16 %v2170, %v2170
  %v2187 = vpack.c.b16 %v2171, %v2171
  %v2188 = vpack.c.b16 %v2172, %v2172
  %v2189 = vpack.c.b16 %v2173, %v2173
  %v2190 = vpack.c.b16 %v2174, %v2174
  %v2191 = vpack.c.b16 %v2175, %v2175
  %v2192 = vpack.c.b16 %v2176, %v2176
  %v2193 = vpack.c.b16 %v2177, %v2177
  %v2194 = vpack.c.b16 %v2178, %v2178
  %v2195 = vpack.c.b16 %v2179, %v2179
  %v2196 = vpack.c.b16 %v2180, %v2180
  %v2197 = vpack.c.b16 %v2181, %v2181
  %v2198 = vpack.c.b16 %v2182, %v2182
  %v2199 = vpack.c.b16 %v2183, %v2183
  %v2200 = vpack.c.b16 %v2184, %v2184
  %2217 = vst [vmem:[%s7] sm:$0xf] %v2185
  %2218 = vst [vmem:[%s7 + $0x4] sm:$0xf] %v2186
  %2219 = vst [vmem:[%s7 + $0x8] sm:$0xf] %v2187
  %2220 = vst [vmem:[%s7 + $0xc] sm:$0xf] %v2188
  %2221 = vst [vmem:[%s7 + $0x10] sm:$0xf] %v2189
  %2222 = vst [vmem:[%s7 + $0x14] sm:$0xf] %v2190
  %2223 = vst [vmem:[%s7 + $0x18] sm:$0xf] %v2191
  %2224 = vst [vmem:[%s7 + $0x1c] sm:$0xf] %v2192
  %2225 = vst [vmem:[%s7 + $0x20] sm:$0xf] %v2193
  %2226 = vst [vmem:[%s7 + $0x24] sm:$0xf] %v2194
  %2227 = vst [vmem:[%s7 + $0x28] sm:$0xf] %v2195
  %2228 = vst [vmem:[%s7 + $0x2c] sm:$0xf] %v2196
  %2229 = vst [vmem:[%s7 + $0x30] sm:$0xf] %v2197
  %2230 = vst [vmem:[%s7 + $0x34] sm:$0xf] %v2198
  %2231 = vst [vmem:[%s7 + $0x38] sm:$0xf] %v2199
  %2232 = vst [vmem:[%s7 + $0x3c] sm:$0xf] %v2200
  // Predicated region
  $region30: #{multi_encoder_forward.13} parent=0 // pred_check
    _
  $region31: #{multi_encoder_forward.13} parent=0 // pred_check_branch
    %2234 = sbr.rel (0) target = $region33
  $region32: #{multi_encoder_forward.13} parent=0 // pred_region
    _
  $region33: #{multi_encoder_forward.13} parent=0 // pred_fallthru
    _
  // Predicated region
  $region34: #{multi_encoder_forward.13} parent=0 // pred_check
    _
  $region35: #{multi_encoder_forward.13} parent=0 // pred_check_branch
    %2236 = sbr.rel (0) target = $region37
  $region36: #{multi_encoder_forward.13} parent=0 // pred_region
    _
  $region37: #{multi_encoder_forward.13} parent=0 // pred_fallthru
    _

// kernel: multi_encoder_forward.15
$region0: #{multi_encoder_forward.15}
  #allocation0 [shape = 'u32[]', space=smem, size = 0x4, offset = 0x4, fixed_abs, tag = 'smem constant byte address 0x4 - core index']
  #allocation1 [shape = 'u32[144,128]{1,0:T(1,128)}', space=vmem, size = 0x12000, scoped, tag = 'internal scratch']
  %s0 = inlined_call_operand.vmem [shape: bf16[2,512], index: 0, kind: input, shape index: {}]
  %s1 = inlined_call_operand.vmem [shape: bf16[512,256], index: 1, kind: input, shape index: {}]
  %s2 = inlined_call_operand.vmem [shape: f32[1,256], index: 2, kind: input, shape index: {}]
  %s3 = inlined_call_operand.vmem [shape: bf16[256,256], index: 3, kind: input, shape index: {}]
  %s4 = inlined_call_operand.vmem [shape: f32[1,256], index: 4, kind: input, shape index: {}]
  %s5 = inlined_call_operand.vmem [shape: bf16[256,128], index: 5, kind: input, shape index: {}]
  %s6 = inlined_call_operand.vmem [shape: f32[1,128], index: 6, kind: input, shape index: {}]
  %s7 = inlined_call_operand.hbm [shape: f32[2,128], index: 7, kind: output, shape index: {}]
  %s8 = sld [smem:[#allocation0]]
  $region38: #{multi_encoder_forward.15} parent=0
    _
  %s10 = ssub.s32 1, %s8
  %s11 = scalar_select 0, %s10, %s8
  $region1: #{multi_encoder_forward.15} parent=0
    #allocation2 [shape = 'u8[1024]{0}', space=vmem, size = 0x400, scoped, tag = 'output window, operand 0, single buffered']
    #allocation3 [shape = 's32[1]{0}', space=sflag, size = 0x4, scoped, tag = 'scoped memory for multi_encoder_forward.15']
    %12 = vsyncpa [#allocation3], 0
    // Predicated region
    $region2: #{multi_encoder_forward.15} parent=1 // pred_check
      _
    $region3: #{multi_encoder_forward.15} parent=1 // pred_check_branch
      %14 = sbr.rel (0) target = $region5
    $region4: #{multi_encoder_forward.15} parent=1 // pred_region
      _
    $region5: #{multi_encoder_forward.15} parent=1 // pred_fallthru
      _
    // Predicated region
    $region6: #{multi_encoder_forward.15} parent=1 // pred_check
      _
    $region7: #{multi_encoder_forward.15} parent=1 // pred_check_branch
      %16 = sbr.rel (0) target = $region9
    $region8: #{multi_encoder_forward.15} parent=1 // pred_region
      _
    $region9: #{multi_encoder_forward.15} parent=1 // pred_fallthru
      _
    // Predicated region
    $region10: #{multi_encoder_forward.15} parent=1 // pred_check
      _
    $region11: #{multi_encoder_forward.15} parent=1 // pred_check_branch
      %18 = sbr.rel (0) target = $region13
    $region12: #{multi_encoder_forward.15} parent=1 // pred_region
      _
    $region13: #{multi_encoder_forward.15} parent=1 // pred_fallthru
      _
    // Predicated region
    $region14: #{multi_encoder_forward.15} parent=1 // pred_check
      _
    $region15: #{multi_encoder_forward.15} parent=1 // pred_check_branch
      %20 = sbr.rel (0) target = $region17
    $region16: #{multi_encoder_forward.15} parent=1 // pred_region
      _
    $region17: #{multi_encoder_forward.15} parent=1 // pred_fallthru
      _
    // Predicated region
    $region18: #{multi_encoder_forward.15} parent=1 // pred_check
      _
    $region19: #{multi_encoder_forward.15} parent=1 // pred_check_branch
      %22 = sbr.rel (0) target = $region21
    $region20: #{multi_encoder_forward.15} parent=1 // pred_region
      _
    $region21: #{multi_encoder_forward.15} parent=1 // pred_fallthru
      _
    // Predicated region
    $region22: #{multi_encoder_forward.15} parent=1 // pred_check
      _
    $region23: #{multi_encoder_forward.15} parent=1 // pred_check_branch
      %24 = sbr.rel (0) target = $region25
    $region24: #{multi_encoder_forward.15} parent=1 // pred_region
      _
    $region25: #{multi_encoder_forward.15} parent=1 // pred_fallthru
      _
    // Predicated region
    $region26: #{multi_encoder_forward.15} parent=1 // pred_check
      _
    $region27: #{multi_encoder_forward.15} parent=1 // pred_check_branch
      %26 = sbr.rel (0) target = $region29
    $region28: #{multi_encoder_forward.15} parent=1 // pred_region
      _
    $region29: #{multi_encoder_forward.15} parent=1 // pred_fallthru
      _
    %v28 = vld [vmem:[%s0] sm:$0xf]
    %v29 = vld [vmem:[%s1] sm:$0xff]
    %v30 = vld [vmem:[%s1 + $0x8] sm:$0xff]
    %v31 = vld [vmem:[%s1 + $0x10] sm:$0xff]
    %v32 = vld [vmem:[%s1 + $0x18] sm:$0xff]
    %v33 = vld [vmem:[%s1 + $0x20] sm:$0xff]
    %v34 = vld [vmem:[%s1 + $0x28] sm:$0xff]
    %v35 = vld [vmem:[%s1 + $0x30] sm:$0xff]
    %v36 = vld [vmem:[%s1 + $0x38] sm:$0xff]
    %v37 = vld [vmem:[%s1 + $0x40] sm:$0xff]
    %v38 = vld [vmem:[%s1 + $0x48] sm:$0xff]
    %v39 = vld [vmem:[%s1 + $0x50] sm:$0xff]
    %v40 = vld [vmem:[%s1 + $0x58] sm:$0xff]
    %v41 = vld [vmem:[%s1 + $0x60] sm:$0xff]
    %v42 = vld [vmem:[%s1 + $0x68] sm:$0xff]
    %v43 = vld [vmem:[%s1 + $0x70] sm:$0xff]
    %v44 = vld [vmem:[%s1 + $0x78] sm:$0xff]
    %v45 = vld [vmem:[%s1 + $0x80] sm:$0xff]
    %v46 = vld [vmem:[%s1 + $0x88] sm:$0xff]
    %v47 = vld [vmem:[%s1 + $0x90] sm:$0xff]
    %v48 = vld [vmem:[%s1 + $0x98] sm:$0xff]
    %v49 = vld [vmem:[%s1 + $0xa0] sm:$0xff]
    %v50 = vld [vmem:[%s1 + $0xa8] sm:$0xff]
    %v51 = vld [vmem:[%s1 + $0xb0] sm:$0xff]
    %v52 = vld [vmem:[%s1 + $0xb8] sm:$0xff]
    %v53 = vld [vmem:[%s1 + $0xc0] sm:$0xff]
    %v54 = vld [vmem:[%s1 + $0xc8] sm:$0xff]
    %v55 = vld [vmem:[%s1 + $0xd0] sm:$0xff]
    %v56 = vld [vmem:[%s1 + $0xd8] sm:$0xff]
    %v57 = vld [vmem:[%s1 + $0xe0] sm:$0xff]
    %v58 = vld [vmem:[%s1 + $0xe8] sm:$0xff]
    %v59 = vld [vmem:[%s1 + $0xf0] sm:$0xff]
    %v60 = vld [vmem:[%s1 + $0xf8] sm:$0xff]
    %v61 = vld [vmem:[%s1 + $0x100] sm:$0xff]
    %v62 = vld [vmem:[%s1 + $0x108] sm:$0xff]
    %v63 = vld [vmem:[%s1 + $0x110] sm:$0xff]
    %v64 = vld [vmem:[%s1 + $0x118] sm:$0xff]
    %v65 = vld [vmem:[%s1 + $0x120] sm:$0xff]
    %v66 = vld [vmem:[%s1 + $0x128] sm:$0xff]
    %v67 = vld [vmem:[%s1 + $0x130] sm:$0xff]
    %v68 = vld [vmem:[%s1 + $0x138] sm:$0xff]
    %v69 = vld [vmem:[%s1 + $0x140] sm:$0xff]
    %v70 = vld [vmem:[%s1 + $0x148] sm:$0xff]
    %v71 = vld [vmem:[%s1 + $0x150] sm:$0xff]
    %v72 = vld [vmem:[%s1 + $0x158] sm:$0xff]
    %v73 = vld [vmem:[%s1 + $0x160] sm:$0xff]
    %v74 = vld [vmem:[%s1 + $0x168] sm:$0xff]
    %v75 = vld [vmem:[%s1 + $0x170] sm:$0xff]
    %v76 = vld [vmem:[%s1 + $0x178] sm:$0xff]
    %v77 = vld [vmem:[%s1 + $0x180] sm:$0xff]
    %v78 = vld [vmem:[%s1 + $0x188] sm:$0xff]
    %v79 = vld [vmem:[%s1 + $0x190] sm:$0xff]
    %v80 = vld [vmem:[%s1 + $0x198] sm:$0xff]
    %v81 = vld [vmem:[%s1 + $0x1a0] sm:$0xff]
    %v82 = vld [vmem:[%s1 + $0x1a8] sm:$0xff]
    %v83 = vld [vmem:[%s1 + $0x1b0] sm:$0xff]
    %v84 = vld [vmem:[%s1 + $0x1b8] sm:$0xff]
    %v85 = vld [vmem:[%s1 + $0x1c0] sm:$0xff]
    %v86 = vld [vmem:[%s1 + $0x1c8] sm:$0xff]
    %v87 = vld [vmem:[%s1 + $0x1d0] sm:$0xff]
    %v88 = vld [vmem:[%s1 + $0x1d8] sm:$0xff]
    %v89 = vld [vmem:[%s1 + $0x1e0] sm:$0xff]
    %v90 = vld [vmem:[%s1 + $0x1e8] sm:$0xff]
    %v91 = vld [vmem:[%s1 + $0x1f0] sm:$0xff]
    %v92 = vld [vmem:[%s1 + $0x1f8] sm:$0xff]
    %v93 = vld [vmem:[%s2] sm:$0x3]
    %v95 = vlaneseq
    %v96 = vshrl.u32 %v95, 7
    %v97 = vsub.s32 0, %v96
    %v98 = vrot.slane %v93, %v97
    %v99 = vlaneseq
    %v100 = vshrl.u32 %v99, 7
    %v101 = vsub.s32 1, %v100
    %v102 = vrot.slane %v93, %v101
    %v107 = vunpack.c.l.s4 1966171168
    %v108 = vunpack.c.0.s8 %v107
    %v109 = vlaneseq
    %v110 = vshrl.u32 %v109, 7
    %v111 = vsub.s32 %v108, %v110
    %v112 = vrot.slane %v28, %v111
    %v113 = vcombine.high %v112, %v112
    %v115 = vunpack.c.l.s4 1966171168
    %v116 = vunpack.c.0.s8 %v115
    %v117 = vlaneseq
    %v118 = vshrl.u32 %v117, 7
    %v119 = vsub.s32 %v116, %v118
    %v120 = vrot.slane %v112, %v119
    %v122 = vunpack.c.l.s4 1966171168
    %v123 = vunpack.c.0.s8 %v122
    %v124 = vlaneseq
    %v125 = vshrl.u32 %v124, 7
    %v126 = vsub.s32 %v123, %v125
    %v127 = vrot.slane %v113, %v126
    %v128 = vcombine.high %v120, %v120
    %v129 = vcombine.high %v127, %v127
    %v198 = vunpack.c.l.b16 %v29
    %v199 = vunpack.c.h.b16 %v29
    %v200 = vunpack.c.l.b16 %v30
    %v201 = vunpack.c.h.b16 %v30
    %v202 = vunpack.c.l.b16 %v31
    %v203 = vunpack.c.h.b16 %v31
    %v204 = vunpack.c.l.b16 %v32
    %v205 = vunpack.c.h.b16 %v32
    %v206 = vunpack.c.l.b16 %v33
    %v207 = vunpack.c.h.b16 %v33
    %v208 = vunpack.c.l.b16 %v34
    %v209 = vunpack.c.h.b16 %v34
    %v210 = vunpack.c.l.b16 %v35
    %v211 = vunpack.c.h.b16 %v35
    %v212 = vunpack.c.l.b16 %v36
    %v213 = vunpack.c.h.b16 %v36
    %v214 = vunpack.c.l.b16 %v37
    %v215 = vunpack.c.h.b16 %v37
    %v216 = vunpack.c.l.b16 %v38
    %v217 = vunpack.c.h.b16 %v38
    %v218 = vunpack.c.l.b16 %v39
    %v219 = vunpack.c.h.b16 %v39
    %v220 = vunpack.c.l.b16 %v40
    %v221 = vunpack.c.h.b16 %v40
    %v222 = vunpack.c.l.b16 %v41
    %v223 = vunpack.c.h.b16 %v41
    %v224 = vunpack.c.l.b16 %v42
    %v225 = vunpack.c.h.b16 %v42
    %v226 = vunpack.c.l.b16 %v43
    %v227 = vunpack.c.h.b16 %v43
    %v228 = vunpack.c.l.b16 %v44
    %v229 = vunpack.c.h.b16 %v44
    %v230 = vunpack.c.l.b16 %v45
    %v231 = vunpack.c.h.b16 %v45
    %v232 = vunpack.c.l.b16 %v46
    %v233 = vunpack.c.h.b16 %v46
    %v234 = vunpack.c.l.b16 %v47
    %v235 = vunpack.c.h.b16 %v47
    %v236 = vunpack.c.l.b16 %v48
    %v237 = vunpack.c.h.b16 %v48
    %v238 = vunpack.c.l.b16 %v49
    %v239 = vunpack.c.h.b16 %v49
    %v240 = vunpack.c.l.b16 %v50
    %v241 = vunpack.c.h.b16 %v50
    %v242 = vunpack.c.l.b16 %v51
    %v243 = vunpack.c.h.b16 %v51
    %v244 = vunpack.c.l.b16 %v52
    %v245 = vunpack.c.h.b16 %v52
    %v246 = vunpack.c.l.b16 %v53
    %v247 = vunpack.c.h.b16 %v53
    %v248 = vunpack.c.l.b16 %v54
    %v249 = vunpack.c.h.b16 %v54
    %v250 = vunpack.c.l.b16 %v55
    %v251 = vunpack.c.h.b16 %v55
    %v252 = vunpack.c.l.b16 %v56
    %v253 = vunpack.c.h.b16 %v56
    %v254 = vunpack.c.l.b16 %v57
    %v255 = vunpack.c.h.b16 %v57
    %v256 = vunpack.c.l.b16 %v58
    %v257 = vunpack.c.h.b16 %v58
    %v258 = vunpack.c.l.b16 %v59
    %v259 = vunpack.c.h.b16 %v59
    %v260 = vunpack.c.l.b16 %v60
    %v261 = vunpack.c.h.b16 %v60
    %v262 = vunpack.c.l.b16 %v61
    %v263 = vunpack.c.h.b16 %v61
    %v264 = vunpack.c.l.b16 %v62
    %v265 = vunpack.c.h.b16 %v62
    %v266 = vunpack.c.l.b16 %v63
    %v267 = vunpack.c.h.b16 %v63
    %v268 = vunpack.c.l.b16 %v64
    %v269 = vunpack.c.h.b16 %v64
    %v270 = vunpack.c.l.b16 %v65
    %v271 = vunpack.c.h.b16 %v65
    %v272 = vunpack.c.l.b16 %v66
    %v273 = vunpack.c.h.b16 %v66
    %v274 = vunpack.c.l.b16 %v67
    %v275 = vunpack.c.h.b16 %v67
    %v276 = vunpack.c.l.b16 %v68
    %v277 = vunpack.c.h.b16 %v68
    %v278 = vunpack.c.l.b16 %v69
    %v279 = vunpack.c.h.b16 %v69
    %v280 = vunpack.c.l.b16 %v70
    %v281 = vunpack.c.h.b16 %v70
    %v282 = vunpack.c.l.b16 %v71
    %v283 = vunpack.c.h.b16 %v71
    %v284 = vunpack.c.l.b16 %v72
    %v285 = vunpack.c.h.b16 %v72
    %v286 = vunpack.c.l.b16 %v73
    %v287 = vunpack.c.h.b16 %v73
    %v288 = vunpack.c.l.b16 %v74
    %v289 = vunpack.c.h.b16 %v74
    %v290 = vunpack.c.l.b16 %v75
    %v291 = vunpack.c.h.b16 %v75
    %v292 = vunpack.c.l.b16 %v76
    %v293 = vunpack.c.h.b16 %v76
    %v294 = vunpack.c.l.b16 %v77
    %v295 = vunpack.c.h.b16 %v77
    %v296 = vunpack.c.l.b16 %v78
    %v297 = vunpack.c.h.b16 %v78
    %v298 = vunpack.c.l.b16 %v79
    %v299 = vunpack.c.h.b16 %v79
    %v300 = vunpack.c.l.b16 %v80
    %v301 = vunpack.c.h.b16 %v80
    %v302 = vunpack.c.l.b16 %v81
    %v303 = vunpack.c.h.b16 %v81
    %v304 = vunpack.c.l.b16 %v82
    %v305 = vunpack.c.h.b16 %v82
    %v306 = vunpack.c.l.b16 %v83
    %v307 = vunpack.c.h.b16 %v83
    %v308 = vunpack.c.l.b16 %v84
    %v309 = vunpack.c.h.b16 %v84
    %v310 = vunpack.c.l.b16 %v85
    %v311 = vunpack.c.h.b16 %v85
    %v312 = vunpack.c.l.b16 %v86
    %v313 = vunpack.c.h.b16 %v86
    %v314 = vunpack.c.l.b16 %v87
    %v315 = vunpack.c.h.b16 %v87
    %v316 = vunpack.c.l.b16 %v88
    %v317 = vunpack.c.h.b16 %v88
    %v318 = vunpack.c.l.b16 %v89
    %v319 = vunpack.c.h.b16 %v89
    %v320 = vunpack.c.l.b16 %v90
    %v321 = vunpack.c.h.b16 %v90
    %v322 = vunpack.c.l.b16 %v91
    %v323 = vunpack.c.h.b16 %v91
    %v324 = vunpack.c.l.b16 %v92
    %v325 = vunpack.c.h.b16 %v92
    %v326 = vpack.c.b16 %v200, %v198
    %v327 = vpack.c.b16 %v201, %v199
    %v328 = vpack.c.b16 %v204, %v202
    %v329 = vpack.c.b16 %v205, %v203
    %v330 = vpack.c.b16 %v208, %v206
    %v331 = vpack.c.b16 %v209, %v207
    %v332 = vpack.c.b16 %v212, %v210
    %v333 = vpack.c.b16 %v213, %v211
    %v334 = vpack.c.b16 %v216, %v214
    %v335 = vpack.c.b16 %v217, %v215
    %v336 = vpack.c.b16 %v220, %v218
    %v337 = vpack.c.b16 %v221, %v219
    %v338 = vpack.c.b16 %v224, %v222
    %v339 = vpack.c.b16 %v225, %v223
    %v340 = vpack.c.b16 %v228, %v226
    %v341 = vpack.c.b16 %v229, %v227
    %v342 = vpack.c.b16 %v232, %v230
    %v343 = vpack.c.b16 %v233, %v231
    %v344 = vpack.c.b16 %v236, %v234
    %v345 = vpack.c.b16 %v237, %v235
    %v346 = vpack.c.b16 %v240, %v238
    %v347 = vpack.c.b16 %v241, %v239
    %v348 = vpack.c.b16 %v244, %v242
    %v349 = vpack.c.b16 %v245, %v243
    %v350 = vpack.c.b16 %v248, %v246
    %v351 = vpack.c.b16 %v249, %v247
    %v352 = vpack.c.b16 %v252, %v250
    %v353 = vpack.c.b16 %v253, %v251
    %v354 = vpack.c.b16 %v256, %v254
    %v355 = vpack.c.b16 %v257, %v255
    %v356 = vpack.c.b16 %v260, %v258
    %v357 = vpack.c.b16 %v261, %v259
    %v358 = vpack.c.b16 %v264, %v262
    %v359 = vpack.c.b16 %v265, %v263
    %v360 = vpack.c.b16 %v268, %v266
    %v361 = vpack.c.b16 %v269, %v267
    %v362 = vpack.c.b16 %v272, %v270
    %v363 = vpack.c.b16 %v273, %v271
    %v364 = vpack.c.b16 %v276, %v274
    %v365 = vpack.c.b16 %v277, %v275
    %v366 = vpack.c.b16 %v280, %v278
    %v367 = vpack.c.b16 %v281, %v279
    %v368 = vpack.c.b16 %v284, %v282
    %v369 = vpack.c.b16 %v285, %v283
    %v370 = vpack.c.b16 %v288, %v286
    %v371 = vpack.c.b16 %v289, %v287
    %v372 = vpack.c.b16 %v292, %v290
    %v373 = vpack.c.b16 %v293, %v291
    %v374 = vpack.c.b16 %v296, %v294
    %v375 = vpack.c.b16 %v297, %v295
    %v376 = vpack.c.b16 %v300, %v298
    %v377 = vpack.c.b16 %v301, %v299
    %v378 = vpack.c.b16 %v304, %v302
    %v379 = vpack.c.b16 %v305, %v303
    %v380 = vpack.c.b16 %v308, %v306
    %v381 = vpack.c.b16 %v309, %v307
    %v382 = vpack.c.b16 %v312, %v310
    %v383 = vpack.c.b16 %v313, %v311
    %v384 = vpack.c.b16 %v316, %v314
    %v385 = vpack.c.b16 %v317, %v315
    %v386 = vpack.c.b16 %v320, %v318
    %v387 = vpack.c.b16 %v321, %v319
    %v388 = vpack.c.b16 %v324, %v322
    %v389 = vpack.c.b16 %v325, %v323
    %454 = vmatprep.subr.bf16.mxu0 %v327
    %455 = vmatpush1.bf16.msra.mxu0 %v326
    %456 = vmatprep.subr.bf16.mxu0 %v329
    %457 = vmatpush1.bf16.msra.mxu0 %v328
    %458 = vmatprep.subr.bf16.mxu0 %v331
    %459 = vmatpush1.bf16.msra.mxu0 %v330
    %460 = vmatprep.subr.bf16.mxu0 %v333
    %461 = vmatpush1.bf16.msra.mxu0 %v332
    %462 = vmatprep.subr.bf16.mxu0 %v335
    %463 = vmatpush1.bf16.msra.mxu0 %v334
    %464 = vmatprep.subr.bf16.mxu0 %v337
    %465 = vmatpush1.bf16.msra.mxu0 %v336
    %466 = vmatprep.subr.bf16.mxu0 %v339
    %467 = vmatpush1.bf16.msra.mxu0 %v338
    %468 = vmatprep.subr.bf16.mxu0 %v341
    %469 = vmatpush1.bf16.msra.mxu0 %v340
    %470 = vmatprep.subr.bf16.mxu0 %v343
    %471 = vmatpush1.bf16.msra.mxu0 %v342
    %472 = vmatprep.subr.bf16.mxu0 %v345
    %473 = vmatpush1.bf16.msra.mxu0 %v344
    %474 = vmatprep.subr.bf16.mxu0 %v347
    %475 = vmatpush1.bf16.msra.mxu0 %v346
    %476 = vmatprep.subr.bf16.mxu0 %v349
    %477 = vmatpush1.bf16.msra.mxu0 %v348
    %478 = vmatprep.subr.bf16.mxu0 %v351
    %479 = vmatpush1.bf16.msra.mxu0 %v350
    %480 = vmatprep.subr.bf16.mxu0 %v353
    %481 = vmatpush1.bf16.msra.mxu0 %v352
    %482 = vmatprep.subr.bf16.mxu0 %v355
    %483 = vmatpush1.bf16.msra.mxu0 %v354
    %484 = vmatprep.subr.bf16.mxu0 %v357
    %485 = vmatpush1.bf16.msra.mxu0 %v356
    %486 = vmatprep.mubr.bf16.mxu0 %v127
    %487 = vmatmul.mubr.bf16.gmra.mrb[0].mxu0 %v120
    %v488 = vpop.f32.mrb[0].mxu0
    %v489 = vadd.f32 %v98, %v488
    %v490 = vpop.f32.mrb[0].mxu0
    %v491 = vadd.f32 %v102, %v490
    %v492 = vpop.f32.mrb[0].mxu0
    %v493 = vpop.f32.mrb[0].mxu0
    %494 = vdwg.mxu0
    %495 = vmatprep.subr.bf16.mxu0 %v359
    %496 = vmatpush1.bf16.msra.mxu0 %v358
    %497 = vmatprep.subr.bf16.mxu0 %v361
    %498 = vmatpush1.bf16.msra.mxu0 %v360
    %499 = vmatprep.subr.bf16.mxu0 %v363
    %500 = vmatpush1.bf16.msra.mxu0 %v362
    %501 = vmatprep.subr.bf16.mxu0 %v365
    %502 = vmatpush1.bf16.msra.mxu0 %v364
    %503 = vmatprep.subr.bf16.mxu0 %v367
    %504 = vmatpush1.bf16.msra.mxu0 %v366
    %505 = vmatprep.subr.bf16.mxu0 %v369
    %506 = vmatpush1.bf16.msra.mxu0 %v368
    %507 = vmatprep.subr.bf16.mxu0 %v371
    %508 = vmatpush1.bf16.msra.mxu0 %v370
    %509 = vmatprep.subr.bf16.mxu0 %v373
    %510 = vmatpush1.bf16.msra.mxu0 %v372
    %511 = vmatprep.subr.bf16.mxu0 %v375
    %512 = vmatpush1.bf16.msra.mxu0 %v374
    %513 = vmatprep.subr.bf16.mxu0 %v377
    %514 = vmatpush1.bf16.msra.mxu0 %v376
    %515 = vmatprep.subr.bf16.mxu0 %v379
    %516 = vmatpush1.bf16.msra.mxu0 %v378
    %517 = vmatprep.subr.bf16.mxu0 %v381
    %518 = vmatpush1.bf16.msra.mxu0 %v380
    %519 = vmatprep.subr.bf16.mxu0 %v383
    %520 = vmatpush1.bf16.msra.mxu0 %v382
    %521 = vmatprep.subr.bf16.mxu0 %v385
    %522 = vmatpush1.bf16.msra.mxu0 %v384
    %523 = vmatprep.subr.bf16.mxu0 %v387
    %524 = vmatpush1.bf16.msra.mxu0 %v386
    %525 = vmatprep.subr.bf16.mxu0 %v389
    %526 = vmatpush1.bf16.msra.mxu0 %v388
    %527 = vmatprep.mubr.bf16.mxu0 %v129
    %528 = vmatmul.mubr.bf16.gmra.mrb[0].mxu0 %v128
    %v529 = vpop.f32.mrb[0].mxu0
    %v530 = vadd.f32 %v489, %v529
    %v531 = vpop.f32.mrb[0].mxu0
    %v532 = vadd.f32 %v491, %v531
    %v533 = vpop.f32.mrb[0].mxu0
    %v534 = vpop.f32.mrb[0].mxu0
    %535 = vdwg.mxu0
    %v536 = vmax.f32 %v530, 0.0
    %v537 = vmax.f32 %v532, 0.0
    %v538 = vpack.c.bf16 %v536, %v536
    %v539 = vpack.c.bf16 %v537, %v537
    %v540 = vld [vmem:[%s3] sm:$0xff]
    %v541 = vld [vmem:[%s3 + $0x8] sm:$0xff]
    %v542 = vld [vmem:[%s3 + $0x10] sm:$0xff]
    %v543 = vld [vmem:[%s3 + $0x18] sm:$0xff]
    %v544 = vld [vmem:[%s3 + $0x20] sm:$0xff]
    %v545 = vld [vmem:[%s3 + $0x28] sm:$0xff]
    %v546 = vld [vmem:[%s3 + $0x30] sm:$0xff]
    %v547 = vld [vmem:[%s3 + $0x38] sm:$0xff]
    %v548 = vld [vmem:[%s3 + $0x40] sm:$0xff]
    %v549 = vld [vmem:[%s3 + $0x48] sm:$0xff]
    %v550 = vld [vmem:[%s3 + $0x50] sm:$0xff]
    %v551 = vld [vmem:[%s3 + $0x58] sm:$0xff]
    %v552 = vld [vmem:[%s3 + $0x60] sm:$0xff]
    %v553 = vld [vmem:[%s3 + $0x68] sm:$0xff]
    %v554 = vld [vmem:[%s3 + $0x70] sm:$0xff]
    %v555 = vld [vmem:[%s3 + $0x78] sm:$0xff]
    %v556 = vld [vmem:[%s3 + $0x80] sm:$0xff]
    %v557 = vld [vmem:[%s3 + $0x88] sm:$0xff]
    %v558 = vld [vmem:[%s3 + $0x90] sm:$0xff]
    %v559 = vld [vmem:[%s3 + $0x98] sm:$0xff]
    %v560 = vld [vmem:[%s3 + $0xa0] sm:$0xff]
    %v561 = vld [vmem:[%s3 + $0xa8] sm:$0xff]
    %v562 = vld [vmem:[%s3 + $0xb0] sm:$0xff]
    %v563 = vld [vmem:[%s3 + $0xb8] sm:$0xff]
    %v564 = vld [vmem:[%s3 + $0xc0] sm:$0xff]
    %v565 = vld [vmem:[%s3 + $0xc8] sm:$0xff]
    %v566 = vld [vmem:[%s3 + $0xd0] sm:$0xff]
    %v567 = vld [vmem:[%s3 + $0xd8] sm:$0xff]
    %v568 = vld [vmem:[%s3 + $0xe0] sm:$0xff]
    %v569 = vld [vmem:[%s3 + $0xe8] sm:$0xff]
    %v570 = vld [vmem:[%s3 + $0xf0] sm:$0xff]
    %v571 = vld [vmem:[%s3 + $0xf8] sm:$0xff]
    %v572 = vld [vmem:[%s4] sm:$0x3]
    %v574 = vlaneseq
    %v575 = vshrl.u32 %v574, 7
    %v576 = vsub.s32 0, %v575
    %v577 = vrot.slane %v572, %v576
    %v578 = vlaneseq
    %v579 = vshrl.u32 %v578, 7
    %v580 = vsub.s32 1, %v579
    %v581 = vrot.slane %v572, %v580
    %v616 = vunpack.c.l.b16 %v540
    %v617 = vunpack.c.h.b16 %v540
    %v618 = vunpack.c.l.b16 %v541
    %v619 = vunpack.c.h.b16 %v541
    %v620 = vunpack.c.l.b16 %v542
    %v621 = vunpack.c.h.b16 %v542
    %v622 = vunpack.c.l.b16 %v543
    %v623 = vunpack.c.h.b16 %v543
    %v624 = vunpack.c.l.b16 %v544
    %v625 = vunpack.c.h.b16 %v544
    %v626 = vunpack.c.l.b16 %v545
    %v627 = vunpack.c.h.b16 %v545
    %v628 = vunpack.c.l.b16 %v546
    %v629 = vunpack.c.h.b16 %v546
    %v630 = vunpack.c.l.b16 %v547
    %v631 = vunpack.c.h.b16 %v547
    %v632 = vunpack.c.l.b16 %v548
    %v633 = vunpack.c.h.b16 %v548
    %v634 = vunpack.c.l.b16 %v549
    %v635 = vunpack.c.h.b16 %v549
    %v636 = vunpack.c.l.b16 %v550
    %v637 = vunpack.c.h.b16 %v550
    %v638 = vunpack.c.l.b16 %v551
    %v639 = vunpack.c.h.b16 %v551
    %v640 = vunpack.c.l.b16 %v552
    %v641 = vunpack.c.h.b16 %v552
    %v642 = vunpack.c.l.b16 %v553
    %v643 = vunpack.c.h.b16 %v553
    %v644 = vunpack.c.l.b16 %v554
    %v645 = vunpack.c.h.b16 %v554
    %v646 = vunpack.c.l.b16 %v555
    %v647 = vunpack.c.h.b16 %v555
    %v648 = vunpack.c.l.b16 %v556
    %v649 = vunpack.c.h.b16 %v556
    %v650 = vunpack.c.l.b16 %v557
    %v651 = vunpack.c.h.b16 %v557
    %v652 = vunpack.c.l.b16 %v558
    %v653 = vunpack.c.h.b16 %v558
    %v654 = vunpack.c.l.b16 %v559
    %v655 = vunpack.c.h.b16 %v559
    %v656 = vunpack.c.l.b16 %v560
    %v657 = vunpack.c.h.b16 %v560
    %v658 = vunpack.c.l.b16 %v561
    %v659 = vunpack.c.h.b16 %v561
    %v660 = vunpack.c.l.b16 %v562
    %v661 = vunpack.c.h.b16 %v562
    %v662 = vunpack.c.l.b16 %v563
    %v663 = vunpack.c.h.b16 %v563
    %v664 = vunpack.c.l.b16 %v564
    %v665 = vunpack.c.h.b16 %v564
    %v666 = vunpack.c.l.b16 %v565
    %v667 = vunpack.c.h.b16 %v565
    %v668 = vunpack.c.l.b16 %v566
    %v669 = vunpack.c.h.b16 %v566
    %v670 = vunpack.c.l.b16 %v567
    %v671 = vunpack.c.h.b16 %v567
    %v672 = vunpack.c.l.b16 %v568
    %v673 = vunpack.c.h.b16 %v568
    %v674 = vunpack.c.l.b16 %v569
    %v675 = vunpack.c.h.b16 %v569
    %v676 = vunpack.c.l.b16 %v570
    %v677 = vunpack.c.h.b16 %v570
    %v678 = vunpack.c.l.b16 %v571
    %v679 = vunpack.c.h.b16 %v571
    %v680 = vpack.c.b16 %v618, %v616
    %v681 = vpack.c.b16 %v619, %v617
    %v682 = vpack.c.b16 %v622, %v620
    %v683 = vpack.c.b16 %v623, %v621
    %v684 = vpack.c.b16 %v626, %v624
    %v685 = vpack.c.b16 %v627, %v625
    %v686 = vpack.c.b16 %v630, %v628
    %v687 = vpack.c.b16 %v631, %v629
    %v688 = vpack.c.b16 %v634, %v632
    %v689 = vpack.c.b16 %v635, %v633
    %v690 = vpack.c.b16 %v638, %v636
    %v691 = vpack.c.b16 %v639, %v637
    %v692 = vpack.c.b16 %v642, %v640
    %v693 = vpack.c.b16 %v643, %v641
    %v694 = vpack.c.b16 %v646, %v644
    %v695 = vpack.c.b16 %v647, %v645
    %v696 = vpack.c.b16 %v650, %v648
    %v697 = vpack.c.b16 %v651, %v649
    %v698 = vpack.c.b16 %v654, %v652
    %v699 = vpack.c.b16 %v655, %v653
    %v700 = vpack.c.b16 %v658, %v656
    %v701 = vpack.c.b16 %v659, %v657
    %v702 = vpack.c.b16 %v662, %v660
    %v703 = vpack.c.b16 %v663, %v661
    %v704 = vpack.c.b16 %v666, %v664
    %v705 = vpack.c.b16 %v667, %v665
    %v706 = vpack.c.b16 %v670, %v668
    %v707 = vpack.c.b16 %v671, %v669
    %v708 = vpack.c.b16 %v674, %v672
    %v709 = vpack.c.b16 %v675, %v673
    %v710 = vpack.c.b16 %v678, %v676
    %v711 = vpack.c.b16 %v679, %v677
    %744 = vmatprep.subr.bf16.mxu0 %v681
    %745 = vmatpush1.bf16.msra.mxu0 %v680
    %746 = vmatprep.subr.bf16.mxu0 %v683
    %747 = vmatpush1.bf16.msra.mxu0 %v682
    %748 = vmatprep.subr.bf16.mxu0 %v685
    %749 = vmatpush1.bf16.msra.mxu0 %v684
    %750 = vmatprep.subr.bf16.mxu0 %v687
    %751 = vmatpush1.bf16.msra.mxu0 %v686
    %752 = vmatprep.subr.bf16.mxu0 %v689
    %753 = vmatpush1.bf16.msra.mxu0 %v688
    %754 = vmatprep.subr.bf16.mxu0 %v691
    %755 = vmatpush1.bf16.msra.mxu0 %v690
    %756 = vmatprep.subr.bf16.mxu0 %v693
    %757 = vmatpush1.bf16.msra.mxu0 %v692
    %758 = vmatprep.subr.bf16.mxu0 %v695
    %759 = vmatpush1.bf16.msra.mxu0 %v694
    %760 = vmatprep.subr.bf16.mxu0 %v697
    %761 = vmatpush1.bf16.msra.mxu0 %v696
    %762 = vmatprep.subr.bf16.mxu0 %v699
    %763 = vmatpush1.bf16.msra.mxu0 %v698
    %764 = vmatprep.subr.bf16.mxu0 %v701
    %765 = vmatpush1.bf16.msra.mxu0 %v700
    %766 = vmatprep.subr.bf16.mxu0 %v703
    %767 = vmatpush1.bf16.msra.mxu0 %v702
    %768 = vmatprep.subr.bf16.mxu0 %v705
    %769 = vmatpush1.bf16.msra.mxu0 %v704
    %770 = vmatprep.subr.bf16.mxu0 %v707
    %771 = vmatpush1.bf16.msra.mxu0 %v706
    %772 = vmatprep.subr.bf16.mxu0 %v709
    %773 = vmatpush1.bf16.msra.mxu0 %v708
    %774 = vmatprep.subr.bf16.mxu0 %v711
    %775 = vmatpush1.bf16.msra.mxu0 %v710
    %776 = vmatprep.mubr.bf16.mxu0 %v539
    %777 = vmatmul.mubr.bf16.gmra.mrb[0].mxu0 %v538
    %v778 = vpop.f32.mrb[0].mxu0
    %v779 = vadd.f32 %v577, %v778
    %v780 = vpop.f32.mrb[0].mxu0
    %v781 = vadd.f32 %v581, %v780
    %v782 = vpop.f32.mrb[0].mxu0
    %v783 = vpop.f32.mrb[0].mxu0
    %784 = vdwg.mxu0
    %v785 = vmax.f32 %v779, 0.0
    %v786 = vmax.f32 %v781, 0.0
    %v787 = vpack.c.bf16 %v785, %v785
    %v788 = vpack.c.bf16 %v786, %v786
    %v789 = vld [vmem:[%s5] sm:$0xf]
    %v790 = vld [vmem:[%s5 + $0x4] sm:$0xf]
    %v791 = vld [vmem:[%s5 + $0x8] sm:$0xf]
    %v792 = vld [vmem:[%s5 + $0xc] sm:$0xf]
    %v793 = vld [vmem:[%s5 + $0x10] sm:$0xf]
    %v794 = vld [vmem:[%s5 + $0x14] sm:$0xf]
    %v795 = vld [vmem:[%s5 + $0x18] sm:$0xf]
    %v796 = vld [vmem:[%s5 + $0x1c] sm:$0xf]
    %v797 = vld [vmem:[%s5 + $0x20] sm:$0xf]
    %v798 = vld [vmem:[%s5 + $0x24] sm:$0xf]
    %v799 = vld [vmem:[%s5 + $0x28] sm:$0xf]
    %v800 = vld [vmem:[%s5 + $0x2c] sm:$0xf]
    %v801 = vld [vmem:[%s5 + $0x30] sm:$0xf]
    %v802 = vld [vmem:[%s5 + $0x34] sm:$0xf]
    %v803 = vld [vmem:[%s5 + $0x38] sm:$0xf]
    %v804 = vld [vmem:[%s5 + $0x3c] sm:$0xf]
    %v805 = vld [vmem:[%s5 + $0x40] sm:$0xf]
    %v806 = vld [vmem:[%s5 + $0x44] sm:$0xf]
    %v807 = vld [vmem:[%s5 + $0x48] sm:$0xf]
    %v808 = vld [vmem:[%s5 + $0x4c] sm:$0xf]
    %v809 = vld [vmem:[%s5 + $0x50] sm:$0xf]
    %v810 = vld [vmem:[%s5 + $0x54] sm:$0xf]
    %v811 = vld [vmem:[%s5 + $0x58] sm:$0xf]
    %v812 = vld [vmem:[%s5 + $0x5c] sm:$0xf]
    %v813 = vld [vmem:[%s5 + $0x60] sm:$0xf]
    %v814 = vld [vmem:[%s5 + $0x64] sm:$0xf]
    %v815 = vld [vmem:[%s5 + $0x68] sm:$0xf]
    %v816 = vld [vmem:[%s5 + $0x6c] sm:$0xf]
    %v817 = vld [vmem:[%s5 + $0x70] sm:$0xf]
    %v818 = vld [vmem:[%s5 + $0x74] sm:$0xf]
    %v819 = vld [vmem:[%s5 + $0x78] sm:$0xf]
    %v820 = vld [vmem:[%s5 + $0x7c] sm:$0xf]
    %v821 = vld [vmem:[%s6] sm:$0x1]
    %v823 = vlaneseq
    %v824 = vshrl.u32 %v823, 7
    %v825 = vsub.s32 0, %v824
    %v826 = vrot.slane %v821, %v825
    %v860 = vunpack.c.l.b16 %v789
    %v861 = vunpack.c.l.b16 %v790
    %v862 = vunpack.c.l.b16 %v791
    %v863 = vunpack.c.l.b16 %v792
    %v864 = vunpack.c.l.b16 %v793
    %v865 = vunpack.c.l.b16 %v794
    %v866 = vunpack.c.l.b16 %v795
    %v867 = vunpack.c.l.b16 %v796
    %v868 = vunpack.c.l.b16 %v797
    %v869 = vunpack.c.l.b16 %v798
    %v870 = vunpack.c.l.b16 %v799
    %v871 = vunpack.c.l.b16 %v800
    %v872 = vunpack.c.l.b16 %v801
    %v873 = vunpack.c.l.b16 %v802
    %v874 = vunpack.c.l.b16 %v803
    %v875 = vunpack.c.l.b16 %v804
    %v876 = vunpack.c.l.b16 %v805
    %v877 = vunpack.c.l.b16 %v806
    %v878 = vunpack.c.l.b16 %v807
    %v879 = vunpack.c.l.b16 %v808
    %v880 = vunpack.c.l.b16 %v809
    %v881 = vunpack.c.l.b16 %v810
    %v882 = vunpack.c.l.b16 %v811
    %v883 = vunpack.c.l.b16 %v812
    %v884 = vunpack.c.l.b16 %v813
    %v885 = vunpack.c.l.b16 %v814
    %v886 = vunpack.c.l.b16 %v815
    %v887 = vunpack.c.l.b16 %v816
    %v888 = vunpack.c.l.b16 %v817
    %v889 = vunpack.c.l.b16 %v818
    %v890 = vunpack.c.l.b16 %v819
    %v891 = vunpack.c.l.b16 %v820
    %v892 = vpack.c.b16 %v861, %v860
    %v893 = vpack.c.b16 %v863, %v862
    %v894 = vpack.c.b16 %v865, %v864
    %v895 = vpack.c.b16 %v867, %v866
    %v896 = vpack.c.b16 %v869, %v868
    %v897 = vpack.c.b16 %v871, %v870
    %v898 = vpack.c.b16 %v873, %v872
    %v899 = vpack.c.b16 %v875, %v874
    %v900 = vpack.c.b16 %v877, %v876
    %v901 = vpack.c.b16 %v879, %v878
    %v902 = vpack.c.b16 %v881, %v880
    %v903 = vpack.c.b16 %v883, %v882
    %v904 = vpack.c.b16 %v885, %v884
    %v905 = vpack.c.b16 %v887, %v886
    %v906 = vpack.c.b16 %v889, %v888
    %v907 = vpack.c.b16 %v891, %v890
    %924 = vmatprep.subr.bf16.mxu0 0
    %925 = vmatpush1.bf16.msra.mxu0 %v892
    %926 = vmatprep.subr.bf16.mxu0 0
    %927 = vmatpush1.bf16.msra.mxu0 %v893
    %928 = vmatprep.subr.bf16.mxu0 0
    %929 = vmatpush1.bf16.msra.mxu0 %v894
    %930 = vmatprep.subr.bf16.mxu0 0
    %931 = vmatpush1.bf16.msra.mxu0 %v895
    %932 = vmatprep.subr.bf16.mxu0 0
    %933 = vmatpush1.bf16.msra.mxu0 %v896
    %934 = vmatprep.subr.bf16.mxu0 0
    %935 = vmatpush1.bf16.msra.mxu0 %v897
    %936 = vmatprep.subr.bf16.mxu0 0
    %937 = vmatpush1.bf16.msra.mxu0 %v898
    %938 = vmatprep.subr.bf16.mxu0 0
    %939 = vmatpush1.bf16.msra.mxu0 %v899
    %940 = vmatprep.subr.bf16.mxu0 0
    %941 = vmatpush1.bf16.msra.mxu0 %v900
    %942 = vmatprep.subr.bf16.mxu0 0
    %943 = vmatpush1.bf16.msra.mxu0 %v901
    %944 = vmatprep.subr.bf16.mxu0 0
    %945 = vmatpush1.bf16.msra.mxu0 %v902
    %946 = vmatprep.subr.bf16.mxu0 0
    %947 = vmatpush1.bf16.msra.mxu0 %v903
    %948 = vmatprep.subr.bf16.mxu0 0
    %949 = vmatpush1.bf16.msra.mxu0 %v904
    %950 = vmatprep.subr.bf16.mxu0 0
    %951 = vmatpush1.bf16.msra.mxu0 %v905
    %952 = vmatprep.subr.bf16.mxu0 0
    %953 = vmatpush1.bf16.msra.mxu0 %v906
    %954 = vmatprep.subr.bf16.mxu0 0
    %955 = vmatpush1.bf16.msra.mxu0 %v907
    %956 = vmatprep.mubr.bf16.mxu0 %v788
    %957 = vmatmul.mubr.bf16.gmra.mrb[0].mxu0 %v787
    %v958 = vpop.f32.mrb[0].mxu0
    %v959 = vadd.f32 %v826, %v958
    %v960 = vpop.f32.mrb[0].mxu0
    %v961 = vpop.f32.mrb[0].mxu0
    %v962 = vpop.f32.mrb[0].mxu0
    %963 = vdwg.mxu0
    %964 = vst [vmem:[#allocation2] sm:$0x3] %v959
    // Predicated region
    $region30: #{multi_encoder_forward.15} parent=1 // pred_check
      _
    $region31: #{multi_encoder_forward.15} parent=1 // pred_check_branch
      %966 = sbr.rel (0) target = $region33
    $region32: #{multi_encoder_forward.15} parent=1 // pred_region
      %s968 = ssub.s32 32, 32
      %969 = vsyncadd [#allocation3], %s968
      %s971 = sshll.u32 [#allocation2], 4
      %s972 = int_to_ptr.vmem [resolvable:$true] %s971
      %974 = dma.vmem_to_hbm [thread:$0]  %s972, 32, %s7, [#allocation3]
    $region33: #{multi_encoder_forward.15} parent=1 // pred_fallthru
      _
    // Predicated region
    $region34: #{multi_encoder_forward.15} parent=1 // pred_check
      _
    $region35: #{multi_encoder_forward.15} parent=1 // pred_check_branch
      %976 = sbr.rel (0) target = $region37
    $region36: #{multi_encoder_forward.15} parent=1 // pred_region
      %977 = dma.done [#allocation3], 32
    $region37: #{multi_encoder_forward.15} parent=1 // pred_fallthru
      _
    %978 = vsyncpa [#allocation3], 1

</llo_original>
